<compile_context>
chip_gen: v7x
topology: tpu7x:2x2x1
jax: 0.10.0
libtpu: 0.0.40
codegen_flags: <defaults>
</compile_context>

<pallas_src>
import functools

import numpy as np
import jax
import jax.numpy as jnp
from jax import lax
from jax.experimental import pallas as pl
from jax.experimental.pallas import tpu as pltpu


_HALO = 128                              # lane-aligned right halo (>= P-1 = 15)
_PREC = jax.lax.Precision.HIGHEST        # deliberate MXU precision choice


# ----------------------------------------------------------------------------
# Deterministic filter construction (replicates scipy firwin(kaiser) + PQMF
# cosine modulation from the module's __init__, without scipy).
# ----------------------------------------------------------------------------
def _firwin_kaiser(numtaps, cutoff, beta):
    alpha = 0.5 * (numtaps - 1)
    m = np.arange(numtaps) - alpha
    h = cutoff * np.sinc(cutoff * m)
    h = h * np.kaiser(numtaps, beta)
    return h / h.sum()                   # unity DC gain


def make_pqmf_analysis_filter(N=4, taps=62, cutoff=0.15, beta=9.0):
    qmf = _firwin_kaiser(taps + 1, cutoff, beta)
    H = np.zeros((N, taps + 1), dtype=np.float64)
    for k in range(N):
        cf = (2 * k + 1) * (np.pi / (2 * N)) * (np.arange(taps + 1) - (taps - 1) / 2)
        phase = (-1) ** k * np.pi / 4
        H[k] = 2 * qmf * np.cos(cf + phase)
    return jnp.asarray(H, dtype=jnp.float32)          # (N, taps+1)


# ----------------------------------------------------------------------------
# Pallas kernel: one (batch-group, time-tile) block.
#   x_ref : (ROWS, TILE_T)      polyphase rows, row q = b_local*N + r (phase r)
#   xh_ref: (ROWS, 128)         the next 128 time samples (right halo)
#   h_ref : (P, ROWS, ROWS)     per-phase block-diagonal polyphase filter
#   o_ref : (ROWS, TILE_T)      row = b_local*N + k (subband k), lane-dense
# ----------------------------------------------------------------------------
def _pqmf_analysis_kernel(x_ref, xh_ref, h_ref, o_ref, *, chunk):
    rows, tile_t = o_ref.shape
    p_taps = h_ref.shape[0]              # P (16)
    halo = xh_ref.shape[1]               # 128
    ext = chunk + halo                   # width of one extended column chunk

    def chunk_out(xe):
        # xe: (rows, chunk + halo).  Per-phase accumulate, everything stays in
        # vregs: acc is (rows, chunk) f32, each shifted slab is produced by an
        # XLU roll (free slot) + aligned trim and fed straight to the MXU.
        acc = jnp.dot(h_ref[0], xe[:, :chunk],
                      preferred_element_type=jnp.float32, precision=_PREC)
        for p in range(1, p_taps):
            # sh[:, t] = xe[:, t + p]   (roll by ext - p == roll by -p)
            sh = pltpu.roll(xe, ext - p, 1)[:, :chunk]
            acc = acc + jnp.dot(h_ref[p], sh,
                                preferred_element_type=jnp.float32,
                                precision=_PREC)
        return acc

    n_chunks = tile_t // chunk

    # main chunks: their right halo is still inside the main tile
    def body(c, carry):
        start = pl.multiple_of(c * chunk, chunk)
        xe = x_ref[:, pl.ds(start, ext)]
        o_ref[:, pl.ds(start, chunk)] = chunk_out(xe).astype(o_ref.dtype)
        return carry

    if n_chunks > 1:
        lax.fori_loop(0, n_chunks - 1, body, 0, unroll=2)

    # last chunk: right halo comes from the dedicated 128-lane halo block
    last = tile_t - chunk
    xe_last = jnp.concatenate([x_ref[:, last:], xh_ref[...]], axis=1)
    o_ref[:, last:] = chunk_out(xe_last).astype(o_ref.dtype)


# ----------------------------------------------------------------------------
# Wrapper: padding / polyphase plumbing + pallas_call.
# ----------------------------------------------------------------------------
def pqmf_analysis(x, H, *, N=4, taps=62, tile_t=16384):
    B0, C, T = x.shape
    assert C == 1, "PQMF analysis expects a single input channel"
    assert T % N == 0, "T must be a multiple of N (hard requirement)"

    pad = taps // 2                       # 31
    Tq = T // N                           # conv1d output length (stride=N)
    P = -(-(taps + 1) // N)               # 16 polyphase taps per phase

    # fold up to 8 batches into one block -> up to 32 sublane rows
    B_TILE = min(8, 2 * (-(-B0 // 2)))
    B = -(-B0 // B_TILE) * B_TILE
    ROWS = B_TILE * N
    n_rb = B // B_TILE
    if B != B0:
        x = jnp.pad(x, ((0, B - B0), (0, 0), (0, 0)))

    # lane-dense time tiles (multiples of 128)
    Tq_128 = -(-Tq // 128) * 128
    TILE_T = min(-(-tile_t // 128) * 128, Tq_128)
    if n_rb == 1 and TILE_T >= Tq_128 and Tq_128 >= 256:
        # keep >= 2 grid steps so both v7x TensorCores get work
        TILE_T = -(-(Tq_128 // 2) // 128) * 128
    n_tt = -(-Tq_128 // TILE_T)
    Tq_pad = n_tt * TILE_T
    CHUNK = 256 if TILE_T % 256 == 0 else 128

    # zero-pad (conv left pad + right pad up to the tiled/halo extent) and
    # polyphase-deinterleave: xm[g, b_local*N + r, m] = xpad[b, N*m + r]
    Ttot = Tq_pad + _HALO
    x2d = jnp.pad(x[:, 0, :], ((0, 0), (pad, N * Ttot - T - pad)))
    xm = (x2d.reshape(n_rb, B_TILE, Ttot, N)
              .transpose(0, 1, 3, 2)
              .reshape(n_rb, ROWS, Ttot))

    # per-phase block-diagonal filter:
    #   Hw[p, b*N + k, b'*N + r] = Hpad[k, p*N + r] * (b == b')
    Hpad = jnp.pad(H.astype(jnp.float32), ((0, 0), (0, N * P - (taps + 1))))
    Hpr = jnp.transpose(Hpad.reshape(N, P, N), (1, 0, 2))          # [p, k, r]
    eye = jnp.eye(B_TILE, dtype=jnp.float32)                       # [b, b']
    Hw = (eye[None, :, None, :, None] * Hpr[:, None, :, None, :]).reshape(
        P, ROWS, ROWS)

    kernel = functools.partial(_pqmf_analysis_kernel, chunk=CHUNK)

    flops = 2 * P * ROWS * ROWS * Tq_pad * n_rb
    bytes_accessed = 4 * (n_rb * ROWS * Ttot + n_rb * ROWS * Tq_pad
                          + P * ROWS * ROWS)

    out_flat = pl.pallas_call(
        kernel,
        out_shape=jax.ShapeDtypeStruct((n_rb * ROWS, Tq_pad), jnp.float32),
        grid=(n_rb, n_tt),
        in_specs=[
            # main polyphase tile
            pl.BlockSpec((None, ROWS, TILE_T), lambda i, j: (i, 0, j)),
            # lane-aligned 128-wide right halo (same array, shifted block idx)
            pl.BlockSpec((None, ROWS, _HALO),
                         lambda i, j: (i, 0, (j + 1) * (TILE_T // _HALO))),
            # tiny per-phase filter, grid-invariant -> stays resident in VMEM
            pl.BlockSpec((P, ROWS, ROWS), lambda i, j: (0, 0, 0)),
        ],
        out_specs=pl.BlockSpec((ROWS, TILE_T), lambda i, j: (i, j)),
        compiler_params=pltpu.CompilerParams(
            dimension_semantics=("parallel", "parallel")),
        cost_estimate=pl.CostEstimate(flops=int(flops), transcendentals=0,
                                      bytes_accessed=int(bytes_accessed)),
    )(xm, xm, Hw)

    # back to the PyTorch (B, N, T//N) layout
    return out_flat.reshape(B, N, Tq_pad)[:B0, :, :Tq]


if __name__ == "__main__":
    N, taps, cutoff, beta = 4, 62, 0.15, 9.0
    H = make_pqmf_analysis_filter(N, taps, cutoff, beta)          # (4, 63)

    def reference(xin):
        return lax.conv_general_dilated(
            xin, H[:, None, :], window_strides=(N,),
            padding=[(taps // 2, taps // 2)],
            dimension_numbers=("NCH", "OIH", "NCH"),
            precision=_PREC)

    # --- small demo shape: one batch pair, single time tile ---
    x1 = jax.random.normal(jax.random.PRNGKey(0), (2, 1, 256), dtype=jnp.float32)
    y1 = jax.block_until_ready(pqmf_analysis(x1, H, N=N, taps=taps))
    assert y1.shape == (2, N, 256 // N)
    np.testing.assert_allclose(np.asarray(y1), np.asarray(reference(x1)),
                               rtol=1e-4, atol=1e-5)

    # --- batch padding (3 -> 4, ROWS=16), multi-tile time grid + halo blocks ---
    x2 = jax.random.normal(jax.random.PRNGKey(1), (3, 1, 8192), dtype=jnp.float32)
    y2 = jax.block_until_ready(pqmf_analysis(x2, H, N=N, taps=taps, tile_t=512))
    assert y2.shape == (3, N, 8192 // N)
    np.testing.assert_allclose(np.asarray(y2), np.asarray(reference(x2)),
                               rtol=1e-4, atol=1e-5)

    # --- 8 batches folded (ROWS=32) + automatic 2-way time split (v7x) ---
    x3 = jax.random.normal(jax.random.PRNGKey(2), (8, 1, 4096), dtype=jnp.float32)
    y3 = jax.block_until_ready(pqmf_analysis(x3, H, N=N, taps=taps))
    assert y3.shape == (8, N, 4096 // N)
    np.testing.assert_allclose(np.asarray(y3), np.asarray(reference(x3)),
                               rtol=1e-4, atol=1e-5)

    print("KERNEL_OK")
</pallas_src>

<mosaic_0001>
module attributes {stable_mosaic.version = 11 : i64} {
  func.func @_pqmf_analysis_kernel(%arg0: i32, %arg1: i32, %arg2: memref<1x8x128xf32, #tpu.memory_space<vmem>>, %arg3: memref<1x8x128xf32, #tpu.memory_space<vmem>>, %arg4: memref<16x8x8xf32, #tpu.memory_space<vmem>>, %arg5: memref<8x128xf32, #tpu.memory_space<vmem>>) attributes {dimension_semantics = [#tpu.dimension_semantics<parallel>, #tpu.dimension_semantics<parallel>], iteration_bounds = array<i64: 1, 1>, scalar_prefetch = 0 : i64, scratch_operands = 0 : i64, tpu.core_type = #tpu.core_type<tc>, window_params = [{transform_indices = @transform_0, window_bounds = array<i64: 1, 8, 128>}, {transform_indices = @transform_1, window_bounds = array<i64: 1, 8, 128>}, {pipeline_mode = #tpu.pipeline_mode<synchronous>, transform_indices = @transform_2, window_bounds = array<i64: 16, 8, 8>}, {transform_indices = @transform_3, window_bounds = array<i64: 8, 128>}]} {
    %c0 = arith.constant 0 : index
    %c0_0 = arith.constant 0 : index
    %c0_1 = arith.constant 0 : index
    %0 = vector.load %arg2[%c0, %c0_0, %c0_1] : memref<1x8x128xf32, #tpu.memory_space<vmem>>, vector<1x8x128xf32>
    %1 = vector.shape_cast %0 : vector<1x8x128xf32> to vector<8x128xf32>
    %c0_2 = arith.constant 0 : index
    %c0_3 = arith.constant 0 : index
    %c0_4 = arith.constant 0 : index
    %2 = vector.load %arg3[%c0_2, %c0_3, %c0_4] : memref<1x8x128xf32, #tpu.memory_space<vmem>>, vector<1x8x128xf32>
    %3 = vector.shape_cast %2 : vector<1x8x128xf32> to vector<8x128xf32>
    %4 = tpu.concatenate %1, %3 in 1 : vector<8x128xf32>, vector<8x128xf32> -> vector<8x256xf32>
    %c0_5 = arith.constant 0 : index
    %c0_6 = arith.constant 0 : index
    %c0_7 = arith.constant 0 : index
    %5 = vector.load %arg4[%c0_5, %c0_6, %c0_7] : memref<16x8x8xf32, #tpu.memory_space<vmem>>, vector<1x8x8xf32>
    %6 = vector.shape_cast %5 : vector<1x8x8xf32> to vector<8x8xf32>
    %7 = vector.extract_strided_slice %4 {offsets = [0, 0], sizes = [8, 128], strides = [1, 1]} : vector<8x256xf32> to vector<8x128xf32>
    %cst = arith.constant dense<0.000000e+00> : vector<8x128xf32>
    %8 = tpu.matmul %6, %7, %cst {dimension_numbers = #tpu.dot_dimension_numbers<[1], [0], [0], [1], [0, 0, 1, 1], [], []>, precision = #tpu.contract_precision<fp32>} : vector<8x8xf32>, vector<8x128xf32>, vector<8x128xf32> -> vector<8x128xf32>
    %c255_i32 = arith.constant 255 : i32
    %9 = tpu.dynamic_rotate %4 by %c255_i32 dim 1 : vector<8x256xf32>, i32 -> vector<8x256xf32>
    %10 = vector.extract_strided_slice %9 {offsets = [0, 0], sizes = [8, 128], strides = [1, 1]} : vector<8x256xf32> to vector<8x128xf32>
    %c1 = arith.constant 1 : index
    %c0_8 = arith.constant 0 : index
    %c0_9 = arith.constant 0 : index
    %11 = vector.load %arg4[%c1, %c0_8, %c0_9] : memref<16x8x8xf32, #tpu.memory_space<vmem>>, vector<1x8x8xf32>
    %12 = vector.shape_cast %11 : vector<1x8x8xf32> to vector<8x8xf32>
    %cst_10 = arith.constant dense<0.000000e+00> : vector<8x128xf32>
    %13 = tpu.matmul %12, %10, %cst_10 {dimension_numbers = #tpu.dot_dimension_numbers<[1], [0], [0], [1], [0, 0, 1, 1], [], []>, precision = #tpu.contract_precision<fp32>} : vector<8x8xf32>, vector<8x128xf32>, vector<8x128xf32> -> vector<8x128xf32>
    %14 = arith.addf %8, %13 : vector<8x128xf32>
    %c254_i32 = arith.constant 254 : i32
    %15 = tpu.dynamic_rotate %4 by %c254_i32 dim 1 : vector<8x256xf32>, i32 -> vector<8x256xf32>
    %16 = vector.extract_strided_slice %15 {offsets = [0, 0], sizes = [8, 128], strides = [1, 1]} : vector<8x256xf32> to vector<8x128xf32>
    %c2 = arith.constant 2 : index
    %c0_11 = arith.constant 0 : index
    %c0_12 = arith.constant 0 : index
    %17 = vector.load %arg4[%c2, %c0_11, %c0_12] : memref<16x8x8xf32, #tpu.memory_space<vmem>>, vector<1x8x8xf32>
    %18 = vector.shape_cast %17 : vector<1x8x8xf32> to vector<8x8xf32>
    %cst_13 = arith.constant dense<0.000000e+00> : vector<8x128xf32>
    %19 = tpu.matmul %18, %16, %cst_13 {dimension_numbers = #tpu.dot_dimension_numbers<[1], [0], [0], [1], [0, 0, 1, 1], [], []>, precision = #tpu.contract_precision<fp32>} : vector<8x8xf32>, vector<8x128xf32>, vector<8x128xf32> -> vector<8x128xf32>
    %20 = arith.addf %14, %19 : vector<8x128xf32>
    %c253_i32 = arith.constant 253 : i32
    %21 = tpu.dynamic_rotate %4 by %c253_i32 dim 1 : vector<8x256xf32>, i32 -> vector<8x256xf32>
    %22 = vector.extract_strided_slice %21 {offsets = [0, 0], sizes = [8, 128], strides = [1, 1]} : vector<8x256xf32> to vector<8x128xf32>
    %c3 = arith.constant 3 : index
    %c0_14 = arith.constant 0 : index
    %c0_15 = arith.constant 0 : index
    %23 = vector.load %arg4[%c3, %c0_14, %c0_15] : memref<16x8x8xf32, #tpu.memory_space<vmem>>, vector<1x8x8xf32>
    %24 = vector.shape_cast %23 : vector<1x8x8xf32> to vector<8x8xf32>
    %cst_16 = arith.constant dense<0.000000e+00> : vector<8x128xf32>
    %25 = tpu.matmul %24, %22, %cst_16 {dimension_numbers = #tpu.dot_dimension_numbers<[1], [0], [0], [1], [0, 0, 1, 1], [], []>, precision = #tpu.contract_precision<fp32>} : vector<8x8xf32>, vector<8x128xf32>, vector<8x128xf32> -> vector<8x128xf32>
    %26 = arith.addf %20, %25 : vector<8x128xf32>
    %c252_i32 = arith.constant 252 : i32
    %27 = tpu.dynamic_rotate %4 by %c252_i32 dim 1 : vector<8x256xf32>, i32 -> vector<8x256xf32>
    %28 = vector.extract_strided_slice %27 {offsets = [0, 0], sizes = [8, 128], strides = [1, 1]} : vector<8x256xf32> to vector<8x128xf32>
    %c4 = arith.constant 4 : index
    %c0_17 = arith.constant 0 : index
    %c0_18 = arith.constant 0 : index
    %29 = vector.load %arg4[%c4, %c0_17, %c0_18] : memref<16x8x8xf32, #tpu.memory_space<vmem>>, vector<1x8x8xf32>
    %30 = vector.shape_cast %29 : vector<1x8x8xf32> to vector<8x8xf32>
    %cst_19 = arith.constant dense<0.000000e+00> : vector<8x128xf32>
    %31 = tpu.matmul %30, %28, %cst_19 {dimension_numbers = #tpu.dot_dimension_numbers<[1], [0], [0], [1], [0, 0, 1, 1], [], []>, precision = #tpu.contract_precision<fp32>} : vector<8x8xf32>, vector<8x128xf32>, vector<8x128xf32> -> vector<8x128xf32>
    %32 = arith.addf %26, %31 : vector<8x128xf32>
    %c251_i32 = arith.constant 251 : i32
    %33 = tpu.dynamic_rotate %4 by %c251_i32 dim 1 : vector<8x256xf32>, i32 -> vector<8x256xf32>
    %34 = vector.extract_strided_slice %33 {offsets = [0, 0], sizes = [8, 128], strides = [1, 1]} : vector<8x256xf32> to vector<8x128xf32>
    %c5 = arith.constant 5 : index
    %c0_20 = arith.constant 0 : index
    %c0_21 = arith.constant 0 : index
    %35 = vector.load %arg4[%c5, %c0_20, %c0_21] : memref<16x8x8xf32, #tpu.memory_space<vmem>>, vector<1x8x8xf32>
    %36 = vector.shape_cast %35 : vector<1x8x8xf32> to vector<8x8xf32>
    %cst_22 = arith.constant dense<0.000000e+00> : vector<8x128xf32>
    %37 = tpu.matmul %36, %34, %cst_22 {dimension_numbers = #tpu.dot_dimension_numbers<[1], [0], [0], [1], [0, 0, 1, 1], [], []>, precision = #tpu.contract_precision<fp32>} : vector<8x8xf32>, vector<8x128xf32>, vector<8x128xf32> -> vector<8x128xf32>
    %38 = arith.addf %32, %37 : vector<8x128xf32>
    %c250_i32 = arith.constant 250 : i32
    %39 = tpu.dynamic_rotate %4 by %c250_i32 dim 1 : vector<8x256xf32>, i32 -> vector<8x256xf32>
    %40 = vector.extract_strided_slice %39 {offsets = [0, 0], sizes = [8, 128], strides = [1, 1]} : vector<8x256xf32> to vector<8x128xf32>
    %c6 = arith.constant 6 : index
    %c0_23 = arith.constant 0 : index
    %c0_24 = arith.constant 0 : index
    %41 = vector.load %arg4[%c6, %c0_23, %c0_24] : memref<16x8x8xf32, #tpu.memory_space<vmem>>, vector<1x8x8xf32>
    %42 = vector.shape_cast %41 : vector<1x8x8xf32> to vector<8x8xf32>
    %cst_25 = arith.constant dense<0.000000e+00> : vector<8x128xf32>
    %43 = tpu.matmul %42, %40, %cst_25 {dimension_numbers = #tpu.dot_dimension_numbers<[1], [0], [0], [1], [0, 0, 1, 1], [], []>, precision = #tpu.contract_precision<fp32>} : vector<8x8xf32>, vector<8x128xf32>, vector<8x128xf32> -> vector<8x128xf32>
    %44 = arith.addf %38, %43 : vector<8x128xf32>
    %c249_i32 = arith.constant 249 : i32
    %45 = tpu.dynamic_rotate %4 by %c249_i32 dim 1 : vector<8x256xf32>, i32 -> vector<8x256xf32>
    %46 = vector.extract_strided_slice %45 {offsets = [0, 0], sizes = [8, 128], strides = [1, 1]} : vector<8x256xf32> to vector<8x128xf32>
    %c7 = arith.constant 7 : index
    %c0_26 = arith.constant 0 : index
    %c0_27 = arith.constant 0 : index
    %47 = vector.load %arg4[%c7, %c0_26, %c0_27] : memref<16x8x8xf32, #tpu.memory_space<vmem>>, vector<1x8x8xf32>
    %48 = vector.shape_cast %47 : vector<1x8x8xf32> to vector<8x8xf32>
    %cst_28 = arith.constant dense<0.000000e+00> : vector<8x128xf32>
    %49 = tpu.matmul %48, %46, %cst_28 {dimension_numbers = #tpu.dot_dimension_numbers<[1], [0], [0], [1], [0, 0, 1, 1], [], []>, precision = #tpu.contract_precision<fp32>} : vector<8x8xf32>, vector<8x128xf32>, vector<8x128xf32> -> vector<8x128xf32>
    %50 = arith.addf %44, %49 : vector<8x128xf32>
    %c248_i32 = arith.constant 248 : i32
    %51 = tpu.dynamic_rotate %4 by %c248_i32 dim 1 : vector<8x256xf32>, i32 -> vector<8x256xf32>
    %52 = vector.extract_strided_slice %51 {offsets = [0, 0], sizes = [8, 128], strides = [1, 1]} : vector<8x256xf32> to vector<8x128xf32>
    %c8 = arith.constant 8 : index
    %c0_29 = arith.constant 0 : index
    %c0_30 = arith.constant 0 : index
    %53 = vector.load %arg4[%c8, %c0_29, %c0_30] : memref<16x8x8xf32, #tpu.memory_space<vmem>>, vector<1x8x8xf32>
    %54 = vector.shape_cast %53 : vector<1x8x8xf32> to vector<8x8xf32>
    %cst_31 = arith.constant dense<0.000000e+00> : vector<8x128xf32>
    %55 = tpu.matmul %54, %52, %cst_31 {dimension_numbers = #tpu.dot_dimension_numbers<[1], [0], [0], [1], [0, 0, 1, 1], [], []>, precision = #tpu.contract_precision<fp32>} : vector<8x8xf32>, vector<8x128xf32>, vector<8x128xf32> -> vector<8x128xf32>
    %56 = arith.addf %50, %55 : vector<8x128xf32>
    %c247_i32 = arith.constant 247 : i32
    %57 = tpu.dynamic_rotate %4 by %c247_i32 dim 1 : vector<8x256xf32>, i32 -> vector<8x256xf32>
    %58 = vector.extract_strided_slice %57 {offsets = [0, 0], sizes = [8, 128], strides = [1, 1]} : vector<8x256xf32> to vector<8x128xf32>
    %c9 = arith.constant 9 : index
    %c0_32 = arith.constant 0 : index
    %c0_33 = arith.constant 0 : index
    %59 = vector.load %arg4[%c9, %c0_32, %c0_33] : memref<16x8x8xf32, #tpu.memory_space<vmem>>, vector<1x8x8xf32>
    %60 = vector.shape_cast %59 : vector<1x8x8xf32> to vector<8x8xf32>
    %cst_34 = arith.constant dense<0.000000e+00> : vector<8x128xf32>
    %61 = tpu.matmul %60, %58, %cst_34 {dimension_numbers = #tpu.dot_dimension_numbers<[1], [0], [0], [1], [0, 0, 1, 1], [], []>, precision = #tpu.contract_precision<fp32>} : vector<8x8xf32>, vector<8x128xf32>, vector<8x128xf32> -> vector<8x128xf32>
    %62 = arith.addf %56, %61 : vector<8x128xf32>
    %c246_i32 = arith.constant 246 : i32
    %63 = tpu.dynamic_rotate %4 by %c246_i32 dim 1 : vector<8x256xf32>, i32 -> vector<8x256xf32>
    %64 = vector.extract_strided_slice %63 {offsets = [0, 0], sizes = [8, 128], strides = [1, 1]} : vector<8x256xf32> to vector<8x128xf32>
    %c10 = arith.constant 10 : index
    %c0_35 = arith.constant 0 : index
    %c0_36 = arith.constant 0 : index
    %65 = vector.load %arg4[%c10, %c0_35, %c0_36] : memref<16x8x8xf32, #tpu.memory_space<vmem>>, vector<1x8x8xf32>
    %66 = vector.shape_cast %65 : vector<1x8x8xf32> to vector<8x8xf32>
    %cst_37 = arith.constant dense<0.000000e+00> : vector<8x128xf32>
    %67 = tpu.matmul %66, %64, %cst_37 {dimension_numbers = #tpu.dot_dimension_numbers<[1], [0], [0], [1], [0, 0, 1, 1], [], []>, precision = #tpu.contract_precision<fp32>} : vector<8x8xf32>, vector<8x128xf32>, vector<8x128xf32> -> vector<8x128xf32>
    %68 = arith.addf %62, %67 : vector<8x128xf32>
    %c245_i32 = arith.constant 245 : i32
    %69 = tpu.dynamic_rotate %4 by %c245_i32 dim 1 : vector<8x256xf32>, i32 -> vector<8x256xf32>
    %70 = vector.extract_strided_slice %69 {offsets = [0, 0], sizes = [8, 128], strides = [1, 1]} : vector<8x256xf32> to vector<8x128xf32>
    %c11 = arith.constant 11 : index
    %c0_38 = arith.constant 0 : index
    %c0_39 = arith.constant 0 : index
    %71 = vector.load %arg4[%c11, %c0_38, %c0_39] : memref<16x8x8xf32, #tpu.memory_space<vmem>>, vector<1x8x8xf32>
    %72 = vector.shape_cast %71 : vector<1x8x8xf32> to vector<8x8xf32>
    %cst_40 = arith.constant dense<0.000000e+00> : vector<8x128xf32>
    %73 = tpu.matmul %72, %70, %cst_40 {dimension_numbers = #tpu.dot_dimension_numbers<[1], [0], [0], [1], [0, 0, 1, 1], [], []>, precision = #tpu.contract_precision<fp32>} : vector<8x8xf32>, vector<8x128xf32>, vector<8x128xf32> -> vector<8x128xf32>
    %74 = arith.addf %68, %73 : vector<8x128xf32>
    %c244_i32 = arith.constant 244 : i32
    %75 = tpu.dynamic_rotate %4 by %c244_i32 dim 1 : vector<8x256xf32>, i32 -> vector<8x256xf32>
    %76 = vector.extract_strided_slice %75 {offsets = [0, 0], sizes = [8, 128], strides = [1, 1]} : vector<8x256xf32> to vector<8x128xf32>
    %c12 = arith.constant 12 : index
    %c0_41 = arith.constant 0 : index
    %c0_42 = arith.constant 0 : index
    %77 = vector.load %arg4[%c12, %c0_41, %c0_42] : memref<16x8x8xf32, #tpu.memory_space<vmem>>, vector<1x8x8xf32>
    %78 = vector.shape_cast %77 : vector<1x8x8xf32> to vector<8x8xf32>
    %cst_43 = arith.constant dense<0.000000e+00> : vector<8x128xf32>
    %79 = tpu.matmul %78, %76, %cst_43 {dimension_numbers = #tpu.dot_dimension_numbers<[1], [0], [0], [1], [0, 0, 1, 1], [], []>, precision = #tpu.contract_precision<fp32>} : vector<8x8xf32>, vector<8x128xf32>, vector<8x128xf32> -> vector<8x128xf32>
    %80 = arith.addf %74, %79 : vector<8x128xf32>
    %c243_i32 = arith.constant 243 : i32
    %81 = tpu.dynamic_rotate %4 by %c243_i32 dim 1 : vector<8x256xf32>, i32 -> vector<8x256xf32>
    %82 = vector.extract_strided_slice %81 {offsets = [0, 0], sizes = [8, 128], strides = [1, 1]} : vector<8x256xf32> to vector<8x128xf32>
    %c13 = arith.constant 13 : index
    %c0_44 = arith.constant 0 : index
    %c0_45 = arith.constant 0 : index
    %83 = vector.load %arg4[%c13, %c0_44, %c0_45] : memref<16x8x8xf32, #tpu.memory_space<vmem>>, vector<1x8x8xf32>
    %84 = vector.shape_cast %83 : vector<1x8x8xf32> to vector<8x8xf32>
    %cst_46 = arith.constant dense<0.000000e+00> : vector<8x128xf32>
    %85 = tpu.matmul %84, %82, %cst_46 {dimension_numbers = #tpu.dot_dimension_numbers<[1], [0], [0], [1], [0, 0, 1, 1], [], []>, precision = #tpu.contract_precision<fp32>} : vector<8x8xf32>, vector<8x128xf32>, vector<8x128xf32> -> vector<8x128xf32>
    %86 = arith.addf %80, %85 : vector<8x128xf32>
    %c242_i32 = arith.constant 242 : i32
    %87 = tpu.dynamic_rotate %4 by %c242_i32 dim 1 : vector<8x256xf32>, i32 -> vector<8x256xf32>
    %88 = vector.extract_strided_slice %87 {offsets = [0, 0], sizes = [8, 128], strides = [1, 1]} : vector<8x256xf32> to vector<8x128xf32>
    %c14 = arith.constant 14 : index
    %c0_47 = arith.constant 0 : index
    %c0_48 = arith.constant 0 : index
    %89 = vector.load %arg4[%c14, %c0_47, %c0_48] : memref<16x8x8xf32, #tpu.memory_space<vmem>>, vector<1x8x8xf32>
    %90 = vector.shape_cast %89 : vector<1x8x8xf32> to vector<8x8xf32>
    %cst_49 = arith.constant dense<0.000000e+00> : vector<8x128xf32>
    %91 = tpu.matmul %90, %88, %cst_49 {dimension_numbers = #tpu.dot_dimension_numbers<[1], [0], [0], [1], [0, 0, 1, 1], [], []>, precision = #tpu.contract_precision<fp32>} : vector<8x8xf32>, vector<8x128xf32>, vector<8x128xf32> -> vector<8x128xf32>
    %92 = arith.addf %86, %91 : vector<8x128xf32>
    %c241_i32 = arith.constant 241 : i32
    %93 = tpu.dynamic_rotate %4 by %c241_i32 dim 1 : vector<8x256xf32>, i32 -> vector<8x256xf32>
    %94 = vector.extract_strided_slice %93 {offsets = [0, 0], sizes = [8, 128], strides = [1, 1]} : vector<8x256xf32> to vector<8x128xf32>
    %c15 = arith.constant 15 : index
    %c0_50 = arith.constant 0 : index
    %c0_51 = arith.constant 0 : index
    %95 = vector.load %arg4[%c15, %c0_50, %c0_51] : memref<16x8x8xf32, #tpu.memory_space<vmem>>, vector<1x8x8xf32>
    %96 = vector.shape_cast %95 : vector<1x8x8xf32> to vector<8x8xf32>
    %cst_52 = arith.constant dense<0.000000e+00> : vector<8x128xf32>
    %97 = tpu.matmul %96, %94, %cst_52 {dimension_numbers = #tpu.dot_dimension_numbers<[1], [0], [0], [1], [0, 0, 1, 1], [], []>, precision = #tpu.contract_precision<fp32>} : vector<8x8xf32>, vector<8x128xf32>, vector<8x128xf32> -> vector<8x128xf32>
    %98 = arith.addf %92, %97 : vector<8x128xf32>
    %c0_53 = arith.constant 0 : index
    %c0_54 = arith.constant 0 : index
    %99 = vector.load %arg5[%c0_53, %c0_54] : memref<8x128xf32, #tpu.memory_space<vmem>>, vector<8x128xf32>
    tpu.vector_store %arg5[%c0_53, %c0_54], %98 {strides = array<i32>} : memref<8x128xf32, #tpu.memory_space<vmem>>, vector<8x128xf32>,
    return
  }
  func.func @transform_0(%arg0: i32, %arg1: i32) -> (i32, i32, i32) {
    %c0_i32 = arith.constant 0 : i32
    %c0_i32_0 = arith.constant 0 : i32
    return %arg0, %c0_i32, %arg1 : i32, i32, i32
  }
  func.func @transform_1(%arg0: i32, %arg1: i32) -> (i32, i32, i32) {
    %c1_i32 = arith.constant 1 : i32
    %0 = arith.addi %arg1, %c1_i32 : i32
    %c1_i32_0 = arith.constant 1 : i32
    %1 = arith.muli %0, %c1_i32_0 : i32
    %c0_i32 = arith.constant 0 : i32
    %c0_i32_1 = arith.constant 0 : i32
    return %arg0, %c0_i32, %1 : i32, i32, i32
  }
  func.func @transform_2(%arg0: i32, %arg1: i32) -> (i32, i32, i32) {
    %c0_i32 = arith.constant 0 : i32
    %c0_i32_0 = arith.constant 0 : i32
    %c0_i32_1 = arith.constant 0 : i32
    %c0_i32_2 = arith.constant 0 : i32
    return %c0_i32, %c0_i32_0, %c0_i32_1 : i32, i32, i32
  }
  func.func @transform_3(%arg0: i32, %arg1: i32) -> (i32, i32) {
    %c0_i32 = arith.constant 0 : i32
    return %arg0, %arg1 : i32, i32
  }
}

</mosaic_0001>

<llo_original>
// kernel: tpu_custom_call.1
$region0: #{tpu_custom_call.1}
  #allocation0 [shape = 'u32[]', space=smem, size = 0x4, offset = 0x4, fixed_abs, tag = 'smem constant byte address 0x4 - core index']
  #allocation1 [shape = 'u32[144,128]{1,0:T(1,128)}', space=vmem, size = 0x12000, scoped, tag = 'internal scratch']
  %s0 = inlined_call_operand.vmem [shape: f32[1,8,256], index: 0, kind: input, shape index: {}]
  %s1 = inlined_call_operand.vmem [shape: f32[1,8,256], index: 1, kind: input, shape index: {}]
  %s2 = inlined_call_operand.vmem [shape: f32[16,8,8], index: 2, kind: input, shape index: {}]
  %s3 = inlined_call_operand.hbm [shape: f32[8,128], index: 3, kind: output, shape index: {}]
  %s4 = sld [smem:[#allocation0]]
  $region22: #{tpu_custom_call.1} parent=0
    _
  %s6 = ssub.s32 1, %s4
  %s7 = scalar_select 0, %s6, %s4
  $region1: #{tpu_custom_call.1} parent=0
    #allocation2 [shape = 'u8[4096]{0}', space=vmem, size = 0x1000, scoped, tag = 'output window, operand 0, single buffered']
    #allocation3 [shape = 's32[1]{0}', space=sflag, size = 0x4, scoped, tag = 'scoped memory for tpu_custom_call.1']
    %8 = vsyncpa [#allocation3], 0
    // Predicated region
    $region2: #{tpu_custom_call.1} parent=1 // pred_check
      _
    $region3: #{tpu_custom_call.1} parent=1 // pred_check_branch
      %10 = sbr.rel (0) target = $region5
    $region4: #{tpu_custom_call.1} parent=1 // pred_region
      _
    $region5: #{tpu_custom_call.1} parent=1 // pred_fallthru
      _
    // Predicated region
    $region6: #{tpu_custom_call.1} parent=1 // pred_check
      _
    $region7: #{tpu_custom_call.1} parent=1 // pred_check_branch
      %12 = sbr.rel (0) target = $region9
    $region8: #{tpu_custom_call.1} parent=1 // pred_region
      %s13 = sadd.s32 0, 1
      %p14 = scmp.lt.s32.totalorder %s13, 1
      %s15 = scalar_select %p14, %s13, 1
      %s16 = smul.addr %s15, 8
      %s17 = scalar_lea.vmem %s1, %s16
      %s18 = sadd.s32 0, 1
    $region9: #{tpu_custom_call.1} parent=1 // pred_fallthru
      _
    // Predicated region
    $region10: #{tpu_custom_call.1} parent=1 // pred_check
      _
    $region11: #{tpu_custom_call.1} parent=1 // pred_check_branch
      %20 = sbr.rel (0) target = $region13
    $region12: #{tpu_custom_call.1} parent=1 // pred_region
      _
    $region13: #{tpu_custom_call.1} parent=1 // pred_fallthru
      _
    %s21 = sadd.s32 0, 1
    %p22 = scmp.lt.s32.totalorder %s21, 1
    %s23 = scalar_select %p22, %s21, 1
    %s24 = smul.addr %s23, 8
    %s25 = scalar_lea.vmem %s1, %s24
    %s26 = sadd.s32 0, 1
    %p27 = scmp.lt.s32.totalorder %s26, 1
    %s28 = scalar_select %p27, %s26, 1
    %s29 = smul.addr %s28, 8
    %s30 = scalar_lea.vmem %s1, %s29
    %s31 = sadd.s32 0, 1
    %v32 = vld [vmem:[%s0] sm:$0xff]
    %v33 = vld [vmem:[%s30] sm:$0xff]
    %v34 = vld [vmem:[%s2] sm:$0xff]
    %35 = vrot.lane.b32.xlu0 %v32, 127
    %v36 = vpop.permute.xlu0 %35
    %37 = vrot.lane.b32.xlu0 %v33, 127
    %v38 = vpop.permute.xlu0 %37
    %v39 = vlaneseq
    %v40 = vand.u32 %v39, 127
    %vm41 = vcmp.lt.s32.totalorder %v40, 127
    %v42 = vsel %vm41, %v36, %v38
    %s43 = scalar_lea.vmem %s2, 8
    %v44 = vld [vmem:[%s43] sm:$0xff]
    %vm45 = vcmask 64512
    %v47 = vsel %vm45, %v44, 0
    %49 = vmatprep.subr.mxu0 0.0
    %v50 = vand.u32 %v42, 4294901760
    %51 = vmatpush1.msra.mxu0 %v50
    %52 = vmatprep.subr.mxu0 0.0
    %53 = vmatpush1.msra.mxu0 0.0
    %54 = vmatprep.subr.mxu0 0.0
    %55 = vmatpush1.msra.mxu0 0.0
    %56 = vmatprep.subr.mxu0 0.0
    %57 = vmatpush1.msra.mxu0 0.0
    %58 = vmatprep.subr.mxu0 0.0
    %59 = vmatpush1.msra.mxu0 0.0
    %60 = vmatprep.subr.mxu0 0.0
    %61 = vmatpush1.msra.mxu0 0.0
    %62 = vmatprep.subr.mxu0 0.0
    %63 = vmatpush1.msra.mxu0 0.0
    %64 = vmatprep.subr.mxu0 0.0
    %65 = vmatpush1.msra.mxu0 0.0
    %66 = vmatprep.subr.mxu0 0.0
    %67 = vmatpush1.msra.mxu0 0.0
    %68 = vmatprep.subr.mxu0 0.0
    %69 = vmatpush1.msra.mxu0 0.0
    %70 = vmatprep.subr.mxu0 0.0
    %71 = vmatpush1.msra.mxu0 0.0
    %72 = vmatprep.subr.mxu0 0.0
    %73 = vmatpush1.msra.mxu0 0.0
    %74 = vmatprep.subr.mxu0 0.0
    %75 = vmatpush1.msra.mxu0 0.0
    %76 = vmatprep.subr.mxu0 0.0
    %77 = vmatpush1.msra.mxu0 0.0
    %78 = vmatprep.subr.mxu0 0.0
    %79 = vmatpush1.msra.mxu0 0.0
    %80 = vmatprep.subr.mxu0 0.0
    %81 = vmatpush1.msra.mxu0 0.0
    %82 = vmatprep.subr.mxu0 0.0
    %83 = vmatpush1.msra.mxu0 0.0
    %84 = vmatprep.subr.mxu0 0.0
    %85 = vmatpush1.msra.mxu0 0.0
    %86 = vmatprep.subr.mxu0 0.0
    %87 = vmatpush1.msra.mxu0 0.0
    %88 = vmatprep.subr.mxu0 0.0
    %89 = vmatpush1.msra.mxu0 0.0
    %90 = vmatprep.subr.mxu0 0.0
    %91 = vmatpush1.msra.mxu0 0.0
    %92 = vmatprep.subr.mxu0 0.0
    %93 = vmatpush1.msra.mxu0 0.0
    %94 = vmatprep.subr.mxu0 0.0
    %95 = vmatpush1.msra.mxu0 0.0
    %96 = vmatprep.subr.mxu0 0.0
    %97 = vmatpush1.msra.mxu0 0.0
    %98 = vmatprep.subr.mxu0 0.0
    %99 = vmatpush1.msra.mxu0 0.0
    %100 = vmatprep.subr.mxu0 0.0
    %101 = vmatpush1.msra.mxu0 0.0
    %102 = vmatprep.subr.mxu0 0.0
    %103 = vmatpush1.msra.mxu0 0.0
    %104 = vmatprep.subr.mxu0 0.0
    %105 = vmatpush1.msra.mxu0 0.0
    %106 = vmatprep.subr.mxu0 0.0
    %107 = vmatpush1.msra.mxu0 0.0
    %108 = vmatprep.subr.mxu0 0.0
    %109 = vmatpush1.msra.mxu0 0.0
    %110 = vmatprep.subr.mxu0 0.0
    %111 = vmatpush1.msra.mxu0 0.0
    %112 = vmatprep.subr.mxu0 0.0
    %113 = vmatpush1.msra.mxu0 0.0
    %114 = vmatprep.mubr.f32.mxu0 0.0
    %v115 = vand.u32 %v47, 4294901760
    %v116 = vsub.f32 %v47, %v115
    %v117 = vand.u32 %v116, 4294901760
    %v118 = vsub.f32 %v116, %v117
    %v119 = vand.u32 %v118, 4294901760
    %120 = vmatmul.mubr.f32.gmra.mrb[0].mxu0 %v119
    %v121 = vpop.f32.mrb[0].mxu0
    %v122 = vadd.f32 0.0, %v121
    %v123 = vpop.f32.mrb[0].mxu0
    %124 = vdwg.mxu0
    %125 = vmatprep.subr.mxu0 0.0
    %v126 = vand.u32 %v42, 4294901760
    %v127 = vsub.f32 %v42, %v126
    %v128 = vand.u32 %v127, 4294901760
    %v129 = vsub.f32 %v127, %v128
    %v130 = vand.u32 %v129, 4294901760
    %131 = vmatpush1.msra.mxu0 %v130
    %132 = vmatprep.subr.mxu0 0.0
    %133 = vmatpush1.msra.mxu0 0.0
    %134 = vmatprep.subr.mxu0 0.0
    %135 = vmatpush1.msra.mxu0 0.0
    %136 = vmatprep.subr.mxu0 0.0
    %137 = vmatpush1.msra.mxu0 0.0
    %138 = vmatprep.subr.mxu0 0.0
    %139 = vmatpush1.msra.mxu0 0.0
    %140 = vmatprep.subr.mxu0 0.0
    %141 = vmatpush1.msra.mxu0 0.0
    %142 = vmatprep.subr.mxu0 0.0
    %143 = vmatpush1.msra.mxu0 0.0
    %144 = vmatprep.subr.mxu0 0.0
    %145 = vmatpush1.msra.mxu0 0.0
    %146 = vmatprep.subr.mxu0 0.0
    %147 = vmatpush1.msra.mxu0 0.0
    %148 = vmatprep.subr.mxu0 0.0
    %149 = vmatpush1.msra.mxu0 0.0
    %150 = vmatprep.subr.mxu0 0.0
    %151 = vmatpush1.msra.mxu0 0.0
    %152 = vmatprep.subr.mxu0 0.0
    %153 = vmatpush1.msra.mxu0 0.0
    %154 = vmatprep.subr.mxu0 0.0
    %155 = vmatpush1.msra.mxu0 0.0
    %156 = vmatprep.subr.mxu0 0.0
    %157 = vmatpush1.msra.mxu0 0.0
    %158 = vmatprep.subr.mxu0 0.0
    %159 = vmatpush1.msra.mxu0 0.0
    %160 = vmatprep.subr.mxu0 0.0
    %161 = vmatpush1.msra.mxu0 0.0
    %162 = vmatprep.subr.mxu0 0.0
    %163 = vmatpush1.msra.mxu0 0.0
    %164 = vmatprep.subr.mxu0 0.0
    %165 = vmatpush1.msra.mxu0 0.0
    %166 = vmatprep.subr.mxu0 0.0
    %167 = vmatpush1.msra.mxu0 0.0
    %168 = vmatprep.subr.mxu0 0.0
    %169 = vmatpush1.msra.mxu0 0.0
    %170 = vmatprep.subr.mxu0 0.0
    %171 = vmatpush1.msra.mxu0 0.0
    %172 = vmatprep.subr.mxu0 0.0
    %173 = vmatpush1.msra.mxu0 0.0
    %174 = vmatprep.subr.mxu0 0.0
    %175 = vmatpush1.msra.mxu0 0.0
    %176 = vmatprep.subr.mxu0 0.0
    %177 = vmatpush1.msra.mxu0 0.0
    %178 = vmatprep.subr.mxu0 0.0
    %179 = vmatpush1.msra.mxu0 0.0
    %180 = vmatprep.subr.mxu0 0.0
    %181 = vmatpush1.msra.mxu0 0.0
    %182 = vmatprep.subr.mxu0 0.0
    %183 = vmatpush1.msra.mxu0 0.0
    %184 = vmatprep.subr.mxu0 0.0
    %185 = vmatpush1.msra.mxu0 0.0
    %186 = vmatprep.subr.mxu0 0.0
    %187 = vmatpush1.msra.mxu0 0.0
    %188 = vmatprep.subr.mxu0 0.0
    %189 = vmatpush1.msra.mxu0 0.0
    %190 = vmatprep.subr.mxu0 0.0
    %191 = vmatpush1.msra.mxu0 0.0
    %192 = vmatprep.subr.mxu0 0.0
    %193 = vmatpush1.msra.mxu0 0.0
    %194 = vmatprep.mubr.f32.mxu0 0.0
    %v195 = vand.u32 %v47, 4294901760
    %196 = vmatmul.mubr.f32.gmra.mrb[0].mxu0 %v195
    %v197 = vpop.f32.mrb[0].mxu0
    %v198 = vadd.f32 %v122, %v197
    %v199 = vpop.f32.mrb[0].mxu0
    %200 = vdwg.mxu0
    %201 = vmatprep.subr.mxu0 0.0
    %v202 = vand.u32 %v42, 4294901760
    %v203 = vsub.f32 %v42, %v202
    %204 = vmatpush1.msra.mxu0 %v203
    %205 = vmatprep.subr.mxu0 0.0
    %206 = vmatpush1.msra.mxu0 0.0
    %207 = vmatprep.subr.mxu0 0.0
    %208 = vmatpush1.msra.mxu0 0.0
    %209 = vmatprep.subr.mxu0 0.0
    %210 = vmatpush1.msra.mxu0 0.0
    %211 = vmatprep.subr.mxu0 0.0
    %212 = vmatpush1.msra.mxu0 0.0
    %213 = vmatprep.subr.mxu0 0.0
    %214 = vmatpush1.msra.mxu0 0.0
    %215 = vmatprep.subr.mxu0 0.0
    %216 = vmatpush1.msra.mxu0 0.0
    %217 = vmatprep.subr.mxu0 0.0
    %218 = vmatpush1.msra.mxu0 0.0
    %219 = vmatprep.subr.mxu0 0.0
    %220 = vmatpush1.msra.mxu0 0.0
    %221 = vmatprep.subr.mxu0 0.0
    %222 = vmatpush1.msra.mxu0 0.0
    %223 = vmatprep.subr.mxu0 0.0
    %224 = vmatpush1.msra.mxu0 0.0
    %225 = vmatprep.subr.mxu0 0.0
    %226 = vmatpush1.msra.mxu0 0.0
    %227 = vmatprep.subr.mxu0 0.0
    %228 = vmatpush1.msra.mxu0 0.0
    %229 = vmatprep.subr.mxu0 0.0
    %230 = vmatpush1.msra.mxu0 0.0
    %231 = vmatprep.subr.mxu0 0.0
    %232 = vmatpush1.msra.mxu0 0.0
    %233 = vmatprep.subr.mxu0 0.0
    %234 = vmatpush1.msra.mxu0 0.0
    %235 = vmatprep.subr.mxu0 0.0
    %236 = vmatpush1.msra.mxu0 0.0
    %237 = vmatprep.subr.mxu0 0.0
    %238 = vmatpush1.msra.mxu0 0.0
    %239 = vmatprep.subr.mxu0 0.0
    %240 = vmatpush1.msra.mxu0 0.0
    %241 = vmatprep.subr.mxu0 0.0
    %242 = vmatpush1.msra.mxu0 0.0
    %243 = vmatprep.subr.mxu0 0.0
    %244 = vmatpush1.msra.mxu0 0.0
    %245 = vmatprep.subr.mxu0 0.0
    %246 = vmatpush1.msra.mxu0 0.0
    %247 = vmatprep.subr.mxu0 0.0
    %248 = vmatpush1.msra.mxu0 0.0
    %249 = vmatprep.subr.mxu0 0.0
    %250 = vmatpush1.msra.mxu0 0.0
    %251 = vmatprep.subr.mxu0 0.0
    %252 = vmatpush1.msra.mxu0 0.0
    %253 = vmatprep.subr.mxu0 0.0
    %254 = vmatpush1.msra.mxu0 0.0
    %255 = vmatprep.subr.mxu0 0.0
    %256 = vmatpush1.msra.mxu0 0.0
    %257 = vmatprep.subr.mxu0 0.0
    %258 = vmatpush1.msra.mxu0 0.0
    %259 = vmatprep.subr.mxu0 0.0
    %260 = vmatpush1.msra.mxu0 0.0
    %261 = vmatprep.subr.mxu0 0.0
    %262 = vmatpush1.msra.mxu0 0.0
    %263 = vmatprep.subr.mxu0 0.0
    %264 = vmatpush1.msra.mxu0 0.0
    %265 = vmatprep.subr.mxu0 0.0
    %266 = vmatpush1.msra.mxu0 0.0
    %267 = vmatprep.mubr.f32.mxu0 0.0
    %v268 = vand.u32 %v47, 4294901760
    %v269 = vsub.f32 %v47, %v268
    %270 = vmatmul.mubr.f32.gmra.mrb[0].mxu0 %v269
    %v271 = vpop.f32.mrb[0].mxu0
    %v272 = vadd.f32 %v198, %v271
    %v273 = vpop.f32.mrb[0].mxu0
    %274 = vdwg.mxu0
    %275 = vmatprep.subr.mxu0 0.0
    %v276 = vand.u32 %v42, 4294901760
    %277 = vmatpush1.msra.mxu0 %v276
    %278 = vmatprep.subr.mxu0 0.0
    %279 = vmatpush1.msra.mxu0 0.0
    %280 = vmatprep.subr.mxu0 0.0
    %281 = vmatpush1.msra.mxu0 0.0
    %282 = vmatprep.subr.mxu0 0.0
    %283 = vmatpush1.msra.mxu0 0.0
    %284 = vmatprep.subr.mxu0 0.0
    %285 = vmatpush1.msra.mxu0 0.0
    %286 = vmatprep.subr.mxu0 0.0
    %287 = vmatpush1.msra.mxu0 0.0
    %288 = vmatprep.subr.mxu0 0.0
    %289 = vmatpush1.msra.mxu0 0.0
    %290 = vmatprep.subr.mxu0 0.0
    %291 = vmatpush1.msra.mxu0 0.0
    %292 = vmatprep.subr.mxu0 0.0
    %293 = vmatpush1.msra.mxu0 0.0
    %294 = vmatprep.subr.mxu0 0.0
    %295 = vmatpush1.msra.mxu0 0.0
    %296 = vmatprep.subr.mxu0 0.0
    %297 = vmatpush1.msra.mxu0 0.0
    %298 = vmatprep.subr.mxu0 0.0
    %299 = vmatpush1.msra.mxu0 0.0
    %300 = vmatprep.subr.mxu0 0.0
    %301 = vmatpush1.msra.mxu0 0.0
    %302 = vmatprep.subr.mxu0 0.0
    %303 = vmatpush1.msra.mxu0 0.0
    %304 = vmatprep.subr.mxu0 0.0
    %305 = vmatpush1.msra.mxu0 0.0
    %306 = vmatprep.subr.mxu0 0.0
    %307 = vmatpush1.msra.mxu0 0.0
    %308 = vmatprep.subr.mxu0 0.0
    %309 = vmatpush1.msra.mxu0 0.0
    %310 = vmatprep.subr.mxu0 0.0
    %311 = vmatpush1.msra.mxu0 0.0
    %312 = vmatprep.subr.mxu0 0.0
    %313 = vmatpush1.msra.mxu0 0.0
    %314 = vmatprep.subr.mxu0 0.0
    %315 = vmatpush1.msra.mxu0 0.0
    %316 = vmatprep.subr.mxu0 0.0
    %317 = vmatpush1.msra.mxu0 0.0
    %318 = vmatprep.subr.mxu0 0.0
    %319 = vmatpush1.msra.mxu0 0.0
    %320 = vmatprep.subr.mxu0 0.0
    %321 = vmatpush1.msra.mxu0 0.0
    %322 = vmatprep.subr.mxu0 0.0
    %323 = vmatpush1.msra.mxu0 0.0
    %324 = vmatprep.subr.mxu0 0.0
    %325 = vmatpush1.msra.mxu0 0.0
    %326 = vmatprep.subr.mxu0 0.0
    %327 = vmatpush1.msra.mxu0 0.0
    %328 = vmatprep.subr.mxu0 0.0
    %329 = vmatpush1.msra.mxu0 0.0
    %330 = vmatprep.subr.mxu0 0.0
    %331 = vmatpush1.msra.mxu0 0.0
    %332 = vmatprep.subr.mxu0 0.0
    %333 = vmatpush1.msra.mxu0 0.0
    %334 = vmatprep.subr.mxu0 0.0
    %335 = vmatpush1.msra.mxu0 0.0
    %336 = vmatprep.subr.mxu0 0.0
    %337 = vmatpush1.msra.mxu0 0.0
    %338 = vmatprep.subr.mxu0 0.0
    %339 = vmatpush1.msra.mxu0 0.0
    %340 = vmatprep.mubr.f32.mxu0 0.0
    %v341 = vand.u32 %v47, 4294901760
    %v342 = vsub.f32 %v47, %v341
    %v343 = vand.u32 %v342, 4294901760
    %344 = vmatmul.mubr.f32.gmra.mrb[0].mxu0 %v343
    %v345 = vpop.f32.mrb[0].mxu0
    %v346 = vadd.f32 %v272, %v345
    %v347 = vpop.f32.mrb[0].mxu0
    %348 = vdwg.mxu0
    %349 = vmatprep.subr.mxu0 0.0
    %v350 = vand.u32 %v42, 4294901760
    %v351 = vsub.f32 %v42, %v350
    %v352 = vand.u32 %v351, 4294901760
    %353 = vmatpush1.msra.mxu0 %v352
    %354 = vmatprep.subr.mxu0 0.0
    %355 = vmatpush1.msra.mxu0 0.0
    %356 = vmatprep.subr.mxu0 0.0
    %357 = vmatpush1.msra.mxu0 0.0
    %358 = vmatprep.subr.mxu0 0.0
    %359 = vmatpush1.msra.mxu0 0.0
    %360 = vmatprep.subr.mxu0 0.0
    %361 = vmatpush1.msra.mxu0 0.0
    %362 = vmatprep.subr.mxu0 0.0
    %363 = vmatpush1.msra.mxu0 0.0
    %364 = vmatprep.subr.mxu0 0.0
    %365 = vmatpush1.msra.mxu0 0.0
    %366 = vmatprep.subr.mxu0 0.0
    %367 = vmatpush1.msra.mxu0 0.0
    %368 = vmatprep.subr.mxu0 0.0
    %369 = vmatpush1.msra.mxu0 0.0
    %370 = vmatprep.subr.mxu0 0.0
    %371 = vmatpush1.msra.mxu0 0.0
    %372 = vmatprep.subr.mxu0 0.0
    %373 = vmatpush1.msra.mxu0 0.0
    %374 = vmatprep.subr.mxu0 0.0
    %375 = vmatpush1.msra.mxu0 0.0
    %376 = vmatprep.subr.mxu0 0.0
    %377 = vmatpush1.msra.mxu0 0.0
    %378 = vmatprep.subr.mxu0 0.0
    %379 = vmatpush1.msra.mxu0 0.0
    %380 = vmatprep.subr.mxu0 0.0
    %381 = vmatpush1.msra.mxu0 0.0
    %382 = vmatprep.subr.mxu0 0.0
    %383 = vmatpush1.msra.mxu0 0.0
    %384 = vmatprep.subr.mxu0 0.0
    %385 = vmatpush1.msra.mxu0 0.0
    %386 = vmatprep.subr.mxu0 0.0
    %387 = vmatpush1.msra.mxu0 0.0
    %388 = vmatprep.subr.mxu0 0.0
    %389 = vmatpush1.msra.mxu0 0.0
    %390 = vmatprep.subr.mxu0 0.0
    %391 = vmatpush1.msra.mxu0 0.0
    %392 = vmatprep.subr.mxu0 0.0
    %393 = vmatpush1.msra.mxu0 0.0
    %394 = vmatprep.subr.mxu0 0.0
    %395 = vmatpush1.msra.mxu0 0.0
    %396 = vmatprep.subr.mxu0 0.0
    %397 = vmatpush1.msra.mxu0 0.0
    %398 = vmatprep.subr.mxu0 0.0
    %399 = vmatpush1.msra.mxu0 0.0
    %400 = vmatprep.subr.mxu0 0.0
    %401 = vmatpush1.msra.mxu0 0.0
    %402 = vmatprep.subr.mxu0 0.0
    %403 = vmatpush1.msra.mxu0 0.0
    %404 = vmatprep.subr.mxu0 0.0
    %405 = vmatpush1.msra.mxu0 0.0
    %406 = vmatprep.subr.mxu0 0.0
    %407 = vmatpush1.msra.mxu0 0.0
    %408 = vmatprep.subr.mxu0 0.0
    %409 = vmatpush1.msra.mxu0 0.0
    %410 = vmatprep.subr.mxu0 0.0
    %411 = vmatpush1.msra.mxu0 0.0
    %412 = vmatprep.subr.mxu0 0.0
    %413 = vmatpush1.msra.mxu0 0.0
    %414 = vmatprep.subr.mxu0 0.0
    %415 = vmatpush1.msra.mxu0 0.0
    %416 = vmatprep.mubr.f32.mxu0 0.0
    %v417 = vand.u32 %v47, 4294901760
    %418 = vmatmul.mubr.f32.gmra.mrb[0].mxu0 %v417
    %v419 = vpop.f32.mrb[0].mxu0
    %v420 = vadd.f32 %v346, %v419
    %v421 = vpop.f32.mrb[0].mxu0
    %422 = vdwg.mxu0
    %423 = vmatprep.subr.mxu0 0.0
    %v424 = vand.u32 %v42, 4294901760
    %425 = vmatpush1.msra.mxu0 %v424
    %426 = vmatprep.subr.mxu0 0.0
    %427 = vmatpush1.msra.mxu0 0.0
    %428 = vmatprep.subr.mxu0 0.0
    %429 = vmatpush1.msra.mxu0 0.0
    %430 = vmatprep.subr.mxu0 0.0
    %431 = vmatpush1.msra.mxu0 0.0
    %432 = vmatprep.subr.mxu0 0.0
    %433 = vmatpush1.msra.mxu0 0.0
    %434 = vmatprep.subr.mxu0 0.0
    %435 = vmatpush1.msra.mxu0 0.0
    %436 = vmatprep.subr.mxu0 0.0
    %437 = vmatpush1.msra.mxu0 0.0
    %438 = vmatprep.subr.mxu0 0.0
    %439 = vmatpush1.msra.mxu0 0.0
    %440 = vmatprep.subr.mxu0 0.0
    %441 = vmatpush1.msra.mxu0 0.0
    %442 = vmatprep.subr.mxu0 0.0
    %443 = vmatpush1.msra.mxu0 0.0
    %444 = vmatprep.subr.mxu0 0.0
    %445 = vmatpush1.msra.mxu0 0.0
    %446 = vmatprep.subr.mxu0 0.0
    %447 = vmatpush1.msra.mxu0 0.0
    %448 = vmatprep.subr.mxu0 0.0
    %449 = vmatpush1.msra.mxu0 0.0
    %450 = vmatprep.subr.mxu0 0.0
    %451 = vmatpush1.msra.mxu0 0.0
    %452 = vmatprep.subr.mxu0 0.0
    %453 = vmatpush1.msra.mxu0 0.0
    %454 = vmatprep.subr.mxu0 0.0
    %455 = vmatpush1.msra.mxu0 0.0
    %456 = vmatprep.subr.mxu0 0.0
    %457 = vmatpush1.msra.mxu0 0.0
    %458 = vmatprep.subr.mxu0 0.0
    %459 = vmatpush1.msra.mxu0 0.0
    %460 = vmatprep.subr.mxu0 0.0
    %461 = vmatpush1.msra.mxu0 0.0
    %462 = vmatprep.subr.mxu0 0.0
    %463 = vmatpush1.msra.mxu0 0.0
    %464 = vmatprep.subr.mxu0 0.0
    %465 = vmatpush1.msra.mxu0 0.0
    %466 = vmatprep.subr.mxu0 0.0
    %467 = vmatpush1.msra.mxu0 0.0
    %468 = vmatprep.subr.mxu0 0.0
    %469 = vmatpush1.msra.mxu0 0.0
    %470 = vmatprep.subr.mxu0 0.0
    %471 = vmatpush1.msra.mxu0 0.0
    %472 = vmatprep.subr.mxu0 0.0
    %473 = vmatpush1.msra.mxu0 0.0
    %474 = vmatprep.subr.mxu0 0.0
    %475 = vmatpush1.msra.mxu0 0.0
    %476 = vmatprep.subr.mxu0 0.0
    %477 = vmatpush1.msra.mxu0 0.0
    %478 = vmatprep.subr.mxu0 0.0
    %479 = vmatpush1.msra.mxu0 0.0
    %480 = vmatprep.subr.mxu0 0.0
    %481 = vmatpush1.msra.mxu0 0.0
    %482 = vmatprep.subr.mxu0 0.0
    %483 = vmatpush1.msra.mxu0 0.0
    %484 = vmatprep.subr.mxu0 0.0
    %485 = vmatpush1.msra.mxu0 0.0
    %486 = vmatprep.subr.mxu0 0.0
    %487 = vmatpush1.msra.mxu0 0.0
    %488 = vmatprep.mubr.f32.mxu0 0.0
    %v489 = vand.u32 %v47, 4294901760
    %490 = vmatmul.mubr.f32.gmra.mrb[0].mxu0 %v489
    %v491 = vpop.f32.mrb[0].mxu0
    %v492 = vadd.f32 %v420, %v491
    %v493 = vpop.f32.mrb[0].mxu0
    %494 = vdwg.mxu0
    %v496 = vsel %vm45, %v34, 0
    %498 = vmatprep.subr.mxu0 0.0
    %v499 = vand.u32 %v32, 4294901760
    %500 = vmatpush1.msra.mxu0 %v499
    %501 = vmatprep.subr.mxu0 0.0
    %502 = vmatpush1.msra.mxu0 0.0
    %503 = vmatprep.subr.mxu0 0.0
    %504 = vmatpush1.msra.mxu0 0.0
    %505 = vmatprep.subr.mxu0 0.0
    %506 = vmatpush1.msra.mxu0 0.0
    %507 = vmatprep.subr.mxu0 0.0
    %508 = vmatpush1.msra.mxu0 0.0
    %509 = vmatprep.subr.mxu0 0.0
    %510 = vmatpush1.msra.mxu0 0.0
    %511 = vmatprep.subr.mxu0 0.0
    %512 = vmatpush1.msra.mxu0 0.0
    %513 = vmatprep.subr.mxu0 0.0
    %514 = vmatpush1.msra.mxu0 0.0
    %515 = vmatprep.subr.mxu0 0.0
    %516 = vmatpush1.msra.mxu0 0.0
    %517 = vmatprep.subr.mxu0 0.0
    %518 = vmatpush1.msra.mxu0 0.0
    %519 = vmatprep.subr.mxu0 0.0
    %520 = vmatpush1.msra.mxu0 0.0
    %521 = vmatprep.subr.mxu0 0.0
    %522 = vmatpush1.msra.mxu0 0.0
    %523 = vmatprep.subr.mxu0 0.0
    %524 = vmatpush1.msra.mxu0 0.0
    %525 = vmatprep.subr.mxu0 0.0
    %526 = vmatpush1.msra.mxu0 0.0
    %527 = vmatprep.subr.mxu0 0.0
    %528 = vmatpush1.msra.mxu0 0.0
    %529 = vmatprep.subr.mxu0 0.0
    %530 = vmatpush1.msra.mxu0 0.0
    %531 = vmatprep.subr.mxu0 0.0
    %532 = vmatpush1.msra.mxu0 0.0
    %533 = vmatprep.subr.mxu0 0.0
    %534 = vmatpush1.msra.mxu0 0.0
    %535 = vmatprep.subr.mxu0 0.0
    %536 = vmatpush1.msra.mxu0 0.0
    %537 = vmatprep.subr.mxu0 0.0
    %538 = vmatpush1.msra.mxu0 0.0
    %539 = vmatprep.subr.mxu0 0.0
    %540 = vmatpush1.msra.mxu0 0.0
    %541 = vmatprep.subr.mxu0 0.0
    %542 = vmatpush1.msra.mxu0 0.0
    %543 = vmatprep.subr.mxu0 0.0
    %544 = vmatpush1.msra.mxu0 0.0
    %545 = vmatprep.subr.mxu0 0.0
    %546 = vmatpush1.msra.mxu0 0.0
    %547 = vmatprep.subr.mxu0 0.0
    %548 = vmatpush1.msra.mxu0 0.0
    %549 = vmatprep.subr.mxu0 0.0
    %550 = vmatpush1.msra.mxu0 0.0
    %551 = vmatprep.subr.mxu0 0.0
    %552 = vmatpush1.msra.mxu0 0.0
    %553 = vmatprep.subr.mxu0 0.0
    %554 = vmatpush1.msra.mxu0 0.0
    %555 = vmatprep.subr.mxu0 0.0
    %556 = vmatpush1.msra.mxu0 0.0
    %557 = vmatprep.subr.mxu0 0.0
    %558 = vmatpush1.msra.mxu0 0.0
    %559 = vmatprep.subr.mxu0 0.0
    %560 = vmatpush1.msra.mxu0 0.0
    %561 = vmatprep.subr.mxu0 0.0
    %562 = vmatpush1.msra.mxu0 0.0
    %563 = vmatprep.mubr.f32.mxu0 0.0
    %v564 = vand.u32 %v496, 4294901760
    %v565 = vsub.f32 %v496, %v564
    %v566 = vand.u32 %v565, 4294901760
    %v567 = vsub.f32 %v565, %v566
    %v568 = vand.u32 %v567, 4294901760
    %569 = vmatmul.mubr.f32.gmra.mrb[0].mxu0 %v568
    %v570 = vpop.f32.mrb[0].mxu0
    %v571 = vadd.f32 %v492, %v570
    %v572 = vpop.f32.mrb[0].mxu0
    %573 = vdwg.mxu0
    %574 = vmatprep.subr.mxu0 0.0
    %v575 = vand.u32 %v32, 4294901760
    %v576 = vsub.f32 %v32, %v575
    %v577 = vand.u32 %v576, 4294901760
    %v578 = vsub.f32 %v576, %v577
    %v579 = vand.u32 %v578, 4294901760
    %580 = vmatpush1.msra.mxu0 %v579
    %581 = vmatprep.subr.mxu0 0.0
    %582 = vmatpush1.msra.mxu0 0.0
    %583 = vmatprep.subr.mxu0 0.0
    %584 = vmatpush1.msra.mxu0 0.0
    %585 = vmatprep.subr.mxu0 0.0
    %586 = vmatpush1.msra.mxu0 0.0
    %587 = vmatprep.subr.mxu0 0.0
    %588 = vmatpush1.msra.mxu0 0.0
    %589 = vmatprep.subr.mxu0 0.0
    %590 = vmatpush1.msra.mxu0 0.0
    %591 = vmatprep.subr.mxu0 0.0
    %592 = vmatpush1.msra.mxu0 0.0
    %593 = vmatprep.subr.mxu0 0.0
    %594 = vmatpush1.msra.mxu0 0.0
    %595 = vmatprep.subr.mxu0 0.0
    %596 = vmatpush1.msra.mxu0 0.0
    %597 = vmatprep.subr.mxu0 0.0
    %598 = vmatpush1.msra.mxu0 0.0
    %599 = vmatprep.subr.mxu0 0.0
    %600 = vmatpush1.msra.mxu0 0.0
    %601 = vmatprep.subr.mxu0 0.0
    %602 = vmatpush1.msra.mxu0 0.0
    %603 = vmatprep.subr.mxu0 0.0
    %604 = vmatpush1.msra.mxu0 0.0
    %605 = vmatprep.subr.mxu0 0.0
    %606 = vmatpush1.msra.mxu0 0.0
    %607 = vmatprep.subr.mxu0 0.0
    %608 = vmatpush1.msra.mxu0 0.0
    %609 = vmatprep.subr.mxu0 0.0
    %610 = vmatpush1.msra.mxu0 0.0
    %611 = vmatprep.subr.mxu0 0.0
    %612 = vmatpush1.msra.mxu0 0.0
    %613 = vmatprep.subr.mxu0 0.0
    %614 = vmatpush1.msra.mxu0 0.0
    %615 = vmatprep.subr.mxu0 0.0
    %616 = vmatpush1.msra.mxu0 0.0
    %617 = vmatprep.subr.mxu0 0.0
    %618 = vmatpush1.msra.mxu0 0.0
    %619 = vmatprep.subr.mxu0 0.0
    %620 = vmatpush1.msra.mxu0 0.0
    %621 = vmatprep.subr.mxu0 0.0
    %622 = vmatpush1.msra.mxu0 0.0
    %623 = vmatprep.subr.mxu0 0.0
    %624 = vmatpush1.msra.mxu0 0.0
    %625 = vmatprep.subr.mxu0 0.0
    %626 = vmatpush1.msra.mxu0 0.0
    %627 = vmatprep.subr.mxu0 0.0
    %628 = vmatpush1.msra.mxu0 0.0
    %629 = vmatprep.subr.mxu0 0.0
    %630 = vmatpush1.msra.mxu0 0.0
    %631 = vmatprep.subr.mxu0 0.0
    %632 = vmatpush1.msra.mxu0 0.0
    %633 = vmatprep.subr.mxu0 0.0
    %634 = vmatpush1.msra.mxu0 0.0
    %635 = vmatprep.subr.mxu0 0.0
    %636 = vmatpush1.msra.mxu0 0.0
    %637 = vmatprep.subr.mxu0 0.0
    %638 = vmatpush1.msra.mxu0 0.0
    %639 = vmatprep.subr.mxu0 0.0
    %640 = vmatpush1.msra.mxu0 0.0
    %641 = vmatprep.subr.mxu0 0.0
    %642 = vmatpush1.msra.mxu0 0.0
    %643 = vmatprep.mubr.f32.mxu0 0.0
    %v644 = vand.u32 %v496, 4294901760
    %645 = vmatmul.mubr.f32.gmra.mrb[0].mxu0 %v644
    %v646 = vpop.f32.mrb[0].mxu0
    %v647 = vadd.f32 %v571, %v646
    %v648 = vpop.f32.mrb[0].mxu0
    %649 = vdwg.mxu0
    %650 = vmatprep.subr.mxu0 0.0
    %v651 = vand.u32 %v32, 4294901760
    %v652 = vsub.f32 %v32, %v651
    %653 = vmatpush1.msra.mxu0 %v652
    %654 = vmatprep.subr.mxu0 0.0
    %655 = vmatpush1.msra.mxu0 0.0
    %656 = vmatprep.subr.mxu0 0.0
    %657 = vmatpush1.msra.mxu0 0.0
    %658 = vmatprep.subr.mxu0 0.0
    %659 = vmatpush1.msra.mxu0 0.0
    %660 = vmatprep.subr.mxu0 0.0
    %661 = vmatpush1.msra.mxu0 0.0
    %662 = vmatprep.subr.mxu0 0.0
    %663 = vmatpush1.msra.mxu0 0.0
    %664 = vmatprep.subr.mxu0 0.0
    %665 = vmatpush1.msra.mxu0 0.0
    %666 = vmatprep.subr.mxu0 0.0
    %667 = vmatpush1.msra.mxu0 0.0
    %668 = vmatprep.subr.mxu0 0.0
    %669 = vmatpush1.msra.mxu0 0.0
    %670 = vmatprep.subr.mxu0 0.0
    %671 = vmatpush1.msra.mxu0 0.0
    %672 = vmatprep.subr.mxu0 0.0
    %673 = vmatpush1.msra.mxu0 0.0
    %674 = vmatprep.subr.mxu0 0.0
    %675 = vmatpush1.msra.mxu0 0.0
    %676 = vmatprep.subr.mxu0 0.0
    %677 = vmatpush1.msra.mxu0 0.0
    %678 = vmatprep.subr.mxu0 0.0
    %679 = vmatpush1.msra.mxu0 0.0
    %680 = vmatprep.subr.mxu0 0.0
    %681 = vmatpush1.msra.mxu0 0.0
    %682 = vmatprep.subr.mxu0 0.0
    %683 = vmatpush1.msra.mxu0 0.0
    %684 = vmatprep.subr.mxu0 0.0
    %685 = vmatpush1.msra.mxu0 0.0
    %686 = vmatprep.subr.mxu0 0.0
    %687 = vmatpush1.msra.mxu0 0.0
    %688 = vmatprep.subr.mxu0 0.0
    %689 = vmatpush1.msra.mxu0 0.0
    %690 = vmatprep.subr.mxu0 0.0
    %691 = vmatpush1.msra.mxu0 0.0
    %692 = vmatprep.subr.mxu0 0.0
    %693 = vmatpush1.msra.mxu0 0.0
    %694 = vmatprep.subr.mxu0 0.0
    %695 = vmatpush1.msra.mxu0 0.0
    %696 = vmatprep.subr.mxu0 0.0
    %697 = vmatpush1.msra.mxu0 0.0
    %698 = vmatprep.subr.mxu0 0.0
    %699 = vmatpush1.msra.mxu0 0.0
    %700 = vmatprep.subr.mxu0 0.0
    %701 = vmatpush1.msra.mxu0 0.0
    %702 = vmatprep.subr.mxu0 0.0
    %703 = vmatpush1.msra.mxu0 0.0
    %704 = vmatprep.subr.mxu0 0.0
    %705 = vmatpush1.msra.mxu0 0.0
    %706 = vmatprep.subr.mxu0 0.0
    %707 = vmatpush1.msra.mxu0 0.0
    %708 = vmatprep.subr.mxu0 0.0
    %709 = vmatpush1.msra.mxu0 0.0
    %710 = vmatprep.subr.mxu0 0.0
    %711 = vmatpush1.msra.mxu0 0.0
    %712 = vmatprep.subr.mxu0 0.0
    %713 = vmatpush1.msra.mxu0 0.0
    %714 = vmatprep.subr.mxu0 0.0
    %715 = vmatpush1.msra.mxu0 0.0
    %716 = vmatprep.mubr.f32.mxu0 0.0
    %v717 = vand.u32 %v496, 4294901760
    %v718 = vsub.f32 %v496, %v717
    %719 = vmatmul.mubr.f32.gmra.mrb[0].mxu0 %v718
    %v720 = vpop.f32.mrb[0].mxu0
    %v721 = vadd.f32 %v647, %v720
    %v722 = vpop.f32.mrb[0].mxu0
    %723 = vdwg.mxu0
    %724 = vmatprep.subr.mxu0 0.0
    %v725 = vand.u32 %v32, 4294901760
    %726 = vmatpush1.msra.mxu0 %v725
    %727 = vmatprep.subr.mxu0 0.0
    %728 = vmatpush1.msra.mxu0 0.0
    %729 = vmatprep.subr.mxu0 0.0
    %730 = vmatpush1.msra.mxu0 0.0
    %731 = vmatprep.subr.mxu0 0.0
    %732 = vmatpush1.msra.mxu0 0.0
    %733 = vmatprep.subr.mxu0 0.0
    %734 = vmatpush1.msra.mxu0 0.0
    %735 = vmatprep.subr.mxu0 0.0
    %736 = vmatpush1.msra.mxu0 0.0
    %737 = vmatprep.subr.mxu0 0.0
    %738 = vmatpush1.msra.mxu0 0.0
    %739 = vmatprep.subr.mxu0 0.0
    %740 = vmatpush1.msra.mxu0 0.0
    %741 = vmatprep.subr.mxu0 0.0
    %742 = vmatpush1.msra.mxu0 0.0
    %743 = vmatprep.subr.mxu0 0.0
    %744 = vmatpush1.msra.mxu0 0.0
    %745 = vmatprep.subr.mxu0 0.0
    %746 = vmatpush1.msra.mxu0 0.0
    %747 = vmatprep.subr.mxu0 0.0
    %748 = vmatpush1.msra.mxu0 0.0
    %749 = vmatprep.subr.mxu0 0.0
    %750 = vmatpush1.msra.mxu0 0.0
    %751 = vmatprep.subr.mxu0 0.0
    %752 = vmatpush1.msra.mxu0 0.0
    %753 = vmatprep.subr.mxu0 0.0
    %754 = vmatpush1.msra.mxu0 0.0
    %755 = vmatprep.subr.mxu0 0.0
    %756 = vmatpush1.msra.mxu0 0.0
    %757 = vmatprep.subr.mxu0 0.0
    %758 = vmatpush1.msra.mxu0 0.0
    %759 = vmatprep.subr.mxu0 0.0
    %760 = vmatpush1.msra.mxu0 0.0
    %761 = vmatprep.subr.mxu0 0.0
    %762 = vmatpush1.msra.mxu0 0.0
    %763 = vmatprep.subr.mxu0 0.0
    %764 = vmatpush1.msra.mxu0 0.0
    %765 = vmatprep.subr.mxu0 0.0
    %766 = vmatpush1.msra.mxu0 0.0
    %767 = vmatprep.subr.mxu0 0.0
    %768 = vmatpush1.msra.mxu0 0.0
    %769 = vmatprep.subr.mxu0 0.0
    %770 = vmatpush1.msra.mxu0 0.0
    %771 = vmatprep.subr.mxu0 0.0
    %772 = vmatpush1.msra.mxu0 0.0
    %773 = vmatprep.subr.mxu0 0.0
    %774 = vmatpush1.msra.mxu0 0.0
    %775 = vmatprep.subr.mxu0 0.0
    %776 = vmatpush1.msra.mxu0 0.0
    %777 = vmatprep.subr.mxu0 0.0
    %778 = vmatpush1.msra.mxu0 0.0
    %779 = vmatprep.subr.mxu0 0.0
    %780 = vmatpush1.msra.mxu0 0.0
    %781 = vmatprep.subr.mxu0 0.0
    %782 = vmatpush1.msra.mxu0 0.0
    %783 = vmatprep.subr.mxu0 0.0
    %784 = vmatpush1.msra.mxu0 0.0
    %785 = vmatprep.subr.mxu0 0.0
    %786 = vmatpush1.msra.mxu0 0.0
    %787 = vmatprep.subr.mxu0 0.0
    %788 = vmatpush1.msra.mxu0 0.0
    %789 = vmatprep.mubr.f32.mxu0 0.0
    %v790 = vand.u32 %v496, 4294901760
    %v791 = vsub.f32 %v496, %v790
    %v792 = vand.u32 %v791, 4294901760
    %793 = vmatmul.mubr.f32.gmra.mrb[0].mxu0 %v792
    %v794 = vpop.f32.mrb[0].mxu0
    %v795 = vadd.f32 %v721, %v794
    %v796 = vpop.f32.mrb[0].mxu0
    %797 = vdwg.mxu0
    %798 = vmatprep.subr.mxu0 0.0
    %v799 = vand.u32 %v32, 4294901760
    %v800 = vsub.f32 %v32, %v799
    %v801 = vand.u32 %v800, 4294901760
    %802 = vmatpush1.msra.mxu0 %v801
    %803 = vmatprep.subr.mxu0 0.0
    %804 = vmatpush1.msra.mxu0 0.0
    %805 = vmatprep.subr.mxu0 0.0
    %806 = vmatpush1.msra.mxu0 0.0
    %807 = vmatprep.subr.mxu0 0.0
    %808 = vmatpush1.msra.mxu0 0.0
    %809 = vmatprep.subr.mxu0 0.0
    %810 = vmatpush1.msra.mxu0 0.0
    %811 = vmatprep.subr.mxu0 0.0
    %812 = vmatpush1.msra.mxu0 0.0
    %813 = vmatprep.subr.mxu0 0.0
    %814 = vmatpush1.msra.mxu0 0.0
    %815 = vmatprep.subr.mxu0 0.0
    %816 = vmatpush1.msra.mxu0 0.0
    %817 = vmatprep.subr.mxu0 0.0
    %818 = vmatpush1.msra.mxu0 0.0
    %819 = vmatprep.subr.mxu0 0.0
    %820 = vmatpush1.msra.mxu0 0.0
    %821 = vmatprep.subr.mxu0 0.0
    %822 = vmatpush1.msra.mxu0 0.0
    %823 = vmatprep.subr.mxu0 0.0
    %824 = vmatpush1.msra.mxu0 0.0
    %825 = vmatprep.subr.mxu0 0.0
    %826 = vmatpush1.msra.mxu0 0.0
    %827 = vmatprep.subr.mxu0 0.0
    %828 = vmatpush1.msra.mxu0 0.0
    %829 = vmatprep.subr.mxu0 0.0
    %830 = vmatpush1.msra.mxu0 0.0
    %831 = vmatprep.subr.mxu0 0.0
    %832 = vmatpush1.msra.mxu0 0.0
    %833 = vmatprep.subr.mxu0 0.0
    %834 = vmatpush1.msra.mxu0 0.0
    %835 = vmatprep.subr.mxu0 0.0
    %836 = vmatpush1.msra.mxu0 0.0
    %837 = vmatprep.subr.mxu0 0.0
    %838 = vmatpush1.msra.mxu0 0.0
    %839 = vmatprep.subr.mxu0 0.0
    %840 = vmatpush1.msra.mxu0 0.0
    %841 = vmatprep.subr.mxu0 0.0
    %842 = vmatpush1.msra.mxu0 0.0
    %843 = vmatprep.subr.mxu0 0.0
    %844 = vmatpush1.msra.mxu0 0.0
    %845 = vmatprep.subr.mxu0 0.0
    %846 = vmatpush1.msra.mxu0 0.0
    %847 = vmatprep.subr.mxu0 0.0
    %848 = vmatpush1.msra.mxu0 0.0
    %849 = vmatprep.subr.mxu0 0.0
    %850 = vmatpush1.msra.mxu0 0.0
    %851 = vmatprep.subr.mxu0 0.0
    %852 = vmatpush1.msra.mxu0 0.0
    %853 = vmatprep.subr.mxu0 0.0
    %854 = vmatpush1.msra.mxu0 0.0
    %855 = vmatprep.subr.mxu0 0.0
    %856 = vmatpush1.msra.mxu0 0.0
    %857 = vmatprep.subr.mxu0 0.0
    %858 = vmatpush1.msra.mxu0 0.0
    %859 = vmatprep.subr.mxu0 0.0
    %860 = vmatpush1.msra.mxu0 0.0
    %861 = vmatprep.subr.mxu0 0.0
    %862 = vmatpush1.msra.mxu0 0.0
    %863 = vmatprep.subr.mxu0 0.0
    %864 = vmatpush1.msra.mxu0 0.0
    %865 = vmatprep.mubr.f32.mxu0 0.0
    %v866 = vand.u32 %v496, 4294901760
    %867 = vmatmul.mubr.f32.gmra.mrb[0].mxu0 %v866
    %v868 = vpop.f32.mrb[0].mxu0
    %v869 = vadd.f32 %v795, %v868
    %v870 = vpop.f32.mrb[0].mxu0
    %871 = vdwg.mxu0
    %872 = vmatprep.subr.mxu0 0.0
    %v873 = vand.u32 %v32, 4294901760
    %874 = vmatpush1.msra.mxu0 %v873
    %875 = vmatprep.subr.mxu0 0.0
    %876 = vmatpush1.msra.mxu0 0.0
    %877 = vmatprep.subr.mxu0 0.0
    %878 = vmatpush1.msra.mxu0 0.0
    %879 = vmatprep.subr.mxu0 0.0
    %880 = vmatpush1.msra.mxu0 0.0
    %881 = vmatprep.subr.mxu0 0.0
    %882 = vmatpush1.msra.mxu0 0.0
    %883 = vmatprep.subr.mxu0 0.0
    %884 = vmatpush1.msra.mxu0 0.0
    %885 = vmatprep.subr.mxu0 0.0
    %886 = vmatpush1.msra.mxu0 0.0
    %887 = vmatprep.subr.mxu0 0.0
    %888 = vmatpush1.msra.mxu0 0.0
    %889 = vmatprep.subr.mxu0 0.0
    %890 = vmatpush1.msra.mxu0 0.0
    %891 = vmatprep.subr.mxu0 0.0
    %892 = vmatpush1.msra.mxu0 0.0
    %893 = vmatprep.subr.mxu0 0.0
    %894 = vmatpush1.msra.mxu0 0.0
    %895 = vmatprep.subr.mxu0 0.0
    %896 = vmatpush1.msra.mxu0 0.0
    %897 = vmatprep.subr.mxu0 0.0
    %898 = vmatpush1.msra.mxu0 0.0
    %899 = vmatprep.subr.mxu0 0.0
    %900 = vmatpush1.msra.mxu0 0.0
    %901 = vmatprep.subr.mxu0 0.0
    %902 = vmatpush1.msra.mxu0 0.0
    %903 = vmatprep.subr.mxu0 0.0
    %904 = vmatpush1.msra.mxu0 0.0
    %905 = vmatprep.subr.mxu0 0.0
    %906 = vmatpush1.msra.mxu0 0.0
    %907 = vmatprep.subr.mxu0 0.0
    %908 = vmatpush1.msra.mxu0 0.0
    %909 = vmatprep.subr.mxu0 0.0
    %910 = vmatpush1.msra.mxu0 0.0
    %911 = vmatprep.subr.mxu0 0.0
    %912 = vmatpush1.msra.mxu0 0.0
    %913 = vmatprep.subr.mxu0 0.0
    %914 = vmatpush1.msra.mxu0 0.0
    %915 = vmatprep.subr.mxu0 0.0
    %916 = vmatpush1.msra.mxu0 0.0
    %917 = vmatprep.subr.mxu0 0.0
    %918 = vmatpush1.msra.mxu0 0.0
    %919 = vmatprep.subr.mxu0 0.0
    %920 = vmatpush1.msra.mxu0 0.0
    %921 = vmatprep.subr.mxu0 0.0
    %922 = vmatpush1.msra.mxu0 0.0
    %923 = vmatprep.subr.mxu0 0.0
    %924 = vmatpush1.msra.mxu0 0.0
    %925 = vmatprep.subr.mxu0 0.0
    %926 = vmatpush1.msra.mxu0 0.0
    %927 = vmatprep.subr.mxu0 0.0
    %928 = vmatpush1.msra.mxu0 0.0
    %929 = vmatprep.subr.mxu0 0.0
    %930 = vmatpush1.msra.mxu0 0.0
    %931 = vmatprep.subr.mxu0 0.0
    %932 = vmatpush1.msra.mxu0 0.0
    %933 = vmatprep.subr.mxu0 0.0
    %934 = vmatpush1.msra.mxu0 0.0
    %935 = vmatprep.subr.mxu0 0.0
    %936 = vmatpush1.msra.mxu0 0.0
    %937 = vmatprep.mubr.f32.mxu0 0.0
    %v938 = vand.u32 %v496, 4294901760
    %939 = vmatmul.mubr.f32.gmra.mrb[0].mxu0 %v938
    %v940 = vpop.f32.mrb[0].mxu0
    %v941 = vadd.f32 %v869, %v940
    %v942 = vpop.f32.mrb[0].mxu0
    %943 = vdwg.mxu0
    %944 = vrot.lane.b32.xlu0 %v32, 126
    %v945 = vpop.permute.xlu0 %944
    %946 = vrot.lane.b32.xlu0 %v33, 126
    %v947 = vpop.permute.xlu0 %946
    %vm948 = vcmp.lt.s32.totalorder %v40, 126
    %v949 = vsel %vm948, %v945, %v947
    %s950 = scalar_lea.vmem %s2, 16
    %v951 = vld [vmem:[%s950] sm:$0xff]
    %v953 = vsel %vm45, %v951, 0
    %955 = vmatprep.subr.mxu0 0.0
    %v956 = vand.u32 %v949, 4294901760
    %957 = vmatpush1.msra.mxu0 %v956
    %958 = vmatprep.subr.mxu0 0.0
    %959 = vmatpush1.msra.mxu0 0.0
    %960 = vmatprep.subr.mxu0 0.0
    %961 = vmatpush1.msra.mxu0 0.0
    %962 = vmatprep.subr.mxu0 0.0
    %963 = vmatpush1.msra.mxu0 0.0
    %964 = vmatprep.subr.mxu0 0.0
    %965 = vmatpush1.msra.mxu0 0.0
    %966 = vmatprep.subr.mxu0 0.0
    %967 = vmatpush1.msra.mxu0 0.0
    %968 = vmatprep.subr.mxu0 0.0
    %969 = vmatpush1.msra.mxu0 0.0
    %970 = vmatprep.subr.mxu0 0.0
    %971 = vmatpush1.msra.mxu0 0.0
    %972 = vmatprep.subr.mxu0 0.0
    %973 = vmatpush1.msra.mxu0 0.0
    %974 = vmatprep.subr.mxu0 0.0
    %975 = vmatpush1.msra.mxu0 0.0
    %976 = vmatprep.subr.mxu0 0.0
    %977 = vmatpush1.msra.mxu0 0.0
    %978 = vmatprep.subr.mxu0 0.0
    %979 = vmatpush1.msra.mxu0 0.0
    %980 = vmatprep.subr.mxu0 0.0
    %981 = vmatpush1.msra.mxu0 0.0
    %982 = vmatprep.subr.mxu0 0.0
    %983 = vmatpush1.msra.mxu0 0.0
    %984 = vmatprep.subr.mxu0 0.0
    %985 = vmatpush1.msra.mxu0 0.0
    %986 = vmatprep.subr.mxu0 0.0
    %987 = vmatpush1.msra.mxu0 0.0
    %988 = vmatprep.subr.mxu0 0.0
    %989 = vmatpush1.msra.mxu0 0.0
    %990 = vmatprep.subr.mxu0 0.0
    %991 = vmatpush1.msra.mxu0 0.0
    %992 = vmatprep.subr.mxu0 0.0
    %993 = vmatpush1.msra.mxu0 0.0
    %994 = vmatprep.subr.mxu0 0.0
    %995 = vmatpush1.msra.mxu0 0.0
    %996 = vmatprep.subr.mxu0 0.0
    %997 = vmatpush1.msra.mxu0 0.0
    %998 = vmatprep.subr.mxu0 0.0
    %999 = vmatpush1.msra.mxu0 0.0
    %1000 = vmatprep.subr.mxu0 0.0
    %1001 = vmatpush1.msra.mxu0 0.0
    %1002 = vmatprep.subr.mxu0 0.0
    %1003 = vmatpush1.msra.mxu0 0.0
    %1004 = vmatprep.subr.mxu0 0.0
    %1005 = vmatpush1.msra.mxu0 0.0
    %1006 = vmatprep.subr.mxu0 0.0
    %1007 = vmatpush1.msra.mxu0 0.0
    %1008 = vmatprep.subr.mxu0 0.0
    %1009 = vmatpush1.msra.mxu0 0.0
    %1010 = vmatprep.subr.mxu0 0.0
    %1011 = vmatpush1.msra.mxu0 0.0
    %1012 = vmatprep.subr.mxu0 0.0
    %1013 = vmatpush1.msra.mxu0 0.0
    %1014 = vmatprep.subr.mxu0 0.0
    %1015 = vmatpush1.msra.mxu0 0.0
    %1016 = vmatprep.subr.mxu0 0.0
    %1017 = vmatpush1.msra.mxu0 0.0
    %1018 = vmatprep.subr.mxu0 0.0
    %1019 = vmatpush1.msra.mxu0 0.0
    %1020 = vmatprep.mubr.f32.mxu0 0.0
    %v1021 = vand.u32 %v953, 4294901760
    %v1022 = vsub.f32 %v953, %v1021
    %v1023 = vand.u32 %v1022, 4294901760
    %v1024 = vsub.f32 %v1022, %v1023
    %v1025 = vand.u32 %v1024, 4294901760
    %1026 = vmatmul.mubr.f32.gmra.mrb[0].mxu0 %v1025
    %v1027 = vpop.f32.mrb[0].mxu0
    %v1028 = vadd.f32 0.0, %v1027
    %v1029 = vpop.f32.mrb[0].mxu0
    %1030 = vdwg.mxu0
    %1031 = vmatprep.subr.mxu0 0.0
    %v1032 = vand.u32 %v949, 4294901760
    %v1033 = vsub.f32 %v949, %v1032
    %v1034 = vand.u32 %v1033, 4294901760
    %v1035 = vsub.f32 %v1033, %v1034
    %v1036 = vand.u32 %v1035, 4294901760
    %1037 = vmatpush1.msra.mxu0 %v1036
    %1038 = vmatprep.subr.mxu0 0.0
    %1039 = vmatpush1.msra.mxu0 0.0
    %1040 = vmatprep.subr.mxu0 0.0
    %1041 = vmatpush1.msra.mxu0 0.0
    %1042 = vmatprep.subr.mxu0 0.0
    %1043 = vmatpush1.msra.mxu0 0.0
    %1044 = vmatprep.subr.mxu0 0.0
    %1045 = vmatpush1.msra.mxu0 0.0
    %1046 = vmatprep.subr.mxu0 0.0
    %1047 = vmatpush1.msra.mxu0 0.0
    %1048 = vmatprep.subr.mxu0 0.0
    %1049 = vmatpush1.msra.mxu0 0.0
    %1050 = vmatprep.subr.mxu0 0.0
    %1051 = vmatpush1.msra.mxu0 0.0
    %1052 = vmatprep.subr.mxu0 0.0
    %1053 = vmatpush1.msra.mxu0 0.0
    %1054 = vmatprep.subr.mxu0 0.0
    %1055 = vmatpush1.msra.mxu0 0.0
    %1056 = vmatprep.subr.mxu0 0.0
    %1057 = vmatpush1.msra.mxu0 0.0
    %1058 = vmatprep.subr.mxu0 0.0
    %1059 = vmatpush1.msra.mxu0 0.0
    %1060 = vmatprep.subr.mxu0 0.0
    %1061 = vmatpush1.msra.mxu0 0.0
    %1062 = vmatprep.subr.mxu0 0.0
    %1063 = vmatpush1.msra.mxu0 0.0
    %1064 = vmatprep.subr.mxu0 0.0
    %1065 = vmatpush1.msra.mxu0 0.0
    %1066 = vmatprep.subr.mxu0 0.0
    %1067 = vmatpush1.msra.mxu0 0.0
    %1068 = vmatprep.subr.mxu0 0.0
    %1069 = vmatpush1.msra.mxu0 0.0
    %1070 = vmatprep.subr.mxu0 0.0
    %1071 = vmatpush1.msra.mxu0 0.0
    %1072 = vmatprep.subr.mxu0 0.0
    %1073 = vmatpush1.msra.mxu0 0.0
    %1074 = vmatprep.subr.mxu0 0.0
    %1075 = vmatpush1.msra.mxu0 0.0
    %1076 = vmatprep.subr.mxu0 0.0
    %1077 = vmatpush1.msra.mxu0 0.0
    %1078 = vmatprep.subr.mxu0 0.0
    %1079 = vmatpush1.msra.mxu0 0.0
    %1080 = vmatprep.subr.mxu0 0.0
    %1081 = vmatpush1.msra.mxu0 0.0
    %1082 = vmatprep.subr.mxu0 0.0
    %1083 = vmatpush1.msra.mxu0 0.0
    %1084 = vmatprep.subr.mxu0 0.0
    %1085 = vmatpush1.msra.mxu0 0.0
    %1086 = vmatprep.subr.mxu0 0.0
    %1087 = vmatpush1.msra.mxu0 0.0
    %1088 = vmatprep.subr.mxu0 0.0
    %1089 = vmatpush1.msra.mxu0 0.0
    %1090 = vmatprep.subr.mxu0 0.0
    %1091 = vmatpush1.msra.mxu0 0.0
    %1092 = vmatprep.subr.mxu0 0.0
    %1093 = vmatpush1.msra.mxu0 0.0
    %1094 = vmatprep.subr.mxu0 0.0
    %1095 = vmatpush1.msra.mxu0 0.0
    %1096 = vmatprep.subr.mxu0 0.0
    %1097 = vmatpush1.msra.mxu0 0.0
    %1098 = vmatprep.subr.mxu0 0.0
    %1099 = vmatpush1.msra.mxu0 0.0
    %1100 = vmatprep.mubr.f32.mxu0 0.0
    %v1101 = vand.u32 %v953, 4294901760
    %1102 = vmatmul.mubr.f32.gmra.mrb[0].mxu0 %v1101
    %v1103 = vpop.f32.mrb[0].mxu0
    %v1104 = vadd.f32 %v1028, %v1103
    %v1105 = vpop.f32.mrb[0].mxu0
    %1106 = vdwg.mxu0
    %1107 = vmatprep.subr.mxu0 0.0
    %v1108 = vand.u32 %v949, 4294901760
    %v1109 = vsub.f32 %v949, %v1108
    %1110 = vmatpush1.msra.mxu0 %v1109
    %1111 = vmatprep.subr.mxu0 0.0
    %1112 = vmatpush1.msra.mxu0 0.0
    %1113 = vmatprep.subr.mxu0 0.0
    %1114 = vmatpush1.msra.mxu0 0.0
    %1115 = vmatprep.subr.mxu0 0.0
    %1116 = vmatpush1.msra.mxu0 0.0
    %1117 = vmatprep.subr.mxu0 0.0
    %1118 = vmatpush1.msra.mxu0 0.0
    %1119 = vmatprep.subr.mxu0 0.0
    %1120 = vmatpush1.msra.mxu0 0.0
    %1121 = vmatprep.subr.mxu0 0.0
    %1122 = vmatpush1.msra.mxu0 0.0
    %1123 = vmatprep.subr.mxu0 0.0
    %1124 = vmatpush1.msra.mxu0 0.0
    %1125 = vmatprep.subr.mxu0 0.0
    %1126 = vmatpush1.msra.mxu0 0.0
    %1127 = vmatprep.subr.mxu0 0.0
    %1128 = vmatpush1.msra.mxu0 0.0
    %1129 = vmatprep.subr.mxu0 0.0
    %1130 = vmatpush1.msra.mxu0 0.0
    %1131 = vmatprep.subr.mxu0 0.0
    %1132 = vmatpush1.msra.mxu0 0.0
    %1133 = vmatprep.subr.mxu0 0.0
    %1134 = vmatpush1.msra.mxu0 0.0
    %1135 = vmatprep.subr.mxu0 0.0
    %1136 = vmatpush1.msra.mxu0 0.0
    %1137 = vmatprep.subr.mxu0 0.0
    %1138 = vmatpush1.msra.mxu0 0.0
    %1139 = vmatprep.subr.mxu0 0.0
    %1140 = vmatpush1.msra.mxu0 0.0
    %1141 = vmatprep.subr.mxu0 0.0
    %1142 = vmatpush1.msra.mxu0 0.0
    %1143 = vmatprep.subr.mxu0 0.0
    %1144 = vmatpush1.msra.mxu0 0.0
    %1145 = vmatprep.subr.mxu0 0.0
    %1146 = vmatpush1.msra.mxu0 0.0
    %1147 = vmatprep.subr.mxu0 0.0
    %1148 = vmatpush1.msra.mxu0 0.0
    %1149 = vmatprep.subr.mxu0 0.0
    %1150 = vmatpush1.msra.mxu0 0.0
    %1151 = vmatprep.subr.mxu0 0.0
    %1152 = vmatpush1.msra.mxu0 0.0
    %1153 = vmatprep.subr.mxu0 0.0
    %1154 = vmatpush1.msra.mxu0 0.0
    %1155 = vmatprep.subr.mxu0 0.0
    %1156 = vmatpush1.msra.mxu0 0.0
    %1157 = vmatprep.subr.mxu0 0.0
    %1158 = vmatpush1.msra.mxu0 0.0
    %1159 = vmatprep.subr.mxu0 0.0
    %1160 = vmatpush1.msra.mxu0 0.0
    %1161 = vmatprep.subr.mxu0 0.0
    %1162 = vmatpush1.msra.mxu0 0.0
    %1163 = vmatprep.subr.mxu0 0.0
    %1164 = vmatpush1.msra.mxu0 0.0
    %1165 = vmatprep.subr.mxu0 0.0
    %1166 = vmatpush1.msra.mxu0 0.0
    %1167 = vmatprep.subr.mxu0 0.0
    %1168 = vmatpush1.msra.mxu0 0.0
    %1169 = vmatprep.subr.mxu0 0.0
    %1170 = vmatpush1.msra.mxu0 0.0
    %1171 = vmatprep.subr.mxu0 0.0
    %1172 = vmatpush1.msra.mxu0 0.0
    %1173 = vmatprep.mubr.f32.mxu0 0.0
    %v1174 = vand.u32 %v953, 4294901760
    %v1175 = vsub.f32 %v953, %v1174
    %1176 = vmatmul.mubr.f32.gmra.mrb[0].mxu0 %v1175
    %v1177 = vpop.f32.mrb[0].mxu0
    %v1178 = vadd.f32 %v1104, %v1177
    %v1179 = vpop.f32.mrb[0].mxu0
    %1180 = vdwg.mxu0
    %1181 = vmatprep.subr.mxu0 0.0
    %v1182 = vand.u32 %v949, 4294901760
    %1183 = vmatpush1.msra.mxu0 %v1182
    %1184 = vmatprep.subr.mxu0 0.0
    %1185 = vmatpush1.msra.mxu0 0.0
    %1186 = vmatprep.subr.mxu0 0.0
    %1187 = vmatpush1.msra.mxu0 0.0
    %1188 = vmatprep.subr.mxu0 0.0
    %1189 = vmatpush1.msra.mxu0 0.0
    %1190 = vmatprep.subr.mxu0 0.0
    %1191 = vmatpush1.msra.mxu0 0.0
    %1192 = vmatprep.subr.mxu0 0.0
    %1193 = vmatpush1.msra.mxu0 0.0
    %1194 = vmatprep.subr.mxu0 0.0
    %1195 = vmatpush1.msra.mxu0 0.0
    %1196 = vmatprep.subr.mxu0 0.0
    %1197 = vmatpush1.msra.mxu0 0.0
    %1198 = vmatprep.subr.mxu0 0.0
    %1199 = vmatpush1.msra.mxu0 0.0
    %1200 = vmatprep.subr.mxu0 0.0
    %1201 = vmatpush1.msra.mxu0 0.0
    %1202 = vmatprep.subr.mxu0 0.0
    %1203 = vmatpush1.msra.mxu0 0.0
    %1204 = vmatprep.subr.mxu0 0.0
    %1205 = vmatpush1.msra.mxu0 0.0
    %1206 = vmatprep.subr.mxu0 0.0
    %1207 = vmatpush1.msra.mxu0 0.0
    %1208 = vmatprep.subr.mxu0 0.0
    %1209 = vmatpush1.msra.mxu0 0.0
    %1210 = vmatprep.subr.mxu0 0.0
    %1211 = vmatpush1.msra.mxu0 0.0
    %1212 = vmatprep.subr.mxu0 0.0
    %1213 = vmatpush1.msra.mxu0 0.0
    %1214 = vmatprep.subr.mxu0 0.0
    %1215 = vmatpush1.msra.mxu0 0.0
    %1216 = vmatprep.subr.mxu0 0.0
    %1217 = vmatpush1.msra.mxu0 0.0
    %1218 = vmatprep.subr.mxu0 0.0
    %1219 = vmatpush1.msra.mxu0 0.0
    %1220 = vmatprep.subr.mxu0 0.0
    %1221 = vmatpush1.msra.mxu0 0.0
    %1222 = vmatprep.subr.mxu0 0.0
    %1223 = vmatpush1.msra.mxu0 0.0
    %1224 = vmatprep.subr.mxu0 0.0
    %1225 = vmatpush1.msra.mxu0 0.0
    %1226 = vmatprep.subr.mxu0 0.0
    %1227 = vmatpush1.msra.mxu0 0.0
    %1228 = vmatprep.subr.mxu0 0.0
    %1229 = vmatpush1.msra.mxu0 0.0
    %1230 = vmatprep.subr.mxu0 0.0
    %1231 = vmatpush1.msra.mxu0 0.0
    %1232 = vmatprep.subr.mxu0 0.0
    %1233 = vmatpush1.msra.mxu0 0.0
    %1234 = vmatprep.subr.mxu0 0.0
    %1235 = vmatpush1.msra.mxu0 0.0
    %1236 = vmatprep.subr.mxu0 0.0
    %1237 = vmatpush1.msra.mxu0 0.0
    %1238 = vmatprep.subr.mxu0 0.0
    %1239 = vmatpush1.msra.mxu0 0.0
    %1240 = vmatprep.subr.mxu0 0.0
    %1241 = vmatpush1.msra.mxu0 0.0
    %1242 = vmatprep.subr.mxu0 0.0
    %1243 = vmatpush1.msra.mxu0 0.0
    %1244 = vmatprep.subr.mxu0 0.0
    %1245 = vmatpush1.msra.mxu0 0.0
    %1246 = vmatprep.mubr.f32.mxu0 0.0
    %v1247 = vand.u32 %v953, 4294901760
    %v1248 = vsub.f32 %v953, %v1247
    %v1249 = vand.u32 %v1248, 4294901760
    %1250 = vmatmul.mubr.f32.gmra.mrb[0].mxu0 %v1249
    %v1251 = vpop.f32.mrb[0].mxu0
    %v1252 = vadd.f32 %v1178, %v1251
    %v1253 = vpop.f32.mrb[0].mxu0
    %1254 = vdwg.mxu0
    %1255 = vmatprep.subr.mxu0 0.0
    %v1256 = vand.u32 %v949, 4294901760
    %v1257 = vsub.f32 %v949, %v1256
    %v1258 = vand.u32 %v1257, 4294901760
    %1259 = vmatpush1.msra.mxu0 %v1258
    %1260 = vmatprep.subr.mxu0 0.0
    %1261 = vmatpush1.msra.mxu0 0.0
    %1262 = vmatprep.subr.mxu0 0.0
    %1263 = vmatpush1.msra.mxu0 0.0
    %1264 = vmatprep.subr.mxu0 0.0
    %1265 = vmatpush1.msra.mxu0 0.0
    %1266 = vmatprep.subr.mxu0 0.0
    %1267 = vmatpush1.msra.mxu0 0.0
    %1268 = vmatprep.subr.mxu0 0.0
    %1269 = vmatpush1.msra.mxu0 0.0
    %1270 = vmatprep.subr.mxu0 0.0
    %1271 = vmatpush1.msra.mxu0 0.0
    %1272 = vmatprep.subr.mxu0 0.0
    %1273 = vmatpush1.msra.mxu0 0.0
    %1274 = vmatprep.subr.mxu0 0.0
    %1275 = vmatpush1.msra.mxu0 0.0
    %1276 = vmatprep.subr.mxu0 0.0
    %1277 = vmatpush1.msra.mxu0 0.0
    %1278 = vmatprep.subr.mxu0 0.0
    %1279 = vmatpush1.msra.mxu0 0.0
    %1280 = vmatprep.subr.mxu0 0.0
    %1281 = vmatpush1.msra.mxu0 0.0
    %1282 = vmatprep.subr.mxu0 0.0
    %1283 = vmatpush1.msra.mxu0 0.0
    %1284 = vmatprep.subr.mxu0 0.0
    %1285 = vmatpush1.msra.mxu0 0.0
    %1286 = vmatprep.subr.mxu0 0.0
    %1287 = vmatpush1.msra.mxu0 0.0
    %1288 = vmatprep.subr.mxu0 0.0
    %1289 = vmatpush1.msra.mxu0 0.0
    %1290 = vmatprep.subr.mxu0 0.0
    %1291 = vmatpush1.msra.mxu0 0.0
    %1292 = vmatprep.subr.mxu0 0.0
    %1293 = vmatpush1.msra.mxu0 0.0
    %1294 = vmatprep.subr.mxu0 0.0
    %1295 = vmatpush1.msra.mxu0 0.0
    %1296 = vmatprep.subr.mxu0 0.0
    %1297 = vmatpush1.msra.mxu0 0.0
    %1298 = vmatprep.subr.mxu0 0.0
    %1299 = vmatpush1.msra.mxu0 0.0
    %1300 = vmatprep.subr.mxu0 0.0
    %1301 = vmatpush1.msra.mxu0 0.0
    %1302 = vmatprep.subr.mxu0 0.0
    %1303 = vmatpush1.msra.mxu0 0.0
    %1304 = vmatprep.subr.mxu0 0.0
    %1305 = vmatpush1.msra.mxu0 0.0
    %1306 = vmatprep.subr.mxu0 0.0
    %1307 = vmatpush1.msra.mxu0 0.0
    %1308 = vmatprep.subr.mxu0 0.0
    %1309 = vmatpush1.msra.mxu0 0.0
    %1310 = vmatprep.subr.mxu0 0.0
    %1311 = vmatpush1.msra.mxu0 0.0
    %1312 = vmatprep.subr.mxu0 0.0
    %1313 = vmatpush1.msra.mxu0 0.0
    %1314 = vmatprep.subr.mxu0 0.0
    %1315 = vmatpush1.msra.mxu0 0.0
    %1316 = vmatprep.subr.mxu0 0.0
    %1317 = vmatpush1.msra.mxu0 0.0
    %1318 = vmatprep.subr.mxu0 0.0
    %1319 = vmatpush1.msra.mxu0 0.0
    %1320 = vmatprep.subr.mxu0 0.0
    %1321 = vmatpush1.msra.mxu0 0.0
    %1322 = vmatprep.mubr.f32.mxu0 0.0
    %v1323 = vand.u32 %v953, 4294901760
    %1324 = vmatmul.mubr.f32.gmra.mrb[0].mxu0 %v1323
    %v1325 = vpop.f32.mrb[0].mxu0
    %v1326 = vadd.f32 %v1252, %v1325
    %v1327 = vpop.f32.mrb[0].mxu0
    %1328 = vdwg.mxu0
    %1329 = vmatprep.subr.mxu0 0.0
    %v1330 = vand.u32 %v949, 4294901760
    %1331 = vmatpush1.msra.mxu0 %v1330
    %1332 = vmatprep.subr.mxu0 0.0
    %1333 = vmatpush1.msra.mxu0 0.0
    %1334 = vmatprep.subr.mxu0 0.0
    %1335 = vmatpush1.msra.mxu0 0.0
    %1336 = vmatprep.subr.mxu0 0.0
    %1337 = vmatpush1.msra.mxu0 0.0
    %1338 = vmatprep.subr.mxu0 0.0
    %1339 = vmatpush1.msra.mxu0 0.0
    %1340 = vmatprep.subr.mxu0 0.0
    %1341 = vmatpush1.msra.mxu0 0.0
    %1342 = vmatprep.subr.mxu0 0.0
    %1343 = vmatpush1.msra.mxu0 0.0
    %1344 = vmatprep.subr.mxu0 0.0
    %1345 = vmatpush1.msra.mxu0 0.0
    %1346 = vmatprep.subr.mxu0 0.0
    %1347 = vmatpush1.msra.mxu0 0.0
    %1348 = vmatprep.subr.mxu0 0.0
    %1349 = vmatpush1.msra.mxu0 0.0
    %1350 = vmatprep.subr.mxu0 0.0
    %1351 = vmatpush1.msra.mxu0 0.0
    %1352 = vmatprep.subr.mxu0 0.0
    %1353 = vmatpush1.msra.mxu0 0.0
    %1354 = vmatprep.subr.mxu0 0.0
    %1355 = vmatpush1.msra.mxu0 0.0
    %1356 = vmatprep.subr.mxu0 0.0
    %1357 = vmatpush1.msra.mxu0 0.0
    %1358 = vmatprep.subr.mxu0 0.0
    %1359 = vmatpush1.msra.mxu0 0.0
    %1360 = vmatprep.subr.mxu0 0.0
    %1361 = vmatpush1.msra.mxu0 0.0
    %1362 = vmatprep.subr.mxu0 0.0
    %1363 = vmatpush1.msra.mxu0 0.0
    %1364 = vmatprep.subr.mxu0 0.0
    %1365 = vmatpush1.msra.mxu0 0.0
    %1366 = vmatprep.subr.mxu0 0.0
    %1367 = vmatpush1.msra.mxu0 0.0
    %1368 = vmatprep.subr.mxu0 0.0
    %1369 = vmatpush1.msra.mxu0 0.0
    %1370 = vmatprep.subr.mxu0 0.0
    %1371 = vmatpush1.msra.mxu0 0.0
    %1372 = vmatprep.subr.mxu0 0.0
    %1373 = vmatpush1.msra.mxu0 0.0
    %1374 = vmatprep.subr.mxu0 0.0
    %1375 = vmatpush1.msra.mxu0 0.0
    %1376 = vmatprep.subr.mxu0 0.0
    %1377 = vmatpush1.msra.mxu0 0.0
    %1378 = vmatprep.subr.mxu0 0.0
    %1379 = vmatpush1.msra.mxu0 0.0
    %1380 = vmatprep.subr.mxu0 0.0
    %1381 = vmatpush1.msra.mxu0 0.0
    %1382 = vmatprep.subr.mxu0 0.0
    %1383 = vmatpush1.msra.mxu0 0.0
    %1384 = vmatprep.subr.mxu0 0.0
    %1385 = vmatpush1.msra.mxu0 0.0
    %1386 = vmatprep.subr.mxu0 0.0
    %1387 = vmatpush1.msra.mxu0 0.0
    %1388 = vmatprep.subr.mxu0 0.0
    %1389 = vmatpush1.msra.mxu0 0.0
    %1390 = vmatprep.subr.mxu0 0.0
    %1391 = vmatpush1.msra.mxu0 0.0
    %1392 = vmatprep.subr.mxu0 0.0
    %1393 = vmatpush1.msra.mxu0 0.0
    %1394 = vmatprep.mubr.f32.mxu0 0.0
    %v1395 = vand.u32 %v953, 4294901760
    %1396 = vmatmul.mubr.f32.gmra.mrb[0].mxu0 %v1395
    %v1397 = vpop.f32.mrb[0].mxu0
    %v1398 = vadd.f32 %v1326, %v1397
    %v1399 = vpop.f32.mrb[0].mxu0
    %1400 = vdwg.mxu0
    %v1401 = vadd.f32 %v941, %v1398
    %1402 = vrot.lane.b32.xlu0 %v32, 125
    %v1403 = vpop.permute.xlu0 %1402
    %1404 = vrot.lane.b32.xlu0 %v33, 125
    %v1405 = vpop.permute.xlu0 %1404
    %vm1406 = vcmp.lt.s32.totalorder %v40, 125
    %v1407 = vsel %vm1406, %v1403, %v1405
    %s1408 = scalar_lea.vmem %s2, 24
    %v1409 = vld [vmem:[%s1408] sm:$0xff]
    %v1411 = vsel %vm45, %v1409, 0
    %1413 = vmatprep.subr.mxu0 0.0
    %v1414 = vand.u32 %v1407, 4294901760
    %1415 = vmatpush1.msra.mxu0 %v1414
    %1416 = vmatprep.subr.mxu0 0.0
    %1417 = vmatpush1.msra.mxu0 0.0
    %1418 = vmatprep.subr.mxu0 0.0
    %1419 = vmatpush1.msra.mxu0 0.0
    %1420 = vmatprep.subr.mxu0 0.0
    %1421 = vmatpush1.msra.mxu0 0.0
    %1422 = vmatprep.subr.mxu0 0.0
    %1423 = vmatpush1.msra.mxu0 0.0
    %1424 = vmatprep.subr.mxu0 0.0
    %1425 = vmatpush1.msra.mxu0 0.0
    %1426 = vmatprep.subr.mxu0 0.0
    %1427 = vmatpush1.msra.mxu0 0.0
    %1428 = vmatprep.subr.mxu0 0.0
    %1429 = vmatpush1.msra.mxu0 0.0
    %1430 = vmatprep.subr.mxu0 0.0
    %1431 = vmatpush1.msra.mxu0 0.0
    %1432 = vmatprep.subr.mxu0 0.0
    %1433 = vmatpush1.msra.mxu0 0.0
    %1434 = vmatprep.subr.mxu0 0.0
    %1435 = vmatpush1.msra.mxu0 0.0
    %1436 = vmatprep.subr.mxu0 0.0
    %1437 = vmatpush1.msra.mxu0 0.0
    %1438 = vmatprep.subr.mxu0 0.0
    %1439 = vmatpush1.msra.mxu0 0.0
    %1440 = vmatprep.subr.mxu0 0.0
    %1441 = vmatpush1.msra.mxu0 0.0
    %1442 = vmatprep.subr.mxu0 0.0
    %1443 = vmatpush1.msra.mxu0 0.0
    %1444 = vmatprep.subr.mxu0 0.0
    %1445 = vmatpush1.msra.mxu0 0.0
    %1446 = vmatprep.subr.mxu0 0.0
    %1447 = vmatpush1.msra.mxu0 0.0
    %1448 = vmatprep.subr.mxu0 0.0
    %1449 = vmatpush1.msra.mxu0 0.0
    %1450 = vmatprep.subr.mxu0 0.0
    %1451 = vmatpush1.msra.mxu0 0.0
    %1452 = vmatprep.subr.mxu0 0.0
    %1453 = vmatpush1.msra.mxu0 0.0
    %1454 = vmatprep.subr.mxu0 0.0
    %1455 = vmatpush1.msra.mxu0 0.0
    %1456 = vmatprep.subr.mxu0 0.0
    %1457 = vmatpush1.msra.mxu0 0.0
    %1458 = vmatprep.subr.mxu0 0.0
    %1459 = vmatpush1.msra.mxu0 0.0
    %1460 = vmatprep.subr.mxu0 0.0
    %1461 = vmatpush1.msra.mxu0 0.0
    %1462 = vmatprep.subr.mxu0 0.0
    %1463 = vmatpush1.msra.mxu0 0.0
    %1464 = vmatprep.subr.mxu0 0.0
    %1465 = vmatpush1.msra.mxu0 0.0
    %1466 = vmatprep.subr.mxu0 0.0
    %1467 = vmatpush1.msra.mxu0 0.0
    %1468 = vmatprep.subr.mxu0 0.0
    %1469 = vmatpush1.msra.mxu0 0.0
    %1470 = vmatprep.subr.mxu0 0.0
    %1471 = vmatpush1.msra.mxu0 0.0
    %1472 = vmatprep.subr.mxu0 0.0
    %1473 = vmatpush1.msra.mxu0 0.0
    %1474 = vmatprep.subr.mxu0 0.0
    %1475 = vmatpush1.msra.mxu0 0.0
    %1476 = vmatprep.subr.mxu0 0.0
    %1477 = vmatpush1.msra.mxu0 0.0
    %1478 = vmatprep.mubr.f32.mxu0 0.0
    %v1479 = vand.u32 %v1411, 4294901760
    %v1480 = vsub.f32 %v1411, %v1479
    %v1481 = vand.u32 %v1480, 4294901760
    %v1482 = vsub.f32 %v1480, %v1481
    %v1483 = vand.u32 %v1482, 4294901760
    %1484 = vmatmul.mubr.f32.gmra.mrb[0].mxu0 %v1483
    %v1485 = vpop.f32.mrb[0].mxu0
    %v1486 = vadd.f32 0.0, %v1485
    %v1487 = vpop.f32.mrb[0].mxu0
    %1488 = vdwg.mxu0
    %1489 = vmatprep.subr.mxu0 0.0
    %v1490 = vand.u32 %v1407, 4294901760
    %v1491 = vsub.f32 %v1407, %v1490
    %v1492 = vand.u32 %v1491, 4294901760
    %v1493 = vsub.f32 %v1491, %v1492
    %v1494 = vand.u32 %v1493, 4294901760
    %1495 = vmatpush1.msra.mxu0 %v1494
    %1496 = vmatprep.subr.mxu0 0.0
    %1497 = vmatpush1.msra.mxu0 0.0
    %1498 = vmatprep.subr.mxu0 0.0
    %1499 = vmatpush1.msra.mxu0 0.0
    %1500 = vmatprep.subr.mxu0 0.0
    %1501 = vmatpush1.msra.mxu0 0.0
    %1502 = vmatprep.subr.mxu0 0.0
    %1503 = vmatpush1.msra.mxu0 0.0
    %1504 = vmatprep.subr.mxu0 0.0
    %1505 = vmatpush1.msra.mxu0 0.0
    %1506 = vmatprep.subr.mxu0 0.0
    %1507 = vmatpush1.msra.mxu0 0.0
    %1508 = vmatprep.subr.mxu0 0.0
    %1509 = vmatpush1.msra.mxu0 0.0
    %1510 = vmatprep.subr.mxu0 0.0
    %1511 = vmatpush1.msra.mxu0 0.0
    %1512 = vmatprep.subr.mxu0 0.0
    %1513 = vmatpush1.msra.mxu0 0.0
    %1514 = vmatprep.subr.mxu0 0.0
    %1515 = vmatpush1.msra.mxu0 0.0
    %1516 = vmatprep.subr.mxu0 0.0
    %1517 = vmatpush1.msra.mxu0 0.0
    %1518 = vmatprep.subr.mxu0 0.0
    %1519 = vmatpush1.msra.mxu0 0.0
    %1520 = vmatprep.subr.mxu0 0.0
    %1521 = vmatpush1.msra.mxu0 0.0
    %1522 = vmatprep.subr.mxu0 0.0
    %1523 = vmatpush1.msra.mxu0 0.0
    %1524 = vmatprep.subr.mxu0 0.0
    %1525 = vmatpush1.msra.mxu0 0.0
    %1526 = vmatprep.subr.mxu0 0.0
    %1527 = vmatpush1.msra.mxu0 0.0
    %1528 = vmatprep.subr.mxu0 0.0
    %1529 = vmatpush1.msra.mxu0 0.0
    %1530 = vmatprep.subr.mxu0 0.0
    %1531 = vmatpush1.msra.mxu0 0.0
    %1532 = vmatprep.subr.mxu0 0.0
    %1533 = vmatpush1.msra.mxu0 0.0
    %1534 = vmatprep.subr.mxu0 0.0
    %1535 = vmatpush1.msra.mxu0 0.0
    %1536 = vmatprep.subr.mxu0 0.0
    %1537 = vmatpush1.msra.mxu0 0.0
    %1538 = vmatprep.subr.mxu0 0.0
    %1539 = vmatpush1.msra.mxu0 0.0
    %1540 = vmatprep.subr.mxu0 0.0
    %1541 = vmatpush1.msra.mxu0 0.0
    %1542 = vmatprep.subr.mxu0 0.0
    %1543 = vmatpush1.msra.mxu0 0.0
    %1544 = vmatprep.subr.mxu0 0.0
    %1545 = vmatpush1.msra.mxu0 0.0
    %1546 = vmatprep.subr.mxu0 0.0
    %1547 = vmatpush1.msra.mxu0 0.0
    %1548 = vmatprep.subr.mxu0 0.0
    %1549 = vmatpush1.msra.mxu0 0.0
    %1550 = vmatprep.subr.mxu0 0.0
    %1551 = vmatpush1.msra.mxu0 0.0
    %1552 = vmatprep.subr.mxu0 0.0
    %1553 = vmatpush1.msra.mxu0 0.0
    %1554 = vmatprep.subr.mxu0 0.0
    %1555 = vmatpush1.msra.mxu0 0.0
    %1556 = vmatprep.subr.mxu0 0.0
    %1557 = vmatpush1.msra.mxu0 0.0
    %1558 = vmatprep.mubr.f32.mxu0 0.0
    %v1559 = vand.u32 %v1411, 4294901760
    %1560 = vmatmul.mubr.f32.gmra.mrb[0].mxu0 %v1559
    %v1561 = vpop.f32.mrb[0].mxu0
    %v1562 = vadd.f32 %v1486, %v1561
    %v1563 = vpop.f32.mrb[0].mxu0
    %1564 = vdwg.mxu0
    %1565 = vmatprep.subr.mxu0 0.0
    %v1566 = vand.u32 %v1407, 4294901760
    %v1567 = vsub.f32 %v1407, %v1566
    %1568 = vmatpush1.msra.mxu0 %v1567
    %1569 = vmatprep.subr.mxu0 0.0
    %1570 = vmatpush1.msra.mxu0 0.0
    %1571 = vmatprep.subr.mxu0 0.0
    %1572 = vmatpush1.msra.mxu0 0.0
    %1573 = vmatprep.subr.mxu0 0.0
    %1574 = vmatpush1.msra.mxu0 0.0
    %1575 = vmatprep.subr.mxu0 0.0
    %1576 = vmatpush1.msra.mxu0 0.0
    %1577 = vmatprep.subr.mxu0 0.0
    %1578 = vmatpush1.msra.mxu0 0.0
    %1579 = vmatprep.subr.mxu0 0.0
    %1580 = vmatpush1.msra.mxu0 0.0
    %1581 = vmatprep.subr.mxu0 0.0
    %1582 = vmatpush1.msra.mxu0 0.0
    %1583 = vmatprep.subr.mxu0 0.0
    %1584 = vmatpush1.msra.mxu0 0.0
    %1585 = vmatprep.subr.mxu0 0.0
    %1586 = vmatpush1.msra.mxu0 0.0
    %1587 = vmatprep.subr.mxu0 0.0
    %1588 = vmatpush1.msra.mxu0 0.0
    %1589 = vmatprep.subr.mxu0 0.0
    %1590 = vmatpush1.msra.mxu0 0.0
    %1591 = vmatprep.subr.mxu0 0.0
    %1592 = vmatpush1.msra.mxu0 0.0
    %1593 = vmatprep.subr.mxu0 0.0
    %1594 = vmatpush1.msra.mxu0 0.0
    %1595 = vmatprep.subr.mxu0 0.0
    %1596 = vmatpush1.msra.mxu0 0.0
    %1597 = vmatprep.subr.mxu0 0.0
    %1598 = vmatpush1.msra.mxu0 0.0
    %1599 = vmatprep.subr.mxu0 0.0
    %1600 = vmatpush1.msra.mxu0 0.0
    %1601 = vmatprep.subr.mxu0 0.0
    %1602 = vmatpush1.msra.mxu0 0.0
    %1603 = vmatprep.subr.mxu0 0.0
    %1604 = vmatpush1.msra.mxu0 0.0
    %1605 = vmatprep.subr.mxu0 0.0
    %1606 = vmatpush1.msra.mxu0 0.0
    %1607 = vmatprep.subr.mxu0 0.0
    %1608 = vmatpush1.msra.mxu0 0.0
    %1609 = vmatprep.subr.mxu0 0.0
    %1610 = vmatpush1.msra.mxu0 0.0
    %1611 = vmatprep.subr.mxu0 0.0
    %1612 = vmatpush1.msra.mxu0 0.0
    %1613 = vmatprep.subr.mxu0 0.0
    %1614 = vmatpush1.msra.mxu0 0.0
    %1615 = vmatprep.subr.mxu0 0.0
    %1616 = vmatpush1.msra.mxu0 0.0
    %1617 = vmatprep.subr.mxu0 0.0
    %1618 = vmatpush1.msra.mxu0 0.0
    %1619 = vmatprep.subr.mxu0 0.0
    %1620 = vmatpush1.msra.mxu0 0.0
    %1621 = vmatprep.subr.mxu0 0.0
    %1622 = vmatpush1.msra.mxu0 0.0
    %1623 = vmatprep.subr.mxu0 0.0
    %1624 = vmatpush1.msra.mxu0 0.0
    %1625 = vmatprep.subr.mxu0 0.0
    %1626 = vmatpush1.msra.mxu0 0.0
    %1627 = vmatprep.subr.mxu0 0.0
    %1628 = vmatpush1.msra.mxu0 0.0
    %1629 = vmatprep.subr.mxu0 0.0
    %1630 = vmatpush1.msra.mxu0 0.0
    %1631 = vmatprep.mubr.f32.mxu0 0.0
    %v1632 = vand.u32 %v1411, 4294901760
    %v1633 = vsub.f32 %v1411, %v1632
    %1634 = vmatmul.mubr.f32.gmra.mrb[0].mxu0 %v1633
    %v1635 = vpop.f32.mrb[0].mxu0
    %v1636 = vadd.f32 %v1562, %v1635
    %v1637 = vpop.f32.mrb[0].mxu0
    %1638 = vdwg.mxu0
    %1639 = vmatprep.subr.mxu0 0.0
    %v1640 = vand.u32 %v1407, 4294901760
    %1641 = vmatpush1.msra.mxu0 %v1640
    %1642 = vmatprep.subr.mxu0 0.0
    %1643 = vmatpush1.msra.mxu0 0.0
    %1644 = vmatprep.subr.mxu0 0.0
    %1645 = vmatpush1.msra.mxu0 0.0
    %1646 = vmatprep.subr.mxu0 0.0
    %1647 = vmatpush1.msra.mxu0 0.0
    %1648 = vmatprep.subr.mxu0 0.0
    %1649 = vmatpush1.msra.mxu0 0.0
    %1650 = vmatprep.subr.mxu0 0.0
    %1651 = vmatpush1.msra.mxu0 0.0
    %1652 = vmatprep.subr.mxu0 0.0
    %1653 = vmatpush1.msra.mxu0 0.0
    %1654 = vmatprep.subr.mxu0 0.0
    %1655 = vmatpush1.msra.mxu0 0.0
    %1656 = vmatprep.subr.mxu0 0.0
    %1657 = vmatpush1.msra.mxu0 0.0
    %1658 = vmatprep.subr.mxu0 0.0
    %1659 = vmatpush1.msra.mxu0 0.0
    %1660 = vmatprep.subr.mxu0 0.0
    %1661 = vmatpush1.msra.mxu0 0.0
    %1662 = vmatprep.subr.mxu0 0.0
    %1663 = vmatpush1.msra.mxu0 0.0
    %1664 = vmatprep.subr.mxu0 0.0
    %1665 = vmatpush1.msra.mxu0 0.0
    %1666 = vmatprep.subr.mxu0 0.0
    %1667 = vmatpush1.msra.mxu0 0.0
    %1668 = vmatprep.subr.mxu0 0.0
    %1669 = vmatpush1.msra.mxu0 0.0
    %1670 = vmatprep.subr.mxu0 0.0
    %1671 = vmatpush1.msra.mxu0 0.0
    %1672 = vmatprep.subr.mxu0 0.0
    %1673 = vmatpush1.msra.mxu0 0.0
    %1674 = vmatprep.subr.mxu0 0.0
    %1675 = vmatpush1.msra.mxu0 0.0
    %1676 = vmatprep.subr.mxu0 0.0
    %1677 = vmatpush1.msra.mxu0 0.0
    %1678 = vmatprep.subr.mxu0 0.0
    %1679 = vmatpush1.msra.mxu0 0.0
    %1680 = vmatprep.subr.mxu0 0.0
    %1681 = vmatpush1.msra.mxu0 0.0
    %1682 = vmatprep.subr.mxu0 0.0
    %1683 = vmatpush1.msra.mxu0 0.0
    %1684 = vmatprep.subr.mxu0 0.0
    %1685 = vmatpush1.msra.mxu0 0.0
    %1686 = vmatprep.subr.mxu0 0.0
    %1687 = vmatpush1.msra.mxu0 0.0
    %1688 = vmatprep.subr.mxu0 0.0
    %1689 = vmatpush1.msra.mxu0 0.0
    %1690 = vmatprep.subr.mxu0 0.0
    %1691 = vmatpush1.msra.mxu0 0.0
    %1692 = vmatprep.subr.mxu0 0.0
    %1693 = vmatpush1.msra.mxu0 0.0
    %1694 = vmatprep.subr.mxu0 0.0
    %1695 = vmatpush1.msra.mxu0 0.0
    %1696 = vmatprep.subr.mxu0 0.0
    %1697 = vmatpush1.msra.mxu0 0.0
    %1698 = vmatprep.subr.mxu0 0.0
    %1699 = vmatpush1.msra.mxu0 0.0
    %1700 = vmatprep.subr.mxu0 0.0
    %1701 = vmatpush1.msra.mxu0 0.0
    %1702 = vmatprep.subr.mxu0 0.0
    %1703 = vmatpush1.msra.mxu0 0.0
    %1704 = vmatprep.mubr.f32.mxu0 0.0
    %v1705 = vand.u32 %v1411, 4294901760
    %v1706 = vsub.f32 %v1411, %v1705
    %v1707 = vand.u32 %v1706, 4294901760
    %1708 = vmatmul.mubr.f32.gmra.mrb[0].mxu0 %v1707
    %v1709 = vpop.f32.mrb[0].mxu0
    %v1710 = vadd.f32 %v1636, %v1709
    %v1711 = vpop.f32.mrb[0].mxu0
    %1712 = vdwg.mxu0
    %1713 = vmatprep.subr.mxu0 0.0
    %v1714 = vand.u32 %v1407, 4294901760
    %v1715 = vsub.f32 %v1407, %v1714
    %v1716 = vand.u32 %v1715, 4294901760
    %1717 = vmatpush1.msra.mxu0 %v1716
    %1718 = vmatprep.subr.mxu0 0.0
    %1719 = vmatpush1.msra.mxu0 0.0
    %1720 = vmatprep.subr.mxu0 0.0
    %1721 = vmatpush1.msra.mxu0 0.0
    %1722 = vmatprep.subr.mxu0 0.0
    %1723 = vmatpush1.msra.mxu0 0.0
    %1724 = vmatprep.subr.mxu0 0.0
    %1725 = vmatpush1.msra.mxu0 0.0
    %1726 = vmatprep.subr.mxu0 0.0
    %1727 = vmatpush1.msra.mxu0 0.0
    %1728 = vmatprep.subr.mxu0 0.0
    %1729 = vmatpush1.msra.mxu0 0.0
    %1730 = vmatprep.subr.mxu0 0.0
    %1731 = vmatpush1.msra.mxu0 0.0
    %1732 = vmatprep.subr.mxu0 0.0
    %1733 = vmatpush1.msra.mxu0 0.0
    %1734 = vmatprep.subr.mxu0 0.0
    %1735 = vmatpush1.msra.mxu0 0.0
    %1736 = vmatprep.subr.mxu0 0.0
    %1737 = vmatpush1.msra.mxu0 0.0
    %1738 = vmatprep.subr.mxu0 0.0
    %1739 = vmatpush1.msra.mxu0 0.0
    %1740 = vmatprep.subr.mxu0 0.0
    %1741 = vmatpush1.msra.mxu0 0.0
    %1742 = vmatprep.subr.mxu0 0.0
    %1743 = vmatpush1.msra.mxu0 0.0
    %1744 = vmatprep.subr.mxu0 0.0
    %1745 = vmatpush1.msra.mxu0 0.0
    %1746 = vmatprep.subr.mxu0 0.0
    %1747 = vmatpush1.msra.mxu0 0.0
    %1748 = vmatprep.subr.mxu0 0.0
    %1749 = vmatpush1.msra.mxu0 0.0
    %1750 = vmatprep.subr.mxu0 0.0
    %1751 = vmatpush1.msra.mxu0 0.0
    %1752 = vmatprep.subr.mxu0 0.0
    %1753 = vmatpush1.msra.mxu0 0.0
    %1754 = vmatprep.subr.mxu0 0.0
    %1755 = vmatpush1.msra.mxu0 0.0
    %1756 = vmatprep.subr.mxu0 0.0
    %1757 = vmatpush1.msra.mxu0 0.0
    %1758 = vmatprep.subr.mxu0 0.0
    %1759 = vmatpush1.msra.mxu0 0.0
    %1760 = vmatprep.subr.mxu0 0.0
    %1761 = vmatpush1.msra.mxu0 0.0
    %1762 = vmatprep.subr.mxu0 0.0
    %1763 = vmatpush1.msra.mxu0 0.0
    %1764 = vmatprep.subr.mxu0 0.0
    %1765 = vmatpush1.msra.mxu0 0.0
    %1766 = vmatprep.subr.mxu0 0.0
    %1767 = vmatpush1.msra.mxu0 0.0
    %1768 = vmatprep.subr.mxu0 0.0
    %1769 = vmatpush1.msra.mxu0 0.0
    %1770 = vmatprep.subr.mxu0 0.0
    %1771 = vmatpush1.msra.mxu0 0.0
    %1772 = vmatprep.subr.mxu0 0.0
    %1773 = vmatpush1.msra.mxu0 0.0
    %1774 = vmatprep.subr.mxu0 0.0
    %1775 = vmatpush1.msra.mxu0 0.0
    %1776 = vmatprep.subr.mxu0 0.0
    %1777 = vmatpush1.msra.mxu0 0.0
    %1778 = vmatprep.subr.mxu0 0.0
    %1779 = vmatpush1.msra.mxu0 0.0
    %1780 = vmatprep.mubr.f32.mxu0 0.0
    %v1781 = vand.u32 %v1411, 4294901760
    %1782 = vmatmul.mubr.f32.gmra.mrb[0].mxu0 %v1781
    %v1783 = vpop.f32.mrb[0].mxu0
    %v1784 = vadd.f32 %v1710, %v1783
    %v1785 = vpop.f32.mrb[0].mxu0
    %1786 = vdwg.mxu0
    %1787 = vmatprep.subr.mxu0 0.0
    %v1788 = vand.u32 %v1407, 4294901760
    %1789 = vmatpush1.msra.mxu0 %v1788
    %1790 = vmatprep.subr.mxu0 0.0
    %1791 = vmatpush1.msra.mxu0 0.0
    %1792 = vmatprep.subr.mxu0 0.0
    %1793 = vmatpush1.msra.mxu0 0.0
    %1794 = vmatprep.subr.mxu0 0.0
    %1795 = vmatpush1.msra.mxu0 0.0
    %1796 = vmatprep.subr.mxu0 0.0
    %1797 = vmatpush1.msra.mxu0 0.0
    %1798 = vmatprep.subr.mxu0 0.0
    %1799 = vmatpush1.msra.mxu0 0.0
    %1800 = vmatprep.subr.mxu0 0.0
    %1801 = vmatpush1.msra.mxu0 0.0
    %1802 = vmatprep.subr.mxu0 0.0
    %1803 = vmatpush1.msra.mxu0 0.0
    %1804 = vmatprep.subr.mxu0 0.0
    %1805 = vmatpush1.msra.mxu0 0.0
    %1806 = vmatprep.subr.mxu0 0.0
    %1807 = vmatpush1.msra.mxu0 0.0
    %1808 = vmatprep.subr.mxu0 0.0
    %1809 = vmatpush1.msra.mxu0 0.0
    %1810 = vmatprep.subr.mxu0 0.0
    %1811 = vmatpush1.msra.mxu0 0.0
    %1812 = vmatprep.subr.mxu0 0.0
    %1813 = vmatpush1.msra.mxu0 0.0
    %1814 = vmatprep.subr.mxu0 0.0
    %1815 = vmatpush1.msra.mxu0 0.0
    %1816 = vmatprep.subr.mxu0 0.0
    %1817 = vmatpush1.msra.mxu0 0.0
    %1818 = vmatprep.subr.mxu0 0.0
    %1819 = vmatpush1.msra.mxu0 0.0
    %1820 = vmatprep.subr.mxu0 0.0
    %1821 = vmatpush1.msra.mxu0 0.0
    %1822 = vmatprep.subr.mxu0 0.0
    %1823 = vmatpush1.msra.mxu0 0.0
    %1824 = vmatprep.subr.mxu0 0.0
    %1825 = vmatpush1.msra.mxu0 0.0
    %1826 = vmatprep.subr.mxu0 0.0
    %1827 = vmatpush1.msra.mxu0 0.0
    %1828 = vmatprep.subr.mxu0 0.0
    %1829 = vmatpush1.msra.mxu0 0.0
    %1830 = vmatprep.subr.mxu0 0.0
    %1831 = vmatpush1.msra.mxu0 0.0
    %1832 = vmatprep.subr.mxu0 0.0
    %1833 = vmatpush1.msra.mxu0 0.0
    %1834 = vmatprep.subr.mxu0 0.0
    %1835 = vmatpush1.msra.mxu0 0.0
    %1836 = vmatprep.subr.mxu0 0.0
    %1837 = vmatpush1.msra.mxu0 0.0
    %1838 = vmatprep.subr.mxu0 0.0
    %1839 = vmatpush1.msra.mxu0 0.0
    %1840 = vmatprep.subr.mxu0 0.0
    %1841 = vmatpush1.msra.mxu0 0.0
    %1842 = vmatprep.subr.mxu0 0.0
    %1843 = vmatpush1.msra.mxu0 0.0
    %1844 = vmatprep.subr.mxu0 0.0
    %1845 = vmatpush1.msra.mxu0 0.0
    %1846 = vmatprep.subr.mxu0 0.0
    %1847 = vmatpush1.msra.mxu0 0.0
    %1848 = vmatprep.subr.mxu0 0.0
    %1849 = vmatpush1.msra.mxu0 0.0
    %1850 = vmatprep.subr.mxu0 0.0
    %1851 = vmatpush1.msra.mxu0 0.0
    %1852 = vmatprep.mubr.f32.mxu0 0.0
    %v1853 = vand.u32 %v1411, 4294901760
    %1854 = vmatmul.mubr.f32.gmra.mrb[0].mxu0 %v1853
    %v1855 = vpop.f32.mrb[0].mxu0
    %v1856 = vadd.f32 %v1784, %v1855
    %v1857 = vpop.f32.mrb[0].mxu0
    %1858 = vdwg.mxu0
    %v1859 = vadd.f32 %v1401, %v1856
    %1860 = vrot.lane.b32.xlu0 %v32, 124
    %v1861 = vpop.permute.xlu0 %1860
    %1862 = vrot.lane.b32.xlu0 %v33, 124
    %v1863 = vpop.permute.xlu0 %1862
    %vm1864 = vcmp.lt.s32.totalorder %v40, 124
    %v1865 = vsel %vm1864, %v1861, %v1863
    %s1866 = scalar_lea.vmem %s2, 32
    %v1867 = vld [vmem:[%s1866] sm:$0xff]
    %v1869 = vsel %vm45, %v1867, 0
    %1871 = vmatprep.subr.mxu0 0.0
    %v1872 = vand.u32 %v1865, 4294901760
    %1873 = vmatpush1.msra.mxu0 %v1872
    %1874 = vmatprep.subr.mxu0 0.0
    %1875 = vmatpush1.msra.mxu0 0.0
    %1876 = vmatprep.subr.mxu0 0.0
    %1877 = vmatpush1.msra.mxu0 0.0
    %1878 = vmatprep.subr.mxu0 0.0
    %1879 = vmatpush1.msra.mxu0 0.0
    %1880 = vmatprep.subr.mxu0 0.0
    %1881 = vmatpush1.msra.mxu0 0.0
    %1882 = vmatprep.subr.mxu0 0.0
    %1883 = vmatpush1.msra.mxu0 0.0
    %1884 = vmatprep.subr.mxu0 0.0
    %1885 = vmatpush1.msra.mxu0 0.0
    %1886 = vmatprep.subr.mxu0 0.0
    %1887 = vmatpush1.msra.mxu0 0.0
    %1888 = vmatprep.subr.mxu0 0.0
    %1889 = vmatpush1.msra.mxu0 0.0
    %1890 = vmatprep.subr.mxu0 0.0
    %1891 = vmatpush1.msra.mxu0 0.0
    %1892 = vmatprep.subr.mxu0 0.0
    %1893 = vmatpush1.msra.mxu0 0.0
    %1894 = vmatprep.subr.mxu0 0.0
    %1895 = vmatpush1.msra.mxu0 0.0
    %1896 = vmatprep.subr.mxu0 0.0
    %1897 = vmatpush1.msra.mxu0 0.0
    %1898 = vmatprep.subr.mxu0 0.0
    %1899 = vmatpush1.msra.mxu0 0.0
    %1900 = vmatprep.subr.mxu0 0.0
    %1901 = vmatpush1.msra.mxu0 0.0
    %1902 = vmatprep.subr.mxu0 0.0
    %1903 = vmatpush1.msra.mxu0 0.0
    %1904 = vmatprep.subr.mxu0 0.0
    %1905 = vmatpush1.msra.mxu0 0.0
    %1906 = vmatprep.subr.mxu0 0.0
    %1907 = vmatpush1.msra.mxu0 0.0
    %1908 = vmatprep.subr.mxu0 0.0
    %1909 = vmatpush1.msra.mxu0 0.0
    %1910 = vmatprep.subr.mxu0 0.0
    %1911 = vmatpush1.msra.mxu0 0.0
    %1912 = vmatprep.subr.mxu0 0.0
    %1913 = vmatpush1.msra.mxu0 0.0
    %1914 = vmatprep.subr.mxu0 0.0
    %1915 = vmatpush1.msra.mxu0 0.0
    %1916 = vmatprep.subr.mxu0 0.0
    %1917 = vmatpush1.msra.mxu0 0.0
    %1918 = vmatprep.subr.mxu0 0.0
    %1919 = vmatpush1.msra.mxu0 0.0
    %1920 = vmatprep.subr.mxu0 0.0
    %1921 = vmatpush1.msra.mxu0 0.0
    %1922 = vmatprep.subr.mxu0 0.0
    %1923 = vmatpush1.msra.mxu0 0.0
    %1924 = vmatprep.subr.mxu0 0.0
    %1925 = vmatpush1.msra.mxu0 0.0
    %1926 = vmatprep.subr.mxu0 0.0
    %1927 = vmatpush1.msra.mxu0 0.0
    %1928 = vmatprep.subr.mxu0 0.0
    %1929 = vmatpush1.msra.mxu0 0.0
    %1930 = vmatprep.subr.mxu0 0.0
    %1931 = vmatpush1.msra.mxu0 0.0
    %1932 = vmatprep.subr.mxu0 0.0
    %1933 = vmatpush1.msra.mxu0 0.0
    %1934 = vmatprep.subr.mxu0 0.0
    %1935 = vmatpush1.msra.mxu0 0.0
    %1936 = vmatprep.mubr.f32.mxu0 0.0
    %v1937 = vand.u32 %v1869, 4294901760
    %v1938 = vsub.f32 %v1869, %v1937
    %v1939 = vand.u32 %v1938, 4294901760
    %v1940 = vsub.f32 %v1938, %v1939
    %v1941 = vand.u32 %v1940, 4294901760
    %1942 = vmatmul.mubr.f32.gmra.mrb[0].mxu0 %v1941
    %v1943 = vpop.f32.mrb[0].mxu0
    %v1944 = vadd.f32 0.0, %v1943
    %v1945 = vpop.f32.mrb[0].mxu0
    %1946 = vdwg.mxu0
    %1947 = vmatprep.subr.mxu0 0.0
    %v1948 = vand.u32 %v1865, 4294901760
    %v1949 = vsub.f32 %v1865, %v1948
    %v1950 = vand.u32 %v1949, 4294901760
    %v1951 = vsub.f32 %v1949, %v1950
    %v1952 = vand.u32 %v1951, 4294901760
    %1953 = vmatpush1.msra.mxu0 %v1952
    %1954 = vmatprep.subr.mxu0 0.0
    %1955 = vmatpush1.msra.mxu0 0.0
    %1956 = vmatprep.subr.mxu0 0.0
    %1957 = vmatpush1.msra.mxu0 0.0
    %1958 = vmatprep.subr.mxu0 0.0
    %1959 = vmatpush1.msra.mxu0 0.0
    %1960 = vmatprep.subr.mxu0 0.0
    %1961 = vmatpush1.msra.mxu0 0.0
    %1962 = vmatprep.subr.mxu0 0.0
    %1963 = vmatpush1.msra.mxu0 0.0
    %1964 = vmatprep.subr.mxu0 0.0
    %1965 = vmatpush1.msra.mxu0 0.0
    %1966 = vmatprep.subr.mxu0 0.0
    %1967 = vmatpush1.msra.mxu0 0.0
    %1968 = vmatprep.subr.mxu0 0.0
    %1969 = vmatpush1.msra.mxu0 0.0
    %1970 = vmatprep.subr.mxu0 0.0
    %1971 = vmatpush1.msra.mxu0 0.0
    %1972 = vmatprep.subr.mxu0 0.0
    %1973 = vmatpush1.msra.mxu0 0.0
    %1974 = vmatprep.subr.mxu0 0.0
    %1975 = vmatpush1.msra.mxu0 0.0
    %1976 = vmatprep.subr.mxu0 0.0
    %1977 = vmatpush1.msra.mxu0 0.0
    %1978 = vmatprep.subr.mxu0 0.0
    %1979 = vmatpush1.msra.mxu0 0.0
    %1980 = vmatprep.subr.mxu0 0.0
    %1981 = vmatpush1.msra.mxu0 0.0
    %1982 = vmatprep.subr.mxu0 0.0
    %1983 = vmatpush1.msra.mxu0 0.0
    %1984 = vmatprep.subr.mxu0 0.0
    %1985 = vmatpush1.msra.mxu0 0.0
    %1986 = vmatprep.subr.mxu0 0.0
    %1987 = vmatpush1.msra.mxu0 0.0
    %1988 = vmatprep.subr.mxu0 0.0
    %1989 = vmatpush1.msra.mxu0 0.0
    %1990 = vmatprep.subr.mxu0 0.0
    %1991 = vmatpush1.msra.mxu0 0.0
    %1992 = vmatprep.subr.mxu0 0.0
    %1993 = vmatpush1.msra.mxu0 0.0
    %1994 = vmatprep.subr.mxu0 0.0
    %1995 = vmatpush1.msra.mxu0 0.0
    %1996 = vmatprep.subr.mxu0 0.0
    %1997 = vmatpush1.msra.mxu0 0.0
    %1998 = vmatprep.subr.mxu0 0.0
    %1999 = vmatpush1.msra.mxu0 0.0
    %2000 = vmatprep.subr.mxu0 0.0
    %2001 = vmatpush1.msra.mxu0 0.0
    %2002 = vmatprep.subr.mxu0 0.0
    %2003 = vmatpush1.msra.mxu0 0.0
    %2004 = vmatprep.subr.mxu0 0.0
    %2005 = vmatpush1.msra.mxu0 0.0
    %2006 = vmatprep.subr.mxu0 0.0
    %2007 = vmatpush1.msra.mxu0 0.0
    %2008 = vmatprep.subr.mxu0 0.0
    %2009 = vmatpush1.msra.mxu0 0.0
    %2010 = vmatprep.subr.mxu0 0.0
    %2011 = vmatpush1.msra.mxu0 0.0
    %2012 = vmatprep.subr.mxu0 0.0
    %2013 = vmatpush1.msra.mxu0 0.0
    %2014 = vmatprep.subr.mxu0 0.0
    %2015 = vmatpush1.msra.mxu0 0.0
    %2016 = vmatprep.mubr.f32.mxu0 0.0
    %v2017 = vand.u32 %v1869, 4294901760
    %2018 = vmatmul.mubr.f32.gmra.mrb[0].mxu0 %v2017
    %v2019 = vpop.f32.mrb[0].mxu0
    %v2020 = vadd.f32 %v1944, %v2019
    %v2021 = vpop.f32.mrb[0].mxu0
    %2022 = vdwg.mxu0
    %2023 = vmatprep.subr.mxu0 0.0
    %v2024 = vand.u32 %v1865, 4294901760
    %v2025 = vsub.f32 %v1865, %v2024
    %2026 = vmatpush1.msra.mxu0 %v2025
    %2027 = vmatprep.subr.mxu0 0.0
    %2028 = vmatpush1.msra.mxu0 0.0
    %2029 = vmatprep.subr.mxu0 0.0
    %2030 = vmatpush1.msra.mxu0 0.0
    %2031 = vmatprep.subr.mxu0 0.0
    %2032 = vmatpush1.msra.mxu0 0.0
    %2033 = vmatprep.subr.mxu0 0.0
    %2034 = vmatpush1.msra.mxu0 0.0
    %2035 = vmatprep.subr.mxu0 0.0
    %2036 = vmatpush1.msra.mxu0 0.0
    %2037 = vmatprep.subr.mxu0 0.0
    %2038 = vmatpush1.msra.mxu0 0.0
    %2039 = vmatprep.subr.mxu0 0.0
    %2040 = vmatpush1.msra.mxu0 0.0
    %2041 = vmatprep.subr.mxu0 0.0
    %2042 = vmatpush1.msra.mxu0 0.0
    %2043 = vmatprep.subr.mxu0 0.0
    %2044 = vmatpush1.msra.mxu0 0.0
    %2045 = vmatprep.subr.mxu0 0.0
    %2046 = vmatpush1.msra.mxu0 0.0
    %2047 = vmatprep.subr.mxu0 0.0
    %2048 = vmatpush1.msra.mxu0 0.0
    %2049 = vmatprep.subr.mxu0 0.0
    %2050 = vmatpush1.msra.mxu0 0.0
    %2051 = vmatprep.subr.mxu0 0.0
    %2052 = vmatpush1.msra.mxu0 0.0
    %2053 = vmatprep.subr.mxu0 0.0
    %2054 = vmatpush1.msra.mxu0 0.0
    %2055 = vmatprep.subr.mxu0 0.0
    %2056 = vmatpush1.msra.mxu0 0.0
    %2057 = vmatprep.subr.mxu0 0.0
    %2058 = vmatpush1.msra.mxu0 0.0
    %2059 = vmatprep.subr.mxu0 0.0
    %2060 = vmatpush1.msra.mxu0 0.0
    %2061 = vmatprep.subr.mxu0 0.0
    %2062 = vmatpush1.msra.mxu0 0.0
    %2063 = vmatprep.subr.mxu0 0.0
    %2064 = vmatpush1.msra.mxu0 0.0
    %2065 = vmatprep.subr.mxu0 0.0
    %2066 = vmatpush1.msra.mxu0 0.0
    %2067 = vmatprep.subr.mxu0 0.0
    %2068 = vmatpush1.msra.mxu0 0.0
    %2069 = vmatprep.subr.mxu0 0.0
    %2070 = vmatpush1.msra.mxu0 0.0
    %2071 = vmatprep.subr.mxu0 0.0
    %2072 = vmatpush1.msra.mxu0 0.0
    %2073 = vmatprep.subr.mxu0 0.0
    %2074 = vmatpush1.msra.mxu0 0.0
    %2075 = vmatprep.subr.mxu0 0.0
    %2076 = vmatpush1.msra.mxu0 0.0
    %2077 = vmatprep.subr.mxu0 0.0
    %2078 = vmatpush1.msra.mxu0 0.0
    %2079 = vmatprep.subr.mxu0 0.0
    %2080 = vmatpush1.msra.mxu0 0.0
    %2081 = vmatprep.subr.mxu0 0.0
    %2082 = vmatpush1.msra.mxu0 0.0
    %2083 = vmatprep.subr.mxu0 0.0
    %2084 = vmatpush1.msra.mxu0 0.0
    %2085 = vmatprep.subr.mxu0 0.0
    %2086 = vmatpush1.msra.mxu0 0.0
    %2087 = vmatprep.subr.mxu0 0.0
    %2088 = vmatpush1.msra.mxu0 0.0
    %2089 = vmatprep.mubr.f32.mxu0 0.0
    %v2090 = vand.u32 %v1869, 4294901760
    %v2091 = vsub.f32 %v1869, %v2090
    %2092 = vmatmul.mubr.f32.gmra.mrb[0].mxu0 %v2091
    %v2093 = vpop.f32.mrb[0].mxu0
    %v2094 = vadd.f32 %v2020, %v2093
    %v2095 = vpop.f32.mrb[0].mxu0
    %2096 = vdwg.mxu0
    %2097 = vmatprep.subr.mxu0 0.0
    %v2098 = vand.u32 %v1865, 4294901760
    %2099 = vmatpush1.msra.mxu0 %v2098
    %2100 = vmatprep.subr.mxu0 0.0
    %2101 = vmatpush1.msra.mxu0 0.0
    %2102 = vmatprep.subr.mxu0 0.0
    %2103 = vmatpush1.msra.mxu0 0.0
    %2104 = vmatprep.subr.mxu0 0.0
    %2105 = vmatpush1.msra.mxu0 0.0
    %2106 = vmatprep.subr.mxu0 0.0
    %2107 = vmatpush1.msra.mxu0 0.0
    %2108 = vmatprep.subr.mxu0 0.0
    %2109 = vmatpush1.msra.mxu0 0.0
    %2110 = vmatprep.subr.mxu0 0.0
    %2111 = vmatpush1.msra.mxu0 0.0
    %2112 = vmatprep.subr.mxu0 0.0
    %2113 = vmatpush1.msra.mxu0 0.0
    %2114 = vmatprep.subr.mxu0 0.0
    %2115 = vmatpush1.msra.mxu0 0.0
    %2116 = vmatprep.subr.mxu0 0.0
    %2117 = vmatpush1.msra.mxu0 0.0
    %2118 = vmatprep.subr.mxu0 0.0
    %2119 = vmatpush1.msra.mxu0 0.0
    %2120 = vmatprep.subr.mxu0 0.0
    %2121 = vmatpush1.msra.mxu0 0.0
    %2122 = vmatprep.subr.mxu0 0.0
    %2123 = vmatpush1.msra.mxu0 0.0
    %2124 = vmatprep.subr.mxu0 0.0
    %2125 = vmatpush1.msra.mxu0 0.0
    %2126 = vmatprep.subr.mxu0 0.0
    %2127 = vmatpush1.msra.mxu0 0.0
    %2128 = vmatprep.subr.mxu0 0.0
    %2129 = vmatpush1.msra.mxu0 0.0
    %2130 = vmatprep.subr.mxu0 0.0
    %2131 = vmatpush1.msra.mxu0 0.0
    %2132 = vmatprep.subr.mxu0 0.0
    %2133 = vmatpush1.msra.mxu0 0.0
    %2134 = vmatprep.subr.mxu0 0.0
    %2135 = vmatpush1.msra.mxu0 0.0
    %2136 = vmatprep.subr.mxu0 0.0
    %2137 = vmatpush1.msra.mxu0 0.0
    %2138 = vmatprep.subr.mxu0 0.0
    %2139 = vmatpush1.msra.mxu0 0.0
    %2140 = vmatprep.subr.mxu0 0.0
    %2141 = vmatpush1.msra.mxu0 0.0
    %2142 = vmatprep.subr.mxu0 0.0
    %2143 = vmatpush1.msra.mxu0 0.0
    %2144 = vmatprep.subr.mxu0 0.0
    %2145 = vmatpush1.msra.mxu0 0.0
    %2146 = vmatprep.subr.mxu0 0.0
    %2147 = vmatpush1.msra.mxu0 0.0
    %2148 = vmatprep.subr.mxu0 0.0
    %2149 = vmatpush1.msra.mxu0 0.0
    %2150 = vmatprep.subr.mxu0 0.0
    %2151 = vmatpush1.msra.mxu0 0.0
    %2152 = vmatprep.subr.mxu0 0.0
    %2153 = vmatpush1.msra.mxu0 0.0
    %2154 = vmatprep.subr.mxu0 0.0
    %2155 = vmatpush1.msra.mxu0 0.0
    %2156 = vmatprep.subr.mxu0 0.0
    %2157 = vmatpush1.msra.mxu0 0.0
    %2158 = vmatprep.subr.mxu0 0.0
    %2159 = vmatpush1.msra.mxu0 0.0
    %2160 = vmatprep.subr.mxu0 0.0
    %2161 = vmatpush1.msra.mxu0 0.0
    %2162 = vmatprep.mubr.f32.mxu0 0.0
    %v2163 = vand.u32 %v1869, 4294901760
    %v2164 = vsub.f32 %v1869, %v2163
    %v2165 = vand.u32 %v2164, 4294901760
    %2166 = vmatmul.mubr.f32.gmra.mrb[0].mxu0 %v2165
    %v2167 = vpop.f32.mrb[0].mxu0
    %v2168 = vadd.f32 %v2094, %v2167
    %v2169 = vpop.f32.mrb[0].mxu0
    %2170 = vdwg.mxu0
    %2171 = vmatprep.subr.mxu0 0.0
    %v2172 = vand.u32 %v1865, 4294901760
    %v2173 = vsub.f32 %v1865, %v2172
    %v2174 = vand.u32 %v2173, 4294901760
    %2175 = vmatpush1.msra.mxu0 %v2174
    %2176 = vmatprep.subr.mxu0 0.0
    %2177 = vmatpush1.msra.mxu0 0.0
    %2178 = vmatprep.subr.mxu0 0.0
    %2179 = vmatpush1.msra.mxu0 0.0
    %2180 = vmatprep.subr.mxu0 0.0
    %2181 = vmatpush1.msra.mxu0 0.0
    %2182 = vmatprep.subr.mxu0 0.0
    %2183 = vmatpush1.msra.mxu0 0.0
    %2184 = vmatprep.subr.mxu0 0.0
    %2185 = vmatpush1.msra.mxu0 0.0
    %2186 = vmatprep.subr.mxu0 0.0
    %2187 = vmatpush1.msra.mxu0 0.0
    %2188 = vmatprep.subr.mxu0 0.0
    %2189 = vmatpush1.msra.mxu0 0.0
    %2190 = vmatprep.subr.mxu0 0.0
    %2191 = vmatpush1.msra.mxu0 0.0
    %2192 = vmatprep.subr.mxu0 0.0
    %2193 = vmatpush1.msra.mxu0 0.0
    %2194 = vmatprep.subr.mxu0 0.0
    %2195 = vmatpush1.msra.mxu0 0.0
    %2196 = vmatprep.subr.mxu0 0.0
    %2197 = vmatpush1.msra.mxu0 0.0
    %2198 = vmatprep.subr.mxu0 0.0
    %2199 = vmatpush1.msra.mxu0 0.0
    %2200 = vmatprep.subr.mxu0 0.0
    %2201 = vmatpush1.msra.mxu0 0.0
    %2202 = vmatprep.subr.mxu0 0.0
    %2203 = vmatpush1.msra.mxu0 0.0
    %2204 = vmatprep.subr.mxu0 0.0
    %2205 = vmatpush1.msra.mxu0 0.0
    %2206 = vmatprep.subr.mxu0 0.0
    %2207 = vmatpush1.msra.mxu0 0.0
    %2208 = vmatprep.subr.mxu0 0.0
    %2209 = vmatpush1.msra.mxu0 0.0
    %2210 = vmatprep.subr.mxu0 0.0
    %2211 = vmatpush1.msra.mxu0 0.0
    %2212 = vmatprep.subr.mxu0 0.0
    %2213 = vmatpush1.msra.mxu0 0.0
    %2214 = vmatprep.subr.mxu0 0.0
    %2215 = vmatpush1.msra.mxu0 0.0
    %2216 = vmatprep.subr.mxu0 0.0
    %2217 = vmatpush1.msra.mxu0 0.0
    %2218 = vmatprep.subr.mxu0 0.0
    %2219 = vmatpush1.msra.mxu0 0.0
    %2220 = vmatprep.subr.mxu0 0.0
    %2221 = vmatpush1.msra.mxu0 0.0
    %2222 = vmatprep.subr.mxu0 0.0
    %2223 = vmatpush1.msra.mxu0 0.0
    %2224 = vmatprep.subr.mxu0 0.0
    %2225 = vmatpush1.msra.mxu0 0.0
    %2226 = vmatprep.subr.mxu0 0.0
    %2227 = vmatpush1.msra.mxu0 0.0
    %2228 = vmatprep.subr.mxu0 0.0
    %2229 = vmatpush1.msra.mxu0 0.0
    %2230 = vmatprep.subr.mxu0 0.0
    %2231 = vmatpush1.msra.mxu0 0.0
    %2232 = vmatprep.subr.mxu0 0.0
    %2233 = vmatpush1.msra.mxu0 0.0
    %2234 = vmatprep.subr.mxu0 0.0
    %2235 = vmatpush1.msra.mxu0 0.0
    %2236 = vmatprep.subr.mxu0 0.0
    %2237 = vmatpush1.msra.mxu0 0.0
    %2238 = vmatprep.mubr.f32.mxu0 0.0
    %v2239 = vand.u32 %v1869, 4294901760
    %2240 = vmatmul.mubr.f32.gmra.mrb[0].mxu0 %v2239
    %v2241 = vpop.f32.mrb[0].mxu0
    %v2242 = vadd.f32 %v2168, %v2241
    %v2243 = vpop.f32.mrb[0].mxu0
    %2244 = vdwg.mxu0
    %2245 = vmatprep.subr.mxu0 0.0
    %v2246 = vand.u32 %v1865, 4294901760
    %2247 = vmatpush1.msra.mxu0 %v2246
    %2248 = vmatprep.subr.mxu0 0.0
    %2249 = vmatpush1.msra.mxu0 0.0
    %2250 = vmatprep.subr.mxu0 0.0
    %2251 = vmatpush1.msra.mxu0 0.0
    %2252 = vmatprep.subr.mxu0 0.0
    %2253 = vmatpush1.msra.mxu0 0.0
    %2254 = vmatprep.subr.mxu0 0.0
    %2255 = vmatpush1.msra.mxu0 0.0
    %2256 = vmatprep.subr.mxu0 0.0
    %2257 = vmatpush1.msra.mxu0 0.0
    %2258 = vmatprep.subr.mxu0 0.0
    %2259 = vmatpush1.msra.mxu0 0.0
    %2260 = vmatprep.subr.mxu0 0.0
    %2261 = vmatpush1.msra.mxu0 0.0
    %2262 = vmatprep.subr.mxu0 0.0
    %2263 = vmatpush1.msra.mxu0 0.0
    %2264 = vmatprep.subr.mxu0 0.0
    %2265 = vmatpush1.msra.mxu0 0.0
    %2266 = vmatprep.subr.mxu0 0.0
    %2267 = vmatpush1.msra.mxu0 0.0
    %2268 = vmatprep.subr.mxu0 0.0
    %2269 = vmatpush1.msra.mxu0 0.0
    %2270 = vmatprep.subr.mxu0 0.0
    %2271 = vmatpush1.msra.mxu0 0.0
    %2272 = vmatprep.subr.mxu0 0.0
    %2273 = vmatpush1.msra.mxu0 0.0
    %2274 = vmatprep.subr.mxu0 0.0
    %2275 = vmatpush1.msra.mxu0 0.0
    %2276 = vmatprep.subr.mxu0 0.0
    %2277 = vmatpush1.msra.mxu0 0.0
    %2278 = vmatprep.subr.mxu0 0.0
    %2279 = vmatpush1.msra.mxu0 0.0
    %2280 = vmatprep.subr.mxu0 0.0
    %2281 = vmatpush1.msra.mxu0 0.0
    %2282 = vmatprep.subr.mxu0 0.0
    %2283 = vmatpush1.msra.mxu0 0.0
    %2284 = vmatprep.subr.mxu0 0.0
    %2285 = vmatpush1.msra.mxu0 0.0
    %2286 = vmatprep.subr.mxu0 0.0
    %2287 = vmatpush1.msra.mxu0 0.0
    %2288 = vmatprep.subr.mxu0 0.0
    %2289 = vmatpush1.msra.mxu0 0.0
    %2290 = vmatprep.subr.mxu0 0.0
    %2291 = vmatpush1.msra.mxu0 0.0
    %2292 = vmatprep.subr.mxu0 0.0
    %2293 = vmatpush1.msra.mxu0 0.0
    %2294 = vmatprep.subr.mxu0 0.0
    %2295 = vmatpush1.msra.mxu0 0.0
    %2296 = vmatprep.subr.mxu0 0.0
    %2297 = vmatpush1.msra.mxu0 0.0
    %2298 = vmatprep.subr.mxu0 0.0
    %2299 = vmatpush1.msra.mxu0 0.0
    %2300 = vmatprep.subr.mxu0 0.0
    %2301 = vmatpush1.msra.mxu0 0.0
    %2302 = vmatprep.subr.mxu0 0.0
    %2303 = vmatpush1.msra.mxu0 0.0
    %2304 = vmatprep.subr.mxu0 0.0
    %2305 = vmatpush1.msra.mxu0 0.0
    %2306 = vmatprep.subr.mxu0 0.0
    %2307 = vmatpush1.msra.mxu0 0.0
    %2308 = vmatprep.subr.mxu0 0.0
    %2309 = vmatpush1.msra.mxu0 0.0
    %2310 = vmatprep.mubr.f32.mxu0 0.0
    %v2311 = vand.u32 %v1869, 4294901760
    %2312 = vmatmul.mubr.f32.gmra.mrb[0].mxu0 %v2311
    %v2313 = vpop.f32.mrb[0].mxu0
    %v2314 = vadd.f32 %v2242, %v2313
    %v2315 = vpop.f32.mrb[0].mxu0
    %2316 = vdwg.mxu0
    %v2317 = vadd.f32 %v1859, %v2314
    %2318 = vrot.lane.b32.xlu0 %v32, 123
    %v2319 = vpop.permute.xlu0 %2318
    %2320 = vrot.lane.b32.xlu0 %v33, 123
    %v2321 = vpop.permute.xlu0 %2320
    %vm2322 = vcmp.lt.s32.totalorder %v40, 123
    %v2323 = vsel %vm2322, %v2319, %v2321
    %s2324 = scalar_lea.vmem %s2, 40
    %v2325 = vld [vmem:[%s2324] sm:$0xff]
    %v2327 = vsel %vm45, %v2325, 0
    %2329 = vmatprep.subr.mxu0 0.0
    %v2330 = vand.u32 %v2323, 4294901760
    %2331 = vmatpush1.msra.mxu0 %v2330
    %2332 = vmatprep.subr.mxu0 0.0
    %2333 = vmatpush1.msra.mxu0 0.0
    %2334 = vmatprep.subr.mxu0 0.0
    %2335 = vmatpush1.msra.mxu0 0.0
    %2336 = vmatprep.subr.mxu0 0.0
    %2337 = vmatpush1.msra.mxu0 0.0
    %2338 = vmatprep.subr.mxu0 0.0
    %2339 = vmatpush1.msra.mxu0 0.0
    %2340 = vmatprep.subr.mxu0 0.0
    %2341 = vmatpush1.msra.mxu0 0.0
    %2342 = vmatprep.subr.mxu0 0.0
    %2343 = vmatpush1.msra.mxu0 0.0
    %2344 = vmatprep.subr.mxu0 0.0
    %2345 = vmatpush1.msra.mxu0 0.0
    %2346 = vmatprep.subr.mxu0 0.0
    %2347 = vmatpush1.msra.mxu0 0.0
    %2348 = vmatprep.subr.mxu0 0.0
    %2349 = vmatpush1.msra.mxu0 0.0
    %2350 = vmatprep.subr.mxu0 0.0
    %2351 = vmatpush1.msra.mxu0 0.0
    %2352 = vmatprep.subr.mxu0 0.0
    %2353 = vmatpush1.msra.mxu0 0.0
    %2354 = vmatprep.subr.mxu0 0.0
    %2355 = vmatpush1.msra.mxu0 0.0
    %2356 = vmatprep.subr.mxu0 0.0
    %2357 = vmatpush1.msra.mxu0 0.0
    %2358 = vmatprep.subr.mxu0 0.0
    %2359 = vmatpush1.msra.mxu0 0.0
    %2360 = vmatprep.subr.mxu0 0.0
    %2361 = vmatpush1.msra.mxu0 0.0
    %2362 = vmatprep.subr.mxu0 0.0
    %2363 = vmatpush1.msra.mxu0 0.0
    %2364 = vmatprep.subr.mxu0 0.0
    %2365 = vmatpush1.msra.mxu0 0.0
    %2366 = vmatprep.subr.mxu0 0.0
    %2367 = vmatpush1.msra.mxu0 0.0
    %2368 = vmatprep.subr.mxu0 0.0
    %2369 = vmatpush1.msra.mxu0 0.0
    %2370 = vmatprep.subr.mxu0 0.0
    %2371 = vmatpush1.msra.mxu0 0.0
    %2372 = vmatprep.subr.mxu0 0.0
    %2373 = vmatpush1.msra.mxu0 0.0
    %2374 = vmatprep.subr.mxu0 0.0
    %2375 = vmatpush1.msra.mxu0 0.0
    %2376 = vmatprep.subr.mxu0 0.0
    %2377 = vmatpush1.msra.mxu0 0.0
    %2378 = vmatprep.subr.mxu0 0.0
    %2379 = vmatpush1.msra.mxu0 0.0
    %2380 = vmatprep.subr.mxu0 0.0
    %2381 = vmatpush1.msra.mxu0 0.0
    %2382 = vmatprep.subr.mxu0 0.0
    %2383 = vmatpush1.msra.mxu0 0.0
    %2384 = vmatprep.subr.mxu0 0.0
    %2385 = vmatpush1.msra.mxu0 0.0
    %2386 = vmatprep.subr.mxu0 0.0
    %2387 = vmatpush1.msra.mxu0 0.0
    %2388 = vmatprep.subr.mxu0 0.0
    %2389 = vmatpush1.msra.mxu0 0.0
    %2390 = vmatprep.subr.mxu0 0.0
    %2391 = vmatpush1.msra.mxu0 0.0
    %2392 = vmatprep.subr.mxu0 0.0
    %2393 = vmatpush1.msra.mxu0 0.0
    %2394 = vmatprep.mubr.f32.mxu0 0.0
    %v2395 = vand.u32 %v2327, 4294901760
    %v2396 = vsub.f32 %v2327, %v2395
    %v2397 = vand.u32 %v2396, 4294901760
    %v2398 = vsub.f32 %v2396, %v2397
    %v2399 = vand.u32 %v2398, 4294901760
    %2400 = vmatmul.mubr.f32.gmra.mrb[0].mxu0 %v2399
    %v2401 = vpop.f32.mrb[0].mxu0
    %v2402 = vadd.f32 0.0, %v2401
    %v2403 = vpop.f32.mrb[0].mxu0
    %2404 = vdwg.mxu0
    %2405 = vmatprep.subr.mxu0 0.0
    %v2406 = vand.u32 %v2323, 4294901760
    %v2407 = vsub.f32 %v2323, %v2406
    %v2408 = vand.u32 %v2407, 4294901760
    %v2409 = vsub.f32 %v2407, %v2408
    %v2410 = vand.u32 %v2409, 4294901760
    %2411 = vmatpush1.msra.mxu0 %v2410
    %2412 = vmatprep.subr.mxu0 0.0
    %2413 = vmatpush1.msra.mxu0 0.0
    %2414 = vmatprep.subr.mxu0 0.0
    %2415 = vmatpush1.msra.mxu0 0.0
    %2416 = vmatprep.subr.mxu0 0.0
    %2417 = vmatpush1.msra.mxu0 0.0
    %2418 = vmatprep.subr.mxu0 0.0
    %2419 = vmatpush1.msra.mxu0 0.0
    %2420 = vmatprep.subr.mxu0 0.0
    %2421 = vmatpush1.msra.mxu0 0.0
    %2422 = vmatprep.subr.mxu0 0.0
    %2423 = vmatpush1.msra.mxu0 0.0
    %2424 = vmatprep.subr.mxu0 0.0
    %2425 = vmatpush1.msra.mxu0 0.0
    %2426 = vmatprep.subr.mxu0 0.0
    %2427 = vmatpush1.msra.mxu0 0.0
    %2428 = vmatprep.subr.mxu0 0.0
    %2429 = vmatpush1.msra.mxu0 0.0
    %2430 = vmatprep.subr.mxu0 0.0
    %2431 = vmatpush1.msra.mxu0 0.0
    %2432 = vmatprep.subr.mxu0 0.0
    %2433 = vmatpush1.msra.mxu0 0.0
    %2434 = vmatprep.subr.mxu0 0.0
    %2435 = vmatpush1.msra.mxu0 0.0
    %2436 = vmatprep.subr.mxu0 0.0
    %2437 = vmatpush1.msra.mxu0 0.0
    %2438 = vmatprep.subr.mxu0 0.0
    %2439 = vmatpush1.msra.mxu0 0.0
    %2440 = vmatprep.subr.mxu0 0.0
    %2441 = vmatpush1.msra.mxu0 0.0
    %2442 = vmatprep.subr.mxu0 0.0
    %2443 = vmatpush1.msra.mxu0 0.0
    %2444 = vmatprep.subr.mxu0 0.0
    %2445 = vmatpush1.msra.mxu0 0.0
    %2446 = vmatprep.subr.mxu0 0.0
    %2447 = vmatpush1.msra.mxu0 0.0
    %2448 = vmatprep.subr.mxu0 0.0
    %2449 = vmatpush1.msra.mxu0 0.0
    %2450 = vmatprep.subr.mxu0 0.0
    %2451 = vmatpush1.msra.mxu0 0.0
    %2452 = vmatprep.subr.mxu0 0.0
    %2453 = vmatpush1.msra.mxu0 0.0
    %2454 = vmatprep.subr.mxu0 0.0
    %2455 = vmatpush1.msra.mxu0 0.0
    %2456 = vmatprep.subr.mxu0 0.0
    %2457 = vmatpush1.msra.mxu0 0.0
    %2458 = vmatprep.subr.mxu0 0.0
    %2459 = vmatpush1.msra.mxu0 0.0
    %2460 = vmatprep.subr.mxu0 0.0
    %2461 = vmatpush1.msra.mxu0 0.0
    %2462 = vmatprep.subr.mxu0 0.0
    %2463 = vmatpush1.msra.mxu0 0.0
    %2464 = vmatprep.subr.mxu0 0.0
    %2465 = vmatpush1.msra.mxu0 0.0
    %2466 = vmatprep.subr.mxu0 0.0
    %2467 = vmatpush1.msra.mxu0 0.0
    %2468 = vmatprep.subr.mxu0 0.0
    %2469 = vmatpush1.msra.mxu0 0.0
    %2470 = vmatprep.subr.mxu0 0.0
    %2471 = vmatpush1.msra.mxu0 0.0
    %2472 = vmatprep.subr.mxu0 0.0
    %2473 = vmatpush1.msra.mxu0 0.0
    %2474 = vmatprep.mubr.f32.mxu0 0.0
    %v2475 = vand.u32 %v2327, 4294901760
    %2476 = vmatmul.mubr.f32.gmra.mrb[0].mxu0 %v2475
    %v2477 = vpop.f32.mrb[0].mxu0
    %v2478 = vadd.f32 %v2402, %v2477
    %v2479 = vpop.f32.mrb[0].mxu0
    %2480 = vdwg.mxu0
    %2481 = vmatprep.subr.mxu0 0.0
    %v2482 = vand.u32 %v2323, 4294901760
    %v2483 = vsub.f32 %v2323, %v2482
    %2484 = vmatpush1.msra.mxu0 %v2483
    %2485 = vmatprep.subr.mxu0 0.0
    %2486 = vmatpush1.msra.mxu0 0.0
    %2487 = vmatprep.subr.mxu0 0.0
    %2488 = vmatpush1.msra.mxu0 0.0
    %2489 = vmatprep.subr.mxu0 0.0
    %2490 = vmatpush1.msra.mxu0 0.0
    %2491 = vmatprep.subr.mxu0 0.0
    %2492 = vmatpush1.msra.mxu0 0.0
    %2493 = vmatprep.subr.mxu0 0.0
    %2494 = vmatpush1.msra.mxu0 0.0
    %2495 = vmatprep.subr.mxu0 0.0
    %2496 = vmatpush1.msra.mxu0 0.0
    %2497 = vmatprep.subr.mxu0 0.0
    %2498 = vmatpush1.msra.mxu0 0.0
    %2499 = vmatprep.subr.mxu0 0.0
    %2500 = vmatpush1.msra.mxu0 0.0
    %2501 = vmatprep.subr.mxu0 0.0
    %2502 = vmatpush1.msra.mxu0 0.0
    %2503 = vmatprep.subr.mxu0 0.0
    %2504 = vmatpush1.msra.mxu0 0.0
    %2505 = vmatprep.subr.mxu0 0.0
    %2506 = vmatpush1.msra.mxu0 0.0
    %2507 = vmatprep.subr.mxu0 0.0
    %2508 = vmatpush1.msra.mxu0 0.0
    %2509 = vmatprep.subr.mxu0 0.0
    %2510 = vmatpush1.msra.mxu0 0.0
    %2511 = vmatprep.subr.mxu0 0.0
    %2512 = vmatpush1.msra.mxu0 0.0
    %2513 = vmatprep.subr.mxu0 0.0
    %2514 = vmatpush1.msra.mxu0 0.0
    %2515 = vmatprep.subr.mxu0 0.0
    %2516 = vmatpush1.msra.mxu0 0.0
    %2517 = vmatprep.subr.mxu0 0.0
    %2518 = vmatpush1.msra.mxu0 0.0
    %2519 = vmatprep.subr.mxu0 0.0
    %2520 = vmatpush1.msra.mxu0 0.0
    %2521 = vmatprep.subr.mxu0 0.0
    %2522 = vmatpush1.msra.mxu0 0.0
    %2523 = vmatprep.subr.mxu0 0.0
    %2524 = vmatpush1.msra.mxu0 0.0
    %2525 = vmatprep.subr.mxu0 0.0
    %2526 = vmatpush1.msra.mxu0 0.0
    %2527 = vmatprep.subr.mxu0 0.0
    %2528 = vmatpush1.msra.mxu0 0.0
    %2529 = vmatprep.subr.mxu0 0.0
    %2530 = vmatpush1.msra.mxu0 0.0
    %2531 = vmatprep.subr.mxu0 0.0
    %2532 = vmatpush1.msra.mxu0 0.0
    %2533 = vmatprep.subr.mxu0 0.0
    %2534 = vmatpush1.msra.mxu0 0.0
    %2535 = vmatprep.subr.mxu0 0.0
    %2536 = vmatpush1.msra.mxu0 0.0
    %2537 = vmatprep.subr.mxu0 0.0
    %2538 = vmatpush1.msra.mxu0 0.0
    %2539 = vmatprep.subr.mxu0 0.0
    %2540 = vmatpush1.msra.mxu0 0.0
    %2541 = vmatprep.subr.mxu0 0.0
    %2542 = vmatpush1.msra.mxu0 0.0
    %2543 = vmatprep.subr.mxu0 0.0
    %2544 = vmatpush1.msra.mxu0 0.0
    %2545 = vmatprep.subr.mxu0 0.0
    %2546 = vmatpush1.msra.mxu0 0.0
    %2547 = vmatprep.mubr.f32.mxu0 0.0
    %v2548 = vand.u32 %v2327, 4294901760
    %v2549 = vsub.f32 %v2327, %v2548
    %2550 = vmatmul.mubr.f32.gmra.mrb[0].mxu0 %v2549
    %v2551 = vpop.f32.mrb[0].mxu0
    %v2552 = vadd.f32 %v2478, %v2551
    %v2553 = vpop.f32.mrb[0].mxu0
    %2554 = vdwg.mxu0
    %2555 = vmatprep.subr.mxu0 0.0
    %v2556 = vand.u32 %v2323, 4294901760
    %2557 = vmatpush1.msra.mxu0 %v2556
    %2558 = vmatprep.subr.mxu0 0.0
    %2559 = vmatpush1.msra.mxu0 0.0
    %2560 = vmatprep.subr.mxu0 0.0
    %2561 = vmatpush1.msra.mxu0 0.0
    %2562 = vmatprep.subr.mxu0 0.0
    %2563 = vmatpush1.msra.mxu0 0.0
    %2564 = vmatprep.subr.mxu0 0.0
    %2565 = vmatpush1.msra.mxu0 0.0
    %2566 = vmatprep.subr.mxu0 0.0
    %2567 = vmatpush1.msra.mxu0 0.0
    %2568 = vmatprep.subr.mxu0 0.0
    %2569 = vmatpush1.msra.mxu0 0.0
    %2570 = vmatprep.subr.mxu0 0.0
    %2571 = vmatpush1.msra.mxu0 0.0
    %2572 = vmatprep.subr.mxu0 0.0
    %2573 = vmatpush1.msra.mxu0 0.0
    %2574 = vmatprep.subr.mxu0 0.0
    %2575 = vmatpush1.msra.mxu0 0.0
    %2576 = vmatprep.subr.mxu0 0.0
    %2577 = vmatpush1.msra.mxu0 0.0
    %2578 = vmatprep.subr.mxu0 0.0
    %2579 = vmatpush1.msra.mxu0 0.0
    %2580 = vmatprep.subr.mxu0 0.0
    %2581 = vmatpush1.msra.mxu0 0.0
    %2582 = vmatprep.subr.mxu0 0.0
    %2583 = vmatpush1.msra.mxu0 0.0
    %2584 = vmatprep.subr.mxu0 0.0
    %2585 = vmatpush1.msra.mxu0 0.0
    %2586 = vmatprep.subr.mxu0 0.0
    %2587 = vmatpush1.msra.mxu0 0.0
    %2588 = vmatprep.subr.mxu0 0.0
    %2589 = vmatpush1.msra.mxu0 0.0
    %2590 = vmatprep.subr.mxu0 0.0
    %2591 = vmatpush1.msra.mxu0 0.0
    %2592 = vmatprep.subr.mxu0 0.0
    %2593 = vmatpush1.msra.mxu0 0.0
    %2594 = vmatprep.subr.mxu0 0.0
    %2595 = vmatpush1.msra.mxu0 0.0
    %2596 = vmatprep.subr.mxu0 0.0
    %2597 = vmatpush1.msra.mxu0 0.0
    %2598 = vmatprep.subr.mxu0 0.0
    %2599 = vmatpush1.msra.mxu0 0.0
    %2600 = vmatprep.subr.mxu0 0.0
    %2601 = vmatpush1.msra.mxu0 0.0
    %2602 = vmatprep.subr.mxu0 0.0
    %2603 = vmatpush1.msra.mxu0 0.0
    %2604 = vmatprep.subr.mxu0 0.0
    %2605 = vmatpush1.msra.mxu0 0.0
    %2606 = vmatprep.subr.mxu0 0.0
    %2607 = vmatpush1.msra.mxu0 0.0
    %2608 = vmatprep.subr.mxu0 0.0
    %2609 = vmatpush1.msra.mxu0 0.0
    %2610 = vmatprep.subr.mxu0 0.0
    %2611 = vmatpush1.msra.mxu0 0.0
    %2612 = vmatprep.subr.mxu0 0.0
    %2613 = vmatpush1.msra.mxu0 0.0
    %2614 = vmatprep.subr.mxu0 0.0
    %2615 = vmatpush1.msra.mxu0 0.0
    %2616 = vmatprep.subr.mxu0 0.0
    %2617 = vmatpush1.msra.mxu0 0.0
    %2618 = vmatprep.subr.mxu0 0.0
    %2619 = vmatpush1.msra.mxu0 0.0
    %2620 = vmatprep.mubr.f32.mxu0 0.0
    %v2621 = vand.u32 %v2327, 4294901760
    %v2622 = vsub.f32 %v2327, %v2621
    %v2623 = vand.u32 %v2622, 4294901760
    %2624 = vmatmul.mubr.f32.gmra.mrb[0].mxu0 %v2623
    %v2625 = vpop.f32.mrb[0].mxu0
    %v2626 = vadd.f32 %v2552, %v2625
    %v2627 = vpop.f32.mrb[0].mxu0
    %2628 = vdwg.mxu0
    %2629 = vmatprep.subr.mxu0 0.0
    %v2630 = vand.u32 %v2323, 4294901760
    %v2631 = vsub.f32 %v2323, %v2630
    %v2632 = vand.u32 %v2631, 4294901760
    %2633 = vmatpush1.msra.mxu0 %v2632
    %2634 = vmatprep.subr.mxu0 0.0
    %2635 = vmatpush1.msra.mxu0 0.0
    %2636 = vmatprep.subr.mxu0 0.0
    %2637 = vmatpush1.msra.mxu0 0.0
    %2638 = vmatprep.subr.mxu0 0.0
    %2639 = vmatpush1.msra.mxu0 0.0
    %2640 = vmatprep.subr.mxu0 0.0
    %2641 = vmatpush1.msra.mxu0 0.0
    %2642 = vmatprep.subr.mxu0 0.0
    %2643 = vmatpush1.msra.mxu0 0.0
    %2644 = vmatprep.subr.mxu0 0.0
    %2645 = vmatpush1.msra.mxu0 0.0
    %2646 = vmatprep.subr.mxu0 0.0
    %2647 = vmatpush1.msra.mxu0 0.0
    %2648 = vmatprep.subr.mxu0 0.0
    %2649 = vmatpush1.msra.mxu0 0.0
    %2650 = vmatprep.subr.mxu0 0.0
    %2651 = vmatpush1.msra.mxu0 0.0
    %2652 = vmatprep.subr.mxu0 0.0
    %2653 = vmatpush1.msra.mxu0 0.0
    %2654 = vmatprep.subr.mxu0 0.0
    %2655 = vmatpush1.msra.mxu0 0.0
    %2656 = vmatprep.subr.mxu0 0.0
    %2657 = vmatpush1.msra.mxu0 0.0
    %2658 = vmatprep.subr.mxu0 0.0
    %2659 = vmatpush1.msra.mxu0 0.0
    %2660 = vmatprep.subr.mxu0 0.0
    %2661 = vmatpush1.msra.mxu0 0.0
    %2662 = vmatprep.subr.mxu0 0.0
    %2663 = vmatpush1.msra.mxu0 0.0
    %2664 = vmatprep.subr.mxu0 0.0
    %2665 = vmatpush1.msra.mxu0 0.0
    %2666 = vmatprep.subr.mxu0 0.0
    %2667 = vmatpush1.msra.mxu0 0.0
    %2668 = vmatprep.subr.mxu0 0.0
    %2669 = vmatpush1.msra.mxu0 0.0
    %2670 = vmatprep.subr.mxu0 0.0
    %2671 = vmatpush1.msra.mxu0 0.0
    %2672 = vmatprep.subr.mxu0 0.0
    %2673 = vmatpush1.msra.mxu0 0.0
    %2674 = vmatprep.subr.mxu0 0.0
    %2675 = vmatpush1.msra.mxu0 0.0
    %2676 = vmatprep.subr.mxu0 0.0
    %2677 = vmatpush1.msra.mxu0 0.0
    %2678 = vmatprep.subr.mxu0 0.0
    %2679 = vmatpush1.msra.mxu0 0.0
    %2680 = vmatprep.subr.mxu0 0.0
    %2681 = vmatpush1.msra.mxu0 0.0
    %2682 = vmatprep.subr.mxu0 0.0
    %2683 = vmatpush1.msra.mxu0 0.0
    %2684 = vmatprep.subr.mxu0 0.0
    %2685 = vmatpush1.msra.mxu0 0.0
    %2686 = vmatprep.subr.mxu0 0.0
    %2687 = vmatpush1.msra.mxu0 0.0
    %2688 = vmatprep.subr.mxu0 0.0
    %2689 = vmatpush1.msra.mxu0 0.0
    %2690 = vmatprep.subr.mxu0 0.0
    %2691 = vmatpush1.msra.mxu0 0.0
    %2692 = vmatprep.subr.mxu0 0.0
    %2693 = vmatpush1.msra.mxu0 0.0
    %2694 = vmatprep.subr.mxu0 0.0
    %2695 = vmatpush1.msra.mxu0 0.0
    %2696 = vmatprep.mubr.f32.mxu0 0.0
    %v2697 = vand.u32 %v2327, 4294901760
    %2698 = vmatmul.mubr.f32.gmra.mrb[0].mxu0 %v2697
    %v2699 = vpop.f32.mrb[0].mxu0
    %v2700 = vadd.f32 %v2626, %v2699
    %v2701 = vpop.f32.mrb[0].mxu0
    %2702 = vdwg.mxu0
    %2703 = vmatprep.subr.mxu0 0.0
    %v2704 = vand.u32 %v2323, 4294901760
    %2705 = vmatpush1.msra.mxu0 %v2704
    %2706 = vmatprep.subr.mxu0 0.0
    %2707 = vmatpush1.msra.mxu0 0.0
    %2708 = vmatprep.subr.mxu0 0.0
    %2709 = vmatpush1.msra.mxu0 0.0
    %2710 = vmatprep.subr.mxu0 0.0
    %2711 = vmatpush1.msra.mxu0 0.0
    %2712 = vmatprep.subr.mxu0 0.0
    %2713 = vmatpush1.msra.mxu0 0.0
    %2714 = vmatprep.subr.mxu0 0.0
    %2715 = vmatpush1.msra.mxu0 0.0
    %2716 = vmatprep.subr.mxu0 0.0
    %2717 = vmatpush1.msra.mxu0 0.0
    %2718 = vmatprep.subr.mxu0 0.0
    %2719 = vmatpush1.msra.mxu0 0.0
    %2720 = vmatprep.subr.mxu0 0.0
    %2721 = vmatpush1.msra.mxu0 0.0
    %2722 = vmatprep.subr.mxu0 0.0
    %2723 = vmatpush1.msra.mxu0 0.0
    %2724 = vmatprep.subr.mxu0 0.0
    %2725 = vmatpush1.msra.mxu0 0.0
    %2726 = vmatprep.subr.mxu0 0.0
    %2727 = vmatpush1.msra.mxu0 0.0
    %2728 = vmatprep.subr.mxu0 0.0
    %2729 = vmatpush1.msra.mxu0 0.0
    %2730 = vmatprep.subr.mxu0 0.0
    %2731 = vmatpush1.msra.mxu0 0.0
    %2732 = vmatprep.subr.mxu0 0.0
    %2733 = vmatpush1.msra.mxu0 0.0
    %2734 = vmatprep.subr.mxu0 0.0
    %2735 = vmatpush1.msra.mxu0 0.0
    %2736 = vmatprep.subr.mxu0 0.0
    %2737 = vmatpush1.msra.mxu0 0.0
    %2738 = vmatprep.subr.mxu0 0.0
    %2739 = vmatpush1.msra.mxu0 0.0
    %2740 = vmatprep.subr.mxu0 0.0
    %2741 = vmatpush1.msra.mxu0 0.0
    %2742 = vmatprep.subr.mxu0 0.0
    %2743 = vmatpush1.msra.mxu0 0.0
    %2744 = vmatprep.subr.mxu0 0.0
    %2745 = vmatpush1.msra.mxu0 0.0
    %2746 = vmatprep.subr.mxu0 0.0
    %2747 = vmatpush1.msra.mxu0 0.0
    %2748 = vmatprep.subr.mxu0 0.0
    %2749 = vmatpush1.msra.mxu0 0.0
    %2750 = vmatprep.subr.mxu0 0.0
    %2751 = vmatpush1.msra.mxu0 0.0
    %2752 = vmatprep.subr.mxu0 0.0
    %2753 = vmatpush1.msra.mxu0 0.0
    %2754 = vmatprep.subr.mxu0 0.0
    %2755 = vmatpush1.msra.mxu0 0.0
    %2756 = vmatprep.subr.mxu0 0.0
    %2757 = vmatpush1.msra.mxu0 0.0
    %2758 = vmatprep.subr.mxu0 0.0
    %2759 = vmatpush1.msra.mxu0 0.0
    %2760 = vmatprep.subr.mxu0 0.0
    %2761 = vmatpush1.msra.mxu0 0.0
    %2762 = vmatprep.subr.mxu0 0.0
    %2763 = vmatpush1.msra.mxu0 0.0
    %2764 = vmatprep.subr.mxu0 0.0
    %2765 = vmatpush1.msra.mxu0 0.0
    %2766 = vmatprep.subr.mxu0 0.0
    %2767 = vmatpush1.msra.mxu0 0.0
    %2768 = vmatprep.mubr.f32.mxu0 0.0
    %v2769 = vand.u32 %v2327, 4294901760
    %2770 = vmatmul.mubr.f32.gmra.mrb[0].mxu0 %v2769
    %v2771 = vpop.f32.mrb[0].mxu0
    %v2772 = vadd.f32 %v2700, %v2771
    %v2773 = vpop.f32.mrb[0].mxu0
    %2774 = vdwg.mxu0
    %v2775 = vadd.f32 %v2317, %v2772
    %2776 = vrot.lane.b32.xlu0 %v32, 122
    %v2777 = vpop.permute.xlu0 %2776
    %2778 = vrot.lane.b32.xlu0 %v33, 122
    %v2779 = vpop.permute.xlu0 %2778
    %vm2780 = vcmp.lt.s32.totalorder %v40, 122
    %v2781 = vsel %vm2780, %v2777, %v2779
    %s2782 = scalar_lea.vmem %s2, 48
    %v2783 = vld [vmem:[%s2782] sm:$0xff]
    %v2785 = vsel %vm45, %v2783, 0
    %2787 = vmatprep.subr.mxu0 0.0
    %v2788 = vand.u32 %v2781, 4294901760
    %2789 = vmatpush1.msra.mxu0 %v2788
    %2790 = vmatprep.subr.mxu0 0.0
    %2791 = vmatpush1.msra.mxu0 0.0
    %2792 = vmatprep.subr.mxu0 0.0
    %2793 = vmatpush1.msra.mxu0 0.0
    %2794 = vmatprep.subr.mxu0 0.0
    %2795 = vmatpush1.msra.mxu0 0.0
    %2796 = vmatprep.subr.mxu0 0.0
    %2797 = vmatpush1.msra.mxu0 0.0
    %2798 = vmatprep.subr.mxu0 0.0
    %2799 = vmatpush1.msra.mxu0 0.0
    %2800 = vmatprep.subr.mxu0 0.0
    %2801 = vmatpush1.msra.mxu0 0.0
    %2802 = vmatprep.subr.mxu0 0.0
    %2803 = vmatpush1.msra.mxu0 0.0
    %2804 = vmatprep.subr.mxu0 0.0
    %2805 = vmatpush1.msra.mxu0 0.0
    %2806 = vmatprep.subr.mxu0 0.0
    %2807 = vmatpush1.msra.mxu0 0.0
    %2808 = vmatprep.subr.mxu0 0.0
    %2809 = vmatpush1.msra.mxu0 0.0
    %2810 = vmatprep.subr.mxu0 0.0
    %2811 = vmatpush1.msra.mxu0 0.0
    %2812 = vmatprep.subr.mxu0 0.0
    %2813 = vmatpush1.msra.mxu0 0.0
    %2814 = vmatprep.subr.mxu0 0.0
    %2815 = vmatpush1.msra.mxu0 0.0
    %2816 = vmatprep.subr.mxu0 0.0
    %2817 = vmatpush1.msra.mxu0 0.0
    %2818 = vmatprep.subr.mxu0 0.0
    %2819 = vmatpush1.msra.mxu0 0.0
    %2820 = vmatprep.subr.mxu0 0.0
    %2821 = vmatpush1.msra.mxu0 0.0
    %2822 = vmatprep.subr.mxu0 0.0
    %2823 = vmatpush1.msra.mxu0 0.0
    %2824 = vmatprep.subr.mxu0 0.0
    %2825 = vmatpush1.msra.mxu0 0.0
    %2826 = vmatprep.subr.mxu0 0.0
    %2827 = vmatpush1.msra.mxu0 0.0
    %2828 = vmatprep.subr.mxu0 0.0
    %2829 = vmatpush1.msra.mxu0 0.0
    %2830 = vmatprep.subr.mxu0 0.0
    %2831 = vmatpush1.msra.mxu0 0.0
    %2832 = vmatprep.subr.mxu0 0.0
    %2833 = vmatpush1.msra.mxu0 0.0
    %2834 = vmatprep.subr.mxu0 0.0
    %2835 = vmatpush1.msra.mxu0 0.0
    %2836 = vmatprep.subr.mxu0 0.0
    %2837 = vmatpush1.msra.mxu0 0.0
    %2838 = vmatprep.subr.mxu0 0.0
    %2839 = vmatpush1.msra.mxu0 0.0
    %2840 = vmatprep.subr.mxu0 0.0
    %2841 = vmatpush1.msra.mxu0 0.0
    %2842 = vmatprep.subr.mxu0 0.0
    %2843 = vmatpush1.msra.mxu0 0.0
    %2844 = vmatprep.subr.mxu0 0.0
    %2845 = vmatpush1.msra.mxu0 0.0
    %2846 = vmatprep.subr.mxu0 0.0
    %2847 = vmatpush1.msra.mxu0 0.0
    %2848 = vmatprep.subr.mxu0 0.0
    %2849 = vmatpush1.msra.mxu0 0.0
    %2850 = vmatprep.subr.mxu0 0.0
    %2851 = vmatpush1.msra.mxu0 0.0
    %2852 = vmatprep.mubr.f32.mxu0 0.0
    %v2853 = vand.u32 %v2785, 4294901760
    %v2854 = vsub.f32 %v2785, %v2853
    %v2855 = vand.u32 %v2854, 4294901760
    %v2856 = vsub.f32 %v2854, %v2855
    %v2857 = vand.u32 %v2856, 4294901760
    %2858 = vmatmul.mubr.f32.gmra.mrb[0].mxu0 %v2857
    %v2859 = vpop.f32.mrb[0].mxu0
    %v2860 = vadd.f32 0.0, %v2859
    %v2861 = vpop.f32.mrb[0].mxu0
    %2862 = vdwg.mxu0
    %2863 = vmatprep.subr.mxu0 0.0
    %v2864 = vand.u32 %v2781, 4294901760
    %v2865 = vsub.f32 %v2781, %v2864
    %v2866 = vand.u32 %v2865, 4294901760
    %v2867 = vsub.f32 %v2865, %v2866
    %v2868 = vand.u32 %v2867, 4294901760
    %2869 = vmatpush1.msra.mxu0 %v2868
    %2870 = vmatprep.subr.mxu0 0.0
    %2871 = vmatpush1.msra.mxu0 0.0
    %2872 = vmatprep.subr.mxu0 0.0
    %2873 = vmatpush1.msra.mxu0 0.0
    %2874 = vmatprep.subr.mxu0 0.0
    %2875 = vmatpush1.msra.mxu0 0.0
    %2876 = vmatprep.subr.mxu0 0.0
    %2877 = vmatpush1.msra.mxu0 0.0
    %2878 = vmatprep.subr.mxu0 0.0
    %2879 = vmatpush1.msra.mxu0 0.0
    %2880 = vmatprep.subr.mxu0 0.0
    %2881 = vmatpush1.msra.mxu0 0.0
    %2882 = vmatprep.subr.mxu0 0.0
    %2883 = vmatpush1.msra.mxu0 0.0
    %2884 = vmatprep.subr.mxu0 0.0
    %2885 = vmatpush1.msra.mxu0 0.0
    %2886 = vmatprep.subr.mxu0 0.0
    %2887 = vmatpush1.msra.mxu0 0.0
    %2888 = vmatprep.subr.mxu0 0.0
    %2889 = vmatpush1.msra.mxu0 0.0
    %2890 = vmatprep.subr.mxu0 0.0
    %2891 = vmatpush1.msra.mxu0 0.0
    %2892 = vmatprep.subr.mxu0 0.0
    %2893 = vmatpush1.msra.mxu0 0.0
    %2894 = vmatprep.subr.mxu0 0.0
    %2895 = vmatpush1.msra.mxu0 0.0
    %2896 = vmatprep.subr.mxu0 0.0
    %2897 = vmatpush1.msra.mxu0 0.0
    %2898 = vmatprep.subr.mxu0 0.0
    %2899 = vmatpush1.msra.mxu0 0.0
    %2900 = vmatprep.subr.mxu0 0.0
    %2901 = vmatpush1.msra.mxu0 0.0
    %2902 = vmatprep.subr.mxu0 0.0
    %2903 = vmatpush1.msra.mxu0 0.0
    %2904 = vmatprep.subr.mxu0 0.0
    %2905 = vmatpush1.msra.mxu0 0.0
    %2906 = vmatprep.subr.mxu0 0.0
    %2907 = vmatpush1.msra.mxu0 0.0
    %2908 = vmatprep.subr.mxu0 0.0
    %2909 = vmatpush1.msra.mxu0 0.0
    %2910 = vmatprep.subr.mxu0 0.0
    %2911 = vmatpush1.msra.mxu0 0.0
    %2912 = vmatprep.subr.mxu0 0.0
    %2913 = vmatpush1.msra.mxu0 0.0
    %2914 = vmatprep.subr.mxu0 0.0
    %2915 = vmatpush1.msra.mxu0 0.0
    %2916 = vmatprep.subr.mxu0 0.0
    %2917 = vmatpush1.msra.mxu0 0.0
    %2918 = vmatprep.subr.mxu0 0.0
    %2919 = vmatpush1.msra.mxu0 0.0
    %2920 = vmatprep.subr.mxu0 0.0
    %2921 = vmatpush1.msra.mxu0 0.0
    %2922 = vmatprep.subr.mxu0 0.0
    %2923 = vmatpush1.msra.mxu0 0.0
    %2924 = vmatprep.subr.mxu0 0.0
    %2925 = vmatpush1.msra.mxu0 0.0
    %2926 = vmatprep.subr.mxu0 0.0
    %2927 = vmatpush1.msra.mxu0 0.0
    %2928 = vmatprep.subr.mxu0 0.0
    %2929 = vmatpush1.msra.mxu0 0.0
    %2930 = vmatprep.subr.mxu0 0.0
    %2931 = vmatpush1.msra.mxu0 0.0
    %2932 = vmatprep.mubr.f32.mxu0 0.0
    %v2933 = vand.u32 %v2785, 4294901760
    %2934 = vmatmul.mubr.f32.gmra.mrb[0].mxu0 %v2933
    %v2935 = vpop.f32.mrb[0].mxu0
    %v2936 = vadd.f32 %v2860, %v2935
    %v2937 = vpop.f32.mrb[0].mxu0
    %2938 = vdwg.mxu0
    %2939 = vmatprep.subr.mxu0 0.0
    %v2940 = vand.u32 %v2781, 4294901760
    %v2941 = vsub.f32 %v2781, %v2940
    %2942 = vmatpush1.msra.mxu0 %v2941
    %2943 = vmatprep.subr.mxu0 0.0
    %2944 = vmatpush1.msra.mxu0 0.0
    %2945 = vmatprep.subr.mxu0 0.0
    %2946 = vmatpush1.msra.mxu0 0.0
    %2947 = vmatprep.subr.mxu0 0.0
    %2948 = vmatpush1.msra.mxu0 0.0
    %2949 = vmatprep.subr.mxu0 0.0
    %2950 = vmatpush1.msra.mxu0 0.0
    %2951 = vmatprep.subr.mxu0 0.0
    %2952 = vmatpush1.msra.mxu0 0.0
    %2953 = vmatprep.subr.mxu0 0.0
    %2954 = vmatpush1.msra.mxu0 0.0
    %2955 = vmatprep.subr.mxu0 0.0
    %2956 = vmatpush1.msra.mxu0 0.0
    %2957 = vmatprep.subr.mxu0 0.0
    %2958 = vmatpush1.msra.mxu0 0.0
    %2959 = vmatprep.subr.mxu0 0.0
    %2960 = vmatpush1.msra.mxu0 0.0
    %2961 = vmatprep.subr.mxu0 0.0
    %2962 = vmatpush1.msra.mxu0 0.0
    %2963 = vmatprep.subr.mxu0 0.0
    %2964 = vmatpush1.msra.mxu0 0.0
    %2965 = vmatprep.subr.mxu0 0.0
    %2966 = vmatpush1.msra.mxu0 0.0
    %2967 = vmatprep.subr.mxu0 0.0
    %2968 = vmatpush1.msra.mxu0 0.0
    %2969 = vmatprep.subr.mxu0 0.0
    %2970 = vmatpush1.msra.mxu0 0.0
    %2971 = vmatprep.subr.mxu0 0.0
    %2972 = vmatpush1.msra.mxu0 0.0
    %2973 = vmatprep.subr.mxu0 0.0
    %2974 = vmatpush1.msra.mxu0 0.0
    %2975 = vmatprep.subr.mxu0 0.0
    %2976 = vmatpush1.msra.mxu0 0.0
    %2977 = vmatprep.subr.mxu0 0.0
    %2978 = vmatpush1.msra.mxu0 0.0
    %2979 = vmatprep.subr.mxu0 0.0
    %2980 = vmatpush1.msra.mxu0 0.0
    %2981 = vmatprep.subr.mxu0 0.0
    %2982 = vmatpush1.msra.mxu0 0.0
    %2983 = vmatprep.subr.mxu0 0.0
    %2984 = vmatpush1.msra.mxu0 0.0
    %2985 = vmatprep.subr.mxu0 0.0
    %2986 = vmatpush1.msra.mxu0 0.0
    %2987 = vmatprep.subr.mxu0 0.0
    %2988 = vmatpush1.msra.mxu0 0.0
    %2989 = vmatprep.subr.mxu0 0.0
    %2990 = vmatpush1.msra.mxu0 0.0
    %2991 = vmatprep.subr.mxu0 0.0
    %2992 = vmatpush1.msra.mxu0 0.0
    %2993 = vmatprep.subr.mxu0 0.0
    %2994 = vmatpush1.msra.mxu0 0.0
    %2995 = vmatprep.subr.mxu0 0.0
    %2996 = vmatpush1.msra.mxu0 0.0
    %2997 = vmatprep.subr.mxu0 0.0
    %2998 = vmatpush1.msra.mxu0 0.0
    %2999 = vmatprep.subr.mxu0 0.0
    %3000 = vmatpush1.msra.mxu0 0.0
    %3001 = vmatprep.subr.mxu0 0.0
    %3002 = vmatpush1.msra.mxu0 0.0
    %3003 = vmatprep.subr.mxu0 0.0
    %3004 = vmatpush1.msra.mxu0 0.0
    %3005 = vmatprep.mubr.f32.mxu0 0.0
    %v3006 = vand.u32 %v2785, 4294901760
    %v3007 = vsub.f32 %v2785, %v3006
    %3008 = vmatmul.mubr.f32.gmra.mrb[0].mxu0 %v3007
    %v3009 = vpop.f32.mrb[0].mxu0
    %v3010 = vadd.f32 %v2936, %v3009
    %v3011 = vpop.f32.mrb[0].mxu0
    %3012 = vdwg.mxu0
    %3013 = vmatprep.subr.mxu0 0.0
    %v3014 = vand.u32 %v2781, 4294901760
    %3015 = vmatpush1.msra.mxu0 %v3014
    %3016 = vmatprep.subr.mxu0 0.0
    %3017 = vmatpush1.msra.mxu0 0.0
    %3018 = vmatprep.subr.mxu0 0.0
    %3019 = vmatpush1.msra.mxu0 0.0
    %3020 = vmatprep.subr.mxu0 0.0
    %3021 = vmatpush1.msra.mxu0 0.0
    %3022 = vmatprep.subr.mxu0 0.0
    %3023 = vmatpush1.msra.mxu0 0.0
    %3024 = vmatprep.subr.mxu0 0.0
    %3025 = vmatpush1.msra.mxu0 0.0
    %3026 = vmatprep.subr.mxu0 0.0
    %3027 = vmatpush1.msra.mxu0 0.0
    %3028 = vmatprep.subr.mxu0 0.0
    %3029 = vmatpush1.msra.mxu0 0.0
    %3030 = vmatprep.subr.mxu0 0.0
    %3031 = vmatpush1.msra.mxu0 0.0
    %3032 = vmatprep.subr.mxu0 0.0
    %3033 = vmatpush1.msra.mxu0 0.0
    %3034 = vmatprep.subr.mxu0 0.0
    %3035 = vmatpush1.msra.mxu0 0.0
    %3036 = vmatprep.subr.mxu0 0.0
    %3037 = vmatpush1.msra.mxu0 0.0
    %3038 = vmatprep.subr.mxu0 0.0
    %3039 = vmatpush1.msra.mxu0 0.0
    %3040 = vmatprep.subr.mxu0 0.0
    %3041 = vmatpush1.msra.mxu0 0.0
    %3042 = vmatprep.subr.mxu0 0.0
    %3043 = vmatpush1.msra.mxu0 0.0
    %3044 = vmatprep.subr.mxu0 0.0
    %3045 = vmatpush1.msra.mxu0 0.0
    %3046 = vmatprep.subr.mxu0 0.0
    %3047 = vmatpush1.msra.mxu0 0.0
    %3048 = vmatprep.subr.mxu0 0.0
    %3049 = vmatpush1.msra.mxu0 0.0
    %3050 = vmatprep.subr.mxu0 0.0
    %3051 = vmatpush1.msra.mxu0 0.0
    %3052 = vmatprep.subr.mxu0 0.0
    %3053 = vmatpush1.msra.mxu0 0.0
    %3054 = vmatprep.subr.mxu0 0.0
    %3055 = vmatpush1.msra.mxu0 0.0
    %3056 = vmatprep.subr.mxu0 0.0
    %3057 = vmatpush1.msra.mxu0 0.0
    %3058 = vmatprep.subr.mxu0 0.0
    %3059 = vmatpush1.msra.mxu0 0.0
    %3060 = vmatprep.subr.mxu0 0.0
    %3061 = vmatpush1.msra.mxu0 0.0
    %3062 = vmatprep.subr.mxu0 0.0
    %3063 = vmatpush1.msra.mxu0 0.0
    %3064 = vmatprep.subr.mxu0 0.0
    %3065 = vmatpush1.msra.mxu0 0.0
    %3066 = vmatprep.subr.mxu0 0.0
    %3067 = vmatpush1.msra.mxu0 0.0
    %3068 = vmatprep.subr.mxu0 0.0
    %3069 = vmatpush1.msra.mxu0 0.0
    %3070 = vmatprep.subr.mxu0 0.0
    %3071 = vmatpush1.msra.mxu0 0.0
    %3072 = vmatprep.subr.mxu0 0.0
    %3073 = vmatpush1.msra.mxu0 0.0
    %3074 = vmatprep.subr.mxu0 0.0
    %3075 = vmatpush1.msra.mxu0 0.0
    %3076 = vmatprep.subr.mxu0 0.0
    %3077 = vmatpush1.msra.mxu0 0.0
    %3078 = vmatprep.mubr.f32.mxu0 0.0
    %v3079 = vand.u32 %v2785, 4294901760
    %v3080 = vsub.f32 %v2785, %v3079
    %v3081 = vand.u32 %v3080, 4294901760
    %3082 = vmatmul.mubr.f32.gmra.mrb[0].mxu0 %v3081
    %v3083 = vpop.f32.mrb[0].mxu0
    %v3084 = vadd.f32 %v3010, %v3083
    %v3085 = vpop.f32.mrb[0].mxu0
    %3086 = vdwg.mxu0
    %3087 = vmatprep.subr.mxu0 0.0
    %v3088 = vand.u32 %v2781, 4294901760
    %v3089 = vsub.f32 %v2781, %v3088
    %v3090 = vand.u32 %v3089, 4294901760
    %3091 = vmatpush1.msra.mxu0 %v3090
    %3092 = vmatprep.subr.mxu0 0.0
    %3093 = vmatpush1.msra.mxu0 0.0
    %3094 = vmatprep.subr.mxu0 0.0
    %3095 = vmatpush1.msra.mxu0 0.0
    %3096 = vmatprep.subr.mxu0 0.0
    %3097 = vmatpush1.msra.mxu0 0.0
    %3098 = vmatprep.subr.mxu0 0.0
    %3099 = vmatpush1.msra.mxu0 0.0
    %3100 = vmatprep.subr.mxu0 0.0
    %3101 = vmatpush1.msra.mxu0 0.0
    %3102 = vmatprep.subr.mxu0 0.0
    %3103 = vmatpush1.msra.mxu0 0.0
    %3104 = vmatprep.subr.mxu0 0.0
    %3105 = vmatpush1.msra.mxu0 0.0
    %3106 = vmatprep.subr.mxu0 0.0
    %3107 = vmatpush1.msra.mxu0 0.0
    %3108 = vmatprep.subr.mxu0 0.0
    %3109 = vmatpush1.msra.mxu0 0.0
    %3110 = vmatprep.subr.mxu0 0.0
    %3111 = vmatpush1.msra.mxu0 0.0
    %3112 = vmatprep.subr.mxu0 0.0
    %3113 = vmatpush1.msra.mxu0 0.0
    %3114 = vmatprep.subr.mxu0 0.0
    %3115 = vmatpush1.msra.mxu0 0.0
    %3116 = vmatprep.subr.mxu0 0.0
    %3117 = vmatpush1.msra.mxu0 0.0
    %3118 = vmatprep.subr.mxu0 0.0
    %3119 = vmatpush1.msra.mxu0 0.0
    %3120 = vmatprep.subr.mxu0 0.0
    %3121 = vmatpush1.msra.mxu0 0.0
    %3122 = vmatprep.subr.mxu0 0.0
    %3123 = vmatpush1.msra.mxu0 0.0
    %3124 = vmatprep.subr.mxu0 0.0
    %3125 = vmatpush1.msra.mxu0 0.0
    %3126 = vmatprep.subr.mxu0 0.0
    %3127 = vmatpush1.msra.mxu0 0.0
    %3128 = vmatprep.subr.mxu0 0.0
    %3129 = vmatpush1.msra.mxu0 0.0
    %3130 = vmatprep.subr.mxu0 0.0
    %3131 = vmatpush1.msra.mxu0 0.0
    %3132 = vmatprep.subr.mxu0 0.0
    %3133 = vmatpush1.msra.mxu0 0.0
    %3134 = vmatprep.subr.mxu0 0.0
    %3135 = vmatpush1.msra.mxu0 0.0
    %3136 = vmatprep.subr.mxu0 0.0
    %3137 = vmatpush1.msra.mxu0 0.0
    %3138 = vmatprep.subr.mxu0 0.0
    %3139 = vmatpush1.msra.mxu0 0.0
    %3140 = vmatprep.subr.mxu0 0.0
    %3141 = vmatpush1.msra.mxu0 0.0
    %3142 = vmatprep.subr.mxu0 0.0
    %3143 = vmatpush1.msra.mxu0 0.0
    %3144 = vmatprep.subr.mxu0 0.0
    %3145 = vmatpush1.msra.mxu0 0.0
    %3146 = vmatprep.subr.mxu0 0.0
    %3147 = vmatpush1.msra.mxu0 0.0
    %3148 = vmatprep.subr.mxu0 0.0
    %3149 = vmatpush1.msra.mxu0 0.0
    %3150 = vmatprep.subr.mxu0 0.0
    %3151 = vmatpush1.msra.mxu0 0.0
    %3152 = vmatprep.subr.mxu0 0.0
    %3153 = vmatpush1.msra.mxu0 0.0
    %3154 = vmatprep.mubr.f32.mxu0 0.0
    %v3155 = vand.u32 %v2785, 4294901760
    %3156 = vmatmul.mubr.f32.gmra.mrb[0].mxu0 %v3155
    %v3157 = vpop.f32.mrb[0].mxu0
    %v3158 = vadd.f32 %v3084, %v3157
    %v3159 = vpop.f32.mrb[0].mxu0
    %3160 = vdwg.mxu0
    %3161 = vmatprep.subr.mxu0 0.0
    %v3162 = vand.u32 %v2781, 4294901760
    %3163 = vmatpush1.msra.mxu0 %v3162
    %3164 = vmatprep.subr.mxu0 0.0
    %3165 = vmatpush1.msra.mxu0 0.0
    %3166 = vmatprep.subr.mxu0 0.0
    %3167 = vmatpush1.msra.mxu0 0.0
    %3168 = vmatprep.subr.mxu0 0.0
    %3169 = vmatpush1.msra.mxu0 0.0
    %3170 = vmatprep.subr.mxu0 0.0
    %3171 = vmatpush1.msra.mxu0 0.0
    %3172 = vmatprep.subr.mxu0 0.0
    %3173 = vmatpush1.msra.mxu0 0.0
    %3174 = vmatprep.subr.mxu0 0.0
    %3175 = vmatpush1.msra.mxu0 0.0
    %3176 = vmatprep.subr.mxu0 0.0
    %3177 = vmatpush1.msra.mxu0 0.0
    %3178 = vmatprep.subr.mxu0 0.0
    %3179 = vmatpush1.msra.mxu0 0.0
    %3180 = vmatprep.subr.mxu0 0.0
    %3181 = vmatpush1.msra.mxu0 0.0
    %3182 = vmatprep.subr.mxu0 0.0
    %3183 = vmatpush1.msra.mxu0 0.0
    %3184 = vmatprep.subr.mxu0 0.0
    %3185 = vmatpush1.msra.mxu0 0.0
    %3186 = vmatprep.subr.mxu0 0.0
    %3187 = vmatpush1.msra.mxu0 0.0
    %3188 = vmatprep.subr.mxu0 0.0
    %3189 = vmatpush1.msra.mxu0 0.0
    %3190 = vmatprep.subr.mxu0 0.0
    %3191 = vmatpush1.msra.mxu0 0.0
    %3192 = vmatprep.subr.mxu0 0.0
    %3193 = vmatpush1.msra.mxu0 0.0
    %3194 = vmatprep.subr.mxu0 0.0
    %3195 = vmatpush1.msra.mxu0 0.0
    %3196 = vmatprep.subr.mxu0 0.0
    %3197 = vmatpush1.msra.mxu0 0.0
    %3198 = vmatprep.subr.mxu0 0.0
    %3199 = vmatpush1.msra.mxu0 0.0
    %3200 = vmatprep.subr.mxu0 0.0
    %3201 = vmatpush1.msra.mxu0 0.0
    %3202 = vmatprep.subr.mxu0 0.0
    %3203 = vmatpush1.msra.mxu0 0.0
    %3204 = vmatprep.subr.mxu0 0.0
    %3205 = vmatpush1.msra.mxu0 0.0
    %3206 = vmatprep.subr.mxu0 0.0
    %3207 = vmatpush1.msra.mxu0 0.0
    %3208 = vmatprep.subr.mxu0 0.0
    %3209 = vmatpush1.msra.mxu0 0.0
    %3210 = vmatprep.subr.mxu0 0.0
    %3211 = vmatpush1.msra.mxu0 0.0
    %3212 = vmatprep.subr.mxu0 0.0
    %3213 = vmatpush1.msra.mxu0 0.0
    %3214 = vmatprep.subr.mxu0 0.0
    %3215 = vmatpush1.msra.mxu0 0.0
    %3216 = vmatprep.subr.mxu0 0.0
    %3217 = vmatpush1.msra.mxu0 0.0
    %3218 = vmatprep.subr.mxu0 0.0
    %3219 = vmatpush1.msra.mxu0 0.0
    %3220 = vmatprep.subr.mxu0 0.0
    %3221 = vmatpush1.msra.mxu0 0.0
    %3222 = vmatprep.subr.mxu0 0.0
    %3223 = vmatpush1.msra.mxu0 0.0
    %3224 = vmatprep.subr.mxu0 0.0
    %3225 = vmatpush1.msra.mxu0 0.0
    %3226 = vmatprep.mubr.f32.mxu0 0.0
    %v3227 = vand.u32 %v2785, 4294901760
    %3228 = vmatmul.mubr.f32.gmra.mrb[0].mxu0 %v3227
    %v3229 = vpop.f32.mrb[0].mxu0
    %v3230 = vadd.f32 %v3158, %v3229
    %v3231 = vpop.f32.mrb[0].mxu0
    %3232 = vdwg.mxu0
    %v3233 = vadd.f32 %v2775, %v3230
    %3234 = vrot.lane.b32.xlu0 %v32, 121
    %v3235 = vpop.permute.xlu0 %3234
    %3236 = vrot.lane.b32.xlu0 %v33, 121
    %v3237 = vpop.permute.xlu0 %3236
    %vm3238 = vcmp.lt.s32.totalorder %v40, 121
    %v3239 = vsel %vm3238, %v3235, %v3237
    %s3240 = scalar_lea.vmem %s2, 56
    %v3241 = vld [vmem:[%s3240] sm:$0xff]
    %v3243 = vsel %vm45, %v3241, 0
    %3245 = vmatprep.subr.mxu0 0.0
    %v3246 = vand.u32 %v3239, 4294901760
    %3247 = vmatpush1.msra.mxu0 %v3246
    %3248 = vmatprep.subr.mxu0 0.0
    %3249 = vmatpush1.msra.mxu0 0.0
    %3250 = vmatprep.subr.mxu0 0.0
    %3251 = vmatpush1.msra.mxu0 0.0
    %3252 = vmatprep.subr.mxu0 0.0
    %3253 = vmatpush1.msra.mxu0 0.0
    %3254 = vmatprep.subr.mxu0 0.0
    %3255 = vmatpush1.msra.mxu0 0.0
    %3256 = vmatprep.subr.mxu0 0.0
    %3257 = vmatpush1.msra.mxu0 0.0
    %3258 = vmatprep.subr.mxu0 0.0
    %3259 = vmatpush1.msra.mxu0 0.0
    %3260 = vmatprep.subr.mxu0 0.0
    %3261 = vmatpush1.msra.mxu0 0.0
    %3262 = vmatprep.subr.mxu0 0.0
    %3263 = vmatpush1.msra.mxu0 0.0
    %3264 = vmatprep.subr.mxu0 0.0
    %3265 = vmatpush1.msra.mxu0 0.0
    %3266 = vmatprep.subr.mxu0 0.0
    %3267 = vmatpush1.msra.mxu0 0.0
    %3268 = vmatprep.subr.mxu0 0.0
    %3269 = vmatpush1.msra.mxu0 0.0
    %3270 = vmatprep.subr.mxu0 0.0
    %3271 = vmatpush1.msra.mxu0 0.0
    %3272 = vmatprep.subr.mxu0 0.0
    %3273 = vmatpush1.msra.mxu0 0.0
    %3274 = vmatprep.subr.mxu0 0.0
    %3275 = vmatpush1.msra.mxu0 0.0
    %3276 = vmatprep.subr.mxu0 0.0
    %3277 = vmatpush1.msra.mxu0 0.0
    %3278 = vmatprep.subr.mxu0 0.0
    %3279 = vmatpush1.msra.mxu0 0.0
    %3280 = vmatprep.subr.mxu0 0.0
    %3281 = vmatpush1.msra.mxu0 0.0
    %3282 = vmatprep.subr.mxu0 0.0
    %3283 = vmatpush1.msra.mxu0 0.0
    %3284 = vmatprep.subr.mxu0 0.0
    %3285 = vmatpush1.msra.mxu0 0.0
    %3286 = vmatprep.subr.mxu0 0.0
    %3287 = vmatpush1.msra.mxu0 0.0
    %3288 = vmatprep.subr.mxu0 0.0
    %3289 = vmatpush1.msra.mxu0 0.0
    %3290 = vmatprep.subr.mxu0 0.0
    %3291 = vmatpush1.msra.mxu0 0.0
    %3292 = vmatprep.subr.mxu0 0.0
    %3293 = vmatpush1.msra.mxu0 0.0
    %3294 = vmatprep.subr.mxu0 0.0
    %3295 = vmatpush1.msra.mxu0 0.0
    %3296 = vmatprep.subr.mxu0 0.0
    %3297 = vmatpush1.msra.mxu0 0.0
    %3298 = vmatprep.subr.mxu0 0.0
    %3299 = vmatpush1.msra.mxu0 0.0
    %3300 = vmatprep.subr.mxu0 0.0
    %3301 = vmatpush1.msra.mxu0 0.0
    %3302 = vmatprep.subr.mxu0 0.0
    %3303 = vmatpush1.msra.mxu0 0.0
    %3304 = vmatprep.subr.mxu0 0.0
    %3305 = vmatpush1.msra.mxu0 0.0
    %3306 = vmatprep.subr.mxu0 0.0
    %3307 = vmatpush1.msra.mxu0 0.0
    %3308 = vmatprep.subr.mxu0 0.0
    %3309 = vmatpush1.msra.mxu0 0.0
    %3310 = vmatprep.mubr.f32.mxu0 0.0
    %v3311 = vand.u32 %v3243, 4294901760
    %v3312 = vsub.f32 %v3243, %v3311
    %v3313 = vand.u32 %v3312, 4294901760
    %v3314 = vsub.f32 %v3312, %v3313
    %v3315 = vand.u32 %v3314, 4294901760
    %3316 = vmatmul.mubr.f32.gmra.mrb[0].mxu0 %v3315
    %v3317 = vpop.f32.mrb[0].mxu0
    %v3318 = vadd.f32 0.0, %v3317
    %v3319 = vpop.f32.mrb[0].mxu0
    %3320 = vdwg.mxu0
    %3321 = vmatprep.subr.mxu0 0.0
    %v3322 = vand.u32 %v3239, 4294901760
    %v3323 = vsub.f32 %v3239, %v3322
    %v3324 = vand.u32 %v3323, 4294901760
    %v3325 = vsub.f32 %v3323, %v3324
    %v3326 = vand.u32 %v3325, 4294901760
    %3327 = vmatpush1.msra.mxu0 %v3326
    %3328 = vmatprep.subr.mxu0 0.0
    %3329 = vmatpush1.msra.mxu0 0.0
    %3330 = vmatprep.subr.mxu0 0.0
    %3331 = vmatpush1.msra.mxu0 0.0
    %3332 = vmatprep.subr.mxu0 0.0
    %3333 = vmatpush1.msra.mxu0 0.0
    %3334 = vmatprep.subr.mxu0 0.0
    %3335 = vmatpush1.msra.mxu0 0.0
    %3336 = vmatprep.subr.mxu0 0.0
    %3337 = vmatpush1.msra.mxu0 0.0
    %3338 = vmatprep.subr.mxu0 0.0
    %3339 = vmatpush1.msra.mxu0 0.0
    %3340 = vmatprep.subr.mxu0 0.0
    %3341 = vmatpush1.msra.mxu0 0.0
    %3342 = vmatprep.subr.mxu0 0.0
    %3343 = vmatpush1.msra.mxu0 0.0
    %3344 = vmatprep.subr.mxu0 0.0
    %3345 = vmatpush1.msra.mxu0 0.0
    %3346 = vmatprep.subr.mxu0 0.0
    %3347 = vmatpush1.msra.mxu0 0.0
    %3348 = vmatprep.subr.mxu0 0.0
    %3349 = vmatpush1.msra.mxu0 0.0
    %3350 = vmatprep.subr.mxu0 0.0
    %3351 = vmatpush1.msra.mxu0 0.0
    %3352 = vmatprep.subr.mxu0 0.0
    %3353 = vmatpush1.msra.mxu0 0.0
    %3354 = vmatprep.subr.mxu0 0.0
    %3355 = vmatpush1.msra.mxu0 0.0
    %3356 = vmatprep.subr.mxu0 0.0
    %3357 = vmatpush1.msra.mxu0 0.0
    %3358 = vmatprep.subr.mxu0 0.0
    %3359 = vmatpush1.msra.mxu0 0.0
    %3360 = vmatprep.subr.mxu0 0.0
    %3361 = vmatpush1.msra.mxu0 0.0
    %3362 = vmatprep.subr.mxu0 0.0
    %3363 = vmatpush1.msra.mxu0 0.0
    %3364 = vmatprep.subr.mxu0 0.0
    %3365 = vmatpush1.msra.mxu0 0.0
    %3366 = vmatprep.subr.mxu0 0.0
    %3367 = vmatpush1.msra.mxu0 0.0
    %3368 = vmatprep.subr.mxu0 0.0
    %3369 = vmatpush1.msra.mxu0 0.0
    %3370 = vmatprep.subr.mxu0 0.0
    %3371 = vmatpush1.msra.mxu0 0.0
    %3372 = vmatprep.subr.mxu0 0.0
    %3373 = vmatpush1.msra.mxu0 0.0
    %3374 = vmatprep.subr.mxu0 0.0
    %3375 = vmatpush1.msra.mxu0 0.0
    %3376 = vmatprep.subr.mxu0 0.0
    %3377 = vmatpush1.msra.mxu0 0.0
    %3378 = vmatprep.subr.mxu0 0.0
    %3379 = vmatpush1.msra.mxu0 0.0
    %3380 = vmatprep.subr.mxu0 0.0
    %3381 = vmatpush1.msra.mxu0 0.0
    %3382 = vmatprep.subr.mxu0 0.0
    %3383 = vmatpush1.msra.mxu0 0.0
    %3384 = vmatprep.subr.mxu0 0.0
    %3385 = vmatpush1.msra.mxu0 0.0
    %3386 = vmatprep.subr.mxu0 0.0
    %3387 = vmatpush1.msra.mxu0 0.0
    %3388 = vmatprep.subr.mxu0 0.0
    %3389 = vmatpush1.msra.mxu0 0.0
    %3390 = vmatprep.mubr.f32.mxu0 0.0
    %v3391 = vand.u32 %v3243, 4294901760
    %3392 = vmatmul.mubr.f32.gmra.mrb[0].mxu0 %v3391
    %v3393 = vpop.f32.mrb[0].mxu0
    %v3394 = vadd.f32 %v3318, %v3393
    %v3395 = vpop.f32.mrb[0].mxu0
    %3396 = vdwg.mxu0
    %3397 = vmatprep.subr.mxu0 0.0
    %v3398 = vand.u32 %v3239, 4294901760
    %v3399 = vsub.f32 %v3239, %v3398
    %3400 = vmatpush1.msra.mxu0 %v3399
    %3401 = vmatprep.subr.mxu0 0.0
    %3402 = vmatpush1.msra.mxu0 0.0
    %3403 = vmatprep.subr.mxu0 0.0
    %3404 = vmatpush1.msra.mxu0 0.0
    %3405 = vmatprep.subr.mxu0 0.0
    %3406 = vmatpush1.msra.mxu0 0.0
    %3407 = vmatprep.subr.mxu0 0.0
    %3408 = vmatpush1.msra.mxu0 0.0
    %3409 = vmatprep.subr.mxu0 0.0
    %3410 = vmatpush1.msra.mxu0 0.0
    %3411 = vmatprep.subr.mxu0 0.0
    %3412 = vmatpush1.msra.mxu0 0.0
    %3413 = vmatprep.subr.mxu0 0.0
    %3414 = vmatpush1.msra.mxu0 0.0
    %3415 = vmatprep.subr.mxu0 0.0
    %3416 = vmatpush1.msra.mxu0 0.0
    %3417 = vmatprep.subr.mxu0 0.0
    %3418 = vmatpush1.msra.mxu0 0.0
    %3419 = vmatprep.subr.mxu0 0.0
    %3420 = vmatpush1.msra.mxu0 0.0
    %3421 = vmatprep.subr.mxu0 0.0
    %3422 = vmatpush1.msra.mxu0 0.0
    %3423 = vmatprep.subr.mxu0 0.0
    %3424 = vmatpush1.msra.mxu0 0.0
    %3425 = vmatprep.subr.mxu0 0.0
    %3426 = vmatpush1.msra.mxu0 0.0
    %3427 = vmatprep.subr.mxu0 0.0
    %3428 = vmatpush1.msra.mxu0 0.0
    %3429 = vmatprep.subr.mxu0 0.0
    %3430 = vmatpush1.msra.mxu0 0.0
    %3431 = vmatprep.subr.mxu0 0.0
    %3432 = vmatpush1.msra.mxu0 0.0
    %3433 = vmatprep.subr.mxu0 0.0
    %3434 = vmatpush1.msra.mxu0 0.0
    %3435 = vmatprep.subr.mxu0 0.0
    %3436 = vmatpush1.msra.mxu0 0.0
    %3437 = vmatprep.subr.mxu0 0.0
    %3438 = vmatpush1.msra.mxu0 0.0
    %3439 = vmatprep.subr.mxu0 0.0
    %3440 = vmatpush1.msra.mxu0 0.0
    %3441 = vmatprep.subr.mxu0 0.0
    %3442 = vmatpush1.msra.mxu0 0.0
    %3443 = vmatprep.subr.mxu0 0.0
    %3444 = vmatpush1.msra.mxu0 0.0
    %3445 = vmatprep.subr.mxu0 0.0
    %3446 = vmatpush1.msra.mxu0 0.0
    %3447 = vmatprep.subr.mxu0 0.0
    %3448 = vmatpush1.msra.mxu0 0.0
    %3449 = vmatprep.subr.mxu0 0.0
    %3450 = vmatpush1.msra.mxu0 0.0
    %3451 = vmatprep.subr.mxu0 0.0
    %3452 = vmatpush1.msra.mxu0 0.0
    %3453 = vmatprep.subr.mxu0 0.0
    %3454 = vmatpush1.msra.mxu0 0.0
    %3455 = vmatprep.subr.mxu0 0.0
    %3456 = vmatpush1.msra.mxu0 0.0
    %3457 = vmatprep.subr.mxu0 0.0
    %3458 = vmatpush1.msra.mxu0 0.0
    %3459 = vmatprep.subr.mxu0 0.0
    %3460 = vmatpush1.msra.mxu0 0.0
    %3461 = vmatprep.subr.mxu0 0.0
    %3462 = vmatpush1.msra.mxu0 0.0
    %3463 = vmatprep.mubr.f32.mxu0 0.0
    %v3464 = vand.u32 %v3243, 4294901760
    %v3465 = vsub.f32 %v3243, %v3464
    %3466 = vmatmul.mubr.f32.gmra.mrb[0].mxu0 %v3465
    %v3467 = vpop.f32.mrb[0].mxu0
    %v3468 = vadd.f32 %v3394, %v3467
    %v3469 = vpop.f32.mrb[0].mxu0
    %3470 = vdwg.mxu0
    %3471 = vmatprep.subr.mxu0 0.0
    %v3472 = vand.u32 %v3239, 4294901760
    %3473 = vmatpush1.msra.mxu0 %v3472
    %3474 = vmatprep.subr.mxu0 0.0
    %3475 = vmatpush1.msra.mxu0 0.0
    %3476 = vmatprep.subr.mxu0 0.0
    %3477 = vmatpush1.msra.mxu0 0.0
    %3478 = vmatprep.subr.mxu0 0.0
    %3479 = vmatpush1.msra.mxu0 0.0
    %3480 = vmatprep.subr.mxu0 0.0
    %3481 = vmatpush1.msra.mxu0 0.0
    %3482 = vmatprep.subr.mxu0 0.0
    %3483 = vmatpush1.msra.mxu0 0.0
    %3484 = vmatprep.subr.mxu0 0.0
    %3485 = vmatpush1.msra.mxu0 0.0
    %3486 = vmatprep.subr.mxu0 0.0
    %3487 = vmatpush1.msra.mxu0 0.0
    %3488 = vmatprep.subr.mxu0 0.0
    %3489 = vmatpush1.msra.mxu0 0.0
    %3490 = vmatprep.subr.mxu0 0.0
    %3491 = vmatpush1.msra.mxu0 0.0
    %3492 = vmatprep.subr.mxu0 0.0
    %3493 = vmatpush1.msra.mxu0 0.0
    %3494 = vmatprep.subr.mxu0 0.0
    %3495 = vmatpush1.msra.mxu0 0.0
    %3496 = vmatprep.subr.mxu0 0.0
    %3497 = vmatpush1.msra.mxu0 0.0
    %3498 = vmatprep.subr.mxu0 0.0
    %3499 = vmatpush1.msra.mxu0 0.0
    %3500 = vmatprep.subr.mxu0 0.0
    %3501 = vmatpush1.msra.mxu0 0.0
    %3502 = vmatprep.subr.mxu0 0.0
    %3503 = vmatpush1.msra.mxu0 0.0
    %3504 = vmatprep.subr.mxu0 0.0
    %3505 = vmatpush1.msra.mxu0 0.0
    %3506 = vmatprep.subr.mxu0 0.0
    %3507 = vmatpush1.msra.mxu0 0.0
    %3508 = vmatprep.subr.mxu0 0.0
    %3509 = vmatpush1.msra.mxu0 0.0
    %3510 = vmatprep.subr.mxu0 0.0
    %3511 = vmatpush1.msra.mxu0 0.0
    %3512 = vmatprep.subr.mxu0 0.0
    %3513 = vmatpush1.msra.mxu0 0.0
    %3514 = vmatprep.subr.mxu0 0.0
    %3515 = vmatpush1.msra.mxu0 0.0
    %3516 = vmatprep.subr.mxu0 0.0
    %3517 = vmatpush1.msra.mxu0 0.0
    %3518 = vmatprep.subr.mxu0 0.0
    %3519 = vmatpush1.msra.mxu0 0.0
    %3520 = vmatprep.subr.mxu0 0.0
    %3521 = vmatpush1.msra.mxu0 0.0
    %3522 = vmatprep.subr.mxu0 0.0
    %3523 = vmatpush1.msra.mxu0 0.0
    %3524 = vmatprep.subr.mxu0 0.0
    %3525 = vmatpush1.msra.mxu0 0.0
    %3526 = vmatprep.subr.mxu0 0.0
    %3527 = vmatpush1.msra.mxu0 0.0
    %3528 = vmatprep.subr.mxu0 0.0
    %3529 = vmatpush1.msra.mxu0 0.0
    %3530 = vmatprep.subr.mxu0 0.0
    %3531 = vmatpush1.msra.mxu0 0.0
    %3532 = vmatprep.subr.mxu0 0.0
    %3533 = vmatpush1.msra.mxu0 0.0
    %3534 = vmatprep.subr.mxu0 0.0
    %3535 = vmatpush1.msra.mxu0 0.0
    %3536 = vmatprep.mubr.f32.mxu0 0.0
    %v3537 = vand.u32 %v3243, 4294901760
    %v3538 = vsub.f32 %v3243, %v3537
    %v3539 = vand.u32 %v3538, 4294901760
    %3540 = vmatmul.mubr.f32.gmra.mrb[0].mxu0 %v3539
    %v3541 = vpop.f32.mrb[0].mxu0
    %v3542 = vadd.f32 %v3468, %v3541
    %v3543 = vpop.f32.mrb[0].mxu0
    %3544 = vdwg.mxu0
    %3545 = vmatprep.subr.mxu0 0.0
    %v3546 = vand.u32 %v3239, 4294901760
    %v3547 = vsub.f32 %v3239, %v3546
    %v3548 = vand.u32 %v3547, 4294901760
    %3549 = vmatpush1.msra.mxu0 %v3548
    %3550 = vmatprep.subr.mxu0 0.0
    %3551 = vmatpush1.msra.mxu0 0.0
    %3552 = vmatprep.subr.mxu0 0.0
    %3553 = vmatpush1.msra.mxu0 0.0
    %3554 = vmatprep.subr.mxu0 0.0
    %3555 = vmatpush1.msra.mxu0 0.0
    %3556 = vmatprep.subr.mxu0 0.0
    %3557 = vmatpush1.msra.mxu0 0.0
    %3558 = vmatprep.subr.mxu0 0.0
    %3559 = vmatpush1.msra.mxu0 0.0
    %3560 = vmatprep.subr.mxu0 0.0
    %3561 = vmatpush1.msra.mxu0 0.0
    %3562 = vmatprep.subr.mxu0 0.0
    %3563 = vmatpush1.msra.mxu0 0.0
    %3564 = vmatprep.subr.mxu0 0.0
    %3565 = vmatpush1.msra.mxu0 0.0
    %3566 = vmatprep.subr.mxu0 0.0
    %3567 = vmatpush1.msra.mxu0 0.0
    %3568 = vmatprep.subr.mxu0 0.0
    %3569 = vmatpush1.msra.mxu0 0.0
    %3570 = vmatprep.subr.mxu0 0.0
    %3571 = vmatpush1.msra.mxu0 0.0
    %3572 = vmatprep.subr.mxu0 0.0
    %3573 = vmatpush1.msra.mxu0 0.0
    %3574 = vmatprep.subr.mxu0 0.0
    %3575 = vmatpush1.msra.mxu0 0.0
    %3576 = vmatprep.subr.mxu0 0.0
    %3577 = vmatpush1.msra.mxu0 0.0
    %3578 = vmatprep.subr.mxu0 0.0
    %3579 = vmatpush1.msra.mxu0 0.0
    %3580 = vmatprep.subr.mxu0 0.0
    %3581 = vmatpush1.msra.mxu0 0.0
    %3582 = vmatprep.subr.mxu0 0.0
    %3583 = vmatpush1.msra.mxu0 0.0
    %3584 = vmatprep.subr.mxu0 0.0
    %3585 = vmatpush1.msra.mxu0 0.0
    %3586 = vmatprep.subr.mxu0 0.0
    %3587 = vmatpush1.msra.mxu0 0.0
    %3588 = vmatprep.subr.mxu0 0.0
    %3589 = vmatpush1.msra.mxu0 0.0
    %3590 = vmatprep.subr.mxu0 0.0
    %3591 = vmatpush1.msra.mxu0 0.0
    %3592 = vmatprep.subr.mxu0 0.0
    %3593 = vmatpush1.msra.mxu0 0.0
    %3594 = vmatprep.subr.mxu0 0.0
    %3595 = vmatpush1.msra.mxu0 0.0
    %3596 = vmatprep.subr.mxu0 0.0
    %3597 = vmatpush1.msra.mxu0 0.0
    %3598 = vmatprep.subr.mxu0 0.0
    %3599 = vmatpush1.msra.mxu0 0.0
    %3600 = vmatprep.subr.mxu0 0.0
    %3601 = vmatpush1.msra.mxu0 0.0
    %3602 = vmatprep.subr.mxu0 0.0
    %3603 = vmatpush1.msra.mxu0 0.0
    %3604 = vmatprep.subr.mxu0 0.0
    %3605 = vmatpush1.msra.mxu0 0.0
    %3606 = vmatprep.subr.mxu0 0.0
    %3607 = vmatpush1.msra.mxu0 0.0
    %3608 = vmatprep.subr.mxu0 0.0
    %3609 = vmatpush1.msra.mxu0 0.0
    %3610 = vmatprep.subr.mxu0 0.0
    %3611 = vmatpush1.msra.mxu0 0.0
    %3612 = vmatprep.mubr.f32.mxu0 0.0
    %v3613 = vand.u32 %v3243, 4294901760
    %3614 = vmatmul.mubr.f32.gmra.mrb[0].mxu0 %v3613
    %v3615 = vpop.f32.mrb[0].mxu0
    %v3616 = vadd.f32 %v3542, %v3615
    %v3617 = vpop.f32.mrb[0].mxu0
    %3618 = vdwg.mxu0
    %3619 = vmatprep.subr.mxu0 0.0
    %v3620 = vand.u32 %v3239, 4294901760
    %3621 = vmatpush1.msra.mxu0 %v3620
    %3622 = vmatprep.subr.mxu0 0.0
    %3623 = vmatpush1.msra.mxu0 0.0
    %3624 = vmatprep.subr.mxu0 0.0
    %3625 = vmatpush1.msra.mxu0 0.0
    %3626 = vmatprep.subr.mxu0 0.0
    %3627 = vmatpush1.msra.mxu0 0.0
    %3628 = vmatprep.subr.mxu0 0.0
    %3629 = vmatpush1.msra.mxu0 0.0
    %3630 = vmatprep.subr.mxu0 0.0
    %3631 = vmatpush1.msra.mxu0 0.0
    %3632 = vmatprep.subr.mxu0 0.0
    %3633 = vmatpush1.msra.mxu0 0.0
    %3634 = vmatprep.subr.mxu0 0.0
    %3635 = vmatpush1.msra.mxu0 0.0
    %3636 = vmatprep.subr.mxu0 0.0
    %3637 = vmatpush1.msra.mxu0 0.0
    %3638 = vmatprep.subr.mxu0 0.0
    %3639 = vmatpush1.msra.mxu0 0.0
    %3640 = vmatprep.subr.mxu0 0.0
    %3641 = vmatpush1.msra.mxu0 0.0
    %3642 = vmatprep.subr.mxu0 0.0
    %3643 = vmatpush1.msra.mxu0 0.0
    %3644 = vmatprep.subr.mxu0 0.0
    %3645 = vmatpush1.msra.mxu0 0.0
    %3646 = vmatprep.subr.mxu0 0.0
    %3647 = vmatpush1.msra.mxu0 0.0
    %3648 = vmatprep.subr.mxu0 0.0
    %3649 = vmatpush1.msra.mxu0 0.0
    %3650 = vmatprep.subr.mxu0 0.0
    %3651 = vmatpush1.msra.mxu0 0.0
    %3652 = vmatprep.subr.mxu0 0.0
    %3653 = vmatpush1.msra.mxu0 0.0
    %3654 = vmatprep.subr.mxu0 0.0
    %3655 = vmatpush1.msra.mxu0 0.0
    %3656 = vmatprep.subr.mxu0 0.0
    %3657 = vmatpush1.msra.mxu0 0.0
    %3658 = vmatprep.subr.mxu0 0.0
    %3659 = vmatpush1.msra.mxu0 0.0
    %3660 = vmatprep.subr.mxu0 0.0
    %3661 = vmatpush1.msra.mxu0 0.0
    %3662 = vmatprep.subr.mxu0 0.0
    %3663 = vmatpush1.msra.mxu0 0.0
    %3664 = vmatprep.subr.mxu0 0.0
    %3665 = vmatpush1.msra.mxu0 0.0
    %3666 = vmatprep.subr.mxu0 0.0
    %3667 = vmatpush1.msra.mxu0 0.0
    %3668 = vmatprep.subr.mxu0 0.0
    %3669 = vmatpush1.msra.mxu0 0.0
    %3670 = vmatprep.subr.mxu0 0.0
    %3671 = vmatpush1.msra.mxu0 0.0
    %3672 = vmatprep.subr.mxu0 0.0
    %3673 = vmatpush1.msra.mxu0 0.0
    %3674 = vmatprep.subr.mxu0 0.0
    %3675 = vmatpush1.msra.mxu0 0.0
    %3676 = vmatprep.subr.mxu0 0.0
    %3677 = vmatpush1.msra.mxu0 0.0
    %3678 = vmatprep.subr.mxu0 0.0
    %3679 = vmatpush1.msra.mxu0 0.0
    %3680 = vmatprep.subr.mxu0 0.0
    %3681 = vmatpush1.msra.mxu0 0.0
    %3682 = vmatprep.subr.mxu0 0.0
    %3683 = vmatpush1.msra.mxu0 0.0
    %3684 = vmatprep.mubr.f32.mxu0 0.0
    %v3685 = vand.u32 %v3243, 4294901760
    %3686 = vmatmul.mubr.f32.gmra.mrb[0].mxu0 %v3685
    %v3687 = vpop.f32.mrb[0].mxu0
    %v3688 = vadd.f32 %v3616, %v3687
    %v3689 = vpop.f32.mrb[0].mxu0
    %3690 = vdwg.mxu0
    %v3691 = vadd.f32 %v3233, %v3688
    %3692 = vrot.lane.b32.xlu0 %v32, 120
    %v3693 = vpop.permute.xlu0 %3692
    %3694 = vrot.lane.b32.xlu0 %v33, 120
    %v3695 = vpop.permute.xlu0 %3694
    %vm3696 = vcmp.lt.s32.totalorder %v40, 120
    %v3697 = vsel %vm3696, %v3693, %v3695
    %s3698 = scalar_lea.vmem %s2, 64
    %v3699 = vld [vmem:[%s3698] sm:$0xff]
    %v3701 = vsel %vm45, %v3699, 0
    %3703 = vmatprep.subr.mxu0 0.0
    %v3704 = vand.u32 %v3697, 4294901760
    %3705 = vmatpush1.msra.mxu0 %v3704
    %3706 = vmatprep.subr.mxu0 0.0
    %3707 = vmatpush1.msra.mxu0 0.0
    %3708 = vmatprep.subr.mxu0 0.0
    %3709 = vmatpush1.msra.mxu0 0.0
    %3710 = vmatprep.subr.mxu0 0.0
    %3711 = vmatpush1.msra.mxu0 0.0
    %3712 = vmatprep.subr.mxu0 0.0
    %3713 = vmatpush1.msra.mxu0 0.0
    %3714 = vmatprep.subr.mxu0 0.0
    %3715 = vmatpush1.msra.mxu0 0.0
    %3716 = vmatprep.subr.mxu0 0.0
    %3717 = vmatpush1.msra.mxu0 0.0
    %3718 = vmatprep.subr.mxu0 0.0
    %3719 = vmatpush1.msra.mxu0 0.0
    %3720 = vmatprep.subr.mxu0 0.0
    %3721 = vmatpush1.msra.mxu0 0.0
    %3722 = vmatprep.subr.mxu0 0.0
    %3723 = vmatpush1.msra.mxu0 0.0
    %3724 = vmatprep.subr.mxu0 0.0
    %3725 = vmatpush1.msra.mxu0 0.0
    %3726 = vmatprep.subr.mxu0 0.0
    %3727 = vmatpush1.msra.mxu0 0.0
    %3728 = vmatprep.subr.mxu0 0.0
    %3729 = vmatpush1.msra.mxu0 0.0
    %3730 = vmatprep.subr.mxu0 0.0
    %3731 = vmatpush1.msra.mxu0 0.0
    %3732 = vmatprep.subr.mxu0 0.0
    %3733 = vmatpush1.msra.mxu0 0.0
    %3734 = vmatprep.subr.mxu0 0.0
    %3735 = vmatpush1.msra.mxu0 0.0
    %3736 = vmatprep.subr.mxu0 0.0
    %3737 = vmatpush1.msra.mxu0 0.0
    %3738 = vmatprep.subr.mxu0 0.0
    %3739 = vmatpush1.msra.mxu0 0.0
    %3740 = vmatprep.subr.mxu0 0.0
    %3741 = vmatpush1.msra.mxu0 0.0
    %3742 = vmatprep.subr.mxu0 0.0
    %3743 = vmatpush1.msra.mxu0 0.0
    %3744 = vmatprep.subr.mxu0 0.0
    %3745 = vmatpush1.msra.mxu0 0.0
    %3746 = vmatprep.subr.mxu0 0.0
    %3747 = vmatpush1.msra.mxu0 0.0
    %3748 = vmatprep.subr.mxu0 0.0
    %3749 = vmatpush1.msra.mxu0 0.0
    %3750 = vmatprep.subr.mxu0 0.0
    %3751 = vmatpush1.msra.mxu0 0.0
    %3752 = vmatprep.subr.mxu0 0.0
    %3753 = vmatpush1.msra.mxu0 0.0
    %3754 = vmatprep.subr.mxu0 0.0
    %3755 = vmatpush1.msra.mxu0 0.0
    %3756 = vmatprep.subr.mxu0 0.0
    %3757 = vmatpush1.msra.mxu0 0.0
    %3758 = vmatprep.subr.mxu0 0.0
    %3759 = vmatpush1.msra.mxu0 0.0
    %3760 = vmatprep.subr.mxu0 0.0
    %3761 = vmatpush1.msra.mxu0 0.0
    %3762 = vmatprep.subr.mxu0 0.0
    %3763 = vmatpush1.msra.mxu0 0.0
    %3764 = vmatprep.subr.mxu0 0.0
    %3765 = vmatpush1.msra.mxu0 0.0
    %3766 = vmatprep.subr.mxu0 0.0
    %3767 = vmatpush1.msra.mxu0 0.0
    %3768 = vmatprep.mubr.f32.mxu0 0.0
    %v3769 = vand.u32 %v3701, 4294901760
    %v3770 = vsub.f32 %v3701, %v3769
    %v3771 = vand.u32 %v3770, 4294901760
    %v3772 = vsub.f32 %v3770, %v3771
    %v3773 = vand.u32 %v3772, 4294901760
    %3774 = vmatmul.mubr.f32.gmra.mrb[0].mxu0 %v3773
    %v3775 = vpop.f32.mrb[0].mxu0
    %v3776 = vadd.f32 0.0, %v3775
    %v3777 = vpop.f32.mrb[0].mxu0
    %3778 = vdwg.mxu0
    %3779 = vmatprep.subr.mxu0 0.0
    %v3780 = vand.u32 %v3697, 4294901760
    %v3781 = vsub.f32 %v3697, %v3780
    %v3782 = vand.u32 %v3781, 4294901760
    %v3783 = vsub.f32 %v3781, %v3782
    %v3784 = vand.u32 %v3783, 4294901760
    %3785 = vmatpush1.msra.mxu0 %v3784
    %3786 = vmatprep.subr.mxu0 0.0
    %3787 = vmatpush1.msra.mxu0 0.0
    %3788 = vmatprep.subr.mxu0 0.0
    %3789 = vmatpush1.msra.mxu0 0.0
    %3790 = vmatprep.subr.mxu0 0.0
    %3791 = vmatpush1.msra.mxu0 0.0
    %3792 = vmatprep.subr.mxu0 0.0
    %3793 = vmatpush1.msra.mxu0 0.0
    %3794 = vmatprep.subr.mxu0 0.0
    %3795 = vmatpush1.msra.mxu0 0.0
    %3796 = vmatprep.subr.mxu0 0.0
    %3797 = vmatpush1.msra.mxu0 0.0
    %3798 = vmatprep.subr.mxu0 0.0
    %3799 = vmatpush1.msra.mxu0 0.0
    %3800 = vmatprep.subr.mxu0 0.0
    %3801 = vmatpush1.msra.mxu0 0.0
    %3802 = vmatprep.subr.mxu0 0.0
    %3803 = vmatpush1.msra.mxu0 0.0
    %3804 = vmatprep.subr.mxu0 0.0
    %3805 = vmatpush1.msra.mxu0 0.0
    %3806 = vmatprep.subr.mxu0 0.0
    %3807 = vmatpush1.msra.mxu0 0.0
    %3808 = vmatprep.subr.mxu0 0.0
    %3809 = vmatpush1.msra.mxu0 0.0
    %3810 = vmatprep.subr.mxu0 0.0
    %3811 = vmatpush1.msra.mxu0 0.0
    %3812 = vmatprep.subr.mxu0 0.0
    %3813 = vmatpush1.msra.mxu0 0.0
    %3814 = vmatprep.subr.mxu0 0.0
    %3815 = vmatpush1.msra.mxu0 0.0
    %3816 = vmatprep.subr.mxu0 0.0
    %3817 = vmatpush1.msra.mxu0 0.0
    %3818 = vmatprep.subr.mxu0 0.0
    %3819 = vmatpush1.msra.mxu0 0.0
    %3820 = vmatprep.subr.mxu0 0.0
    %3821 = vmatpush1.msra.mxu0 0.0
    %3822 = vmatprep.subr.mxu0 0.0
    %3823 = vmatpush1.msra.mxu0 0.0
    %3824 = vmatprep.subr.mxu0 0.0
    %3825 = vmatpush1.msra.mxu0 0.0
    %3826 = vmatprep.subr.mxu0 0.0
    %3827 = vmatpush1.msra.mxu0 0.0
    %3828 = vmatprep.subr.mxu0 0.0
    %3829 = vmatpush1.msra.mxu0 0.0
    %3830 = vmatprep.subr.mxu0 0.0
    %3831 = vmatpush1.msra.mxu0 0.0
    %3832 = vmatprep.subr.mxu0 0.0
    %3833 = vmatpush1.msra.mxu0 0.0
    %3834 = vmatprep.subr.mxu0 0.0
    %3835 = vmatpush1.msra.mxu0 0.0
    %3836 = vmatprep.subr.mxu0 0.0
    %3837 = vmatpush1.msra.mxu0 0.0
    %3838 = vmatprep.subr.mxu0 0.0
    %3839 = vmatpush1.msra.mxu0 0.0
    %3840 = vmatprep.subr.mxu0 0.0
    %3841 = vmatpush1.msra.mxu0 0.0
    %3842 = vmatprep.subr.mxu0 0.0
    %3843 = vmatpush1.msra.mxu0 0.0
    %3844 = vmatprep.subr.mxu0 0.0
    %3845 = vmatpush1.msra.mxu0 0.0
    %3846 = vmatprep.subr.mxu0 0.0
    %3847 = vmatpush1.msra.mxu0 0.0
    %3848 = vmatprep.mubr.f32.mxu0 0.0
    %v3849 = vand.u32 %v3701, 4294901760
    %3850 = vmatmul.mubr.f32.gmra.mrb[0].mxu0 %v3849
    %v3851 = vpop.f32.mrb[0].mxu0
    %v3852 = vadd.f32 %v3776, %v3851
    %v3853 = vpop.f32.mrb[0].mxu0
    %3854 = vdwg.mxu0
    %3855 = vmatprep.subr.mxu0 0.0
    %v3856 = vand.u32 %v3697, 4294901760
    %v3857 = vsub.f32 %v3697, %v3856
    %3858 = vmatpush1.msra.mxu0 %v3857
    %3859 = vmatprep.subr.mxu0 0.0
    %3860 = vmatpush1.msra.mxu0 0.0
    %3861 = vmatprep.subr.mxu0 0.0
    %3862 = vmatpush1.msra.mxu0 0.0
    %3863 = vmatprep.subr.mxu0 0.0
    %3864 = vmatpush1.msra.mxu0 0.0
    %3865 = vmatprep.subr.mxu0 0.0
    %3866 = vmatpush1.msra.mxu0 0.0
    %3867 = vmatprep.subr.mxu0 0.0
    %3868 = vmatpush1.msra.mxu0 0.0
    %3869 = vmatprep.subr.mxu0 0.0
    %3870 = vmatpush1.msra.mxu0 0.0
    %3871 = vmatprep.subr.mxu0 0.0
    %3872 = vmatpush1.msra.mxu0 0.0
    %3873 = vmatprep.subr.mxu0 0.0
    %3874 = vmatpush1.msra.mxu0 0.0
    %3875 = vmatprep.subr.mxu0 0.0
    %3876 = vmatpush1.msra.mxu0 0.0
    %3877 = vmatprep.subr.mxu0 0.0
    %3878 = vmatpush1.msra.mxu0 0.0
    %3879 = vmatprep.subr.mxu0 0.0
    %3880 = vmatpush1.msra.mxu0 0.0
    %3881 = vmatprep.subr.mxu0 0.0
    %3882 = vmatpush1.msra.mxu0 0.0
    %3883 = vmatprep.subr.mxu0 0.0
    %3884 = vmatpush1.msra.mxu0 0.0
    %3885 = vmatprep.subr.mxu0 0.0
    %3886 = vmatpush1.msra.mxu0 0.0
    %3887 = vmatprep.subr.mxu0 0.0
    %3888 = vmatpush1.msra.mxu0 0.0
    %3889 = vmatprep.subr.mxu0 0.0
    %3890 = vmatpush1.msra.mxu0 0.0
    %3891 = vmatprep.subr.mxu0 0.0
    %3892 = vmatpush1.msra.mxu0 0.0
    %3893 = vmatprep.subr.mxu0 0.0
    %3894 = vmatpush1.msra.mxu0 0.0
    %3895 = vmatprep.subr.mxu0 0.0
    %3896 = vmatpush1.msra.mxu0 0.0
    %3897 = vmatprep.subr.mxu0 0.0
    %3898 = vmatpush1.msra.mxu0 0.0
    %3899 = vmatprep.subr.mxu0 0.0
    %3900 = vmatpush1.msra.mxu0 0.0
    %3901 = vmatprep.subr.mxu0 0.0
    %3902 = vmatpush1.msra.mxu0 0.0
    %3903 = vmatprep.subr.mxu0 0.0
    %3904 = vmatpush1.msra.mxu0 0.0
    %3905 = vmatprep.subr.mxu0 0.0
    %3906 = vmatpush1.msra.mxu0 0.0
    %3907 = vmatprep.subr.mxu0 0.0
    %3908 = vmatpush1.msra.mxu0 0.0
    %3909 = vmatprep.subr.mxu0 0.0
    %3910 = vmatpush1.msra.mxu0 0.0
    %3911 = vmatprep.subr.mxu0 0.0
    %3912 = vmatpush1.msra.mxu0 0.0
    %3913 = vmatprep.subr.mxu0 0.0
    %3914 = vmatpush1.msra.mxu0 0.0
    %3915 = vmatprep.subr.mxu0 0.0
    %3916 = vmatpush1.msra.mxu0 0.0
    %3917 = vmatprep.subr.mxu0 0.0
    %3918 = vmatpush1.msra.mxu0 0.0
    %3919 = vmatprep.subr.mxu0 0.0
    %3920 = vmatpush1.msra.mxu0 0.0
    %3921 = vmatprep.mubr.f32.mxu0 0.0
    %v3922 = vand.u32 %v3701, 4294901760
    %v3923 = vsub.f32 %v3701, %v3922
    %3924 = vmatmul.mubr.f32.gmra.mrb[0].mxu0 %v3923
    %v3925 = vpop.f32.mrb[0].mxu0
    %v3926 = vadd.f32 %v3852, %v3925
    %v3927 = vpop.f32.mrb[0].mxu0
    %3928 = vdwg.mxu0
    %3929 = vmatprep.subr.mxu0 0.0
    %v3930 = vand.u32 %v3697, 4294901760
    %3931 = vmatpush1.msra.mxu0 %v3930
    %3932 = vmatprep.subr.mxu0 0.0
    %3933 = vmatpush1.msra.mxu0 0.0
    %3934 = vmatprep.subr.mxu0 0.0
    %3935 = vmatpush1.msra.mxu0 0.0
    %3936 = vmatprep.subr.mxu0 0.0
    %3937 = vmatpush1.msra.mxu0 0.0
    %3938 = vmatprep.subr.mxu0 0.0
    %3939 = vmatpush1.msra.mxu0 0.0
    %3940 = vmatprep.subr.mxu0 0.0
    %3941 = vmatpush1.msra.mxu0 0.0
    %3942 = vmatprep.subr.mxu0 0.0
    %3943 = vmatpush1.msra.mxu0 0.0
    %3944 = vmatprep.subr.mxu0 0.0
    %3945 = vmatpush1.msra.mxu0 0.0
    %3946 = vmatprep.subr.mxu0 0.0
    %3947 = vmatpush1.msra.mxu0 0.0
    %3948 = vmatprep.subr.mxu0 0.0
    %3949 = vmatpush1.msra.mxu0 0.0
    %3950 = vmatprep.subr.mxu0 0.0
    %3951 = vmatpush1.msra.mxu0 0.0
    %3952 = vmatprep.subr.mxu0 0.0
    %3953 = vmatpush1.msra.mxu0 0.0
    %3954 = vmatprep.subr.mxu0 0.0
    %3955 = vmatpush1.msra.mxu0 0.0
    %3956 = vmatprep.subr.mxu0 0.0
    %3957 = vmatpush1.msra.mxu0 0.0
    %3958 = vmatprep.subr.mxu0 0.0
    %3959 = vmatpush1.msra.mxu0 0.0
    %3960 = vmatprep.subr.mxu0 0.0
    %3961 = vmatpush1.msra.mxu0 0.0
    %3962 = vmatprep.subr.mxu0 0.0
    %3963 = vmatpush1.msra.mxu0 0.0
    %3964 = vmatprep.subr.mxu0 0.0
    %3965 = vmatpush1.msra.mxu0 0.0
    %3966 = vmatprep.subr.mxu0 0.0
    %3967 = vmatpush1.msra.mxu0 0.0
    %3968 = vmatprep.subr.mxu0 0.0
    %3969 = vmatpush1.msra.mxu0 0.0
    %3970 = vmatprep.subr.mxu0 0.0
    %3971 = vmatpush1.msra.mxu0 0.0
    %3972 = vmatprep.subr.mxu0 0.0
    %3973 = vmatpush1.msra.mxu0 0.0
    %3974 = vmatprep.subr.mxu0 0.0
    %3975 = vmatpush1.msra.mxu0 0.0
    %3976 = vmatprep.subr.mxu0 0.0
    %3977 = vmatpush1.msra.mxu0 0.0
    %3978 = vmatprep.subr.mxu0 0.0
    %3979 = vmatpush1.msra.mxu0 0.0
    %3980 = vmatprep.subr.mxu0 0.0
    %3981 = vmatpush1.msra.mxu0 0.0
    %3982 = vmatprep.subr.mxu0 0.0
    %3983 = vmatpush1.msra.mxu0 0.0
    %3984 = vmatprep.subr.mxu0 0.0
    %3985 = vmatpush1.msra.mxu0 0.0
    %3986 = vmatprep.subr.mxu0 0.0
    %3987 = vmatpush1.msra.mxu0 0.0
    %3988 = vmatprep.subr.mxu0 0.0
    %3989 = vmatpush1.msra.mxu0 0.0
    %3990 = vmatprep.subr.mxu0 0.0
    %3991 = vmatpush1.msra.mxu0 0.0
    %3992 = vmatprep.subr.mxu0 0.0
    %3993 = vmatpush1.msra.mxu0 0.0
    %3994 = vmatprep.mubr.f32.mxu0 0.0
    %v3995 = vand.u32 %v3701, 4294901760
    %v3996 = vsub.f32 %v3701, %v3995
    %v3997 = vand.u32 %v3996, 4294901760
    %3998 = vmatmul.mubr.f32.gmra.mrb[0].mxu0 %v3997
    %v3999 = vpop.f32.mrb[0].mxu0
    %v4000 = vadd.f32 %v3926, %v3999
    %v4001 = vpop.f32.mrb[0].mxu0
    %4002 = vdwg.mxu0
    %4003 = vmatprep.subr.mxu0 0.0
    %v4004 = vand.u32 %v3697, 4294901760
    %v4005 = vsub.f32 %v3697, %v4004
    %v4006 = vand.u32 %v4005, 4294901760
    %4007 = vmatpush1.msra.mxu0 %v4006
    %4008 = vmatprep.subr.mxu0 0.0
    %4009 = vmatpush1.msra.mxu0 0.0
    %4010 = vmatprep.subr.mxu0 0.0
    %4011 = vmatpush1.msra.mxu0 0.0
    %4012 = vmatprep.subr.mxu0 0.0
    %4013 = vmatpush1.msra.mxu0 0.0
    %4014 = vmatprep.subr.mxu0 0.0
    %4015 = vmatpush1.msra.mxu0 0.0
    %4016 = vmatprep.subr.mxu0 0.0
    %4017 = vmatpush1.msra.mxu0 0.0
    %4018 = vmatprep.subr.mxu0 0.0
    %4019 = vmatpush1.msra.mxu0 0.0
    %4020 = vmatprep.subr.mxu0 0.0
    %4021 = vmatpush1.msra.mxu0 0.0
    %4022 = vmatprep.subr.mxu0 0.0
    %4023 = vmatpush1.msra.mxu0 0.0
    %4024 = vmatprep.subr.mxu0 0.0
    %4025 = vmatpush1.msra.mxu0 0.0
    %4026 = vmatprep.subr.mxu0 0.0
    %4027 = vmatpush1.msra.mxu0 0.0
    %4028 = vmatprep.subr.mxu0 0.0
    %4029 = vmatpush1.msra.mxu0 0.0
    %4030 = vmatprep.subr.mxu0 0.0
    %4031 = vmatpush1.msra.mxu0 0.0
    %4032 = vmatprep.subr.mxu0 0.0
    %4033 = vmatpush1.msra.mxu0 0.0
    %4034 = vmatprep.subr.mxu0 0.0
    %4035 = vmatpush1.msra.mxu0 0.0
    %4036 = vmatprep.subr.mxu0 0.0
    %4037 = vmatpush1.msra.mxu0 0.0
    %4038 = vmatprep.subr.mxu0 0.0
    %4039 = vmatpush1.msra.mxu0 0.0
    %4040 = vmatprep.subr.mxu0 0.0
    %4041 = vmatpush1.msra.mxu0 0.0
    %4042 = vmatprep.subr.mxu0 0.0
    %4043 = vmatpush1.msra.mxu0 0.0
    %4044 = vmatprep.subr.mxu0 0.0
    %4045 = vmatpush1.msra.mxu0 0.0
    %4046 = vmatprep.subr.mxu0 0.0
    %4047 = vmatpush1.msra.mxu0 0.0
    %4048 = vmatprep.subr.mxu0 0.0
    %4049 = vmatpush1.msra.mxu0 0.0
    %4050 = vmatprep.subr.mxu0 0.0
    %4051 = vmatpush1.msra.mxu0 0.0
    %4052 = vmatprep.subr.mxu0 0.0
    %4053 = vmatpush1.msra.mxu0 0.0
    %4054 = vmatprep.subr.mxu0 0.0
    %4055 = vmatpush1.msra.mxu0 0.0
    %4056 = vmatprep.subr.mxu0 0.0
    %4057 = vmatpush1.msra.mxu0 0.0
    %4058 = vmatprep.subr.mxu0 0.0
    %4059 = vmatpush1.msra.mxu0 0.0
    %4060 = vmatprep.subr.mxu0 0.0
    %4061 = vmatpush1.msra.mxu0 0.0
    %4062 = vmatprep.subr.mxu0 0.0
    %4063 = vmatpush1.msra.mxu0 0.0
    %4064 = vmatprep.subr.mxu0 0.0
    %4065 = vmatpush1.msra.mxu0 0.0
    %4066 = vmatprep.subr.mxu0 0.0
    %4067 = vmatpush1.msra.mxu0 0.0
    %4068 = vmatprep.subr.mxu0 0.0
    %4069 = vmatpush1.msra.mxu0 0.0
    %4070 = vmatprep.mubr.f32.mxu0 0.0
    %v4071 = vand.u32 %v3701, 4294901760
    %4072 = vmatmul.mubr.f32.gmra.mrb[0].mxu0 %v4071
    %v4073 = vpop.f32.mrb[0].mxu0
    %v4074 = vadd.f32 %v4000, %v4073
    %v4075 = vpop.f32.mrb[0].mxu0
    %4076 = vdwg.mxu0
    %4077 = vmatprep.subr.mxu0 0.0
    %v4078 = vand.u32 %v3697, 4294901760
    %4079 = vmatpush1.msra.mxu0 %v4078
    %4080 = vmatprep.subr.mxu0 0.0
    %4081 = vmatpush1.msra.mxu0 0.0
    %4082 = vmatprep.subr.mxu0 0.0
    %4083 = vmatpush1.msra.mxu0 0.0
    %4084 = vmatprep.subr.mxu0 0.0
    %4085 = vmatpush1.msra.mxu0 0.0
    %4086 = vmatprep.subr.mxu0 0.0
    %4087 = vmatpush1.msra.mxu0 0.0
    %4088 = vmatprep.subr.mxu0 0.0
    %4089 = vmatpush1.msra.mxu0 0.0
    %4090 = vmatprep.subr.mxu0 0.0
    %4091 = vmatpush1.msra.mxu0 0.0
    %4092 = vmatprep.subr.mxu0 0.0
    %4093 = vmatpush1.msra.mxu0 0.0
    %4094 = vmatprep.subr.mxu0 0.0
    %4095 = vmatpush1.msra.mxu0 0.0
    %4096 = vmatprep.subr.mxu0 0.0
    %4097 = vmatpush1.msra.mxu0 0.0
    %4098 = vmatprep.subr.mxu0 0.0
    %4099 = vmatpush1.msra.mxu0 0.0
    %4100 = vmatprep.subr.mxu0 0.0
    %4101 = vmatpush1.msra.mxu0 0.0
    %4102 = vmatprep.subr.mxu0 0.0
    %4103 = vmatpush1.msra.mxu0 0.0
    %4104 = vmatprep.subr.mxu0 0.0
    %4105 = vmatpush1.msra.mxu0 0.0
    %4106 = vmatprep.subr.mxu0 0.0
    %4107 = vmatpush1.msra.mxu0 0.0
    %4108 = vmatprep.subr.mxu0 0.0
    %4109 = vmatpush1.msra.mxu0 0.0
    %4110 = vmatprep.subr.mxu0 0.0
    %4111 = vmatpush1.msra.mxu0 0.0
    %4112 = vmatprep.subr.mxu0 0.0
    %4113 = vmatpush1.msra.mxu0 0.0
    %4114 = vmatprep.subr.mxu0 0.0
    %4115 = vmatpush1.msra.mxu0 0.0
    %4116 = vmatprep.subr.mxu0 0.0
    %4117 = vmatpush1.msra.mxu0 0.0
    %4118 = vmatprep.subr.mxu0 0.0
    %4119 = vmatpush1.msra.mxu0 0.0
    %4120 = vmatprep.subr.mxu0 0.0
    %4121 = vmatpush1.msra.mxu0 0.0
    %4122 = vmatprep.subr.mxu0 0.0
    %4123 = vmatpush1.msra.mxu0 0.0
    %4124 = vmatprep.subr.mxu0 0.0
    %4125 = vmatpush1.msra.mxu0 0.0
    %4126 = vmatprep.subr.mxu0 0.0
    %4127 = vmatpush1.msra.mxu0 0.0
    %4128 = vmatprep.subr.mxu0 0.0
    %4129 = vmatpush1.msra.mxu0 0.0
    %4130 = vmatprep.subr.mxu0 0.0
    %4131 = vmatpush1.msra.mxu0 0.0
    %4132 = vmatprep.subr.mxu0 0.0
    %4133 = vmatpush1.msra.mxu0 0.0
    %4134 = vmatprep.subr.mxu0 0.0
    %4135 = vmatpush1.msra.mxu0 0.0
    %4136 = vmatprep.subr.mxu0 0.0
    %4137 = vmatpush1.msra.mxu0 0.0
    %4138 = vmatprep.subr.mxu0 0.0
    %4139 = vmatpush1.msra.mxu0 0.0
    %4140 = vmatprep.subr.mxu0 0.0
    %4141 = vmatpush1.msra.mxu0 0.0
    %4142 = vmatprep.mubr.f32.mxu0 0.0
    %v4143 = vand.u32 %v3701, 4294901760
    %4144 = vmatmul.mubr.f32.gmra.mrb[0].mxu0 %v4143
    %v4145 = vpop.f32.mrb[0].mxu0
    %v4146 = vadd.f32 %v4074, %v4145
    %v4147 = vpop.f32.mrb[0].mxu0
    %4148 = vdwg.mxu0
    %v4149 = vadd.f32 %v3691, %v4146
    %4150 = vrot.lane.b32.xlu0 %v32, 119
    %v4151 = vpop.permute.xlu0 %4150
    %4152 = vrot.lane.b32.xlu0 %v33, 119
    %v4153 = vpop.permute.xlu0 %4152
    %vm4154 = vcmp.lt.s32.totalorder %v40, 119
    %v4155 = vsel %vm4154, %v4151, %v4153
    %s4156 = scalar_lea.vmem %s2, 72
    %v4157 = vld [vmem:[%s4156] sm:$0xff]
    %v4159 = vsel %vm45, %v4157, 0
    %4161 = vmatprep.subr.mxu0 0.0
    %v4162 = vand.u32 %v4155, 4294901760
    %4163 = vmatpush1.msra.mxu0 %v4162
    %4164 = vmatprep.subr.mxu0 0.0
    %4165 = vmatpush1.msra.mxu0 0.0
    %4166 = vmatprep.subr.mxu0 0.0
    %4167 = vmatpush1.msra.mxu0 0.0
    %4168 = vmatprep.subr.mxu0 0.0
    %4169 = vmatpush1.msra.mxu0 0.0
    %4170 = vmatprep.subr.mxu0 0.0
    %4171 = vmatpush1.msra.mxu0 0.0
    %4172 = vmatprep.subr.mxu0 0.0
    %4173 = vmatpush1.msra.mxu0 0.0
    %4174 = vmatprep.subr.mxu0 0.0
    %4175 = vmatpush1.msra.mxu0 0.0
    %4176 = vmatprep.subr.mxu0 0.0
    %4177 = vmatpush1.msra.mxu0 0.0
    %4178 = vmatprep.subr.mxu0 0.0
    %4179 = vmatpush1.msra.mxu0 0.0
    %4180 = vmatprep.subr.mxu0 0.0
    %4181 = vmatpush1.msra.mxu0 0.0
    %4182 = vmatprep.subr.mxu0 0.0
    %4183 = vmatpush1.msra.mxu0 0.0
    %4184 = vmatprep.subr.mxu0 0.0
    %4185 = vmatpush1.msra.mxu0 0.0
    %4186 = vmatprep.subr.mxu0 0.0
    %4187 = vmatpush1.msra.mxu0 0.0
    %4188 = vmatprep.subr.mxu0 0.0
    %4189 = vmatpush1.msra.mxu0 0.0
    %4190 = vmatprep.subr.mxu0 0.0
    %4191 = vmatpush1.msra.mxu0 0.0
    %4192 = vmatprep.subr.mxu0 0.0
    %4193 = vmatpush1.msra.mxu0 0.0
    %4194 = vmatprep.subr.mxu0 0.0
    %4195 = vmatpush1.msra.mxu0 0.0
    %4196 = vmatprep.subr.mxu0 0.0
    %4197 = vmatpush1.msra.mxu0 0.0
    %4198 = vmatprep.subr.mxu0 0.0
    %4199 = vmatpush1.msra.mxu0 0.0
    %4200 = vmatprep.subr.mxu0 0.0
    %4201 = vmatpush1.msra.mxu0 0.0
    %4202 = vmatprep.subr.mxu0 0.0
    %4203 = vmatpush1.msra.mxu0 0.0
    %4204 = vmatprep.subr.mxu0 0.0
    %4205 = vmatpush1.msra.mxu0 0.0
    %4206 = vmatprep.subr.mxu0 0.0
    %4207 = vmatpush1.msra.mxu0 0.0
    %4208 = vmatprep.subr.mxu0 0.0
    %4209 = vmatpush1.msra.mxu0 0.0
    %4210 = vmatprep.subr.mxu0 0.0
    %4211 = vmatpush1.msra.mxu0 0.0
    %4212 = vmatprep.subr.mxu0 0.0
    %4213 = vmatpush1.msra.mxu0 0.0
    %4214 = vmatprep.subr.mxu0 0.0
    %4215 = vmatpush1.msra.mxu0 0.0
    %4216 = vmatprep.subr.mxu0 0.0
    %4217 = vmatpush1.msra.mxu0 0.0
    %4218 = vmatprep.subr.mxu0 0.0
    %4219 = vmatpush1.msra.mxu0 0.0
    %4220 = vmatprep.subr.mxu0 0.0
    %4221 = vmatpush1.msra.mxu0 0.0
    %4222 = vmatprep.subr.mxu0 0.0
    %4223 = vmatpush1.msra.mxu0 0.0
    %4224 = vmatprep.subr.mxu0 0.0
    %4225 = vmatpush1.msra.mxu0 0.0
    %4226 = vmatprep.mubr.f32.mxu0 0.0
    %v4227 = vand.u32 %v4159, 4294901760
    %v4228 = vsub.f32 %v4159, %v4227
    %v4229 = vand.u32 %v4228, 4294901760
    %v4230 = vsub.f32 %v4228, %v4229
    %v4231 = vand.u32 %v4230, 4294901760
    %4232 = vmatmul.mubr.f32.gmra.mrb[0].mxu0 %v4231
    %v4233 = vpop.f32.mrb[0].mxu0
    %v4234 = vadd.f32 0.0, %v4233
    %v4235 = vpop.f32.mrb[0].mxu0
    %4236 = vdwg.mxu0
    %4237 = vmatprep.subr.mxu0 0.0
    %v4238 = vand.u32 %v4155, 4294901760
    %v4239 = vsub.f32 %v4155, %v4238
    %v4240 = vand.u32 %v4239, 4294901760
    %v4241 = vsub.f32 %v4239, %v4240
    %v4242 = vand.u32 %v4241, 4294901760
    %4243 = vmatpush1.msra.mxu0 %v4242
    %4244 = vmatprep.subr.mxu0 0.0
    %4245 = vmatpush1.msra.mxu0 0.0
    %4246 = vmatprep.subr.mxu0 0.0
    %4247 = vmatpush1.msra.mxu0 0.0
    %4248 = vmatprep.subr.mxu0 0.0
    %4249 = vmatpush1.msra.mxu0 0.0
    %4250 = vmatprep.subr.mxu0 0.0
    %4251 = vmatpush1.msra.mxu0 0.0
    %4252 = vmatprep.subr.mxu0 0.0
    %4253 = vmatpush1.msra.mxu0 0.0
    %4254 = vmatprep.subr.mxu0 0.0
    %4255 = vmatpush1.msra.mxu0 0.0
    %4256 = vmatprep.subr.mxu0 0.0
    %4257 = vmatpush1.msra.mxu0 0.0
    %4258 = vmatprep.subr.mxu0 0.0
    %4259 = vmatpush1.msra.mxu0 0.0
    %4260 = vmatprep.subr.mxu0 0.0
    %4261 = vmatpush1.msra.mxu0 0.0
    %4262 = vmatprep.subr.mxu0 0.0
    %4263 = vmatpush1.msra.mxu0 0.0
    %4264 = vmatprep.subr.mxu0 0.0
    %4265 = vmatpush1.msra.mxu0 0.0
    %4266 = vmatprep.subr.mxu0 0.0
    %4267 = vmatpush1.msra.mxu0 0.0
    %4268 = vmatprep.subr.mxu0 0.0
    %4269 = vmatpush1.msra.mxu0 0.0
    %4270 = vmatprep.subr.mxu0 0.0
    %4271 = vmatpush1.msra.mxu0 0.0
    %4272 = vmatprep.subr.mxu0 0.0
    %4273 = vmatpush1.msra.mxu0 0.0
    %4274 = vmatprep.subr.mxu0 0.0
    %4275 = vmatpush1.msra.mxu0 0.0
    %4276 = vmatprep.subr.mxu0 0.0
    %4277 = vmatpush1.msra.mxu0 0.0
    %4278 = vmatprep.subr.mxu0 0.0
    %4279 = vmatpush1.msra.mxu0 0.0
    %4280 = vmatprep.subr.mxu0 0.0
    %4281 = vmatpush1.msra.mxu0 0.0
    %4282 = vmatprep.subr.mxu0 0.0
    %4283 = vmatpush1.msra.mxu0 0.0
    %4284 = vmatprep.subr.mxu0 0.0
    %4285 = vmatpush1.msra.mxu0 0.0
    %4286 = vmatprep.subr.mxu0 0.0
    %4287 = vmatpush1.msra.mxu0 0.0
    %4288 = vmatprep.subr.mxu0 0.0
    %4289 = vmatpush1.msra.mxu0 0.0
    %4290 = vmatprep.subr.mxu0 0.0
    %4291 = vmatpush1.msra.mxu0 0.0
    %4292 = vmatprep.subr.mxu0 0.0
    %4293 = vmatpush1.msra.mxu0 0.0
    %4294 = vmatprep.subr.mxu0 0.0
    %4295 = vmatpush1.msra.mxu0 0.0
    %4296 = vmatprep.subr.mxu0 0.0
    %4297 = vmatpush1.msra.mxu0 0.0
    %4298 = vmatprep.subr.mxu0 0.0
    %4299 = vmatpush1.msra.mxu0 0.0
    %4300 = vmatprep.subr.mxu0 0.0
    %4301 = vmatpush1.msra.mxu0 0.0
    %4302 = vmatprep.subr.mxu0 0.0
    %4303 = vmatpush1.msra.mxu0 0.0
    %4304 = vmatprep.subr.mxu0 0.0
    %4305 = vmatpush1.msra.mxu0 0.0
    %4306 = vmatprep.mubr.f32.mxu0 0.0
    %v4307 = vand.u32 %v4159, 4294901760
    %4308 = vmatmul.mubr.f32.gmra.mrb[0].mxu0 %v4307
    %v4309 = vpop.f32.mrb[0].mxu0
    %v4310 = vadd.f32 %v4234, %v4309
    %v4311 = vpop.f32.mrb[0].mxu0
    %4312 = vdwg.mxu0
    %4313 = vmatprep.subr.mxu0 0.0
    %v4314 = vand.u32 %v4155, 4294901760
    %v4315 = vsub.f32 %v4155, %v4314
    %4316 = vmatpush1.msra.mxu0 %v4315
    %4317 = vmatprep.subr.mxu0 0.0
    %4318 = vmatpush1.msra.mxu0 0.0
    %4319 = vmatprep.subr.mxu0 0.0
    %4320 = vmatpush1.msra.mxu0 0.0
    %4321 = vmatprep.subr.mxu0 0.0
    %4322 = vmatpush1.msra.mxu0 0.0
    %4323 = vmatprep.subr.mxu0 0.0
    %4324 = vmatpush1.msra.mxu0 0.0
    %4325 = vmatprep.subr.mxu0 0.0
    %4326 = vmatpush1.msra.mxu0 0.0
    %4327 = vmatprep.subr.mxu0 0.0
    %4328 = vmatpush1.msra.mxu0 0.0
    %4329 = vmatprep.subr.mxu0 0.0
    %4330 = vmatpush1.msra.mxu0 0.0
    %4331 = vmatprep.subr.mxu0 0.0
    %4332 = vmatpush1.msra.mxu0 0.0
    %4333 = vmatprep.subr.mxu0 0.0
    %4334 = vmatpush1.msra.mxu0 0.0
    %4335 = vmatprep.subr.mxu0 0.0
    %4336 = vmatpush1.msra.mxu0 0.0
    %4337 = vmatprep.subr.mxu0 0.0
    %4338 = vmatpush1.msra.mxu0 0.0
    %4339 = vmatprep.subr.mxu0 0.0
    %4340 = vmatpush1.msra.mxu0 0.0
    %4341 = vmatprep.subr.mxu0 0.0
    %4342 = vmatpush1.msra.mxu0 0.0
    %4343 = vmatprep.subr.mxu0 0.0
    %4344 = vmatpush1.msra.mxu0 0.0
    %4345 = vmatprep.subr.mxu0 0.0
    %4346 = vmatpush1.msra.mxu0 0.0
    %4347 = vmatprep.subr.mxu0 0.0
    %4348 = vmatpush1.msra.mxu0 0.0
    %4349 = vmatprep.subr.mxu0 0.0
    %4350 = vmatpush1.msra.mxu0 0.0
    %4351 = vmatprep.subr.mxu0 0.0
    %4352 = vmatpush1.msra.mxu0 0.0
    %4353 = vmatprep.subr.mxu0 0.0
    %4354 = vmatpush1.msra.mxu0 0.0
    %4355 = vmatprep.subr.mxu0 0.0
    %4356 = vmatpush1.msra.mxu0 0.0
    %4357 = vmatprep.subr.mxu0 0.0
    %4358 = vmatpush1.msra.mxu0 0.0
    %4359 = vmatprep.subr.mxu0 0.0
    %4360 = vmatpush1.msra.mxu0 0.0
    %4361 = vmatprep.subr.mxu0 0.0
    %4362 = vmatpush1.msra.mxu0 0.0
    %4363 = vmatprep.subr.mxu0 0.0
    %4364 = vmatpush1.msra.mxu0 0.0
    %4365 = vmatprep.subr.mxu0 0.0
    %4366 = vmatpush1.msra.mxu0 0.0
    %4367 = vmatprep.subr.mxu0 0.0
    %4368 = vmatpush1.msra.mxu0 0.0
    %4369 = vmatprep.subr.mxu0 0.0
    %4370 = vmatpush1.msra.mxu0 0.0
    %4371 = vmatprep.subr.mxu0 0.0
    %4372 = vmatpush1.msra.mxu0 0.0
    %4373 = vmatprep.subr.mxu0 0.0
    %4374 = vmatpush1.msra.mxu0 0.0
    %4375 = vmatprep.subr.mxu0 0.0
    %4376 = vmatpush1.msra.mxu0 0.0
    %4377 = vmatprep.subr.mxu0 0.0
    %4378 = vmatpush1.msra.mxu0 0.0
    %4379 = vmatprep.mubr.f32.mxu0 0.0
    %v4380 = vand.u32 %v4159, 4294901760
    %v4381 = vsub.f32 %v4159, %v4380
    %4382 = vmatmul.mubr.f32.gmra.mrb[0].mxu0 %v4381
    %v4383 = vpop.f32.mrb[0].mxu0
    %v4384 = vadd.f32 %v4310, %v4383
    %v4385 = vpop.f32.mrb[0].mxu0
    %4386 = vdwg.mxu0
    %4387 = vmatprep.subr.mxu0 0.0
    %v4388 = vand.u32 %v4155, 4294901760
    %4389 = vmatpush1.msra.mxu0 %v4388
    %4390 = vmatprep.subr.mxu0 0.0
    %4391 = vmatpush1.msra.mxu0 0.0
    %4392 = vmatprep.subr.mxu0 0.0
    %4393 = vmatpush1.msra.mxu0 0.0
    %4394 = vmatprep.subr.mxu0 0.0
    %4395 = vmatpush1.msra.mxu0 0.0
    %4396 = vmatprep.subr.mxu0 0.0
    %4397 = vmatpush1.msra.mxu0 0.0
    %4398 = vmatprep.subr.mxu0 0.0
    %4399 = vmatpush1.msra.mxu0 0.0
    %4400 = vmatprep.subr.mxu0 0.0
    %4401 = vmatpush1.msra.mxu0 0.0
    %4402 = vmatprep.subr.mxu0 0.0
    %4403 = vmatpush1.msra.mxu0 0.0
    %4404 = vmatprep.subr.mxu0 0.0
    %4405 = vmatpush1.msra.mxu0 0.0
    %4406 = vmatprep.subr.mxu0 0.0
    %4407 = vmatpush1.msra.mxu0 0.0
    %4408 = vmatprep.subr.mxu0 0.0
    %4409 = vmatpush1.msra.mxu0 0.0
    %4410 = vmatprep.subr.mxu0 0.0
    %4411 = vmatpush1.msra.mxu0 0.0
    %4412 = vmatprep.subr.mxu0 0.0
    %4413 = vmatpush1.msra.mxu0 0.0
    %4414 = vmatprep.subr.mxu0 0.0
    %4415 = vmatpush1.msra.mxu0 0.0
    %4416 = vmatprep.subr.mxu0 0.0
    %4417 = vmatpush1.msra.mxu0 0.0
    %4418 = vmatprep.subr.mxu0 0.0
    %4419 = vmatpush1.msra.mxu0 0.0
    %4420 = vmatprep.subr.mxu0 0.0
    %4421 = vmatpush1.msra.mxu0 0.0
    %4422 = vmatprep.subr.mxu0 0.0
    %4423 = vmatpush1.msra.mxu0 0.0
    %4424 = vmatprep.subr.mxu0 0.0
    %4425 = vmatpush1.msra.mxu0 0.0
    %4426 = vmatprep.subr.mxu0 0.0
    %4427 = vmatpush1.msra.mxu0 0.0
    %4428 = vmatprep.subr.mxu0 0.0
    %4429 = vmatpush1.msra.mxu0 0.0
    %4430 = vmatprep.subr.mxu0 0.0
    %4431 = vmatpush1.msra.mxu0 0.0
    %4432 = vmatprep.subr.mxu0 0.0
    %4433 = vmatpush1.msra.mxu0 0.0
    %4434 = vmatprep.subr.mxu0 0.0
    %4435 = vmatpush1.msra.mxu0 0.0
    %4436 = vmatprep.subr.mxu0 0.0
    %4437 = vmatpush1.msra.mxu0 0.0
    %4438 = vmatprep.subr.mxu0 0.0
    %4439 = vmatpush1.msra.mxu0 0.0
    %4440 = vmatprep.subr.mxu0 0.0
    %4441 = vmatpush1.msra.mxu0 0.0
    %4442 = vmatprep.subr.mxu0 0.0
    %4443 = vmatpush1.msra.mxu0 0.0
    %4444 = vmatprep.subr.mxu0 0.0
    %4445 = vmatpush1.msra.mxu0 0.0
    %4446 = vmatprep.subr.mxu0 0.0
    %4447 = vmatpush1.msra.mxu0 0.0
    %4448 = vmatprep.subr.mxu0 0.0
    %4449 = vmatpush1.msra.mxu0 0.0
    %4450 = vmatprep.subr.mxu0 0.0
    %4451 = vmatpush1.msra.mxu0 0.0
    %4452 = vmatprep.mubr.f32.mxu0 0.0
    %v4453 = vand.u32 %v4159, 4294901760
    %v4454 = vsub.f32 %v4159, %v4453
    %v4455 = vand.u32 %v4454, 4294901760
    %4456 = vmatmul.mubr.f32.gmra.mrb[0].mxu0 %v4455
    %v4457 = vpop.f32.mrb[0].mxu0
    %v4458 = vadd.f32 %v4384, %v4457
    %v4459 = vpop.f32.mrb[0].mxu0
    %4460 = vdwg.mxu0
    %4461 = vmatprep.subr.mxu0 0.0
    %v4462 = vand.u32 %v4155, 4294901760
    %v4463 = vsub.f32 %v4155, %v4462
    %v4464 = vand.u32 %v4463, 4294901760
    %4465 = vmatpush1.msra.mxu0 %v4464
    %4466 = vmatprep.subr.mxu0 0.0
    %4467 = vmatpush1.msra.mxu0 0.0
    %4468 = vmatprep.subr.mxu0 0.0
    %4469 = vmatpush1.msra.mxu0 0.0
    %4470 = vmatprep.subr.mxu0 0.0
    %4471 = vmatpush1.msra.mxu0 0.0
    %4472 = vmatprep.subr.mxu0 0.0
    %4473 = vmatpush1.msra.mxu0 0.0
    %4474 = vmatprep.subr.mxu0 0.0
    %4475 = vmatpush1.msra.mxu0 0.0
    %4476 = vmatprep.subr.mxu0 0.0
    %4477 = vmatpush1.msra.mxu0 0.0
    %4478 = vmatprep.subr.mxu0 0.0
    %4479 = vmatpush1.msra.mxu0 0.0
    %4480 = vmatprep.subr.mxu0 0.0
    %4481 = vmatpush1.msra.mxu0 0.0
    %4482 = vmatprep.subr.mxu0 0.0
    %4483 = vmatpush1.msra.mxu0 0.0
    %4484 = vmatprep.subr.mxu0 0.0
    %4485 = vmatpush1.msra.mxu0 0.0
    %4486 = vmatprep.subr.mxu0 0.0
    %4487 = vmatpush1.msra.mxu0 0.0
    %4488 = vmatprep.subr.mxu0 0.0
    %4489 = vmatpush1.msra.mxu0 0.0
    %4490 = vmatprep.subr.mxu0 0.0
    %4491 = vmatpush1.msra.mxu0 0.0
    %4492 = vmatprep.subr.mxu0 0.0
    %4493 = vmatpush1.msra.mxu0 0.0
    %4494 = vmatprep.subr.mxu0 0.0
    %4495 = vmatpush1.msra.mxu0 0.0
    %4496 = vmatprep.subr.mxu0 0.0
    %4497 = vmatpush1.msra.mxu0 0.0
    %4498 = vmatprep.subr.mxu0 0.0
    %4499 = vmatpush1.msra.mxu0 0.0
    %4500 = vmatprep.subr.mxu0 0.0
    %4501 = vmatpush1.msra.mxu0 0.0
    %4502 = vmatprep.subr.mxu0 0.0
    %4503 = vmatpush1.msra.mxu0 0.0
    %4504 = vmatprep.subr.mxu0 0.0
    %4505 = vmatpush1.msra.mxu0 0.0
    %4506 = vmatprep.subr.mxu0 0.0
    %4507 = vmatpush1.msra.mxu0 0.0
    %4508 = vmatprep.subr.mxu0 0.0
    %4509 = vmatpush1.msra.mxu0 0.0
    %4510 = vmatprep.subr.mxu0 0.0
    %4511 = vmatpush1.msra.mxu0 0.0
    %4512 = vmatprep.subr.mxu0 0.0
    %4513 = vmatpush1.msra.mxu0 0.0
    %4514 = vmatprep.subr.mxu0 0.0
    %4515 = vmatpush1.msra.mxu0 0.0
    %4516 = vmatprep.subr.mxu0 0.0
    %4517 = vmatpush1.msra.mxu0 0.0
    %4518 = vmatprep.subr.mxu0 0.0
    %4519 = vmatpush1.msra.mxu0 0.0
    %4520 = vmatprep.subr.mxu0 0.0
    %4521 = vmatpush1.msra.mxu0 0.0
    %4522 = vmatprep.subr.mxu0 0.0
    %4523 = vmatpush1.msra.mxu0 0.0
    %4524 = vmatprep.subr.mxu0 0.0
    %4525 = vmatpush1.msra.mxu0 0.0
    %4526 = vmatprep.subr.mxu0 0.0
    %4527 = vmatpush1.msra.mxu0 0.0
    %4528 = vmatprep.mubr.f32.mxu0 0.0
    %v4529 = vand.u32 %v4159, 4294901760
    %4530 = vmatmul.mubr.f32.gmra.mrb[0].mxu0 %v4529
    %v4531 = vpop.f32.mrb[0].mxu0
    %v4532 = vadd.f32 %v4458, %v4531
    %v4533 = vpop.f32.mrb[0].mxu0
    %4534 = vdwg.mxu0
    %4535 = vmatprep.subr.mxu0 0.0
    %v4536 = vand.u32 %v4155, 4294901760
    %4537 = vmatpush1.msra.mxu0 %v4536
    %4538 = vmatprep.subr.mxu0 0.0
    %4539 = vmatpush1.msra.mxu0 0.0
    %4540 = vmatprep.subr.mxu0 0.0
    %4541 = vmatpush1.msra.mxu0 0.0
    %4542 = vmatprep.subr.mxu0 0.0
    %4543 = vmatpush1.msra.mxu0 0.0
    %4544 = vmatprep.subr.mxu0 0.0
    %4545 = vmatpush1.msra.mxu0 0.0
    %4546 = vmatprep.subr.mxu0 0.0
    %4547 = vmatpush1.msra.mxu0 0.0
    %4548 = vmatprep.subr.mxu0 0.0
    %4549 = vmatpush1.msra.mxu0 0.0
    %4550 = vmatprep.subr.mxu0 0.0
    %4551 = vmatpush1.msra.mxu0 0.0
    %4552 = vmatprep.subr.mxu0 0.0
    %4553 = vmatpush1.msra.mxu0 0.0
    %4554 = vmatprep.subr.mxu0 0.0
    %4555 = vmatpush1.msra.mxu0 0.0
    %4556 = vmatprep.subr.mxu0 0.0
    %4557 = vmatpush1.msra.mxu0 0.0
    %4558 = vmatprep.subr.mxu0 0.0
    %4559 = vmatpush1.msra.mxu0 0.0
    %4560 = vmatprep.subr.mxu0 0.0
    %4561 = vmatpush1.msra.mxu0 0.0
    %4562 = vmatprep.subr.mxu0 0.0
    %4563 = vmatpush1.msra.mxu0 0.0
    %4564 = vmatprep.subr.mxu0 0.0
    %4565 = vmatpush1.msra.mxu0 0.0
    %4566 = vmatprep.subr.mxu0 0.0
    %4567 = vmatpush1.msra.mxu0 0.0
    %4568 = vmatprep.subr.mxu0 0.0
    %4569 = vmatpush1.msra.mxu0 0.0
    %4570 = vmatprep.subr.mxu0 0.0
    %4571 = vmatpush1.msra.mxu0 0.0
    %4572 = vmatprep.subr.mxu0 0.0
    %4573 = vmatpush1.msra.mxu0 0.0
    %4574 = vmatprep.subr.mxu0 0.0
    %4575 = vmatpush1.msra.mxu0 0.0
    %4576 = vmatprep.subr.mxu0 0.0
    %4577 = vmatpush1.msra.mxu0 0.0
    %4578 = vmatprep.subr.mxu0 0.0
    %4579 = vmatpush1.msra.mxu0 0.0
    %4580 = vmatprep.subr.mxu0 0.0
    %4581 = vmatpush1.msra.mxu0 0.0
    %4582 = vmatprep.subr.mxu0 0.0
    %4583 = vmatpush1.msra.mxu0 0.0
    %4584 = vmatprep.subr.mxu0 0.0
    %4585 = vmatpush1.msra.mxu0 0.0
    %4586 = vmatprep.subr.mxu0 0.0
    %4587 = vmatpush1.msra.mxu0 0.0
    %4588 = vmatprep.subr.mxu0 0.0
    %4589 = vmatpush1.msra.mxu0 0.0
    %4590 = vmatprep.subr.mxu0 0.0
    %4591 = vmatpush1.msra.mxu0 0.0
    %4592 = vmatprep.subr.mxu0 0.0
    %4593 = vmatpush1.msra.mxu0 0.0
    %4594 = vmatprep.subr.mxu0 0.0
    %4595 = vmatpush1.msra.mxu0 0.0
    %4596 = vmatprep.subr.mxu0 0.0
    %4597 = vmatpush1.msra.mxu0 0.0
    %4598 = vmatprep.subr.mxu0 0.0
    %4599 = vmatpush1.msra.mxu0 0.0
    %4600 = vmatprep.mubr.f32.mxu0 0.0
    %v4601 = vand.u32 %v4159, 4294901760
    %4602 = vmatmul.mubr.f32.gmra.mrb[0].mxu0 %v4601
    %v4603 = vpop.f32.mrb[0].mxu0
    %v4604 = vadd.f32 %v4532, %v4603
    %v4605 = vpop.f32.mrb[0].mxu0
    %4606 = vdwg.mxu0
    %v4607 = vadd.f32 %v4149, %v4604
    %4608 = vrot.lane.b32.xlu0 %v32, 118
    %v4609 = vpop.permute.xlu0 %4608
    %4610 = vrot.lane.b32.xlu0 %v33, 118
    %v4611 = vpop.permute.xlu0 %4610
    %vm4612 = vcmp.lt.s32.totalorder %v40, 118
    %v4613 = vsel %vm4612, %v4609, %v4611
    %s4614 = scalar_lea.vmem %s2, 80
    %v4615 = vld [vmem:[%s4614] sm:$0xff]
    %v4617 = vsel %vm45, %v4615, 0
    %4619 = vmatprep.subr.mxu0 0.0
    %v4620 = vand.u32 %v4613, 4294901760
    %4621 = vmatpush1.msra.mxu0 %v4620
    %4622 = vmatprep.subr.mxu0 0.0
    %4623 = vmatpush1.msra.mxu0 0.0
    %4624 = vmatprep.subr.mxu0 0.0
    %4625 = vmatpush1.msra.mxu0 0.0
    %4626 = vmatprep.subr.mxu0 0.0
    %4627 = vmatpush1.msra.mxu0 0.0
    %4628 = vmatprep.subr.mxu0 0.0
    %4629 = vmatpush1.msra.mxu0 0.0
    %4630 = vmatprep.subr.mxu0 0.0
    %4631 = vmatpush1.msra.mxu0 0.0
    %4632 = vmatprep.subr.mxu0 0.0
    %4633 = vmatpush1.msra.mxu0 0.0
    %4634 = vmatprep.subr.mxu0 0.0
    %4635 = vmatpush1.msra.mxu0 0.0
    %4636 = vmatprep.subr.mxu0 0.0
    %4637 = vmatpush1.msra.mxu0 0.0
    %4638 = vmatprep.subr.mxu0 0.0
    %4639 = vmatpush1.msra.mxu0 0.0
    %4640 = vmatprep.subr.mxu0 0.0
    %4641 = vmatpush1.msra.mxu0 0.0
    %4642 = vmatprep.subr.mxu0 0.0
    %4643 = vmatpush1.msra.mxu0 0.0
    %4644 = vmatprep.subr.mxu0 0.0
    %4645 = vmatpush1.msra.mxu0 0.0
    %4646 = vmatprep.subr.mxu0 0.0
    %4647 = vmatpush1.msra.mxu0 0.0
    %4648 = vmatprep.subr.mxu0 0.0
    %4649 = vmatpush1.msra.mxu0 0.0
    %4650 = vmatprep.subr.mxu0 0.0
    %4651 = vmatpush1.msra.mxu0 0.0
    %4652 = vmatprep.subr.mxu0 0.0
    %4653 = vmatpush1.msra.mxu0 0.0
    %4654 = vmatprep.subr.mxu0 0.0
    %4655 = vmatpush1.msra.mxu0 0.0
    %4656 = vmatprep.subr.mxu0 0.0
    %4657 = vmatpush1.msra.mxu0 0.0
    %4658 = vmatprep.subr.mxu0 0.0
    %4659 = vmatpush1.msra.mxu0 0.0
    %4660 = vmatprep.subr.mxu0 0.0
    %4661 = vmatpush1.msra.mxu0 0.0
    %4662 = vmatprep.subr.mxu0 0.0
    %4663 = vmatpush1.msra.mxu0 0.0
    %4664 = vmatprep.subr.mxu0 0.0
    %4665 = vmatpush1.msra.mxu0 0.0
    %4666 = vmatprep.subr.mxu0 0.0
    %4667 = vmatpush1.msra.mxu0 0.0
    %4668 = vmatprep.subr.mxu0 0.0
    %4669 = vmatpush1.msra.mxu0 0.0
    %4670 = vmatprep.subr.mxu0 0.0
    %4671 = vmatpush1.msra.mxu0 0.0
    %4672 = vmatprep.subr.mxu0 0.0
    %4673 = vmatpush1.msra.mxu0 0.0
    %4674 = vmatprep.subr.mxu0 0.0
    %4675 = vmatpush1.msra.mxu0 0.0
    %4676 = vmatprep.subr.mxu0 0.0
    %4677 = vmatpush1.msra.mxu0 0.0
    %4678 = vmatprep.subr.mxu0 0.0
    %4679 = vmatpush1.msra.mxu0 0.0
    %4680 = vmatprep.subr.mxu0 0.0
    %4681 = vmatpush1.msra.mxu0 0.0
    %4682 = vmatprep.subr.mxu0 0.0
    %4683 = vmatpush1.msra.mxu0 0.0
    %4684 = vmatprep.mubr.f32.mxu0 0.0
    %v4685 = vand.u32 %v4617, 4294901760
    %v4686 = vsub.f32 %v4617, %v4685
    %v4687 = vand.u32 %v4686, 4294901760
    %v4688 = vsub.f32 %v4686, %v4687
    %v4689 = vand.u32 %v4688, 4294901760
    %4690 = vmatmul.mubr.f32.gmra.mrb[0].mxu0 %v4689
    %v4691 = vpop.f32.mrb[0].mxu0
    %v4692 = vadd.f32 0.0, %v4691
    %v4693 = vpop.f32.mrb[0].mxu0
    %4694 = vdwg.mxu0
    %4695 = vmatprep.subr.mxu0 0.0
    %v4696 = vand.u32 %v4613, 4294901760
    %v4697 = vsub.f32 %v4613, %v4696
    %v4698 = vand.u32 %v4697, 4294901760
    %v4699 = vsub.f32 %v4697, %v4698
    %v4700 = vand.u32 %v4699, 4294901760
    %4701 = vmatpush1.msra.mxu0 %v4700
    %4702 = vmatprep.subr.mxu0 0.0
    %4703 = vmatpush1.msra.mxu0 0.0
    %4704 = vmatprep.subr.mxu0 0.0
    %4705 = vmatpush1.msra.mxu0 0.0
    %4706 = vmatprep.subr.mxu0 0.0
    %4707 = vmatpush1.msra.mxu0 0.0
    %4708 = vmatprep.subr.mxu0 0.0
    %4709 = vmatpush1.msra.mxu0 0.0
    %4710 = vmatprep.subr.mxu0 0.0
    %4711 = vmatpush1.msra.mxu0 0.0
    %4712 = vmatprep.subr.mxu0 0.0
    %4713 = vmatpush1.msra.mxu0 0.0
    %4714 = vmatprep.subr.mxu0 0.0
    %4715 = vmatpush1.msra.mxu0 0.0
    %4716 = vmatprep.subr.mxu0 0.0
    %4717 = vmatpush1.msra.mxu0 0.0
    %4718 = vmatprep.subr.mxu0 0.0
    %4719 = vmatpush1.msra.mxu0 0.0
    %4720 = vmatprep.subr.mxu0 0.0
    %4721 = vmatpush1.msra.mxu0 0.0
    %4722 = vmatprep.subr.mxu0 0.0
    %4723 = vmatpush1.msra.mxu0 0.0
    %4724 = vmatprep.subr.mxu0 0.0
    %4725 = vmatpush1.msra.mxu0 0.0
    %4726 = vmatprep.subr.mxu0 0.0
    %4727 = vmatpush1.msra.mxu0 0.0
    %4728 = vmatprep.subr.mxu0 0.0
    %4729 = vmatpush1.msra.mxu0 0.0
    %4730 = vmatprep.subr.mxu0 0.0
    %4731 = vmatpush1.msra.mxu0 0.0
    %4732 = vmatprep.subr.mxu0 0.0
    %4733 = vmatpush1.msra.mxu0 0.0
    %4734 = vmatprep.subr.mxu0 0.0
    %4735 = vmatpush1.msra.mxu0 0.0
    %4736 = vmatprep.subr.mxu0 0.0
    %4737 = vmatpush1.msra.mxu0 0.0
    %4738 = vmatprep.subr.mxu0 0.0
    %4739 = vmatpush1.msra.mxu0 0.0
    %4740 = vmatprep.subr.mxu0 0.0
    %4741 = vmatpush1.msra.mxu0 0.0
    %4742 = vmatprep.subr.mxu0 0.0
    %4743 = vmatpush1.msra.mxu0 0.0
    %4744 = vmatprep.subr.mxu0 0.0
    %4745 = vmatpush1.msra.mxu0 0.0
    %4746 = vmatprep.subr.mxu0 0.0
    %4747 = vmatpush1.msra.mxu0 0.0
    %4748 = vmatprep.subr.mxu0 0.0
    %4749 = vmatpush1.msra.mxu0 0.0
    %4750 = vmatprep.subr.mxu0 0.0
    %4751 = vmatpush1.msra.mxu0 0.0
    %4752 = vmatprep.subr.mxu0 0.0
    %4753 = vmatpush1.msra.mxu0 0.0
    %4754 = vmatprep.subr.mxu0 0.0
    %4755 = vmatpush1.msra.mxu0 0.0
    %4756 = vmatprep.subr.mxu0 0.0
    %4757 = vmatpush1.msra.mxu0 0.0
    %4758 = vmatprep.subr.mxu0 0.0
    %4759 = vmatpush1.msra.mxu0 0.0
    %4760 = vmatprep.subr.mxu0 0.0
    %4761 = vmatpush1.msra.mxu0 0.0
    %4762 = vmatprep.subr.mxu0 0.0
    %4763 = vmatpush1.msra.mxu0 0.0
    %4764 = vmatprep.mubr.f32.mxu0 0.0
    %v4765 = vand.u32 %v4617, 4294901760
    %4766 = vmatmul.mubr.f32.gmra.mrb[0].mxu0 %v4765
    %v4767 = vpop.f32.mrb[0].mxu0
    %v4768 = vadd.f32 %v4692, %v4767
    %v4769 = vpop.f32.mrb[0].mxu0
    %4770 = vdwg.mxu0
    %4771 = vmatprep.subr.mxu0 0.0
    %v4772 = vand.u32 %v4613, 4294901760
    %v4773 = vsub.f32 %v4613, %v4772
    %4774 = vmatpush1.msra.mxu0 %v4773
    %4775 = vmatprep.subr.mxu0 0.0
    %4776 = vmatpush1.msra.mxu0 0.0
    %4777 = vmatprep.subr.mxu0 0.0
    %4778 = vmatpush1.msra.mxu0 0.0
    %4779 = vmatprep.subr.mxu0 0.0
    %4780 = vmatpush1.msra.mxu0 0.0
    %4781 = vmatprep.subr.mxu0 0.0
    %4782 = vmatpush1.msra.mxu0 0.0
    %4783 = vmatprep.subr.mxu0 0.0
    %4784 = vmatpush1.msra.mxu0 0.0
    %4785 = vmatprep.subr.mxu0 0.0
    %4786 = vmatpush1.msra.mxu0 0.0
    %4787 = vmatprep.subr.mxu0 0.0
    %4788 = vmatpush1.msra.mxu0 0.0
    %4789 = vmatprep.subr.mxu0 0.0
    %4790 = vmatpush1.msra.mxu0 0.0
    %4791 = vmatprep.subr.mxu0 0.0
    %4792 = vmatpush1.msra.mxu0 0.0
    %4793 = vmatprep.subr.mxu0 0.0
    %4794 = vmatpush1.msra.mxu0 0.0
    %4795 = vmatprep.subr.mxu0 0.0
    %4796 = vmatpush1.msra.mxu0 0.0
    %4797 = vmatprep.subr.mxu0 0.0
    %4798 = vmatpush1.msra.mxu0 0.0
    %4799 = vmatprep.subr.mxu0 0.0
    %4800 = vmatpush1.msra.mxu0 0.0
    %4801 = vmatprep.subr.mxu0 0.0
    %4802 = vmatpush1.msra.mxu0 0.0
    %4803 = vmatprep.subr.mxu0 0.0
    %4804 = vmatpush1.msra.mxu0 0.0
    %4805 = vmatprep.subr.mxu0 0.0
    %4806 = vmatpush1.msra.mxu0 0.0
    %4807 = vmatprep.subr.mxu0 0.0
    %4808 = vmatpush1.msra.mxu0 0.0
    %4809 = vmatprep.subr.mxu0 0.0
    %4810 = vmatpush1.msra.mxu0 0.0
    %4811 = vmatprep.subr.mxu0 0.0
    %4812 = vmatpush1.msra.mxu0 0.0
    %4813 = vmatprep.subr.mxu0 0.0
    %4814 = vmatpush1.msra.mxu0 0.0
    %4815 = vmatprep.subr.mxu0 0.0
    %4816 = vmatpush1.msra.mxu0 0.0
    %4817 = vmatprep.subr.mxu0 0.0
    %4818 = vmatpush1.msra.mxu0 0.0
    %4819 = vmatprep.subr.mxu0 0.0
    %4820 = vmatpush1.msra.mxu0 0.0
    %4821 = vmatprep.subr.mxu0 0.0
    %4822 = vmatpush1.msra.mxu0 0.0
    %4823 = vmatprep.subr.mxu0 0.0
    %4824 = vmatpush1.msra.mxu0 0.0
    %4825 = vmatprep.subr.mxu0 0.0
    %4826 = vmatpush1.msra.mxu0 0.0
    %4827 = vmatprep.subr.mxu0 0.0
    %4828 = vmatpush1.msra.mxu0 0.0
    %4829 = vmatprep.subr.mxu0 0.0
    %4830 = vmatpush1.msra.mxu0 0.0
    %4831 = vmatprep.subr.mxu0 0.0
    %4832 = vmatpush1.msra.mxu0 0.0
    %4833 = vmatprep.subr.mxu0 0.0
    %4834 = vmatpush1.msra.mxu0 0.0
    %4835 = vmatprep.subr.mxu0 0.0
    %4836 = vmatpush1.msra.mxu0 0.0
    %4837 = vmatprep.mubr.f32.mxu0 0.0
    %v4838 = vand.u32 %v4617, 4294901760
    %v4839 = vsub.f32 %v4617, %v4838
    %4840 = vmatmul.mubr.f32.gmra.mrb[0].mxu0 %v4839
    %v4841 = vpop.f32.mrb[0].mxu0
    %v4842 = vadd.f32 %v4768, %v4841
    %v4843 = vpop.f32.mrb[0].mxu0
    %4844 = vdwg.mxu0
    %4845 = vmatprep.subr.mxu0 0.0
    %v4846 = vand.u32 %v4613, 4294901760
    %4847 = vmatpush1.msra.mxu0 %v4846
    %4848 = vmatprep.subr.mxu0 0.0
    %4849 = vmatpush1.msra.mxu0 0.0
    %4850 = vmatprep.subr.mxu0 0.0
    %4851 = vmatpush1.msra.mxu0 0.0
    %4852 = vmatprep.subr.mxu0 0.0
    %4853 = vmatpush1.msra.mxu0 0.0
    %4854 = vmatprep.subr.mxu0 0.0
    %4855 = vmatpush1.msra.mxu0 0.0
    %4856 = vmatprep.subr.mxu0 0.0
    %4857 = vmatpush1.msra.mxu0 0.0
    %4858 = vmatprep.subr.mxu0 0.0
    %4859 = vmatpush1.msra.mxu0 0.0
    %4860 = vmatprep.subr.mxu0 0.0
    %4861 = vmatpush1.msra.mxu0 0.0
    %4862 = vmatprep.subr.mxu0 0.0
    %4863 = vmatpush1.msra.mxu0 0.0
    %4864 = vmatprep.subr.mxu0 0.0
    %4865 = vmatpush1.msra.mxu0 0.0
    %4866 = vmatprep.subr.mxu0 0.0
    %4867 = vmatpush1.msra.mxu0 0.0
    %4868 = vmatprep.subr.mxu0 0.0
    %4869 = vmatpush1.msra.mxu0 0.0
    %4870 = vmatprep.subr.mxu0 0.0
    %4871 = vmatpush1.msra.mxu0 0.0
    %4872 = vmatprep.subr.mxu0 0.0
    %4873 = vmatpush1.msra.mxu0 0.0
    %4874 = vmatprep.subr.mxu0 0.0
    %4875 = vmatpush1.msra.mxu0 0.0
    %4876 = vmatprep.subr.mxu0 0.0
    %4877 = vmatpush1.msra.mxu0 0.0
    %4878 = vmatprep.subr.mxu0 0.0
    %4879 = vmatpush1.msra.mxu0 0.0
    %4880 = vmatprep.subr.mxu0 0.0
    %4881 = vmatpush1.msra.mxu0 0.0
    %4882 = vmatprep.subr.mxu0 0.0
    %4883 = vmatpush1.msra.mxu0 0.0
    %4884 = vmatprep.subr.mxu0 0.0
    %4885 = vmatpush1.msra.mxu0 0.0
    %4886 = vmatprep.subr.mxu0 0.0
    %4887 = vmatpush1.msra.mxu0 0.0
    %4888 = vmatprep.subr.mxu0 0.0
    %4889 = vmatpush1.msra.mxu0 0.0
    %4890 = vmatprep.subr.mxu0 0.0
    %4891 = vmatpush1.msra.mxu0 0.0
    %4892 = vmatprep.subr.mxu0 0.0
    %4893 = vmatpush1.msra.mxu0 0.0
    %4894 = vmatprep.subr.mxu0 0.0
    %4895 = vmatpush1.msra.mxu0 0.0
    %4896 = vmatprep.subr.mxu0 0.0
    %4897 = vmatpush1.msra.mxu0 0.0
    %4898 = vmatprep.subr.mxu0 0.0
    %4899 = vmatpush1.msra.mxu0 0.0
    %4900 = vmatprep.subr.mxu0 0.0
    %4901 = vmatpush1.msra.mxu0 0.0
    %4902 = vmatprep.subr.mxu0 0.0
    %4903 = vmatpush1.msra.mxu0 0.0
    %4904 = vmatprep.subr.mxu0 0.0
    %4905 = vmatpush1.msra.mxu0 0.0
    %4906 = vmatprep.subr.mxu0 0.0
    %4907 = vmatpush1.msra.mxu0 0.0
    %4908 = vmatprep.subr.mxu0 0.0
    %4909 = vmatpush1.msra.mxu0 0.0
    %4910 = vmatprep.mubr.f32.mxu0 0.0
    %v4911 = vand.u32 %v4617, 4294901760
    %v4912 = vsub.f32 %v4617, %v4911
    %v4913 = vand.u32 %v4912, 4294901760
    %4914 = vmatmul.mubr.f32.gmra.mrb[0].mxu0 %v4913
    %v4915 = vpop.f32.mrb[0].mxu0
    %v4916 = vadd.f32 %v4842, %v4915
    %v4917 = vpop.f32.mrb[0].mxu0
    %4918 = vdwg.mxu0
    %4919 = vmatprep.subr.mxu0 0.0
    %v4920 = vand.u32 %v4613, 4294901760
    %v4921 = vsub.f32 %v4613, %v4920
    %v4922 = vand.u32 %v4921, 4294901760
    %4923 = vmatpush1.msra.mxu0 %v4922
    %4924 = vmatprep.subr.mxu0 0.0
    %4925 = vmatpush1.msra.mxu0 0.0
    %4926 = vmatprep.subr.mxu0 0.0
    %4927 = vmatpush1.msra.mxu0 0.0
    %4928 = vmatprep.subr.mxu0 0.0
    %4929 = vmatpush1.msra.mxu0 0.0
    %4930 = vmatprep.subr.mxu0 0.0
    %4931 = vmatpush1.msra.mxu0 0.0
    %4932 = vmatprep.subr.mxu0 0.0
    %4933 = vmatpush1.msra.mxu0 0.0
    %4934 = vmatprep.subr.mxu0 0.0
    %4935 = vmatpush1.msra.mxu0 0.0
    %4936 = vmatprep.subr.mxu0 0.0
    %4937 = vmatpush1.msra.mxu0 0.0
    %4938 = vmatprep.subr.mxu0 0.0
    %4939 = vmatpush1.msra.mxu0 0.0
    %4940 = vmatprep.subr.mxu0 0.0
    %4941 = vmatpush1.msra.mxu0 0.0
    %4942 = vmatprep.subr.mxu0 0.0
    %4943 = vmatpush1.msra.mxu0 0.0
    %4944 = vmatprep.subr.mxu0 0.0
    %4945 = vmatpush1.msra.mxu0 0.0
    %4946 = vmatprep.subr.mxu0 0.0
    %4947 = vmatpush1.msra.mxu0 0.0
    %4948 = vmatprep.subr.mxu0 0.0
    %4949 = vmatpush1.msra.mxu0 0.0
    %4950 = vmatprep.subr.mxu0 0.0
    %4951 = vmatpush1.msra.mxu0 0.0
    %4952 = vmatprep.subr.mxu0 0.0
    %4953 = vmatpush1.msra.mxu0 0.0
    %4954 = vmatprep.subr.mxu0 0.0
    %4955 = vmatpush1.msra.mxu0 0.0
    %4956 = vmatprep.subr.mxu0 0.0
    %4957 = vmatpush1.msra.mxu0 0.0
    %4958 = vmatprep.subr.mxu0 0.0
    %4959 = vmatpush1.msra.mxu0 0.0
    %4960 = vmatprep.subr.mxu0 0.0
    %4961 = vmatpush1.msra.mxu0 0.0
    %4962 = vmatprep.subr.mxu0 0.0
    %4963 = vmatpush1.msra.mxu0 0.0
    %4964 = vmatprep.subr.mxu0 0.0
    %4965 = vmatpush1.msra.mxu0 0.0
    %4966 = vmatprep.subr.mxu0 0.0
    %4967 = vmatpush1.msra.mxu0 0.0
    %4968 = vmatprep.subr.mxu0 0.0
    %4969 = vmatpush1.msra.mxu0 0.0
    %4970 = vmatprep.subr.mxu0 0.0
    %4971 = vmatpush1.msra.mxu0 0.0
    %4972 = vmatprep.subr.mxu0 0.0
    %4973 = vmatpush1.msra.mxu0 0.0
    %4974 = vmatprep.subr.mxu0 0.0
    %4975 = vmatpush1.msra.mxu0 0.0
    %4976 = vmatprep.subr.mxu0 0.0
    %4977 = vmatpush1.msra.mxu0 0.0
    %4978 = vmatprep.subr.mxu0 0.0
    %4979 = vmatpush1.msra.mxu0 0.0
    %4980 = vmatprep.subr.mxu0 0.0
    %4981 = vmatpush1.msra.mxu0 0.0
    %4982 = vmatprep.subr.mxu0 0.0
    %4983 = vmatpush1.msra.mxu0 0.0
    %4984 = vmatprep.subr.mxu0 0.0
    %4985 = vmatpush1.msra.mxu0 0.0
    %4986 = vmatprep.mubr.f32.mxu0 0.0
    %v4987 = vand.u32 %v4617, 4294901760
    %4988 = vmatmul.mubr.f32.gmra.mrb[0].mxu0 %v4987
    %v4989 = vpop.f32.mrb[0].mxu0
    %v4990 = vadd.f32 %v4916, %v4989
    %v4991 = vpop.f32.mrb[0].mxu0
    %4992 = vdwg.mxu0
    %4993 = vmatprep.subr.mxu0 0.0
    %v4994 = vand.u32 %v4613, 4294901760
    %4995 = vmatpush1.msra.mxu0 %v4994
    %4996 = vmatprep.subr.mxu0 0.0
    %4997 = vmatpush1.msra.mxu0 0.0
    %4998 = vmatprep.subr.mxu0 0.0
    %4999 = vmatpush1.msra.mxu0 0.0
    %5000 = vmatprep.subr.mxu0 0.0
    %5001 = vmatpush1.msra.mxu0 0.0
    %5002 = vmatprep.subr.mxu0 0.0
    %5003 = vmatpush1.msra.mxu0 0.0
    %5004 = vmatprep.subr.mxu0 0.0
    %5005 = vmatpush1.msra.mxu0 0.0
    %5006 = vmatprep.subr.mxu0 0.0
    %5007 = vmatpush1.msra.mxu0 0.0
    %5008 = vmatprep.subr.mxu0 0.0
    %5009 = vmatpush1.msra.mxu0 0.0
    %5010 = vmatprep.subr.mxu0 0.0
    %5011 = vmatpush1.msra.mxu0 0.0
    %5012 = vmatprep.subr.mxu0 0.0
    %5013 = vmatpush1.msra.mxu0 0.0
    %5014 = vmatprep.subr.mxu0 0.0
    %5015 = vmatpush1.msra.mxu0 0.0
    %5016 = vmatprep.subr.mxu0 0.0
    %5017 = vmatpush1.msra.mxu0 0.0
    %5018 = vmatprep.subr.mxu0 0.0
    %5019 = vmatpush1.msra.mxu0 0.0
    %5020 = vmatprep.subr.mxu0 0.0
    %5021 = vmatpush1.msra.mxu0 0.0
    %5022 = vmatprep.subr.mxu0 0.0
    %5023 = vmatpush1.msra.mxu0 0.0
    %5024 = vmatprep.subr.mxu0 0.0
    %5025 = vmatpush1.msra.mxu0 0.0
    %5026 = vmatprep.subr.mxu0 0.0
    %5027 = vmatpush1.msra.mxu0 0.0
    %5028 = vmatprep.subr.mxu0 0.0
    %5029 = vmatpush1.msra.mxu0 0.0
    %5030 = vmatprep.subr.mxu0 0.0
    %5031 = vmatpush1.msra.mxu0 0.0
    %5032 = vmatprep.subr.mxu0 0.0
    %5033 = vmatpush1.msra.mxu0 0.0
    %5034 = vmatprep.subr.mxu0 0.0
    %5035 = vmatpush1.msra.mxu0 0.0
    %5036 = vmatprep.subr.mxu0 0.0
    %5037 = vmatpush1.msra.mxu0 0.0
    %5038 = vmatprep.subr.mxu0 0.0
    %5039 = vmatpush1.msra.mxu0 0.0
    %5040 = vmatprep.subr.mxu0 0.0
    %5041 = vmatpush1.msra.mxu0 0.0
    %5042 = vmatprep.subr.mxu0 0.0
    %5043 = vmatpush1.msra.mxu0 0.0
    %5044 = vmatprep.subr.mxu0 0.0
    %5045 = vmatpush1.msra.mxu0 0.0
    %5046 = vmatprep.subr.mxu0 0.0
    %5047 = vmatpush1.msra.mxu0 0.0
    %5048 = vmatprep.subr.mxu0 0.0
    %5049 = vmatpush1.msra.mxu0 0.0
    %5050 = vmatprep.subr.mxu0 0.0
    %5051 = vmatpush1.msra.mxu0 0.0
    %5052 = vmatprep.subr.mxu0 0.0
    %5053 = vmatpush1.msra.mxu0 0.0
    %5054 = vmatprep.subr.mxu0 0.0
    %5055 = vmatpush1.msra.mxu0 0.0
    %5056 = vmatprep.subr.mxu0 0.0
    %5057 = vmatpush1.msra.mxu0 0.0
    %5058 = vmatprep.mubr.f32.mxu0 0.0
    %v5059 = vand.u32 %v4617, 4294901760
    %5060 = vmatmul.mubr.f32.gmra.mrb[0].mxu0 %v5059
    %v5061 = vpop.f32.mrb[0].mxu0
    %v5062 = vadd.f32 %v4990, %v5061
    %v5063 = vpop.f32.mrb[0].mxu0
    %5064 = vdwg.mxu0
    %v5065 = vadd.f32 %v4607, %v5062
    %5066 = vrot.lane.b32.xlu0 %v32, 117
    %v5067 = vpop.permute.xlu0 %5066
    %5068 = vrot.lane.b32.xlu0 %v33, 117
    %v5069 = vpop.permute.xlu0 %5068
    %vm5070 = vcmp.lt.s32.totalorder %v40, 117
    %v5071 = vsel %vm5070, %v5067, %v5069
    %s5072 = scalar_lea.vmem %s2, 88
    %v5073 = vld [vmem:[%s5072] sm:$0xff]
    %v5075 = vsel %vm45, %v5073, 0
    %5077 = vmatprep.subr.mxu0 0.0
    %v5078 = vand.u32 %v5071, 4294901760
    %5079 = vmatpush1.msra.mxu0 %v5078
    %5080 = vmatprep.subr.mxu0 0.0
    %5081 = vmatpush1.msra.mxu0 0.0
    %5082 = vmatprep.subr.mxu0 0.0
    %5083 = vmatpush1.msra.mxu0 0.0
    %5084 = vmatprep.subr.mxu0 0.0
    %5085 = vmatpush1.msra.mxu0 0.0
    %5086 = vmatprep.subr.mxu0 0.0
    %5087 = vmatpush1.msra.mxu0 0.0
    %5088 = vmatprep.subr.mxu0 0.0
    %5089 = vmatpush1.msra.mxu0 0.0
    %5090 = vmatprep.subr.mxu0 0.0
    %5091 = vmatpush1.msra.mxu0 0.0
    %5092 = vmatprep.subr.mxu0 0.0
    %5093 = vmatpush1.msra.mxu0 0.0
    %5094 = vmatprep.subr.mxu0 0.0
    %5095 = vmatpush1.msra.mxu0 0.0
    %5096 = vmatprep.subr.mxu0 0.0
    %5097 = vmatpush1.msra.mxu0 0.0
    %5098 = vmatprep.subr.mxu0 0.0
    %5099 = vmatpush1.msra.mxu0 0.0
    %5100 = vmatprep.subr.mxu0 0.0
    %5101 = vmatpush1.msra.mxu0 0.0
    %5102 = vmatprep.subr.mxu0 0.0
    %5103 = vmatpush1.msra.mxu0 0.0
    %5104 = vmatprep.subr.mxu0 0.0
    %5105 = vmatpush1.msra.mxu0 0.0
    %5106 = vmatprep.subr.mxu0 0.0
    %5107 = vmatpush1.msra.mxu0 0.0
    %5108 = vmatprep.subr.mxu0 0.0
    %5109 = vmatpush1.msra.mxu0 0.0
    %5110 = vmatprep.subr.mxu0 0.0
    %5111 = vmatpush1.msra.mxu0 0.0
    %5112 = vmatprep.subr.mxu0 0.0
    %5113 = vmatpush1.msra.mxu0 0.0
    %5114 = vmatprep.subr.mxu0 0.0
    %5115 = vmatpush1.msra.mxu0 0.0
    %5116 = vmatprep.subr.mxu0 0.0
    %5117 = vmatpush1.msra.mxu0 0.0
    %5118 = vmatprep.subr.mxu0 0.0
    %5119 = vmatpush1.msra.mxu0 0.0
    %5120 = vmatprep.subr.mxu0 0.0
    %5121 = vmatpush1.msra.mxu0 0.0
    %5122 = vmatprep.subr.mxu0 0.0
    %5123 = vmatpush1.msra.mxu0 0.0
    %5124 = vmatprep.subr.mxu0 0.0
    %5125 = vmatpush1.msra.mxu0 0.0
    %5126 = vmatprep.subr.mxu0 0.0
    %5127 = vmatpush1.msra.mxu0 0.0
    %5128 = vmatprep.subr.mxu0 0.0
    %5129 = vmatpush1.msra.mxu0 0.0
    %5130 = vmatprep.subr.mxu0 0.0
    %5131 = vmatpush1.msra.mxu0 0.0
    %5132 = vmatprep.subr.mxu0 0.0
    %5133 = vmatpush1.msra.mxu0 0.0
    %5134 = vmatprep.subr.mxu0 0.0
    %5135 = vmatpush1.msra.mxu0 0.0
    %5136 = vmatprep.subr.mxu0 0.0
    %5137 = vmatpush1.msra.mxu0 0.0
    %5138 = vmatprep.subr.mxu0 0.0
    %5139 = vmatpush1.msra.mxu0 0.0
    %5140 = vmatprep.subr.mxu0 0.0
    %5141 = vmatpush1.msra.mxu0 0.0
    %5142 = vmatprep.mubr.f32.mxu0 0.0
    %v5143 = vand.u32 %v5075, 4294901760
    %v5144 = vsub.f32 %v5075, %v5143
    %v5145 = vand.u32 %v5144, 4294901760
    %v5146 = vsub.f32 %v5144, %v5145
    %v5147 = vand.u32 %v5146, 4294901760
    %5148 = vmatmul.mubr.f32.gmra.mrb[0].mxu0 %v5147
    %v5149 = vpop.f32.mrb[0].mxu0
    %v5150 = vadd.f32 0.0, %v5149
    %v5151 = vpop.f32.mrb[0].mxu0
    %5152 = vdwg.mxu0
    %5153 = vmatprep.subr.mxu0 0.0
    %v5154 = vand.u32 %v5071, 4294901760
    %v5155 = vsub.f32 %v5071, %v5154
    %v5156 = vand.u32 %v5155, 4294901760
    %v5157 = vsub.f32 %v5155, %v5156
    %v5158 = vand.u32 %v5157, 4294901760
    %5159 = vmatpush1.msra.mxu0 %v5158
    %5160 = vmatprep.subr.mxu0 0.0
    %5161 = vmatpush1.msra.mxu0 0.0
    %5162 = vmatprep.subr.mxu0 0.0
    %5163 = vmatpush1.msra.mxu0 0.0
    %5164 = vmatprep.subr.mxu0 0.0
    %5165 = vmatpush1.msra.mxu0 0.0
    %5166 = vmatprep.subr.mxu0 0.0
    %5167 = vmatpush1.msra.mxu0 0.0
    %5168 = vmatprep.subr.mxu0 0.0
    %5169 = vmatpush1.msra.mxu0 0.0
    %5170 = vmatprep.subr.mxu0 0.0
    %5171 = vmatpush1.msra.mxu0 0.0
    %5172 = vmatprep.subr.mxu0 0.0
    %5173 = vmatpush1.msra.mxu0 0.0
    %5174 = vmatprep.subr.mxu0 0.0
    %5175 = vmatpush1.msra.mxu0 0.0
    %5176 = vmatprep.subr.mxu0 0.0
    %5177 = vmatpush1.msra.mxu0 0.0
    %5178 = vmatprep.subr.mxu0 0.0
    %5179 = vmatpush1.msra.mxu0 0.0
    %5180 = vmatprep.subr.mxu0 0.0
    %5181 = vmatpush1.msra.mxu0 0.0
    %5182 = vmatprep.subr.mxu0 0.0
    %5183 = vmatpush1.msra.mxu0 0.0
    %5184 = vmatprep.subr.mxu0 0.0
    %5185 = vmatpush1.msra.mxu0 0.0
    %5186 = vmatprep.subr.mxu0 0.0
    %5187 = vmatpush1.msra.mxu0 0.0
    %5188 = vmatprep.subr.mxu0 0.0
    %5189 = vmatpush1.msra.mxu0 0.0
    %5190 = vmatprep.subr.mxu0 0.0
    %5191 = vmatpush1.msra.mxu0 0.0
    %5192 = vmatprep.subr.mxu0 0.0
    %5193 = vmatpush1.msra.mxu0 0.0
    %5194 = vmatprep.subr.mxu0 0.0
    %5195 = vmatpush1.msra.mxu0 0.0
    %5196 = vmatprep.subr.mxu0 0.0
    %5197 = vmatpush1.msra.mxu0 0.0
    %5198 = vmatprep.subr.mxu0 0.0
    %5199 = vmatpush1.msra.mxu0 0.0
    %5200 = vmatprep.subr.mxu0 0.0
    %5201 = vmatpush1.msra.mxu0 0.0
    %5202 = vmatprep.subr.mxu0 0.0
    %5203 = vmatpush1.msra.mxu0 0.0
    %5204 = vmatprep.subr.mxu0 0.0
    %5205 = vmatpush1.msra.mxu0 0.0
    %5206 = vmatprep.subr.mxu0 0.0
    %5207 = vmatpush1.msra.mxu0 0.0
    %5208 = vmatprep.subr.mxu0 0.0
    %5209 = vmatpush1.msra.mxu0 0.0
    %5210 = vmatprep.subr.mxu0 0.0
    %5211 = vmatpush1.msra.mxu0 0.0
    %5212 = vmatprep.subr.mxu0 0.0
    %5213 = vmatpush1.msra.mxu0 0.0
    %5214 = vmatprep.subr.mxu0 0.0
    %5215 = vmatpush1.msra.mxu0 0.0
    %5216 = vmatprep.subr.mxu0 0.0
    %5217 = vmatpush1.msra.mxu0 0.0
    %5218 = vmatprep.subr.mxu0 0.0
    %5219 = vmatpush1.msra.mxu0 0.0
    %5220 = vmatprep.subr.mxu0 0.0
    %5221 = vmatpush1.msra.mxu0 0.0
    %5222 = vmatprep.mubr.f32.mxu0 0.0
    %v5223 = vand.u32 %v5075, 4294901760
    %5224 = vmatmul.mubr.f32.gmra.mrb[0].mxu0 %v5223
    %v5225 = vpop.f32.mrb[0].mxu0
    %v5226 = vadd.f32 %v5150, %v5225
    %v5227 = vpop.f32.mrb[0].mxu0
    %5228 = vdwg.mxu0
    %5229 = vmatprep.subr.mxu0 0.0
    %v5230 = vand.u32 %v5071, 4294901760
    %v5231 = vsub.f32 %v5071, %v5230
    %5232 = vmatpush1.msra.mxu0 %v5231
    %5233 = vmatprep.subr.mxu0 0.0
    %5234 = vmatpush1.msra.mxu0 0.0
    %5235 = vmatprep.subr.mxu0 0.0
    %5236 = vmatpush1.msra.mxu0 0.0
    %5237 = vmatprep.subr.mxu0 0.0
    %5238 = vmatpush1.msra.mxu0 0.0
    %5239 = vmatprep.subr.mxu0 0.0
    %5240 = vmatpush1.msra.mxu0 0.0
    %5241 = vmatprep.subr.mxu0 0.0
    %5242 = vmatpush1.msra.mxu0 0.0
    %5243 = vmatprep.subr.mxu0 0.0
    %5244 = vmatpush1.msra.mxu0 0.0
    %5245 = vmatprep.subr.mxu0 0.0
    %5246 = vmatpush1.msra.mxu0 0.0
    %5247 = vmatprep.subr.mxu0 0.0
    %5248 = vmatpush1.msra.mxu0 0.0
    %5249 = vmatprep.subr.mxu0 0.0
    %5250 = vmatpush1.msra.mxu0 0.0
    %5251 = vmatprep.subr.mxu0 0.0
    %5252 = vmatpush1.msra.mxu0 0.0
    %5253 = vmatprep.subr.mxu0 0.0
    %5254 = vmatpush1.msra.mxu0 0.0
    %5255 = vmatprep.subr.mxu0 0.0
    %5256 = vmatpush1.msra.mxu0 0.0
    %5257 = vmatprep.subr.mxu0 0.0
    %5258 = vmatpush1.msra.mxu0 0.0
    %5259 = vmatprep.subr.mxu0 0.0
    %5260 = vmatpush1.msra.mxu0 0.0
    %5261 = vmatprep.subr.mxu0 0.0
    %5262 = vmatpush1.msra.mxu0 0.0
    %5263 = vmatprep.subr.mxu0 0.0
    %5264 = vmatpush1.msra.mxu0 0.0
    %5265 = vmatprep.subr.mxu0 0.0
    %5266 = vmatpush1.msra.mxu0 0.0
    %5267 = vmatprep.subr.mxu0 0.0
    %5268 = vmatpush1.msra.mxu0 0.0
    %5269 = vmatprep.subr.mxu0 0.0
    %5270 = vmatpush1.msra.mxu0 0.0
    %5271 = vmatprep.subr.mxu0 0.0
    %5272 = vmatpush1.msra.mxu0 0.0
    %5273 = vmatprep.subr.mxu0 0.0
    %5274 = vmatpush1.msra.mxu0 0.0
    %5275 = vmatprep.subr.mxu0 0.0
    %5276 = vmatpush1.msra.mxu0 0.0
    %5277 = vmatprep.subr.mxu0 0.0
    %5278 = vmatpush1.msra.mxu0 0.0
    %5279 = vmatprep.subr.mxu0 0.0
    %5280 = vmatpush1.msra.mxu0 0.0
    %5281 = vmatprep.subr.mxu0 0.0
    %5282 = vmatpush1.msra.mxu0 0.0
    %5283 = vmatprep.subr.mxu0 0.0
    %5284 = vmatpush1.msra.mxu0 0.0
    %5285 = vmatprep.subr.mxu0 0.0
    %5286 = vmatpush1.msra.mxu0 0.0
    %5287 = vmatprep.subr.mxu0 0.0
    %5288 = vmatpush1.msra.mxu0 0.0
    %5289 = vmatprep.subr.mxu0 0.0
    %5290 = vmatpush1.msra.mxu0 0.0
    %5291 = vmatprep.subr.mxu0 0.0
    %5292 = vmatpush1.msra.mxu0 0.0
    %5293 = vmatprep.subr.mxu0 0.0
    %5294 = vmatpush1.msra.mxu0 0.0
    %5295 = vmatprep.mubr.f32.mxu0 0.0
    %v5296 = vand.u32 %v5075, 4294901760
    %v5297 = vsub.f32 %v5075, %v5296
    %5298 = vmatmul.mubr.f32.gmra.mrb[0].mxu0 %v5297
    %v5299 = vpop.f32.mrb[0].mxu0
    %v5300 = vadd.f32 %v5226, %v5299
    %v5301 = vpop.f32.mrb[0].mxu0
    %5302 = vdwg.mxu0
    %5303 = vmatprep.subr.mxu0 0.0
    %v5304 = vand.u32 %v5071, 4294901760
    %5305 = vmatpush1.msra.mxu0 %v5304
    %5306 = vmatprep.subr.mxu0 0.0
    %5307 = vmatpush1.msra.mxu0 0.0
    %5308 = vmatprep.subr.mxu0 0.0
    %5309 = vmatpush1.msra.mxu0 0.0
    %5310 = vmatprep.subr.mxu0 0.0
    %5311 = vmatpush1.msra.mxu0 0.0
    %5312 = vmatprep.subr.mxu0 0.0
    %5313 = vmatpush1.msra.mxu0 0.0
    %5314 = vmatprep.subr.mxu0 0.0
    %5315 = vmatpush1.msra.mxu0 0.0
    %5316 = vmatprep.subr.mxu0 0.0
    %5317 = vmatpush1.msra.mxu0 0.0
    %5318 = vmatprep.subr.mxu0 0.0
    %5319 = vmatpush1.msra.mxu0 0.0
    %5320 = vmatprep.subr.mxu0 0.0
    %5321 = vmatpush1.msra.mxu0 0.0
    %5322 = vmatprep.subr.mxu0 0.0
    %5323 = vmatpush1.msra.mxu0 0.0
    %5324 = vmatprep.subr.mxu0 0.0
    %5325 = vmatpush1.msra.mxu0 0.0
    %5326 = vmatprep.subr.mxu0 0.0
    %5327 = vmatpush1.msra.mxu0 0.0
    %5328 = vmatprep.subr.mxu0 0.0
    %5329 = vmatpush1.msra.mxu0 0.0
    %5330 = vmatprep.subr.mxu0 0.0
    %5331 = vmatpush1.msra.mxu0 0.0
    %5332 = vmatprep.subr.mxu0 0.0
    %5333 = vmatpush1.msra.mxu0 0.0
    %5334 = vmatprep.subr.mxu0 0.0
    %5335 = vmatpush1.msra.mxu0 0.0
    %5336 = vmatprep.subr.mxu0 0.0
    %5337 = vmatpush1.msra.mxu0 0.0
    %5338 = vmatprep.subr.mxu0 0.0
    %5339 = vmatpush1.msra.mxu0 0.0
    %5340 = vmatprep.subr.mxu0 0.0
    %5341 = vmatpush1.msra.mxu0 0.0
    %5342 = vmatprep.subr.mxu0 0.0
    %5343 = vmatpush1.msra.mxu0 0.0
    %5344 = vmatprep.subr.mxu0 0.0
    %5345 = vmatpush1.msra.mxu0 0.0
    %5346 = vmatprep.subr.mxu0 0.0
    %5347 = vmatpush1.msra.mxu0 0.0
    %5348 = vmatprep.subr.mxu0 0.0
    %5349 = vmatpush1.msra.mxu0 0.0
    %5350 = vmatprep.subr.mxu0 0.0
    %5351 = vmatpush1.msra.mxu0 0.0
    %5352 = vmatprep.subr.mxu0 0.0
    %5353 = vmatpush1.msra.mxu0 0.0
    %5354 = vmatprep.subr.mxu0 0.0
    %5355 = vmatpush1.msra.mxu0 0.0
    %5356 = vmatprep.subr.mxu0 0.0
    %5357 = vmatpush1.msra.mxu0 0.0
    %5358 = vmatprep.subr.mxu0 0.0
    %5359 = vmatpush1.msra.mxu0 0.0
    %5360 = vmatprep.subr.mxu0 0.0
    %5361 = vmatpush1.msra.mxu0 0.0
    %5362 = vmatprep.subr.mxu0 0.0
    %5363 = vmatpush1.msra.mxu0 0.0
    %5364 = vmatprep.subr.mxu0 0.0
    %5365 = vmatpush1.msra.mxu0 0.0
    %5366 = vmatprep.subr.mxu0 0.0
    %5367 = vmatpush1.msra.mxu0 0.0
    %5368 = vmatprep.mubr.f32.mxu0 0.0
    %v5369 = vand.u32 %v5075, 4294901760
    %v5370 = vsub.f32 %v5075, %v5369
    %v5371 = vand.u32 %v5370, 4294901760
    %5372 = vmatmul.mubr.f32.gmra.mrb[0].mxu0 %v5371
    %v5373 = vpop.f32.mrb[0].mxu0
    %v5374 = vadd.f32 %v5300, %v5373
    %v5375 = vpop.f32.mrb[0].mxu0
    %5376 = vdwg.mxu0
    %5377 = vmatprep.subr.mxu0 0.0
    %v5378 = vand.u32 %v5071, 4294901760
    %v5379 = vsub.f32 %v5071, %v5378
    %v5380 = vand.u32 %v5379, 4294901760
    %5381 = vmatpush1.msra.mxu0 %v5380
    %5382 = vmatprep.subr.mxu0 0.0
    %5383 = vmatpush1.msra.mxu0 0.0
    %5384 = vmatprep.subr.mxu0 0.0
    %5385 = vmatpush1.msra.mxu0 0.0
    %5386 = vmatprep.subr.mxu0 0.0
    %5387 = vmatpush1.msra.mxu0 0.0
    %5388 = vmatprep.subr.mxu0 0.0
    %5389 = vmatpush1.msra.mxu0 0.0
    %5390 = vmatprep.subr.mxu0 0.0
    %5391 = vmatpush1.msra.mxu0 0.0
    %5392 = vmatprep.subr.mxu0 0.0
    %5393 = vmatpush1.msra.mxu0 0.0
    %5394 = vmatprep.subr.mxu0 0.0
    %5395 = vmatpush1.msra.mxu0 0.0
    %5396 = vmatprep.subr.mxu0 0.0
    %5397 = vmatpush1.msra.mxu0 0.0
    %5398 = vmatprep.subr.mxu0 0.0
    %5399 = vmatpush1.msra.mxu0 0.0
    %5400 = vmatprep.subr.mxu0 0.0
    %5401 = vmatpush1.msra.mxu0 0.0
    %5402 = vmatprep.subr.mxu0 0.0
    %5403 = vmatpush1.msra.mxu0 0.0
    %5404 = vmatprep.subr.mxu0 0.0
    %5405 = vmatpush1.msra.mxu0 0.0
    %5406 = vmatprep.subr.mxu0 0.0
    %5407 = vmatpush1.msra.mxu0 0.0
    %5408 = vmatprep.subr.mxu0 0.0
    %5409 = vmatpush1.msra.mxu0 0.0
    %5410 = vmatprep.subr.mxu0 0.0
    %5411 = vmatpush1.msra.mxu0 0.0
    %5412 = vmatprep.subr.mxu0 0.0
    %5413 = vmatpush1.msra.mxu0 0.0
    %5414 = vmatprep.subr.mxu0 0.0
    %5415 = vmatpush1.msra.mxu0 0.0
    %5416 = vmatprep.subr.mxu0 0.0
    %5417 = vmatpush1.msra.mxu0 0.0
    %5418 = vmatprep.subr.mxu0 0.0
    %5419 = vmatpush1.msra.mxu0 0.0
    %5420 = vmatprep.subr.mxu0 0.0
    %5421 = vmatpush1.msra.mxu0 0.0
    %5422 = vmatprep.subr.mxu0 0.0
    %5423 = vmatpush1.msra.mxu0 0.0
    %5424 = vmatprep.subr.mxu0 0.0
    %5425 = vmatpush1.msra.mxu0 0.0
    %5426 = vmatprep.subr.mxu0 0.0
    %5427 = vmatpush1.msra.mxu0 0.0
    %5428 = vmatprep.subr.mxu0 0.0
    %5429 = vmatpush1.msra.mxu0 0.0
    %5430 = vmatprep.subr.mxu0 0.0
    %5431 = vmatpush1.msra.mxu0 0.0
    %5432 = vmatprep.subr.mxu0 0.0
    %5433 = vmatpush1.msra.mxu0 0.0
    %5434 = vmatprep.subr.mxu0 0.0
    %5435 = vmatpush1.msra.mxu0 0.0
    %5436 = vmatprep.subr.mxu0 0.0
    %5437 = vmatpush1.msra.mxu0 0.0
    %5438 = vmatprep.subr.mxu0 0.0
    %5439 = vmatpush1.msra.mxu0 0.0
    %5440 = vmatprep.subr.mxu0 0.0
    %5441 = vmatpush1.msra.mxu0 0.0
    %5442 = vmatprep.subr.mxu0 0.0
    %5443 = vmatpush1.msra.mxu0 0.0
    %5444 = vmatprep.mubr.f32.mxu0 0.0
    %v5445 = vand.u32 %v5075, 4294901760
    %5446 = vmatmul.mubr.f32.gmra.mrb[0].mxu0 %v5445
    %v5447 = vpop.f32.mrb[0].mxu0
    %v5448 = vadd.f32 %v5374, %v5447
    %v5449 = vpop.f32.mrb[0].mxu0
    %5450 = vdwg.mxu0
    %5451 = vmatprep.subr.mxu0 0.0
    %v5452 = vand.u32 %v5071, 4294901760
    %5453 = vmatpush1.msra.mxu0 %v5452
    %5454 = vmatprep.subr.mxu0 0.0
    %5455 = vmatpush1.msra.mxu0 0.0
    %5456 = vmatprep.subr.mxu0 0.0
    %5457 = vmatpush1.msra.mxu0 0.0
    %5458 = vmatprep.subr.mxu0 0.0
    %5459 = vmatpush1.msra.mxu0 0.0
    %5460 = vmatprep.subr.mxu0 0.0
    %5461 = vmatpush1.msra.mxu0 0.0
    %5462 = vmatprep.subr.mxu0 0.0
    %5463 = vmatpush1.msra.mxu0 0.0
    %5464 = vmatprep.subr.mxu0 0.0
    %5465 = vmatpush1.msra.mxu0 0.0
    %5466 = vmatprep.subr.mxu0 0.0
    %5467 = vmatpush1.msra.mxu0 0.0
    %5468 = vmatprep.subr.mxu0 0.0
    %5469 = vmatpush1.msra.mxu0 0.0
    %5470 = vmatprep.subr.mxu0 0.0
    %5471 = vmatpush1.msra.mxu0 0.0
    %5472 = vmatprep.subr.mxu0 0.0
    %5473 = vmatpush1.msra.mxu0 0.0
    %5474 = vmatprep.subr.mxu0 0.0
    %5475 = vmatpush1.msra.mxu0 0.0
    %5476 = vmatprep.subr.mxu0 0.0
    %5477 = vmatpush1.msra.mxu0 0.0
    %5478 = vmatprep.subr.mxu0 0.0
    %5479 = vmatpush1.msra.mxu0 0.0
    %5480 = vmatprep.subr.mxu0 0.0
    %5481 = vmatpush1.msra.mxu0 0.0
    %5482 = vmatprep.subr.mxu0 0.0
    %5483 = vmatpush1.msra.mxu0 0.0
    %5484 = vmatprep.subr.mxu0 0.0
    %5485 = vmatpush1.msra.mxu0 0.0
    %5486 = vmatprep.subr.mxu0 0.0
    %5487 = vmatpush1.msra.mxu0 0.0
    %5488 = vmatprep.subr.mxu0 0.0
    %5489 = vmatpush1.msra.mxu0 0.0
    %5490 = vmatprep.subr.mxu0 0.0
    %5491 = vmatpush1.msra.mxu0 0.0
    %5492 = vmatprep.subr.mxu0 0.0
    %5493 = vmatpush1.msra.mxu0 0.0
    %5494 = vmatprep.subr.mxu0 0.0
    %5495 = vmatpush1.msra.mxu0 0.0
    %5496 = vmatprep.subr.mxu0 0.0
    %5497 = vmatpush1.msra.mxu0 0.0
    %5498 = vmatprep.subr.mxu0 0.0
    %5499 = vmatpush1.msra.mxu0 0.0
    %5500 = vmatprep.subr.mxu0 0.0
    %5501 = vmatpush1.msra.mxu0 0.0
    %5502 = vmatprep.subr.mxu0 0.0
    %5503 = vmatpush1.msra.mxu0 0.0
    %5504 = vmatprep.subr.mxu0 0.0
    %5505 = vmatpush1.msra.mxu0 0.0
    %5506 = vmatprep.subr.mxu0 0.0
    %5507 = vmatpush1.msra.mxu0 0.0
    %5508 = vmatprep.subr.mxu0 0.0
    %5509 = vmatpush1.msra.mxu0 0.0
    %5510 = vmatprep.subr.mxu0 0.0
    %5511 = vmatpush1.msra.mxu0 0.0
    %5512 = vmatprep.subr.mxu0 0.0
    %5513 = vmatpush1.msra.mxu0 0.0
    %5514 = vmatprep.subr.mxu0 0.0
    %5515 = vmatpush1.msra.mxu0 0.0
    %5516 = vmatprep.mubr.f32.mxu0 0.0
    %v5517 = vand.u32 %v5075, 4294901760
    %5518 = vmatmul.mubr.f32.gmra.mrb[0].mxu0 %v5517
    %v5519 = vpop.f32.mrb[0].mxu0
    %v5520 = vadd.f32 %v5448, %v5519
    %v5521 = vpop.f32.mrb[0].mxu0
    %5522 = vdwg.mxu0
    %v5523 = vadd.f32 %v5065, %v5520
    %5524 = vrot.lane.b32.xlu0 %v32, 116
    %v5525 = vpop.permute.xlu0 %5524
    %5526 = vrot.lane.b32.xlu0 %v33, 116
    %v5527 = vpop.permute.xlu0 %5526
    %vm5528 = vcmp.lt.s32.totalorder %v40, 116
    %v5529 = vsel %vm5528, %v5525, %v5527
    %s5530 = scalar_lea.vmem %s2, 96
    %v5531 = vld [vmem:[%s5530] sm:$0xff]
    %v5533 = vsel %vm45, %v5531, 0
    %5535 = vmatprep.subr.mxu0 0.0
    %v5536 = vand.u32 %v5529, 4294901760
    %5537 = vmatpush1.msra.mxu0 %v5536
    %5538 = vmatprep.subr.mxu0 0.0
    %5539 = vmatpush1.msra.mxu0 0.0
    %5540 = vmatprep.subr.mxu0 0.0
    %5541 = vmatpush1.msra.mxu0 0.0
    %5542 = vmatprep.subr.mxu0 0.0
    %5543 = vmatpush1.msra.mxu0 0.0
    %5544 = vmatprep.subr.mxu0 0.0
    %5545 = vmatpush1.msra.mxu0 0.0
    %5546 = vmatprep.subr.mxu0 0.0
    %5547 = vmatpush1.msra.mxu0 0.0
    %5548 = vmatprep.subr.mxu0 0.0
    %5549 = vmatpush1.msra.mxu0 0.0
    %5550 = vmatprep.subr.mxu0 0.0
    %5551 = vmatpush1.msra.mxu0 0.0
    %5552 = vmatprep.subr.mxu0 0.0
    %5553 = vmatpush1.msra.mxu0 0.0
    %5554 = vmatprep.subr.mxu0 0.0
    %5555 = vmatpush1.msra.mxu0 0.0
    %5556 = vmatprep.subr.mxu0 0.0
    %5557 = vmatpush1.msra.mxu0 0.0
    %5558 = vmatprep.subr.mxu0 0.0
    %5559 = vmatpush1.msra.mxu0 0.0
    %5560 = vmatprep.subr.mxu0 0.0
    %5561 = vmatpush1.msra.mxu0 0.0
    %5562 = vmatprep.subr.mxu0 0.0
    %5563 = vmatpush1.msra.mxu0 0.0
    %5564 = vmatprep.subr.mxu0 0.0
    %5565 = vmatpush1.msra.mxu0 0.0
    %5566 = vmatprep.subr.mxu0 0.0
    %5567 = vmatpush1.msra.mxu0 0.0
    %5568 = vmatprep.subr.mxu0 0.0
    %5569 = vmatpush1.msra.mxu0 0.0
    %5570 = vmatprep.subr.mxu0 0.0
    %5571 = vmatpush1.msra.mxu0 0.0
    %5572 = vmatprep.subr.mxu0 0.0
    %5573 = vmatpush1.msra.mxu0 0.0
    %5574 = vmatprep.subr.mxu0 0.0
    %5575 = vmatpush1.msra.mxu0 0.0
    %5576 = vmatprep.subr.mxu0 0.0
    %5577 = vmatpush1.msra.mxu0 0.0
    %5578 = vmatprep.subr.mxu0 0.0
    %5579 = vmatpush1.msra.mxu0 0.0
    %5580 = vmatprep.subr.mxu0 0.0
    %5581 = vmatpush1.msra.mxu0 0.0
    %5582 = vmatprep.subr.mxu0 0.0
    %5583 = vmatpush1.msra.mxu0 0.0
    %5584 = vmatprep.subr.mxu0 0.0
    %5585 = vmatpush1.msra.mxu0 0.0
    %5586 = vmatprep.subr.mxu0 0.0
    %5587 = vmatpush1.msra.mxu0 0.0
    %5588 = vmatprep.subr.mxu0 0.0
    %5589 = vmatpush1.msra.mxu0 0.0
    %5590 = vmatprep.subr.mxu0 0.0
    %5591 = vmatpush1.msra.mxu0 0.0
    %5592 = vmatprep.subr.mxu0 0.0
    %5593 = vmatpush1.msra.mxu0 0.0
    %5594 = vmatprep.subr.mxu0 0.0
    %5595 = vmatpush1.msra.mxu0 0.0
    %5596 = vmatprep.subr.mxu0 0.0
    %5597 = vmatpush1.msra.mxu0 0.0
    %5598 = vmatprep.subr.mxu0 0.0
    %5599 = vmatpush1.msra.mxu0 0.0
    %5600 = vmatprep.mubr.f32.mxu0 0.0
    %v5601 = vand.u32 %v5533, 4294901760
    %v5602 = vsub.f32 %v5533, %v5601
    %v5603 = vand.u32 %v5602, 4294901760
    %v5604 = vsub.f32 %v5602, %v5603
    %v5605 = vand.u32 %v5604, 4294901760
    %5606 = vmatmul.mubr.f32.gmra.mrb[0].mxu0 %v5605
    %v5607 = vpop.f32.mrb[0].mxu0
    %v5608 = vadd.f32 0.0, %v5607
    %v5609 = vpop.f32.mrb[0].mxu0
    %5610 = vdwg.mxu0
    %5611 = vmatprep.subr.mxu0 0.0
    %v5612 = vand.u32 %v5529, 4294901760
    %v5613 = vsub.f32 %v5529, %v5612
    %v5614 = vand.u32 %v5613, 4294901760
    %v5615 = vsub.f32 %v5613, %v5614
    %v5616 = vand.u32 %v5615, 4294901760
    %5617 = vmatpush1.msra.mxu0 %v5616
    %5618 = vmatprep.subr.mxu0 0.0
    %5619 = vmatpush1.msra.mxu0 0.0
    %5620 = vmatprep.subr.mxu0 0.0
    %5621 = vmatpush1.msra.mxu0 0.0
    %5622 = vmatprep.subr.mxu0 0.0
    %5623 = vmatpush1.msra.mxu0 0.0
    %5624 = vmatprep.subr.mxu0 0.0
    %5625 = vmatpush1.msra.mxu0 0.0
    %5626 = vmatprep.subr.mxu0 0.0
    %5627 = vmatpush1.msra.mxu0 0.0
    %5628 = vmatprep.subr.mxu0 0.0
    %5629 = vmatpush1.msra.mxu0 0.0
    %5630 = vmatprep.subr.mxu0 0.0
    %5631 = vmatpush1.msra.mxu0 0.0
    %5632 = vmatprep.subr.mxu0 0.0
    %5633 = vmatpush1.msra.mxu0 0.0
    %5634 = vmatprep.subr.mxu0 0.0
    %5635 = vmatpush1.msra.mxu0 0.0
    %5636 = vmatprep.subr.mxu0 0.0
    %5637 = vmatpush1.msra.mxu0 0.0
    %5638 = vmatprep.subr.mxu0 0.0
    %5639 = vmatpush1.msra.mxu0 0.0
    %5640 = vmatprep.subr.mxu0 0.0
    %5641 = vmatpush1.msra.mxu0 0.0
    %5642 = vmatprep.subr.mxu0 0.0
    %5643 = vmatpush1.msra.mxu0 0.0
    %5644 = vmatprep.subr.mxu0 0.0
    %5645 = vmatpush1.msra.mxu0 0.0
    %5646 = vmatprep.subr.mxu0 0.0
    %5647 = vmatpush1.msra.mxu0 0.0
    %5648 = vmatprep.subr.mxu0 0.0
    %5649 = vmatpush1.msra.mxu0 0.0
    %5650 = vmatprep.subr.mxu0 0.0
    %5651 = vmatpush1.msra.mxu0 0.0
    %5652 = vmatprep.subr.mxu0 0.0
    %5653 = vmatpush1.msra.mxu0 0.0
    %5654 = vmatprep.subr.mxu0 0.0
    %5655 = vmatpush1.msra.mxu0 0.0
    %5656 = vmatprep.subr.mxu0 0.0
    %5657 = vmatpush1.msra.mxu0 0.0
    %5658 = vmatprep.subr.mxu0 0.0
    %5659 = vmatpush1.msra.mxu0 0.0
    %5660 = vmatprep.subr.mxu0 0.0
    %5661 = vmatpush1.msra.mxu0 0.0
    %5662 = vmatprep.subr.mxu0 0.0
    %5663 = vmatpush1.msra.mxu0 0.0
    %5664 = vmatprep.subr.mxu0 0.0
    %5665 = vmatpush1.msra.mxu0 0.0
    %5666 = vmatprep.subr.mxu0 0.0
    %5667 = vmatpush1.msra.mxu0 0.0
    %5668 = vmatprep.subr.mxu0 0.0
    %5669 = vmatpush1.msra.mxu0 0.0
    %5670 = vmatprep.subr.mxu0 0.0
    %5671 = vmatpush1.msra.mxu0 0.0
    %5672 = vmatprep.subr.mxu0 0.0
    %5673 = vmatpush1.msra.mxu0 0.0
    %5674 = vmatprep.subr.mxu0 0.0
    %5675 = vmatpush1.msra.mxu0 0.0
    %5676 = vmatprep.subr.mxu0 0.0
    %5677 = vmatpush1.msra.mxu0 0.0
    %5678 = vmatprep.subr.mxu0 0.0
    %5679 = vmatpush1.msra.mxu0 0.0
    %5680 = vmatprep.mubr.f32.mxu0 0.0
    %v5681 = vand.u32 %v5533, 4294901760
    %5682 = vmatmul.mubr.f32.gmra.mrb[0].mxu0 %v5681
    %v5683 = vpop.f32.mrb[0].mxu0
    %v5684 = vadd.f32 %v5608, %v5683
    %v5685 = vpop.f32.mrb[0].mxu0
    %5686 = vdwg.mxu0
    %5687 = vmatprep.subr.mxu0 0.0
    %v5688 = vand.u32 %v5529, 4294901760
    %v5689 = vsub.f32 %v5529, %v5688
    %5690 = vmatpush1.msra.mxu0 %v5689
    %5691 = vmatprep.subr.mxu0 0.0
    %5692 = vmatpush1.msra.mxu0 0.0
    %5693 = vmatprep.subr.mxu0 0.0
    %5694 = vmatpush1.msra.mxu0 0.0
    %5695 = vmatprep.subr.mxu0 0.0
    %5696 = vmatpush1.msra.mxu0 0.0
    %5697 = vmatprep.subr.mxu0 0.0
    %5698 = vmatpush1.msra.mxu0 0.0
    %5699 = vmatprep.subr.mxu0 0.0
    %5700 = vmatpush1.msra.mxu0 0.0
    %5701 = vmatprep.subr.mxu0 0.0
    %5702 = vmatpush1.msra.mxu0 0.0
    %5703 = vmatprep.subr.mxu0 0.0
    %5704 = vmatpush1.msra.mxu0 0.0
    %5705 = vmatprep.subr.mxu0 0.0
    %5706 = vmatpush1.msra.mxu0 0.0
    %5707 = vmatprep.subr.mxu0 0.0
    %5708 = vmatpush1.msra.mxu0 0.0
    %5709 = vmatprep.subr.mxu0 0.0
    %5710 = vmatpush1.msra.mxu0 0.0
    %5711 = vmatprep.subr.mxu0 0.0
    %5712 = vmatpush1.msra.mxu0 0.0
    %5713 = vmatprep.subr.mxu0 0.0
    %5714 = vmatpush1.msra.mxu0 0.0
    %5715 = vmatprep.subr.mxu0 0.0
    %5716 = vmatpush1.msra.mxu0 0.0
    %5717 = vmatprep.subr.mxu0 0.0
    %5718 = vmatpush1.msra.mxu0 0.0
    %5719 = vmatprep.subr.mxu0 0.0
    %5720 = vmatpush1.msra.mxu0 0.0
    %5721 = vmatprep.subr.mxu0 0.0
    %5722 = vmatpush1.msra.mxu0 0.0
    %5723 = vmatprep.subr.mxu0 0.0
    %5724 = vmatpush1.msra.mxu0 0.0
    %5725 = vmatprep.subr.mxu0 0.0
    %5726 = vmatpush1.msra.mxu0 0.0
    %5727 = vmatprep.subr.mxu0 0.0
    %5728 = vmatpush1.msra.mxu0 0.0
    %5729 = vmatprep.subr.mxu0 0.0
    %5730 = vmatpush1.msra.mxu0 0.0
    %5731 = vmatprep.subr.mxu0 0.0
    %5732 = vmatpush1.msra.mxu0 0.0
    %5733 = vmatprep.subr.mxu0 0.0
    %5734 = vmatpush1.msra.mxu0 0.0
    %5735 = vmatprep.subr.mxu0 0.0
    %5736 = vmatpush1.msra.mxu0 0.0
    %5737 = vmatprep.subr.mxu0 0.0
    %5738 = vmatpush1.msra.mxu0 0.0
    %5739 = vmatprep.subr.mxu0 0.0
    %5740 = vmatpush1.msra.mxu0 0.0
    %5741 = vmatprep.subr.mxu0 0.0
    %5742 = vmatpush1.msra.mxu0 0.0
    %5743 = vmatprep.subr.mxu0 0.0
    %5744 = vmatpush1.msra.mxu0 0.0
    %5745 = vmatprep.subr.mxu0 0.0
    %5746 = vmatpush1.msra.mxu0 0.0
    %5747 = vmatprep.subr.mxu0 0.0
    %5748 = vmatpush1.msra.mxu0 0.0
    %5749 = vmatprep.subr.mxu0 0.0
    %5750 = vmatpush1.msra.mxu0 0.0
    %5751 = vmatprep.subr.mxu0 0.0
    %5752 = vmatpush1.msra.mxu0 0.0
    %5753 = vmatprep.mubr.f32.mxu0 0.0
    %v5754 = vand.u32 %v5533, 4294901760
    %v5755 = vsub.f32 %v5533, %v5754
    %5756 = vmatmul.mubr.f32.gmra.mrb[0].mxu0 %v5755
    %v5757 = vpop.f32.mrb[0].mxu0
    %v5758 = vadd.f32 %v5684, %v5757
    %v5759 = vpop.f32.mrb[0].mxu0
    %5760 = vdwg.mxu0
    %5761 = vmatprep.subr.mxu0 0.0
    %v5762 = vand.u32 %v5529, 4294901760
    %5763 = vmatpush1.msra.mxu0 %v5762
    %5764 = vmatprep.subr.mxu0 0.0
    %5765 = vmatpush1.msra.mxu0 0.0
    %5766 = vmatprep.subr.mxu0 0.0
    %5767 = vmatpush1.msra.mxu0 0.0
    %5768 = vmatprep.subr.mxu0 0.0
    %5769 = vmatpush1.msra.mxu0 0.0
    %5770 = vmatprep.subr.mxu0 0.0
    %5771 = vmatpush1.msra.mxu0 0.0
    %5772 = vmatprep.subr.mxu0 0.0
    %5773 = vmatpush1.msra.mxu0 0.0
    %5774 = vmatprep.subr.mxu0 0.0
    %5775 = vmatpush1.msra.mxu0 0.0
    %5776 = vmatprep.subr.mxu0 0.0
    %5777 = vmatpush1.msra.mxu0 0.0
    %5778 = vmatprep.subr.mxu0 0.0
    %5779 = vmatpush1.msra.mxu0 0.0
    %5780 = vmatprep.subr.mxu0 0.0
    %5781 = vmatpush1.msra.mxu0 0.0
    %5782 = vmatprep.subr.mxu0 0.0
    %5783 = vmatpush1.msra.mxu0 0.0
    %5784 = vmatprep.subr.mxu0 0.0
    %5785 = vmatpush1.msra.mxu0 0.0
    %5786 = vmatprep.subr.mxu0 0.0
    %5787 = vmatpush1.msra.mxu0 0.0
    %5788 = vmatprep.subr.mxu0 0.0
    %5789 = vmatpush1.msra.mxu0 0.0
    %5790 = vmatprep.subr.mxu0 0.0
    %5791 = vmatpush1.msra.mxu0 0.0
    %5792 = vmatprep.subr.mxu0 0.0
    %5793 = vmatpush1.msra.mxu0 0.0
    %5794 = vmatprep.subr.mxu0 0.0
    %5795 = vmatpush1.msra.mxu0 0.0
    %5796 = vmatprep.subr.mxu0 0.0
    %5797 = vmatpush1.msra.mxu0 0.0
    %5798 = vmatprep.subr.mxu0 0.0
    %5799 = vmatpush1.msra.mxu0 0.0
    %5800 = vmatprep.subr.mxu0 0.0
    %5801 = vmatpush1.msra.mxu0 0.0
    %5802 = vmatprep.subr.mxu0 0.0
    %5803 = vmatpush1.msra.mxu0 0.0
    %5804 = vmatprep.subr.mxu0 0.0
    %5805 = vmatpush1.msra.mxu0 0.0
    %5806 = vmatprep.subr.mxu0 0.0
    %5807 = vmatpush1.msra.mxu0 0.0
    %5808 = vmatprep.subr.mxu0 0.0
    %5809 = vmatpush1.msra.mxu0 0.0
    %5810 = vmatprep.subr.mxu0 0.0
    %5811 = vmatpush1.msra.mxu0 0.0
    %5812 = vmatprep.subr.mxu0 0.0
    %5813 = vmatpush1.msra.mxu0 0.0
    %5814 = vmatprep.subr.mxu0 0.0
    %5815 = vmatpush1.msra.mxu0 0.0
    %5816 = vmatprep.subr.mxu0 0.0
    %5817 = vmatpush1.msra.mxu0 0.0
    %5818 = vmatprep.subr.mxu0 0.0
    %5819 = vmatpush1.msra.mxu0 0.0
    %5820 = vmatprep.subr.mxu0 0.0
    %5821 = vmatpush1.msra.mxu0 0.0
    %5822 = vmatprep.subr.mxu0 0.0
    %5823 = vmatpush1.msra.mxu0 0.0
    %5824 = vmatprep.subr.mxu0 0.0
    %5825 = vmatpush1.msra.mxu0 0.0
    %5826 = vmatprep.mubr.f32.mxu0 0.0
    %v5827 = vand.u32 %v5533, 4294901760
    %v5828 = vsub.f32 %v5533, %v5827
    %v5829 = vand.u32 %v5828, 4294901760
    %5830 = vmatmul.mubr.f32.gmra.mrb[0].mxu0 %v5829
    %v5831 = vpop.f32.mrb[0].mxu0
    %v5832 = vadd.f32 %v5758, %v5831
    %v5833 = vpop.f32.mrb[0].mxu0
    %5834 = vdwg.mxu0
    %5835 = vmatprep.subr.mxu0 0.0
    %v5836 = vand.u32 %v5529, 4294901760
    %v5837 = vsub.f32 %v5529, %v5836
    %v5838 = vand.u32 %v5837, 4294901760
    %5839 = vmatpush1.msra.mxu0 %v5838
    %5840 = vmatprep.subr.mxu0 0.0
    %5841 = vmatpush1.msra.mxu0 0.0
    %5842 = vmatprep.subr.mxu0 0.0
    %5843 = vmatpush1.msra.mxu0 0.0
    %5844 = vmatprep.subr.mxu0 0.0
    %5845 = vmatpush1.msra.mxu0 0.0
    %5846 = vmatprep.subr.mxu0 0.0
    %5847 = vmatpush1.msra.mxu0 0.0
    %5848 = vmatprep.subr.mxu0 0.0
    %5849 = vmatpush1.msra.mxu0 0.0
    %5850 = vmatprep.subr.mxu0 0.0
    %5851 = vmatpush1.msra.mxu0 0.0
    %5852 = vmatprep.subr.mxu0 0.0
    %5853 = vmatpush1.msra.mxu0 0.0
    %5854 = vmatprep.subr.mxu0 0.0
    %5855 = vmatpush1.msra.mxu0 0.0
    %5856 = vmatprep.subr.mxu0 0.0
    %5857 = vmatpush1.msra.mxu0 0.0
    %5858 = vmatprep.subr.mxu0 0.0
    %5859 = vmatpush1.msra.mxu0 0.0
    %5860 = vmatprep.subr.mxu0 0.0
    %5861 = vmatpush1.msra.mxu0 0.0
    %5862 = vmatprep.subr.mxu0 0.0
    %5863 = vmatpush1.msra.mxu0 0.0
    %5864 = vmatprep.subr.mxu0 0.0
    %5865 = vmatpush1.msra.mxu0 0.0
    %5866 = vmatprep.subr.mxu0 0.0
    %5867 = vmatpush1.msra.mxu0 0.0
    %5868 = vmatprep.subr.mxu0 0.0
    %5869 = vmatpush1.msra.mxu0 0.0
    %5870 = vmatprep.subr.mxu0 0.0
    %5871 = vmatpush1.msra.mxu0 0.0
    %5872 = vmatprep.subr.mxu0 0.0
    %5873 = vmatpush1.msra.mxu0 0.0
    %5874 = vmatprep.subr.mxu0 0.0
    %5875 = vmatpush1.msra.mxu0 0.0
    %5876 = vmatprep.subr.mxu0 0.0
    %5877 = vmatpush1.msra.mxu0 0.0
    %5878 = vmatprep.subr.mxu0 0.0
    %5879 = vmatpush1.msra.mxu0 0.0
    %5880 = vmatprep.subr.mxu0 0.0
    %5881 = vmatpush1.msra.mxu0 0.0
    %5882 = vmatprep.subr.mxu0 0.0
    %5883 = vmatpush1.msra.mxu0 0.0
    %5884 = vmatprep.subr.mxu0 0.0
    %5885 = vmatpush1.msra.mxu0 0.0
    %5886 = vmatprep.subr.mxu0 0.0
    %5887 = vmatpush1.msra.mxu0 0.0
    %5888 = vmatprep.subr.mxu0 0.0
    %5889 = vmatpush1.msra.mxu0 0.0
    %5890 = vmatprep.subr.mxu0 0.0
    %5891 = vmatpush1.msra.mxu0 0.0
    %5892 = vmatprep.subr.mxu0 0.0
    %5893 = vmatpush1.msra.mxu0 0.0
    %5894 = vmatprep.subr.mxu0 0.0
    %5895 = vmatpush1.msra.mxu0 0.0
    %5896 = vmatprep.subr.mxu0 0.0
    %5897 = vmatpush1.msra.mxu0 0.0
    %5898 = vmatprep.subr.mxu0 0.0
    %5899 = vmatpush1.msra.mxu0 0.0
    %5900 = vmatprep.subr.mxu0 0.0
    %5901 = vmatpush1.msra.mxu0 0.0
    %5902 = vmatprep.mubr.f32.mxu0 0.0
    %v5903 = vand.u32 %v5533, 4294901760
    %5904 = vmatmul.mubr.f32.gmra.mrb[0].mxu0 %v5903
    %v5905 = vpop.f32.mrb[0].mxu0
    %v5906 = vadd.f32 %v5832, %v5905
    %v5907 = vpop.f32.mrb[0].mxu0
    %5908 = vdwg.mxu0
    %5909 = vmatprep.subr.mxu0 0.0
    %v5910 = vand.u32 %v5529, 4294901760
    %5911 = vmatpush1.msra.mxu0 %v5910
    %5912 = vmatprep.subr.mxu0 0.0
    %5913 = vmatpush1.msra.mxu0 0.0
    %5914 = vmatprep.subr.mxu0 0.0
    %5915 = vmatpush1.msra.mxu0 0.0
    %5916 = vmatprep.subr.mxu0 0.0
    %5917 = vmatpush1.msra.mxu0 0.0
    %5918 = vmatprep.subr.mxu0 0.0
    %5919 = vmatpush1.msra.mxu0 0.0
    %5920 = vmatprep.subr.mxu0 0.0
    %5921 = vmatpush1.msra.mxu0 0.0
    %5922 = vmatprep.subr.mxu0 0.0
    %5923 = vmatpush1.msra.mxu0 0.0
    %5924 = vmatprep.subr.mxu0 0.0
    %5925 = vmatpush1.msra.mxu0 0.0
    %5926 = vmatprep.subr.mxu0 0.0
    %5927 = vmatpush1.msra.mxu0 0.0
    %5928 = vmatprep.subr.mxu0 0.0
    %5929 = vmatpush1.msra.mxu0 0.0
    %5930 = vmatprep.subr.mxu0 0.0
    %5931 = vmatpush1.msra.mxu0 0.0
    %5932 = vmatprep.subr.mxu0 0.0
    %5933 = vmatpush1.msra.mxu0 0.0
    %5934 = vmatprep.subr.mxu0 0.0
    %5935 = vmatpush1.msra.mxu0 0.0
    %5936 = vmatprep.subr.mxu0 0.0
    %5937 = vmatpush1.msra.mxu0 0.0
    %5938 = vmatprep.subr.mxu0 0.0
    %5939 = vmatpush1.msra.mxu0 0.0
    %5940 = vmatprep.subr.mxu0 0.0
    %5941 = vmatpush1.msra.mxu0 0.0
    %5942 = vmatprep.subr.mxu0 0.0
    %5943 = vmatpush1.msra.mxu0 0.0
    %5944 = vmatprep.subr.mxu0 0.0
    %5945 = vmatpush1.msra.mxu0 0.0
    %5946 = vmatprep.subr.mxu0 0.0
    %5947 = vmatpush1.msra.mxu0 0.0
    %5948 = vmatprep.subr.mxu0 0.0
    %5949 = vmatpush1.msra.mxu0 0.0
    %5950 = vmatprep.subr.mxu0 0.0
    %5951 = vmatpush1.msra.mxu0 0.0
    %5952 = vmatprep.subr.mxu0 0.0
    %5953 = vmatpush1.msra.mxu0 0.0
    %5954 = vmatprep.subr.mxu0 0.0
    %5955 = vmatpush1.msra.mxu0 0.0
    %5956 = vmatprep.subr.mxu0 0.0
    %5957 = vmatpush1.msra.mxu0 0.0
    %5958 = vmatprep.subr.mxu0 0.0
    %5959 = vmatpush1.msra.mxu0 0.0
    %5960 = vmatprep.subr.mxu0 0.0
    %5961 = vmatpush1.msra.mxu0 0.0
    %5962 = vmatprep.subr.mxu0 0.0
    %5963 = vmatpush1.msra.mxu0 0.0
    %5964 = vmatprep.subr.mxu0 0.0
    %5965 = vmatpush1.msra.mxu0 0.0
    %5966 = vmatprep.subr.mxu0 0.0
    %5967 = vmatpush1.msra.mxu0 0.0
    %5968 = vmatprep.subr.mxu0 0.0
    %5969 = vmatpush1.msra.mxu0 0.0
    %5970 = vmatprep.subr.mxu0 0.0
    %5971 = vmatpush1.msra.mxu0 0.0
    %5972 = vmatprep.subr.mxu0 0.0
    %5973 = vmatpush1.msra.mxu0 0.0
    %5974 = vmatprep.mubr.f32.mxu0 0.0
    %v5975 = vand.u32 %v5533, 4294901760
    %5976 = vmatmul.mubr.f32.gmra.mrb[0].mxu0 %v5975
    %v5977 = vpop.f32.mrb[0].mxu0
    %v5978 = vadd.f32 %v5906, %v5977
    %v5979 = vpop.f32.mrb[0].mxu0
    %5980 = vdwg.mxu0
    %v5981 = vadd.f32 %v5523, %v5978
    %5982 = vrot.lane.b32.xlu0 %v32, 115
    %v5983 = vpop.permute.xlu0 %5982
    %5984 = vrot.lane.b32.xlu0 %v33, 115
    %v5985 = vpop.permute.xlu0 %5984
    %vm5986 = vcmp.lt.s32.totalorder %v40, 115
    %v5987 = vsel %vm5986, %v5983, %v5985
    %s5988 = scalar_lea.vmem %s2, 104
    %v5989 = vld [vmem:[%s5988] sm:$0xff]
    %v5991 = vsel %vm45, %v5989, 0
    %5993 = vmatprep.subr.mxu0 0.0
    %v5994 = vand.u32 %v5987, 4294901760
    %5995 = vmatpush1.msra.mxu0 %v5994
    %5996 = vmatprep.subr.mxu0 0.0
    %5997 = vmatpush1.msra.mxu0 0.0
    %5998 = vmatprep.subr.mxu0 0.0
    %5999 = vmatpush1.msra.mxu0 0.0
    %6000 = vmatprep.subr.mxu0 0.0
    %6001 = vmatpush1.msra.mxu0 0.0
    %6002 = vmatprep.subr.mxu0 0.0
    %6003 = vmatpush1.msra.mxu0 0.0
    %6004 = vmatprep.subr.mxu0 0.0
    %6005 = vmatpush1.msra.mxu0 0.0
    %6006 = vmatprep.subr.mxu0 0.0
    %6007 = vmatpush1.msra.mxu0 0.0
    %6008 = vmatprep.subr.mxu0 0.0
    %6009 = vmatpush1.msra.mxu0 0.0
    %6010 = vmatprep.subr.mxu0 0.0
    %6011 = vmatpush1.msra.mxu0 0.0
    %6012 = vmatprep.subr.mxu0 0.0
    %6013 = vmatpush1.msra.mxu0 0.0
    %6014 = vmatprep.subr.mxu0 0.0
    %6015 = vmatpush1.msra.mxu0 0.0
    %6016 = vmatprep.subr.mxu0 0.0
    %6017 = vmatpush1.msra.mxu0 0.0
    %6018 = vmatprep.subr.mxu0 0.0
    %6019 = vmatpush1.msra.mxu0 0.0
    %6020 = vmatprep.subr.mxu0 0.0
    %6021 = vmatpush1.msra.mxu0 0.0
    %6022 = vmatprep.subr.mxu0 0.0
    %6023 = vmatpush1.msra.mxu0 0.0
    %6024 = vmatprep.subr.mxu0 0.0
    %6025 = vmatpush1.msra.mxu0 0.0
    %6026 = vmatprep.subr.mxu0 0.0
    %6027 = vmatpush1.msra.mxu0 0.0
    %6028 = vmatprep.subr.mxu0 0.0
    %6029 = vmatpush1.msra.mxu0 0.0
    %6030 = vmatprep.subr.mxu0 0.0
    %6031 = vmatpush1.msra.mxu0 0.0
    %6032 = vmatprep.subr.mxu0 0.0
    %6033 = vmatpush1.msra.mxu0 0.0
    %6034 = vmatprep.subr.mxu0 0.0
    %6035 = vmatpush1.msra.mxu0 0.0
    %6036 = vmatprep.subr.mxu0 0.0
    %6037 = vmatpush1.msra.mxu0 0.0
    %6038 = vmatprep.subr.mxu0 0.0
    %6039 = vmatpush1.msra.mxu0 0.0
    %6040 = vmatprep.subr.mxu0 0.0
    %6041 = vmatpush1.msra.mxu0 0.0
    %6042 = vmatprep.subr.mxu0 0.0
    %6043 = vmatpush1.msra.mxu0 0.0
    %6044 = vmatprep.subr.mxu0 0.0
    %6045 = vmatpush1.msra.mxu0 0.0
    %6046 = vmatprep.subr.mxu0 0.0
    %6047 = vmatpush1.msra.mxu0 0.0
    %6048 = vmatprep.subr.mxu0 0.0
    %6049 = vmatpush1.msra.mxu0 0.0
    %6050 = vmatprep.subr.mxu0 0.0
    %6051 = vmatpush1.msra.mxu0 0.0
    %6052 = vmatprep.subr.mxu0 0.0
    %6053 = vmatpush1.msra.mxu0 0.0
    %6054 = vmatprep.subr.mxu0 0.0
    %6055 = vmatpush1.msra.mxu0 0.0
    %6056 = vmatprep.subr.mxu0 0.0
    %6057 = vmatpush1.msra.mxu0 0.0
    %6058 = vmatprep.mubr.f32.mxu0 0.0
    %v6059 = vand.u32 %v5991, 4294901760
    %v6060 = vsub.f32 %v5991, %v6059
    %v6061 = vand.u32 %v6060, 4294901760
    %v6062 = vsub.f32 %v6060, %v6061
    %v6063 = vand.u32 %v6062, 4294901760
    %6064 = vmatmul.mubr.f32.gmra.mrb[0].mxu0 %v6063
    %v6065 = vpop.f32.mrb[0].mxu0
    %v6066 = vadd.f32 0.0, %v6065
    %v6067 = vpop.f32.mrb[0].mxu0
    %6068 = vdwg.mxu0
    %6069 = vmatprep.subr.mxu0 0.0
    %v6070 = vand.u32 %v5987, 4294901760
    %v6071 = vsub.f32 %v5987, %v6070
    %v6072 = vand.u32 %v6071, 4294901760
    %v6073 = vsub.f32 %v6071, %v6072
    %v6074 = vand.u32 %v6073, 4294901760
    %6075 = vmatpush1.msra.mxu0 %v6074
    %6076 = vmatprep.subr.mxu0 0.0
    %6077 = vmatpush1.msra.mxu0 0.0
    %6078 = vmatprep.subr.mxu0 0.0
    %6079 = vmatpush1.msra.mxu0 0.0
    %6080 = vmatprep.subr.mxu0 0.0
    %6081 = vmatpush1.msra.mxu0 0.0
    %6082 = vmatprep.subr.mxu0 0.0
    %6083 = vmatpush1.msra.mxu0 0.0
    %6084 = vmatprep.subr.mxu0 0.0
    %6085 = vmatpush1.msra.mxu0 0.0
    %6086 = vmatprep.subr.mxu0 0.0
    %6087 = vmatpush1.msra.mxu0 0.0
    %6088 = vmatprep.subr.mxu0 0.0
    %6089 = vmatpush1.msra.mxu0 0.0
    %6090 = vmatprep.subr.mxu0 0.0
    %6091 = vmatpush1.msra.mxu0 0.0
    %6092 = vmatprep.subr.mxu0 0.0
    %6093 = vmatpush1.msra.mxu0 0.0
    %6094 = vmatprep.subr.mxu0 0.0
    %6095 = vmatpush1.msra.mxu0 0.0
    %6096 = vmatprep.subr.mxu0 0.0
    %6097 = vmatpush1.msra.mxu0 0.0
    %6098 = vmatprep.subr.mxu0 0.0
    %6099 = vmatpush1.msra.mxu0 0.0
    %6100 = vmatprep.subr.mxu0 0.0
    %6101 = vmatpush1.msra.mxu0 0.0
    %6102 = vmatprep.subr.mxu0 0.0
    %6103 = vmatpush1.msra.mxu0 0.0
    %6104 = vmatprep.subr.mxu0 0.0
    %6105 = vmatpush1.msra.mxu0 0.0
    %6106 = vmatprep.subr.mxu0 0.0
    %6107 = vmatpush1.msra.mxu0 0.0
    %6108 = vmatprep.subr.mxu0 0.0
    %6109 = vmatpush1.msra.mxu0 0.0
    %6110 = vmatprep.subr.mxu0 0.0
    %6111 = vmatpush1.msra.mxu0 0.0
    %6112 = vmatprep.subr.mxu0 0.0
    %6113 = vmatpush1.msra.mxu0 0.0
    %6114 = vmatprep.subr.mxu0 0.0
    %6115 = vmatpush1.msra.mxu0 0.0
    %6116 = vmatprep.subr.mxu0 0.0
    %6117 = vmatpush1.msra.mxu0 0.0
    %6118 = vmatprep.subr.mxu0 0.0
    %6119 = vmatpush1.msra.mxu0 0.0
    %6120 = vmatprep.subr.mxu0 0.0
    %6121 = vmatpush1.msra.mxu0 0.0
    %6122 = vmatprep.subr.mxu0 0.0
    %6123 = vmatpush1.msra.mxu0 0.0
    %6124 = vmatprep.subr.mxu0 0.0
    %6125 = vmatpush1.msra.mxu0 0.0
    %6126 = vmatprep.subr.mxu0 0.0
    %6127 = vmatpush1.msra.mxu0 0.0
    %6128 = vmatprep.subr.mxu0 0.0
    %6129 = vmatpush1.msra.mxu0 0.0
    %6130 = vmatprep.subr.mxu0 0.0
    %6131 = vmatpush1.msra.mxu0 0.0
    %6132 = vmatprep.subr.mxu0 0.0
    %6133 = vmatpush1.msra.mxu0 0.0
    %6134 = vmatprep.subr.mxu0 0.0
    %6135 = vmatpush1.msra.mxu0 0.0
    %6136 = vmatprep.subr.mxu0 0.0
    %6137 = vmatpush1.msra.mxu0 0.0
    %6138 = vmatprep.mubr.f32.mxu0 0.0
    %v6139 = vand.u32 %v5991, 4294901760
    %6140 = vmatmul.mubr.f32.gmra.mrb[0].mxu0 %v6139
    %v6141 = vpop.f32.mrb[0].mxu0
    %v6142 = vadd.f32 %v6066, %v6141
    %v6143 = vpop.f32.mrb[0].mxu0
    %6144 = vdwg.mxu0
    %6145 = vmatprep.subr.mxu0 0.0
    %v6146 = vand.u32 %v5987, 4294901760
    %v6147 = vsub.f32 %v5987, %v6146
    %6148 = vmatpush1.msra.mxu0 %v6147
    %6149 = vmatprep.subr.mxu0 0.0
    %6150 = vmatpush1.msra.mxu0 0.0
    %6151 = vmatprep.subr.mxu0 0.0
    %6152 = vmatpush1.msra.mxu0 0.0
    %6153 = vmatprep.subr.mxu0 0.0
    %6154 = vmatpush1.msra.mxu0 0.0
    %6155 = vmatprep.subr.mxu0 0.0
    %6156 = vmatpush1.msra.mxu0 0.0
    %6157 = vmatprep.subr.mxu0 0.0
    %6158 = vmatpush1.msra.mxu0 0.0
    %6159 = vmatprep.subr.mxu0 0.0
    %6160 = vmatpush1.msra.mxu0 0.0
    %6161 = vmatprep.subr.mxu0 0.0
    %6162 = vmatpush1.msra.mxu0 0.0
    %6163 = vmatprep.subr.mxu0 0.0
    %6164 = vmatpush1.msra.mxu0 0.0
    %6165 = vmatprep.subr.mxu0 0.0
    %6166 = vmatpush1.msra.mxu0 0.0
    %6167 = vmatprep.subr.mxu0 0.0
    %6168 = vmatpush1.msra.mxu0 0.0
    %6169 = vmatprep.subr.mxu0 0.0
    %6170 = vmatpush1.msra.mxu0 0.0
    %6171 = vmatprep.subr.mxu0 0.0
    %6172 = vmatpush1.msra.mxu0 0.0
    %6173 = vmatprep.subr.mxu0 0.0
    %6174 = vmatpush1.msra.mxu0 0.0
    %6175 = vmatprep.subr.mxu0 0.0
    %6176 = vmatpush1.msra.mxu0 0.0
    %6177 = vmatprep.subr.mxu0 0.0
    %6178 = vmatpush1.msra.mxu0 0.0
    %6179 = vmatprep.subr.mxu0 0.0
    %6180 = vmatpush1.msra.mxu0 0.0
    %6181 = vmatprep.subr.mxu0 0.0
    %6182 = vmatpush1.msra.mxu0 0.0
    %6183 = vmatprep.subr.mxu0 0.0
    %6184 = vmatpush1.msra.mxu0 0.0
    %6185 = vmatprep.subr.mxu0 0.0
    %6186 = vmatpush1.msra.mxu0 0.0
    %6187 = vmatprep.subr.mxu0 0.0
    %6188 = vmatpush1.msra.mxu0 0.0
    %6189 = vmatprep.subr.mxu0 0.0
    %6190 = vmatpush1.msra.mxu0 0.0
    %6191 = vmatprep.subr.mxu0 0.0
    %6192 = vmatpush1.msra.mxu0 0.0
    %6193 = vmatprep.subr.mxu0 0.0
    %6194 = vmatpush1.msra.mxu0 0.0
    %6195 = vmatprep.subr.mxu0 0.0
    %6196 = vmatpush1.msra.mxu0 0.0
    %6197 = vmatprep.subr.mxu0 0.0
    %6198 = vmatpush1.msra.mxu0 0.0
    %6199 = vmatprep.subr.mxu0 0.0
    %6200 = vmatpush1.msra.mxu0 0.0
    %6201 = vmatprep.subr.mxu0 0.0
    %6202 = vmatpush1.msra.mxu0 0.0
    %6203 = vmatprep.subr.mxu0 0.0
    %6204 = vmatpush1.msra.mxu0 0.0
    %6205 = vmatprep.subr.mxu0 0.0
    %6206 = vmatpush1.msra.mxu0 0.0
    %6207 = vmatprep.subr.mxu0 0.0
    %6208 = vmatpush1.msra.mxu0 0.0
    %6209 = vmatprep.subr.mxu0 0.0
    %6210 = vmatpush1.msra.mxu0 0.0
    %6211 = vmatprep.mubr.f32.mxu0 0.0
    %v6212 = vand.u32 %v5991, 4294901760
    %v6213 = vsub.f32 %v5991, %v6212
    %6214 = vmatmul.mubr.f32.gmra.mrb[0].mxu0 %v6213
    %v6215 = vpop.f32.mrb[0].mxu0
    %v6216 = vadd.f32 %v6142, %v6215
    %v6217 = vpop.f32.mrb[0].mxu0
    %6218 = vdwg.mxu0
    %6219 = vmatprep.subr.mxu0 0.0
    %v6220 = vand.u32 %v5987, 4294901760
    %6221 = vmatpush1.msra.mxu0 %v6220
    %6222 = vmatprep.subr.mxu0 0.0
    %6223 = vmatpush1.msra.mxu0 0.0
    %6224 = vmatprep.subr.mxu0 0.0
    %6225 = vmatpush1.msra.mxu0 0.0
    %6226 = vmatprep.subr.mxu0 0.0
    %6227 = vmatpush1.msra.mxu0 0.0
    %6228 = vmatprep.subr.mxu0 0.0
    %6229 = vmatpush1.msra.mxu0 0.0
    %6230 = vmatprep.subr.mxu0 0.0
    %6231 = vmatpush1.msra.mxu0 0.0
    %6232 = vmatprep.subr.mxu0 0.0
    %6233 = vmatpush1.msra.mxu0 0.0
    %6234 = vmatprep.subr.mxu0 0.0
    %6235 = vmatpush1.msra.mxu0 0.0
    %6236 = vmatprep.subr.mxu0 0.0
    %6237 = vmatpush1.msra.mxu0 0.0
    %6238 = vmatprep.subr.mxu0 0.0
    %6239 = vmatpush1.msra.mxu0 0.0
    %6240 = vmatprep.subr.mxu0 0.0
    %6241 = vmatpush1.msra.mxu0 0.0
    %6242 = vmatprep.subr.mxu0 0.0
    %6243 = vmatpush1.msra.mxu0 0.0
    %6244 = vmatprep.subr.mxu0 0.0
    %6245 = vmatpush1.msra.mxu0 0.0
    %6246 = vmatprep.subr.mxu0 0.0
    %6247 = vmatpush1.msra.mxu0 0.0
    %6248 = vmatprep.subr.mxu0 0.0
    %6249 = vmatpush1.msra.mxu0 0.0
    %6250 = vmatprep.subr.mxu0 0.0
    %6251 = vmatpush1.msra.mxu0 0.0
    %6252 = vmatprep.subr.mxu0 0.0
    %6253 = vmatpush1.msra.mxu0 0.0
    %6254 = vmatprep.subr.mxu0 0.0
    %6255 = vmatpush1.msra.mxu0 0.0
    %6256 = vmatprep.subr.mxu0 0.0
    %6257 = vmatpush1.msra.mxu0 0.0
    %6258 = vmatprep.subr.mxu0 0.0
    %6259 = vmatpush1.msra.mxu0 0.0
    %6260 = vmatprep.subr.mxu0 0.0
    %6261 = vmatpush1.msra.mxu0 0.0
    %6262 = vmatprep.subr.mxu0 0.0
    %6263 = vmatpush1.msra.mxu0 0.0
    %6264 = vmatprep.subr.mxu0 0.0
    %6265 = vmatpush1.msra.mxu0 0.0
    %6266 = vmatprep.subr.mxu0 0.0
    %6267 = vmatpush1.msra.mxu0 0.0
    %6268 = vmatprep.subr.mxu0 0.0
    %6269 = vmatpush1.msra.mxu0 0.0
    %6270 = vmatprep.subr.mxu0 0.0
    %6271 = vmatpush1.msra.mxu0 0.0
    %6272 = vmatprep.subr.mxu0 0.0
    %6273 = vmatpush1.msra.mxu0 0.0
    %6274 = vmatprep.subr.mxu0 0.0
    %6275 = vmatpush1.msra.mxu0 0.0
    %6276 = vmatprep.subr.mxu0 0.0
    %6277 = vmatpush1.msra.mxu0 0.0
    %6278 = vmatprep.subr.mxu0 0.0
    %6279 = vmatpush1.msra.mxu0 0.0
    %6280 = vmatprep.subr.mxu0 0.0
    %6281 = vmatpush1.msra.mxu0 0.0
    %6282 = vmatprep.subr.mxu0 0.0
    %6283 = vmatpush1.msra.mxu0 0.0
    %6284 = vmatprep.mubr.f32.mxu0 0.0
    %v6285 = vand.u32 %v5991, 4294901760
    %v6286 = vsub.f32 %v5991, %v6285
    %v6287 = vand.u32 %v6286, 4294901760
    %6288 = vmatmul.mubr.f32.gmra.mrb[0].mxu0 %v6287
    %v6289 = vpop.f32.mrb[0].mxu0
    %v6290 = vadd.f32 %v6216, %v6289
    %v6291 = vpop.f32.mrb[0].mxu0
    %6292 = vdwg.mxu0
    %6293 = vmatprep.subr.mxu0 0.0
    %v6294 = vand.u32 %v5987, 4294901760
    %v6295 = vsub.f32 %v5987, %v6294
    %v6296 = vand.u32 %v6295, 4294901760
    %6297 = vmatpush1.msra.mxu0 %v6296
    %6298 = vmatprep.subr.mxu0 0.0
    %6299 = vmatpush1.msra.mxu0 0.0
    %6300 = vmatprep.subr.mxu0 0.0
    %6301 = vmatpush1.msra.mxu0 0.0
    %6302 = vmatprep.subr.mxu0 0.0
    %6303 = vmatpush1.msra.mxu0 0.0
    %6304 = vmatprep.subr.mxu0 0.0
    %6305 = vmatpush1.msra.mxu0 0.0
    %6306 = vmatprep.subr.mxu0 0.0
    %6307 = vmatpush1.msra.mxu0 0.0
    %6308 = vmatprep.subr.mxu0 0.0
    %6309 = vmatpush1.msra.mxu0 0.0
    %6310 = vmatprep.subr.mxu0 0.0
    %6311 = vmatpush1.msra.mxu0 0.0
    %6312 = vmatprep.subr.mxu0 0.0
    %6313 = vmatpush1.msra.mxu0 0.0
    %6314 = vmatprep.subr.mxu0 0.0
    %6315 = vmatpush1.msra.mxu0 0.0
    %6316 = vmatprep.subr.mxu0 0.0
    %6317 = vmatpush1.msra.mxu0 0.0
    %6318 = vmatprep.subr.mxu0 0.0
    %6319 = vmatpush1.msra.mxu0 0.0
    %6320 = vmatprep.subr.mxu0 0.0
    %6321 = vmatpush1.msra.mxu0 0.0
    %6322 = vmatprep.subr.mxu0 0.0
    %6323 = vmatpush1.msra.mxu0 0.0
    %6324 = vmatprep.subr.mxu0 0.0
    %6325 = vmatpush1.msra.mxu0 0.0
    %6326 = vmatprep.subr.mxu0 0.0
    %6327 = vmatpush1.msra.mxu0 0.0
    %6328 = vmatprep.subr.mxu0 0.0
    %6329 = vmatpush1.msra.mxu0 0.0
    %6330 = vmatprep.subr.mxu0 0.0
    %6331 = vmatpush1.msra.mxu0 0.0
    %6332 = vmatprep.subr.mxu0 0.0
    %6333 = vmatpush1.msra.mxu0 0.0
    %6334 = vmatprep.subr.mxu0 0.0
    %6335 = vmatpush1.msra.mxu0 0.0
    %6336 = vmatprep.subr.mxu0 0.0
    %6337 = vmatpush1.msra.mxu0 0.0
    %6338 = vmatprep.subr.mxu0 0.0
    %6339 = vmatpush1.msra.mxu0 0.0
    %6340 = vmatprep.subr.mxu0 0.0
    %6341 = vmatpush1.msra.mxu0 0.0
    %6342 = vmatprep.subr.mxu0 0.0
    %6343 = vmatpush1.msra.mxu0 0.0
    %6344 = vmatprep.subr.mxu0 0.0
    %6345 = vmatpush1.msra.mxu0 0.0
    %6346 = vmatprep.subr.mxu0 0.0
    %6347 = vmatpush1.msra.mxu0 0.0
    %6348 = vmatprep.subr.mxu0 0.0
    %6349 = vmatpush1.msra.mxu0 0.0
    %6350 = vmatprep.subr.mxu0 0.0
    %6351 = vmatpush1.msra.mxu0 0.0
    %6352 = vmatprep.subr.mxu0 0.0
    %6353 = vmatpush1.msra.mxu0 0.0
    %6354 = vmatprep.subr.mxu0 0.0
    %6355 = vmatpush1.msra.mxu0 0.0
    %6356 = vmatprep.subr.mxu0 0.0
    %6357 = vmatpush1.msra.mxu0 0.0
    %6358 = vmatprep.subr.mxu0 0.0
    %6359 = vmatpush1.msra.mxu0 0.0
    %6360 = vmatprep.mubr.f32.mxu0 0.0
    %v6361 = vand.u32 %v5991, 4294901760
    %6362 = vmatmul.mubr.f32.gmra.mrb[0].mxu0 %v6361
    %v6363 = vpop.f32.mrb[0].mxu0
    %v6364 = vadd.f32 %v6290, %v6363
    %v6365 = vpop.f32.mrb[0].mxu0
    %6366 = vdwg.mxu0
    %6367 = vmatprep.subr.mxu0 0.0
    %v6368 = vand.u32 %v5987, 4294901760
    %6369 = vmatpush1.msra.mxu0 %v6368
    %6370 = vmatprep.subr.mxu0 0.0
    %6371 = vmatpush1.msra.mxu0 0.0
    %6372 = vmatprep.subr.mxu0 0.0
    %6373 = vmatpush1.msra.mxu0 0.0
    %6374 = vmatprep.subr.mxu0 0.0
    %6375 = vmatpush1.msra.mxu0 0.0
    %6376 = vmatprep.subr.mxu0 0.0
    %6377 = vmatpush1.msra.mxu0 0.0
    %6378 = vmatprep.subr.mxu0 0.0
    %6379 = vmatpush1.msra.mxu0 0.0
    %6380 = vmatprep.subr.mxu0 0.0
    %6381 = vmatpush1.msra.mxu0 0.0
    %6382 = vmatprep.subr.mxu0 0.0
    %6383 = vmatpush1.msra.mxu0 0.0
    %6384 = vmatprep.subr.mxu0 0.0
    %6385 = vmatpush1.msra.mxu0 0.0
    %6386 = vmatprep.subr.mxu0 0.0
    %6387 = vmatpush1.msra.mxu0 0.0
    %6388 = vmatprep.subr.mxu0 0.0
    %6389 = vmatpush1.msra.mxu0 0.0
    %6390 = vmatprep.subr.mxu0 0.0
    %6391 = vmatpush1.msra.mxu0 0.0
    %6392 = vmatprep.subr.mxu0 0.0
    %6393 = vmatpush1.msra.mxu0 0.0
    %6394 = vmatprep.subr.mxu0 0.0
    %6395 = vmatpush1.msra.mxu0 0.0
    %6396 = vmatprep.subr.mxu0 0.0
    %6397 = vmatpush1.msra.mxu0 0.0
    %6398 = vmatprep.subr.mxu0 0.0
    %6399 = vmatpush1.msra.mxu0 0.0
    %6400 = vmatprep.subr.mxu0 0.0
    %6401 = vmatpush1.msra.mxu0 0.0
    %6402 = vmatprep.subr.mxu0 0.0
    %6403 = vmatpush1.msra.mxu0 0.0
    %6404 = vmatprep.subr.mxu0 0.0
    %6405 = vmatpush1.msra.mxu0 0.0
    %6406 = vmatprep.subr.mxu0 0.0
    %6407 = vmatpush1.msra.mxu0 0.0
    %6408 = vmatprep.subr.mxu0 0.0
    %6409 = vmatpush1.msra.mxu0 0.0
    %6410 = vmatprep.subr.mxu0 0.0
    %6411 = vmatpush1.msra.mxu0 0.0
    %6412 = vmatprep.subr.mxu0 0.0
    %6413 = vmatpush1.msra.mxu0 0.0
    %6414 = vmatprep.subr.mxu0 0.0
    %6415 = vmatpush1.msra.mxu0 0.0
    %6416 = vmatprep.subr.mxu0 0.0
    %6417 = vmatpush1.msra.mxu0 0.0
    %6418 = vmatprep.subr.mxu0 0.0
    %6419 = vmatpush1.msra.mxu0 0.0
    %6420 = vmatprep.subr.mxu0 0.0
    %6421 = vmatpush1.msra.mxu0 0.0
    %6422 = vmatprep.subr.mxu0 0.0
    %6423 = vmatpush1.msra.mxu0 0.0
    %6424 = vmatprep.subr.mxu0 0.0
    %6425 = vmatpush1.msra.mxu0 0.0
    %6426 = vmatprep.subr.mxu0 0.0
    %6427 = vmatpush1.msra.mxu0 0.0
    %6428 = vmatprep.subr.mxu0 0.0
    %6429 = vmatpush1.msra.mxu0 0.0
    %6430 = vmatprep.subr.mxu0 0.0
    %6431 = vmatpush1.msra.mxu0 0.0
    %6432 = vmatprep.mubr.f32.mxu0 0.0
    %v6433 = vand.u32 %v5991, 4294901760
    %6434 = vmatmul.mubr.f32.gmra.mrb[0].mxu0 %v6433
    %v6435 = vpop.f32.mrb[0].mxu0
    %v6436 = vadd.f32 %v6364, %v6435
    %v6437 = vpop.f32.mrb[0].mxu0
    %6438 = vdwg.mxu0
    %v6439 = vadd.f32 %v5981, %v6436
    %6440 = vrot.lane.b32.xlu0 %v32, 114
    %v6441 = vpop.permute.xlu0 %6440
    %6442 = vrot.lane.b32.xlu0 %v33, 114
    %v6443 = vpop.permute.xlu0 %6442
    %vm6444 = vcmp.lt.s32.totalorder %v40, 114
    %v6445 = vsel %vm6444, %v6441, %v6443
    %s6446 = scalar_lea.vmem %s2, 112
    %v6447 = vld [vmem:[%s6446] sm:$0xff]
    %v6449 = vsel %vm45, %v6447, 0
    %6451 = vmatprep.subr.mxu0 0.0
    %v6452 = vand.u32 %v6445, 4294901760
    %6453 = vmatpush1.msra.mxu0 %v6452
    %6454 = vmatprep.subr.mxu0 0.0
    %6455 = vmatpush1.msra.mxu0 0.0
    %6456 = vmatprep.subr.mxu0 0.0
    %6457 = vmatpush1.msra.mxu0 0.0
    %6458 = vmatprep.subr.mxu0 0.0
    %6459 = vmatpush1.msra.mxu0 0.0
    %6460 = vmatprep.subr.mxu0 0.0
    %6461 = vmatpush1.msra.mxu0 0.0
    %6462 = vmatprep.subr.mxu0 0.0
    %6463 = vmatpush1.msra.mxu0 0.0
    %6464 = vmatprep.subr.mxu0 0.0
    %6465 = vmatpush1.msra.mxu0 0.0
    %6466 = vmatprep.subr.mxu0 0.0
    %6467 = vmatpush1.msra.mxu0 0.0
    %6468 = vmatprep.subr.mxu0 0.0
    %6469 = vmatpush1.msra.mxu0 0.0
    %6470 = vmatprep.subr.mxu0 0.0
    %6471 = vmatpush1.msra.mxu0 0.0
    %6472 = vmatprep.subr.mxu0 0.0
    %6473 = vmatpush1.msra.mxu0 0.0
    %6474 = vmatprep.subr.mxu0 0.0
    %6475 = vmatpush1.msra.mxu0 0.0
    %6476 = vmatprep.subr.mxu0 0.0
    %6477 = vmatpush1.msra.mxu0 0.0
    %6478 = vmatprep.subr.mxu0 0.0
    %6479 = vmatpush1.msra.mxu0 0.0
    %6480 = vmatprep.subr.mxu0 0.0
    %6481 = vmatpush1.msra.mxu0 0.0
    %6482 = vmatprep.subr.mxu0 0.0
    %6483 = vmatpush1.msra.mxu0 0.0
    %6484 = vmatprep.subr.mxu0 0.0
    %6485 = vmatpush1.msra.mxu0 0.0
    %6486 = vmatprep.subr.mxu0 0.0
    %6487 = vmatpush1.msra.mxu0 0.0
    %6488 = vmatprep.subr.mxu0 0.0
    %6489 = vmatpush1.msra.mxu0 0.0
    %6490 = vmatprep.subr.mxu0 0.0
    %6491 = vmatpush1.msra.mxu0 0.0
    %6492 = vmatprep.subr.mxu0 0.0
    %6493 = vmatpush1.msra.mxu0 0.0
    %6494 = vmatprep.subr.mxu0 0.0
    %6495 = vmatpush1.msra.mxu0 0.0
    %6496 = vmatprep.subr.mxu0 0.0
    %6497 = vmatpush1.msra.mxu0 0.0
    %6498 = vmatprep.subr.mxu0 0.0
    %6499 = vmatpush1.msra.mxu0 0.0
    %6500 = vmatprep.subr.mxu0 0.0
    %6501 = vmatpush1.msra.mxu0 0.0
    %6502 = vmatprep.subr.mxu0 0.0
    %6503 = vmatpush1.msra.mxu0 0.0
    %6504 = vmatprep.subr.mxu0 0.0
    %6505 = vmatpush1.msra.mxu0 0.0
    %6506 = vmatprep.subr.mxu0 0.0
    %6507 = vmatpush1.msra.mxu0 0.0
    %6508 = vmatprep.subr.mxu0 0.0
    %6509 = vmatpush1.msra.mxu0 0.0
    %6510 = vmatprep.subr.mxu0 0.0
    %6511 = vmatpush1.msra.mxu0 0.0
    %6512 = vmatprep.subr.mxu0 0.0
    %6513 = vmatpush1.msra.mxu0 0.0
    %6514 = vmatprep.subr.mxu0 0.0
    %6515 = vmatpush1.msra.mxu0 0.0
    %6516 = vmatprep.mubr.f32.mxu0 0.0
    %v6517 = vand.u32 %v6449, 4294901760
    %v6518 = vsub.f32 %v6449, %v6517
    %v6519 = vand.u32 %v6518, 4294901760
    %v6520 = vsub.f32 %v6518, %v6519
    %v6521 = vand.u32 %v6520, 4294901760
    %6522 = vmatmul.mubr.f32.gmra.mrb[0].mxu0 %v6521
    %v6523 = vpop.f32.mrb[0].mxu0
    %v6524 = vadd.f32 0.0, %v6523
    %v6525 = vpop.f32.mrb[0].mxu0
    %6526 = vdwg.mxu0
    %6527 = vmatprep.subr.mxu0 0.0
    %v6528 = vand.u32 %v6445, 4294901760
    %v6529 = vsub.f32 %v6445, %v6528
    %v6530 = vand.u32 %v6529, 4294901760
    %v6531 = vsub.f32 %v6529, %v6530
    %v6532 = vand.u32 %v6531, 4294901760
    %6533 = vmatpush1.msra.mxu0 %v6532
    %6534 = vmatprep.subr.mxu0 0.0
    %6535 = vmatpush1.msra.mxu0 0.0
    %6536 = vmatprep.subr.mxu0 0.0
    %6537 = vmatpush1.msra.mxu0 0.0
    %6538 = vmatprep.subr.mxu0 0.0
    %6539 = vmatpush1.msra.mxu0 0.0
    %6540 = vmatprep.subr.mxu0 0.0
    %6541 = vmatpush1.msra.mxu0 0.0
    %6542 = vmatprep.subr.mxu0 0.0
    %6543 = vmatpush1.msra.mxu0 0.0
    %6544 = vmatprep.subr.mxu0 0.0
    %6545 = vmatpush1.msra.mxu0 0.0
    %6546 = vmatprep.subr.mxu0 0.0
    %6547 = vmatpush1.msra.mxu0 0.0
    %6548 = vmatprep.subr.mxu0 0.0
    %6549 = vmatpush1.msra.mxu0 0.0
    %6550 = vmatprep.subr.mxu0 0.0
    %6551 = vmatpush1.msra.mxu0 0.0
    %6552 = vmatprep.subr.mxu0 0.0
    %6553 = vmatpush1.msra.mxu0 0.0
    %6554 = vmatprep.subr.mxu0 0.0
    %6555 = vmatpush1.msra.mxu0 0.0
    %6556 = vmatprep.subr.mxu0 0.0
    %6557 = vmatpush1.msra.mxu0 0.0
    %6558 = vmatprep.subr.mxu0 0.0
    %6559 = vmatpush1.msra.mxu0 0.0
    %6560 = vmatprep.subr.mxu0 0.0
    %6561 = vmatpush1.msra.mxu0 0.0
    %6562 = vmatprep.subr.mxu0 0.0
    %6563 = vmatpush1.msra.mxu0 0.0
    %6564 = vmatprep.subr.mxu0 0.0
    %6565 = vmatpush1.msra.mxu0 0.0
    %6566 = vmatprep.subr.mxu0 0.0
    %6567 = vmatpush1.msra.mxu0 0.0
    %6568 = vmatprep.subr.mxu0 0.0
    %6569 = vmatpush1.msra.mxu0 0.0
    %6570 = vmatprep.subr.mxu0 0.0
    %6571 = vmatpush1.msra.mxu0 0.0
    %6572 = vmatprep.subr.mxu0 0.0
    %6573 = vmatpush1.msra.mxu0 0.0
    %6574 = vmatprep.subr.mxu0 0.0
    %6575 = vmatpush1.msra.mxu0 0.0
    %6576 = vmatprep.subr.mxu0 0.0
    %6577 = vmatpush1.msra.mxu0 0.0
    %6578 = vmatprep.subr.mxu0 0.0
    %6579 = vmatpush1.msra.mxu0 0.0
    %6580 = vmatprep.subr.mxu0 0.0
    %6581 = vmatpush1.msra.mxu0 0.0
    %6582 = vmatprep.subr.mxu0 0.0
    %6583 = vmatpush1.msra.mxu0 0.0
    %6584 = vmatprep.subr.mxu0 0.0
    %6585 = vmatpush1.msra.mxu0 0.0
    %6586 = vmatprep.subr.mxu0 0.0
    %6587 = vmatpush1.msra.mxu0 0.0
    %6588 = vmatprep.subr.mxu0 0.0
    %6589 = vmatpush1.msra.mxu0 0.0
    %6590 = vmatprep.subr.mxu0 0.0
    %6591 = vmatpush1.msra.mxu0 0.0
    %6592 = vmatprep.subr.mxu0 0.0
    %6593 = vmatpush1.msra.mxu0 0.0
    %6594 = vmatprep.subr.mxu0 0.0
    %6595 = vmatpush1.msra.mxu0 0.0
    %6596 = vmatprep.mubr.f32.mxu0 0.0
    %v6597 = vand.u32 %v6449, 4294901760
    %6598 = vmatmul.mubr.f32.gmra.mrb[0].mxu0 %v6597
    %v6599 = vpop.f32.mrb[0].mxu0
    %v6600 = vadd.f32 %v6524, %v6599
    %v6601 = vpop.f32.mrb[0].mxu0
    %6602 = vdwg.mxu0
    %6603 = vmatprep.subr.mxu0 0.0
    %v6604 = vand.u32 %v6445, 4294901760
    %v6605 = vsub.f32 %v6445, %v6604
    %6606 = vmatpush1.msra.mxu0 %v6605
    %6607 = vmatprep.subr.mxu0 0.0
    %6608 = vmatpush1.msra.mxu0 0.0
    %6609 = vmatprep.subr.mxu0 0.0
    %6610 = vmatpush1.msra.mxu0 0.0
    %6611 = vmatprep.subr.mxu0 0.0
    %6612 = vmatpush1.msra.mxu0 0.0
    %6613 = vmatprep.subr.mxu0 0.0
    %6614 = vmatpush1.msra.mxu0 0.0
    %6615 = vmatprep.subr.mxu0 0.0
    %6616 = vmatpush1.msra.mxu0 0.0
    %6617 = vmatprep.subr.mxu0 0.0
    %6618 = vmatpush1.msra.mxu0 0.0
    %6619 = vmatprep.subr.mxu0 0.0
    %6620 = vmatpush1.msra.mxu0 0.0
    %6621 = vmatprep.subr.mxu0 0.0
    %6622 = vmatpush1.msra.mxu0 0.0
    %6623 = vmatprep.subr.mxu0 0.0
    %6624 = vmatpush1.msra.mxu0 0.0
    %6625 = vmatprep.subr.mxu0 0.0
    %6626 = vmatpush1.msra.mxu0 0.0
    %6627 = vmatprep.subr.mxu0 0.0
    %6628 = vmatpush1.msra.mxu0 0.0
    %6629 = vmatprep.subr.mxu0 0.0
    %6630 = vmatpush1.msra.mxu0 0.0
    %6631 = vmatprep.subr.mxu0 0.0
    %6632 = vmatpush1.msra.mxu0 0.0
    %6633 = vmatprep.subr.mxu0 0.0
    %6634 = vmatpush1.msra.mxu0 0.0
    %6635 = vmatprep.subr.mxu0 0.0
    %6636 = vmatpush1.msra.mxu0 0.0
    %6637 = vmatprep.subr.mxu0 0.0
    %6638 = vmatpush1.msra.mxu0 0.0
    %6639 = vmatprep.subr.mxu0 0.0
    %6640 = vmatpush1.msra.mxu0 0.0
    %6641 = vmatprep.subr.mxu0 0.0
    %6642 = vmatpush1.msra.mxu0 0.0
    %6643 = vmatprep.subr.mxu0 0.0
    %6644 = vmatpush1.msra.mxu0 0.0
    %6645 = vmatprep.subr.mxu0 0.0
    %6646 = vmatpush1.msra.mxu0 0.0
    %6647 = vmatprep.subr.mxu0 0.0
    %6648 = vmatpush1.msra.mxu0 0.0
    %6649 = vmatprep.subr.mxu0 0.0
    %6650 = vmatpush1.msra.mxu0 0.0
    %6651 = vmatprep.subr.mxu0 0.0
    %6652 = vmatpush1.msra.mxu0 0.0
    %6653 = vmatprep.subr.mxu0 0.0
    %6654 = vmatpush1.msra.mxu0 0.0
    %6655 = vmatprep.subr.mxu0 0.0
    %6656 = vmatpush1.msra.mxu0 0.0
    %6657 = vmatprep.subr.mxu0 0.0
    %6658 = vmatpush1.msra.mxu0 0.0
    %6659 = vmatprep.subr.mxu0 0.0
    %6660 = vmatpush1.msra.mxu0 0.0
    %6661 = vmatprep.subr.mxu0 0.0
    %6662 = vmatpush1.msra.mxu0 0.0
    %6663 = vmatprep.subr.mxu0 0.0
    %6664 = vmatpush1.msra.mxu0 0.0
    %6665 = vmatprep.subr.mxu0 0.0
    %6666 = vmatpush1.msra.mxu0 0.0
    %6667 = vmatprep.subr.mxu0 0.0
    %6668 = vmatpush1.msra.mxu0 0.0
    %6669 = vmatprep.mubr.f32.mxu0 0.0
    %v6670 = vand.u32 %v6449, 4294901760
    %v6671 = vsub.f32 %v6449, %v6670
    %6672 = vmatmul.mubr.f32.gmra.mrb[0].mxu0 %v6671
    %v6673 = vpop.f32.mrb[0].mxu0
    %v6674 = vadd.f32 %v6600, %v6673
    %v6675 = vpop.f32.mrb[0].mxu0
    %6676 = vdwg.mxu0
    %6677 = vmatprep.subr.mxu0 0.0
    %v6678 = vand.u32 %v6445, 4294901760
    %6679 = vmatpush1.msra.mxu0 %v6678
    %6680 = vmatprep.subr.mxu0 0.0
    %6681 = vmatpush1.msra.mxu0 0.0
    %6682 = vmatprep.subr.mxu0 0.0
    %6683 = vmatpush1.msra.mxu0 0.0
    %6684 = vmatprep.subr.mxu0 0.0
    %6685 = vmatpush1.msra.mxu0 0.0
    %6686 = vmatprep.subr.mxu0 0.0
    %6687 = vmatpush1.msra.mxu0 0.0
    %6688 = vmatprep.subr.mxu0 0.0
    %6689 = vmatpush1.msra.mxu0 0.0
    %6690 = vmatprep.subr.mxu0 0.0
    %6691 = vmatpush1.msra.mxu0 0.0
    %6692 = vmatprep.subr.mxu0 0.0
    %6693 = vmatpush1.msra.mxu0 0.0
    %6694 = vmatprep.subr.mxu0 0.0
    %6695 = vmatpush1.msra.mxu0 0.0
    %6696 = vmatprep.subr.mxu0 0.0
    %6697 = vmatpush1.msra.mxu0 0.0
    %6698 = vmatprep.subr.mxu0 0.0
    %6699 = vmatpush1.msra.mxu0 0.0
    %6700 = vmatprep.subr.mxu0 0.0
    %6701 = vmatpush1.msra.mxu0 0.0
    %6702 = vmatprep.subr.mxu0 0.0
    %6703 = vmatpush1.msra.mxu0 0.0
    %6704 = vmatprep.subr.mxu0 0.0
    %6705 = vmatpush1.msra.mxu0 0.0
    %6706 = vmatprep.subr.mxu0 0.0
    %6707 = vmatpush1.msra.mxu0 0.0
    %6708 = vmatprep.subr.mxu0 0.0
    %6709 = vmatpush1.msra.mxu0 0.0
    %6710 = vmatprep.subr.mxu0 0.0
    %6711 = vmatpush1.msra.mxu0 0.0
    %6712 = vmatprep.subr.mxu0 0.0
    %6713 = vmatpush1.msra.mxu0 0.0
    %6714 = vmatprep.subr.mxu0 0.0
    %6715 = vmatpush1.msra.mxu0 0.0
    %6716 = vmatprep.subr.mxu0 0.0
    %6717 = vmatpush1.msra.mxu0 0.0
    %6718 = vmatprep.subr.mxu0 0.0
    %6719 = vmatpush1.msra.mxu0 0.0
    %6720 = vmatprep.subr.mxu0 0.0
    %6721 = vmatpush1.msra.mxu0 0.0
    %6722 = vmatprep.subr.mxu0 0.0
    %6723 = vmatpush1.msra.mxu0 0.0
    %6724 = vmatprep.subr.mxu0 0.0
    %6725 = vmatpush1.msra.mxu0 0.0
    %6726 = vmatprep.subr.mxu0 0.0
    %6727 = vmatpush1.msra.mxu0 0.0
    %6728 = vmatprep.subr.mxu0 0.0
    %6729 = vmatpush1.msra.mxu0 0.0
    %6730 = vmatprep.subr.mxu0 0.0
    %6731 = vmatpush1.msra.mxu0 0.0
    %6732 = vmatprep.subr.mxu0 0.0
    %6733 = vmatpush1.msra.mxu0 0.0
    %6734 = vmatprep.subr.mxu0 0.0
    %6735 = vmatpush1.msra.mxu0 0.0
    %6736 = vmatprep.subr.mxu0 0.0
    %6737 = vmatpush1.msra.mxu0 0.0
    %6738 = vmatprep.subr.mxu0 0.0
    %6739 = vmatpush1.msra.mxu0 0.0
    %6740 = vmatprep.subr.mxu0 0.0
    %6741 = vmatpush1.msra.mxu0 0.0
    %6742 = vmatprep.mubr.f32.mxu0 0.0
    %v6743 = vand.u32 %v6449, 4294901760
    %v6744 = vsub.f32 %v6449, %v6743
    %v6745 = vand.u32 %v6744, 4294901760
    %6746 = vmatmul.mubr.f32.gmra.mrb[0].mxu0 %v6745
    %v6747 = vpop.f32.mrb[0].mxu0
    %v6748 = vadd.f32 %v6674, %v6747
    %v6749 = vpop.f32.mrb[0].mxu0
    %6750 = vdwg.mxu0
    %6751 = vmatprep.subr.mxu0 0.0
    %v6752 = vand.u32 %v6445, 4294901760
    %v6753 = vsub.f32 %v6445, %v6752
    %v6754 = vand.u32 %v6753, 4294901760
    %6755 = vmatpush1.msra.mxu0 %v6754
    %6756 = vmatprep.subr.mxu0 0.0
    %6757 = vmatpush1.msra.mxu0 0.0
    %6758 = vmatprep.subr.mxu0 0.0
    %6759 = vmatpush1.msra.mxu0 0.0
    %6760 = vmatprep.subr.mxu0 0.0
    %6761 = vmatpush1.msra.mxu0 0.0
    %6762 = vmatprep.subr.mxu0 0.0
    %6763 = vmatpush1.msra.mxu0 0.0
    %6764 = vmatprep.subr.mxu0 0.0
    %6765 = vmatpush1.msra.mxu0 0.0
    %6766 = vmatprep.subr.mxu0 0.0
    %6767 = vmatpush1.msra.mxu0 0.0
    %6768 = vmatprep.subr.mxu0 0.0
    %6769 = vmatpush1.msra.mxu0 0.0
    %6770 = vmatprep.subr.mxu0 0.0
    %6771 = vmatpush1.msra.mxu0 0.0
    %6772 = vmatprep.subr.mxu0 0.0
    %6773 = vmatpush1.msra.mxu0 0.0
    %6774 = vmatprep.subr.mxu0 0.0
    %6775 = vmatpush1.msra.mxu0 0.0
    %6776 = vmatprep.subr.mxu0 0.0
    %6777 = vmatpush1.msra.mxu0 0.0
    %6778 = vmatprep.subr.mxu0 0.0
    %6779 = vmatpush1.msra.mxu0 0.0
    %6780 = vmatprep.subr.mxu0 0.0
    %6781 = vmatpush1.msra.mxu0 0.0
    %6782 = vmatprep.subr.mxu0 0.0
    %6783 = vmatpush1.msra.mxu0 0.0
    %6784 = vmatprep.subr.mxu0 0.0
    %6785 = vmatpush1.msra.mxu0 0.0
    %6786 = vmatprep.subr.mxu0 0.0
    %6787 = vmatpush1.msra.mxu0 0.0
    %6788 = vmatprep.subr.mxu0 0.0
    %6789 = vmatpush1.msra.mxu0 0.0
    %6790 = vmatprep.subr.mxu0 0.0
    %6791 = vmatpush1.msra.mxu0 0.0
    %6792 = vmatprep.subr.mxu0 0.0
    %6793 = vmatpush1.msra.mxu0 0.0
    %6794 = vmatprep.subr.mxu0 0.0
    %6795 = vmatpush1.msra.mxu0 0.0
    %6796 = vmatprep.subr.mxu0 0.0
    %6797 = vmatpush1.msra.mxu0 0.0
    %6798 = vmatprep.subr.mxu0 0.0
    %6799 = vmatpush1.msra.mxu0 0.0
    %6800 = vmatprep.subr.mxu0 0.0
    %6801 = vmatpush1.msra.mxu0 0.0
    %6802 = vmatprep.subr.mxu0 0.0
    %6803 = vmatpush1.msra.mxu0 0.0
    %6804 = vmatprep.subr.mxu0 0.0
    %6805 = vmatpush1.msra.mxu0 0.0
    %6806 = vmatprep.subr.mxu0 0.0
    %6807 = vmatpush1.msra.mxu0 0.0
    %6808 = vmatprep.subr.mxu0 0.0
    %6809 = vmatpush1.msra.mxu0 0.0
    %6810 = vmatprep.subr.mxu0 0.0
    %6811 = vmatpush1.msra.mxu0 0.0
    %6812 = vmatprep.subr.mxu0 0.0
    %6813 = vmatpush1.msra.mxu0 0.0
    %6814 = vmatprep.subr.mxu0 0.0
    %6815 = vmatpush1.msra.mxu0 0.0
    %6816 = vmatprep.subr.mxu0 0.0
    %6817 = vmatpush1.msra.mxu0 0.0
    %6818 = vmatprep.mubr.f32.mxu0 0.0
    %v6819 = vand.u32 %v6449, 4294901760
    %6820 = vmatmul.mubr.f32.gmra.mrb[0].mxu0 %v6819
    %v6821 = vpop.f32.mrb[0].mxu0
    %v6822 = vadd.f32 %v6748, %v6821
    %v6823 = vpop.f32.mrb[0].mxu0
    %6824 = vdwg.mxu0
    %6825 = vmatprep.subr.mxu0 0.0
    %v6826 = vand.u32 %v6445, 4294901760
    %6827 = vmatpush1.msra.mxu0 %v6826
    %6828 = vmatprep.subr.mxu0 0.0
    %6829 = vmatpush1.msra.mxu0 0.0
    %6830 = vmatprep.subr.mxu0 0.0
    %6831 = vmatpush1.msra.mxu0 0.0
    %6832 = vmatprep.subr.mxu0 0.0
    %6833 = vmatpush1.msra.mxu0 0.0
    %6834 = vmatprep.subr.mxu0 0.0
    %6835 = vmatpush1.msra.mxu0 0.0
    %6836 = vmatprep.subr.mxu0 0.0
    %6837 = vmatpush1.msra.mxu0 0.0
    %6838 = vmatprep.subr.mxu0 0.0
    %6839 = vmatpush1.msra.mxu0 0.0
    %6840 = vmatprep.subr.mxu0 0.0
    %6841 = vmatpush1.msra.mxu0 0.0
    %6842 = vmatprep.subr.mxu0 0.0
    %6843 = vmatpush1.msra.mxu0 0.0
    %6844 = vmatprep.subr.mxu0 0.0
    %6845 = vmatpush1.msra.mxu0 0.0
    %6846 = vmatprep.subr.mxu0 0.0
    %6847 = vmatpush1.msra.mxu0 0.0
    %6848 = vmatprep.subr.mxu0 0.0
    %6849 = vmatpush1.msra.mxu0 0.0
    %6850 = vmatprep.subr.mxu0 0.0
    %6851 = vmatpush1.msra.mxu0 0.0
    %6852 = vmatprep.subr.mxu0 0.0
    %6853 = vmatpush1.msra.mxu0 0.0
    %6854 = vmatprep.subr.mxu0 0.0
    %6855 = vmatpush1.msra.mxu0 0.0
    %6856 = vmatprep.subr.mxu0 0.0
    %6857 = vmatpush1.msra.mxu0 0.0
    %6858 = vmatprep.subr.mxu0 0.0
    %6859 = vmatpush1.msra.mxu0 0.0
    %6860 = vmatprep.subr.mxu0 0.0
    %6861 = vmatpush1.msra.mxu0 0.0
    %6862 = vmatprep.subr.mxu0 0.0
    %6863 = vmatpush1.msra.mxu0 0.0
    %6864 = vmatprep.subr.mxu0 0.0
    %6865 = vmatpush1.msra.mxu0 0.0
    %6866 = vmatprep.subr.mxu0 0.0
    %6867 = vmatpush1.msra.mxu0 0.0
    %6868 = vmatprep.subr.mxu0 0.0
    %6869 = vmatpush1.msra.mxu0 0.0
    %6870 = vmatprep.subr.mxu0 0.0
    %6871 = vmatpush1.msra.mxu0 0.0
    %6872 = vmatprep.subr.mxu0 0.0
    %6873 = vmatpush1.msra.mxu0 0.0
    %6874 = vmatprep.subr.mxu0 0.0
    %6875 = vmatpush1.msra.mxu0 0.0
    %6876 = vmatprep.subr.mxu0 0.0
    %6877 = vmatpush1.msra.mxu0 0.0
    %6878 = vmatprep.subr.mxu0 0.0
    %6879 = vmatpush1.msra.mxu0 0.0
    %6880 = vmatprep.subr.mxu0 0.0
    %6881 = vmatpush1.msra.mxu0 0.0
    %6882 = vmatprep.subr.mxu0 0.0
    %6883 = vmatpush1.msra.mxu0 0.0
    %6884 = vmatprep.subr.mxu0 0.0
    %6885 = vmatpush1.msra.mxu0 0.0
    %6886 = vmatprep.subr.mxu0 0.0
    %6887 = vmatpush1.msra.mxu0 0.0
    %6888 = vmatprep.subr.mxu0 0.0
    %6889 = vmatpush1.msra.mxu0 0.0
    %6890 = vmatprep.mubr.f32.mxu0 0.0
    %v6891 = vand.u32 %v6449, 4294901760
    %6892 = vmatmul.mubr.f32.gmra.mrb[0].mxu0 %v6891
    %v6893 = vpop.f32.mrb[0].mxu0
    %v6894 = vadd.f32 %v6822, %v6893
    %v6895 = vpop.f32.mrb[0].mxu0
    %6896 = vdwg.mxu0
    %v6897 = vadd.f32 %v6439, %v6894
    %6898 = vrot.lane.b32.xlu0 %v32, 113
    %v6899 = vpop.permute.xlu0 %6898
    %6900 = vrot.lane.b32.xlu0 %v33, 113
    %v6901 = vpop.permute.xlu0 %6900
    %vm6902 = vcmp.lt.s32.totalorder %v40, 113
    %v6903 = vsel %vm6902, %v6899, %v6901
    %s6904 = scalar_lea.vmem %s2, 120
    %v6905 = vld [vmem:[%s6904] sm:$0xff]
    %v6907 = vsel %vm45, %v6905, 0
    %6909 = vmatprep.subr.mxu0 0.0
    %v6910 = vand.u32 %v6903, 4294901760
    %6911 = vmatpush1.msra.mxu0 %v6910
    %6912 = vmatprep.subr.mxu0 0.0
    %6913 = vmatpush1.msra.mxu0 0.0
    %6914 = vmatprep.subr.mxu0 0.0
    %6915 = vmatpush1.msra.mxu0 0.0
    %6916 = vmatprep.subr.mxu0 0.0
    %6917 = vmatpush1.msra.mxu0 0.0
    %6918 = vmatprep.subr.mxu0 0.0
    %6919 = vmatpush1.msra.mxu0 0.0
    %6920 = vmatprep.subr.mxu0 0.0
    %6921 = vmatpush1.msra.mxu0 0.0
    %6922 = vmatprep.subr.mxu0 0.0
    %6923 = vmatpush1.msra.mxu0 0.0
    %6924 = vmatprep.subr.mxu0 0.0
    %6925 = vmatpush1.msra.mxu0 0.0
    %6926 = vmatprep.subr.mxu0 0.0
    %6927 = vmatpush1.msra.mxu0 0.0
    %6928 = vmatprep.subr.mxu0 0.0
    %6929 = vmatpush1.msra.mxu0 0.0
    %6930 = vmatprep.subr.mxu0 0.0
    %6931 = vmatpush1.msra.mxu0 0.0
    %6932 = vmatprep.subr.mxu0 0.0
    %6933 = vmatpush1.msra.mxu0 0.0
    %6934 = vmatprep.subr.mxu0 0.0
    %6935 = vmatpush1.msra.mxu0 0.0
    %6936 = vmatprep.subr.mxu0 0.0
    %6937 = vmatpush1.msra.mxu0 0.0
    %6938 = vmatprep.subr.mxu0 0.0
    %6939 = vmatpush1.msra.mxu0 0.0
    %6940 = vmatprep.subr.mxu0 0.0
    %6941 = vmatpush1.msra.mxu0 0.0
    %6942 = vmatprep.subr.mxu0 0.0
    %6943 = vmatpush1.msra.mxu0 0.0
    %6944 = vmatprep.subr.mxu0 0.0
    %6945 = vmatpush1.msra.mxu0 0.0
    %6946 = vmatprep.subr.mxu0 0.0
    %6947 = vmatpush1.msra.mxu0 0.0
    %6948 = vmatprep.subr.mxu0 0.0
    %6949 = vmatpush1.msra.mxu0 0.0
    %6950 = vmatprep.subr.mxu0 0.0
    %6951 = vmatpush1.msra.mxu0 0.0
    %6952 = vmatprep.subr.mxu0 0.0
    %6953 = vmatpush1.msra.mxu0 0.0
    %6954 = vmatprep.subr.mxu0 0.0
    %6955 = vmatpush1.msra.mxu0 0.0
    %6956 = vmatprep.subr.mxu0 0.0
    %6957 = vmatpush1.msra.mxu0 0.0
    %6958 = vmatprep.subr.mxu0 0.0
    %6959 = vmatpush1.msra.mxu0 0.0
    %6960 = vmatprep.subr.mxu0 0.0
    %6961 = vmatpush1.msra.mxu0 0.0
    %6962 = vmatprep.subr.mxu0 0.0
    %6963 = vmatpush1.msra.mxu0 0.0
    %6964 = vmatprep.subr.mxu0 0.0
    %6965 = vmatpush1.msra.mxu0 0.0
    %6966 = vmatprep.subr.mxu0 0.0
    %6967 = vmatpush1.msra.mxu0 0.0
    %6968 = vmatprep.subr.mxu0 0.0
    %6969 = vmatpush1.msra.mxu0 0.0
    %6970 = vmatprep.subr.mxu0 0.0
    %6971 = vmatpush1.msra.mxu0 0.0
    %6972 = vmatprep.subr.mxu0 0.0
    %6973 = vmatpush1.msra.mxu0 0.0
    %6974 = vmatprep.mubr.f32.mxu0 0.0
    %v6975 = vand.u32 %v6907, 4294901760
    %v6976 = vsub.f32 %v6907, %v6975
    %v6977 = vand.u32 %v6976, 4294901760
    %v6978 = vsub.f32 %v6976, %v6977
    %v6979 = vand.u32 %v6978, 4294901760
    %6980 = vmatmul.mubr.f32.gmra.mrb[0].mxu0 %v6979
    %v6981 = vpop.f32.mrb[0].mxu0
    %v6982 = vadd.f32 0.0, %v6981
    %v6983 = vpop.f32.mrb[0].mxu0
    %6984 = vdwg.mxu0
    %6985 = vmatprep.subr.mxu0 0.0
    %v6986 = vand.u32 %v6903, 4294901760
    %v6987 = vsub.f32 %v6903, %v6986
    %v6988 = vand.u32 %v6987, 4294901760
    %v6989 = vsub.f32 %v6987, %v6988
    %v6990 = vand.u32 %v6989, 4294901760
    %6991 = vmatpush1.msra.mxu0 %v6990
    %6992 = vmatprep.subr.mxu0 0.0
    %6993 = vmatpush1.msra.mxu0 0.0
    %6994 = vmatprep.subr.mxu0 0.0
    %6995 = vmatpush1.msra.mxu0 0.0
    %6996 = vmatprep.subr.mxu0 0.0
    %6997 = vmatpush1.msra.mxu0 0.0
    %6998 = vmatprep.subr.mxu0 0.0
    %6999 = vmatpush1.msra.mxu0 0.0
    %7000 = vmatprep.subr.mxu0 0.0
    %7001 = vmatpush1.msra.mxu0 0.0
    %7002 = vmatprep.subr.mxu0 0.0
    %7003 = vmatpush1.msra.mxu0 0.0
    %7004 = vmatprep.subr.mxu0 0.0
    %7005 = vmatpush1.msra.mxu0 0.0
    %7006 = vmatprep.subr.mxu0 0.0
    %7007 = vmatpush1.msra.mxu0 0.0
    %7008 = vmatprep.subr.mxu0 0.0
    %7009 = vmatpush1.msra.mxu0 0.0
    %7010 = vmatprep.subr.mxu0 0.0
    %7011 = vmatpush1.msra.mxu0 0.0
    %7012 = vmatprep.subr.mxu0 0.0
    %7013 = vmatpush1.msra.mxu0 0.0
    %7014 = vmatprep.subr.mxu0 0.0
    %7015 = vmatpush1.msra.mxu0 0.0
    %7016 = vmatprep.subr.mxu0 0.0
    %7017 = vmatpush1.msra.mxu0 0.0
    %7018 = vmatprep.subr.mxu0 0.0
    %7019 = vmatpush1.msra.mxu0 0.0
    %7020 = vmatprep.subr.mxu0 0.0
    %7021 = vmatpush1.msra.mxu0 0.0
    %7022 = vmatprep.subr.mxu0 0.0
    %7023 = vmatpush1.msra.mxu0 0.0
    %7024 = vmatprep.subr.mxu0 0.0
    %7025 = vmatpush1.msra.mxu0 0.0
    %7026 = vmatprep.subr.mxu0 0.0
    %7027 = vmatpush1.msra.mxu0 0.0
    %7028 = vmatprep.subr.mxu0 0.0
    %7029 = vmatpush1.msra.mxu0 0.0
    %7030 = vmatprep.subr.mxu0 0.0
    %7031 = vmatpush1.msra.mxu0 0.0
    %7032 = vmatprep.subr.mxu0 0.0
    %7033 = vmatpush1.msra.mxu0 0.0
    %7034 = vmatprep.subr.mxu0 0.0
    %7035 = vmatpush1.msra.mxu0 0.0
    %7036 = vmatprep.subr.mxu0 0.0
    %7037 = vmatpush1.msra.mxu0 0.0
    %7038 = vmatprep.subr.mxu0 0.0
    %7039 = vmatpush1.msra.mxu0 0.0
    %7040 = vmatprep.subr.mxu0 0.0
    %7041 = vmatpush1.msra.mxu0 0.0
    %7042 = vmatprep.subr.mxu0 0.0
    %7043 = vmatpush1.msra.mxu0 0.0
    %7044 = vmatprep.subr.mxu0 0.0
    %7045 = vmatpush1.msra.mxu0 0.0
    %7046 = vmatprep.subr.mxu0 0.0
    %7047 = vmatpush1.msra.mxu0 0.0
    %7048 = vmatprep.subr.mxu0 0.0
    %7049 = vmatpush1.msra.mxu0 0.0
    %7050 = vmatprep.subr.mxu0 0.0
    %7051 = vmatpush1.msra.mxu0 0.0
    %7052 = vmatprep.subr.mxu0 0.0
    %7053 = vmatpush1.msra.mxu0 0.0
    %7054 = vmatprep.mubr.f32.mxu0 0.0
    %v7055 = vand.u32 %v6907, 4294901760
    %7056 = vmatmul.mubr.f32.gmra.mrb[0].mxu0 %v7055
    %v7057 = vpop.f32.mrb[0].mxu0
    %v7058 = vadd.f32 %v6982, %v7057
    %v7059 = vpop.f32.mrb[0].mxu0
    %7060 = vdwg.mxu0
    %7061 = vmatprep.subr.mxu0 0.0
    %v7062 = vand.u32 %v6903, 4294901760
    %v7063 = vsub.f32 %v6903, %v7062
    %7064 = vmatpush1.msra.mxu0 %v7063
    %7065 = vmatprep.subr.mxu0 0.0
    %7066 = vmatpush1.msra.mxu0 0.0
    %7067 = vmatprep.subr.mxu0 0.0
    %7068 = vmatpush1.msra.mxu0 0.0
    %7069 = vmatprep.subr.mxu0 0.0
    %7070 = vmatpush1.msra.mxu0 0.0
    %7071 = vmatprep.subr.mxu0 0.0
    %7072 = vmatpush1.msra.mxu0 0.0
    %7073 = vmatprep.subr.mxu0 0.0
    %7074 = vmatpush1.msra.mxu0 0.0
    %7075 = vmatprep.subr.mxu0 0.0
    %7076 = vmatpush1.msra.mxu0 0.0
    %7077 = vmatprep.subr.mxu0 0.0
    %7078 = vmatpush1.msra.mxu0 0.0
    %7079 = vmatprep.subr.mxu0 0.0
    %7080 = vmatpush1.msra.mxu0 0.0
    %7081 = vmatprep.subr.mxu0 0.0
    %7082 = vmatpush1.msra.mxu0 0.0
    %7083 = vmatprep.subr.mxu0 0.0
    %7084 = vmatpush1.msra.mxu0 0.0
    %7085 = vmatprep.subr.mxu0 0.0
    %7086 = vmatpush1.msra.mxu0 0.0
    %7087 = vmatprep.subr.mxu0 0.0
    %7088 = vmatpush1.msra.mxu0 0.0
    %7089 = vmatprep.subr.mxu0 0.0
    %7090 = vmatpush1.msra.mxu0 0.0
    %7091 = vmatprep.subr.mxu0 0.0
    %7092 = vmatpush1.msra.mxu0 0.0
    %7093 = vmatprep.subr.mxu0 0.0
    %7094 = vmatpush1.msra.mxu0 0.0
    %7095 = vmatprep.subr.mxu0 0.0
    %7096 = vmatpush1.msra.mxu0 0.0
    %7097 = vmatprep.subr.mxu0 0.0
    %7098 = vmatpush1.msra.mxu0 0.0
    %7099 = vmatprep.subr.mxu0 0.0
    %7100 = vmatpush1.msra.mxu0 0.0
    %7101 = vmatprep.subr.mxu0 0.0
    %7102 = vmatpush1.msra.mxu0 0.0
    %7103 = vmatprep.subr.mxu0 0.0
    %7104 = vmatpush1.msra.mxu0 0.0
    %7105 = vmatprep.subr.mxu0 0.0
    %7106 = vmatpush1.msra.mxu0 0.0
    %7107 = vmatprep.subr.mxu0 0.0
    %7108 = vmatpush1.msra.mxu0 0.0
    %7109 = vmatprep.subr.mxu0 0.0
    %7110 = vmatpush1.msra.mxu0 0.0
    %7111 = vmatprep.subr.mxu0 0.0
    %7112 = vmatpush1.msra.mxu0 0.0
    %7113 = vmatprep.subr.mxu0 0.0
    %7114 = vmatpush1.msra.mxu0 0.0
    %7115 = vmatprep.subr.mxu0 0.0
    %7116 = vmatpush1.msra.mxu0 0.0
    %7117 = vmatprep.subr.mxu0 0.0
    %7118 = vmatpush1.msra.mxu0 0.0
    %7119 = vmatprep.subr.mxu0 0.0
    %7120 = vmatpush1.msra.mxu0 0.0
    %7121 = vmatprep.subr.mxu0 0.0
    %7122 = vmatpush1.msra.mxu0 0.0
    %7123 = vmatprep.subr.mxu0 0.0
    %7124 = vmatpush1.msra.mxu0 0.0
    %7125 = vmatprep.subr.mxu0 0.0
    %7126 = vmatpush1.msra.mxu0 0.0
    %7127 = vmatprep.mubr.f32.mxu0 0.0
    %v7128 = vand.u32 %v6907, 4294901760
    %v7129 = vsub.f32 %v6907, %v7128
    %7130 = vmatmul.mubr.f32.gmra.mrb[0].mxu0 %v7129
    %v7131 = vpop.f32.mrb[0].mxu0
    %v7132 = vadd.f32 %v7058, %v7131
    %v7133 = vpop.f32.mrb[0].mxu0
    %7134 = vdwg.mxu0
    %7135 = vmatprep.subr.mxu0 0.0
    %v7136 = vand.u32 %v6903, 4294901760
    %7137 = vmatpush1.msra.mxu0 %v7136
    %7138 = vmatprep.subr.mxu0 0.0
    %7139 = vmatpush1.msra.mxu0 0.0
    %7140 = vmatprep.subr.mxu0 0.0
    %7141 = vmatpush1.msra.mxu0 0.0
    %7142 = vmatprep.subr.mxu0 0.0
    %7143 = vmatpush1.msra.mxu0 0.0
    %7144 = vmatprep.subr.mxu0 0.0
    %7145 = vmatpush1.msra.mxu0 0.0
    %7146 = vmatprep.subr.mxu0 0.0
    %7147 = vmatpush1.msra.mxu0 0.0
    %7148 = vmatprep.subr.mxu0 0.0
    %7149 = vmatpush1.msra.mxu0 0.0
    %7150 = vmatprep.subr.mxu0 0.0
    %7151 = vmatpush1.msra.mxu0 0.0
    %7152 = vmatprep.subr.mxu0 0.0
    %7153 = vmatpush1.msra.mxu0 0.0
    %7154 = vmatprep.subr.mxu0 0.0
    %7155 = vmatpush1.msra.mxu0 0.0
    %7156 = vmatprep.subr.mxu0 0.0
    %7157 = vmatpush1.msra.mxu0 0.0
    %7158 = vmatprep.subr.mxu0 0.0
    %7159 = vmatpush1.msra.mxu0 0.0
    %7160 = vmatprep.subr.mxu0 0.0
    %7161 = vmatpush1.msra.mxu0 0.0
    %7162 = vmatprep.subr.mxu0 0.0
    %7163 = vmatpush1.msra.mxu0 0.0
    %7164 = vmatprep.subr.mxu0 0.0
    %7165 = vmatpush1.msra.mxu0 0.0
    %7166 = vmatprep.subr.mxu0 0.0
    %7167 = vmatpush1.msra.mxu0 0.0
    %7168 = vmatprep.subr.mxu0 0.0
    %7169 = vmatpush1.msra.mxu0 0.0
    %7170 = vmatprep.subr.mxu0 0.0
    %7171 = vmatpush1.msra.mxu0 0.0
    %7172 = vmatprep.subr.mxu0 0.0
    %7173 = vmatpush1.msra.mxu0 0.0
    %7174 = vmatprep.subr.mxu0 0.0
    %7175 = vmatpush1.msra.mxu0 0.0
    %7176 = vmatprep.subr.mxu0 0.0
    %7177 = vmatpush1.msra.mxu0 0.0
    %7178 = vmatprep.subr.mxu0 0.0
    %7179 = vmatpush1.msra.mxu0 0.0
    %7180 = vmatprep.subr.mxu0 0.0
    %7181 = vmatpush1.msra.mxu0 0.0
    %7182 = vmatprep.subr.mxu0 0.0
    %7183 = vmatpush1.msra.mxu0 0.0
    %7184 = vmatprep.subr.mxu0 0.0
    %7185 = vmatpush1.msra.mxu0 0.0
    %7186 = vmatprep.subr.mxu0 0.0
    %7187 = vmatpush1.msra.mxu0 0.0
    %7188 = vmatprep.subr.mxu0 0.0
    %7189 = vmatpush1.msra.mxu0 0.0
    %7190 = vmatprep.subr.mxu0 0.0
    %7191 = vmatpush1.msra.mxu0 0.0
    %7192 = vmatprep.subr.mxu0 0.0
    %7193 = vmatpush1.msra.mxu0 0.0
    %7194 = vmatprep.subr.mxu0 0.0
    %7195 = vmatpush1.msra.mxu0 0.0
    %7196 = vmatprep.subr.mxu0 0.0
    %7197 = vmatpush1.msra.mxu0 0.0
    %7198 = vmatprep.subr.mxu0 0.0
    %7199 = vmatpush1.msra.mxu0 0.0
    %7200 = vmatprep.mubr.f32.mxu0 0.0
    %v7201 = vand.u32 %v6907, 4294901760
    %v7202 = vsub.f32 %v6907, %v7201
    %v7203 = vand.u32 %v7202, 4294901760
    %7204 = vmatmul.mubr.f32.gmra.mrb[0].mxu0 %v7203
    %v7205 = vpop.f32.mrb[0].mxu0
    %v7206 = vadd.f32 %v7132, %v7205
    %v7207 = vpop.f32.mrb[0].mxu0
    %7208 = vdwg.mxu0
    %7209 = vmatprep.subr.mxu0 0.0
    %v7210 = vand.u32 %v6903, 4294901760
    %v7211 = vsub.f32 %v6903, %v7210
    %v7212 = vand.u32 %v7211, 4294901760
    %7213 = vmatpush1.msra.mxu0 %v7212
    %7214 = vmatprep.subr.mxu0 0.0
    %7215 = vmatpush1.msra.mxu0 0.0
    %7216 = vmatprep.subr.mxu0 0.0
    %7217 = vmatpush1.msra.mxu0 0.0
    %7218 = vmatprep.subr.mxu0 0.0
    %7219 = vmatpush1.msra.mxu0 0.0
    %7220 = vmatprep.subr.mxu0 0.0
    %7221 = vmatpush1.msra.mxu0 0.0
    %7222 = vmatprep.subr.mxu0 0.0
    %7223 = vmatpush1.msra.mxu0 0.0
    %7224 = vmatprep.subr.mxu0 0.0
    %7225 = vmatpush1.msra.mxu0 0.0
    %7226 = vmatprep.subr.mxu0 0.0
    %7227 = vmatpush1.msra.mxu0 0.0
    %7228 = vmatprep.subr.mxu0 0.0
    %7229 = vmatpush1.msra.mxu0 0.0
    %7230 = vmatprep.subr.mxu0 0.0
    %7231 = vmatpush1.msra.mxu0 0.0
    %7232 = vmatprep.subr.mxu0 0.0
    %7233 = vmatpush1.msra.mxu0 0.0
    %7234 = vmatprep.subr.mxu0 0.0
    %7235 = vmatpush1.msra.mxu0 0.0
    %7236 = vmatprep.subr.mxu0 0.0
    %7237 = vmatpush1.msra.mxu0 0.0
    %7238 = vmatprep.subr.mxu0 0.0
    %7239 = vmatpush1.msra.mxu0 0.0
    %7240 = vmatprep.subr.mxu0 0.0
    %7241 = vmatpush1.msra.mxu0 0.0
    %7242 = vmatprep.subr.mxu0 0.0
    %7243 = vmatpush1.msra.mxu0 0.0
    %7244 = vmatprep.subr.mxu0 0.0
    %7245 = vmatpush1.msra.mxu0 0.0
    %7246 = vmatprep.subr.mxu0 0.0
    %7247 = vmatpush1.msra.mxu0 0.0
    %7248 = vmatprep.subr.mxu0 0.0
    %7249 = vmatpush1.msra.mxu0 0.0
    %7250 = vmatprep.subr.mxu0 0.0
    %7251 = vmatpush1.msra.mxu0 0.0
    %7252 = vmatprep.subr.mxu0 0.0
    %7253 = vmatpush1.msra.mxu0 0.0
    %7254 = vmatprep.subr.mxu0 0.0
    %7255 = vmatpush1.msra.mxu0 0.0
    %7256 = vmatprep.subr.mxu0 0.0
    %7257 = vmatpush1.msra.mxu0 0.0
    %7258 = vmatprep.subr.mxu0 0.0
    %7259 = vmatpush1.msra.mxu0 0.0
    %7260 = vmatprep.subr.mxu0 0.0
    %7261 = vmatpush1.msra.mxu0 0.0
    %7262 = vmatprep.subr.mxu0 0.0
    %7263 = vmatpush1.msra.mxu0 0.0
    %7264 = vmatprep.subr.mxu0 0.0
    %7265 = vmatpush1.msra.mxu0 0.0
    %7266 = vmatprep.subr.mxu0 0.0
    %7267 = vmatpush1.msra.mxu0 0.0
    %7268 = vmatprep.subr.mxu0 0.0
    %7269 = vmatpush1.msra.mxu0 0.0
    %7270 = vmatprep.subr.mxu0 0.0
    %7271 = vmatpush1.msra.mxu0 0.0
    %7272 = vmatprep.subr.mxu0 0.0
    %7273 = vmatpush1.msra.mxu0 0.0
    %7274 = vmatprep.subr.mxu0 0.0
    %7275 = vmatpush1.msra.mxu0 0.0
    %7276 = vmatprep.mubr.f32.mxu0 0.0
    %v7277 = vand.u32 %v6907, 4294901760
    %7278 = vmatmul.mubr.f32.gmra.mrb[0].mxu0 %v7277
    %v7279 = vpop.f32.mrb[0].mxu0
    %v7280 = vadd.f32 %v7206, %v7279
    %v7281 = vpop.f32.mrb[0].mxu0
    %7282 = vdwg.mxu0
    %7283 = vmatprep.subr.mxu0 0.0
    %v7284 = vand.u32 %v6903, 4294901760
    %7285 = vmatpush1.msra.mxu0 %v7284
    %7286 = vmatprep.subr.mxu0 0.0
    %7287 = vmatpush1.msra.mxu0 0.0
    %7288 = vmatprep.subr.mxu0 0.0
    %7289 = vmatpush1.msra.mxu0 0.0
    %7290 = vmatprep.subr.mxu0 0.0
    %7291 = vmatpush1.msra.mxu0 0.0
    %7292 = vmatprep.subr.mxu0 0.0
    %7293 = vmatpush1.msra.mxu0 0.0
    %7294 = vmatprep.subr.mxu0 0.0
    %7295 = vmatpush1.msra.mxu0 0.0
    %7296 = vmatprep.subr.mxu0 0.0
    %7297 = vmatpush1.msra.mxu0 0.0
    %7298 = vmatprep.subr.mxu0 0.0
    %7299 = vmatpush1.msra.mxu0 0.0
    %7300 = vmatprep.subr.mxu0 0.0
    %7301 = vmatpush1.msra.mxu0 0.0
    %7302 = vmatprep.subr.mxu0 0.0
    %7303 = vmatpush1.msra.mxu0 0.0
    %7304 = vmatprep.subr.mxu0 0.0
    %7305 = vmatpush1.msra.mxu0 0.0
    %7306 = vmatprep.subr.mxu0 0.0
    %7307 = vmatpush1.msra.mxu0 0.0
    %7308 = vmatprep.subr.mxu0 0.0
    %7309 = vmatpush1.msra.mxu0 0.0
    %7310 = vmatprep.subr.mxu0 0.0
    %7311 = vmatpush1.msra.mxu0 0.0
    %7312 = vmatprep.subr.mxu0 0.0
    %7313 = vmatpush1.msra.mxu0 0.0
    %7314 = vmatprep.subr.mxu0 0.0
    %7315 = vmatpush1.msra.mxu0 0.0
    %7316 = vmatprep.subr.mxu0 0.0
    %7317 = vmatpush1.msra.mxu0 0.0
    %7318 = vmatprep.subr.mxu0 0.0
    %7319 = vmatpush1.msra.mxu0 0.0
    %7320 = vmatprep.subr.mxu0 0.0
    %7321 = vmatpush1.msra.mxu0 0.0
    %7322 = vmatprep.subr.mxu0 0.0
    %7323 = vmatpush1.msra.mxu0 0.0
    %7324 = vmatprep.subr.mxu0 0.0
    %7325 = vmatpush1.msra.mxu0 0.0
    %7326 = vmatprep.subr.mxu0 0.0
    %7327 = vmatpush1.msra.mxu0 0.0
    %7328 = vmatprep.subr.mxu0 0.0
    %7329 = vmatpush1.msra.mxu0 0.0
    %7330 = vmatprep.subr.mxu0 0.0
    %7331 = vmatpush1.msra.mxu0 0.0
    %7332 = vmatprep.subr.mxu0 0.0
    %7333 = vmatpush1.msra.mxu0 0.0
    %7334 = vmatprep.subr.mxu0 0.0
    %7335 = vmatpush1.msra.mxu0 0.0
    %7336 = vmatprep.subr.mxu0 0.0
    %7337 = vmatpush1.msra.mxu0 0.0
    %7338 = vmatprep.subr.mxu0 0.0
    %7339 = vmatpush1.msra.mxu0 0.0
    %7340 = vmatprep.subr.mxu0 0.0
    %7341 = vmatpush1.msra.mxu0 0.0
    %7342 = vmatprep.subr.mxu0 0.0
    %7343 = vmatpush1.msra.mxu0 0.0
    %7344 = vmatprep.subr.mxu0 0.0
    %7345 = vmatpush1.msra.mxu0 0.0
    %7346 = vmatprep.subr.mxu0 0.0
    %7347 = vmatpush1.msra.mxu0 0.0
    %7348 = vmatprep.mubr.f32.mxu0 0.0
    %v7349 = vand.u32 %v6907, 4294901760
    %7350 = vmatmul.mubr.f32.gmra.mrb[0].mxu0 %v7349
    %v7351 = vpop.f32.mrb[0].mxu0
    %v7352 = vadd.f32 %v7280, %v7351
    %v7353 = vpop.f32.mrb[0].mxu0
    %7354 = vdwg.mxu0
    %v7355 = vadd.f32 %v6897, %v7352
    %7356 = vst [vmem:[#allocation2] sm:$0xff] %v7355
    // Predicated region
    $region14: #{tpu_custom_call.1} parent=1 // pred_check
      _
    $region15: #{tpu_custom_call.1} parent=1 // pred_check_branch
      %7358 = sbr.rel (0) target = $region17
    $region16: #{tpu_custom_call.1} parent=1 // pred_region
      %s7360 = ssub.s32 128, 128
      %7361 = vsyncadd [#allocation3], %s7360
      %s7363 = sshll.u32 [#allocation2], 4
      %s7364 = int_to_ptr.vmem [resolvable:$true] %s7363
      %7366 = dma.vmem_to_hbm [thread:$0]  %s7364, 128, %s3, [#allocation3]
    $region17: #{tpu_custom_call.1} parent=1 // pred_fallthru
      _
    // Predicated region
    $region18: #{tpu_custom_call.1} parent=1 // pred_check
      _
    $region19: #{tpu_custom_call.1} parent=1 // pred_check_branch
      %7368 = sbr.rel (0) target = $region21
    $region20: #{tpu_custom_call.1} parent=1 // pred_region
      %7369 = dma.done [#allocation3], 128
    $region21: #{tpu_custom_call.1} parent=1 // pred_fallthru
      _
    %7370 = vsyncpa [#allocation3], 1

</llo_original>
